<compile_context>
chip_gen: v5e
topology: v5e:2x2
jax: 0.10.0
libtpu: 0.0.40
codegen_flags: <defaults>
</compile_context>

<pallas_src>
import functools

import numpy as np

import jax
import jax.numpy as jnp
from jax.experimental import pallas as pl
from jax.experimental.pallas import tpu as pltpu


LANE = 128
_VMEM_BUDGET = 8 * 1024 * 1024    # per-kernel working-set target
_VMEM_LIMIT = 32 * 1024 * 1024    # scoped VMEM limit (safe on v5e/v6e/v7x)


# ----------------------------------------------------------------------------
# Pallas kernel: out = [PReLU](sum_i A_i @ W_i + b) [+/- residual]
# ----------------------------------------------------------------------------
def _fused_mm_kernel(*refs, n_in, apply_prelu, has_res, res_sign):
    a_refs = refs[:n_in]
    w_refs = refs[n_in:2 * n_in]
    b_ref = refs[2 * n_in]
    alpha_ref = refs[2 * n_in + 1]
    res_ref = refs[2 * n_in + 2] if has_res else None
    o_ref = refs[-1]

    acc = jnp.dot(a_refs[0][...], w_refs[0][...],
                  preferred_element_type=jnp.float32)
    for i in range(1, n_in):
        acc = acc + jnp.dot(a_refs[i][...], w_refs[i][...],
                            preferred_element_type=jnp.float32)
    acc = acc + b_ref[...].astype(jnp.float32)
    if apply_prelu:
        alpha = alpha_ref[0, 0]
        acc = jnp.where(acc >= 0.0, acc, alpha * acc)
    if has_res:
        r = res_ref[...].astype(jnp.float32)
        acc = acc + r if res_sign > 0 else acc - r
    o_ref[...] = acc.astype(o_ref.dtype)


def _pick_tm(m, ks, n, has_res, out_bytes):
    """Largest row tile that divides M, fits the VMEM budget (double-buffered),
    and keeps >= 4 grid steps so v7x's 2 TensorCores can split the M axis."""
    if m % 8 != 0 or m <= 32:
        return m
    cap = max(8, m // 4)

    def vmem_bytes(t):
        a = 2 * 2 * t * sum(ks)                 # bf16 A tiles, double-buffered
        w = 2 * 2 * sum(k * n for k in ks)      # bf16 weights (resident)
        b = 2 * 4 * n                           # f32 bias
        r = 2 * 2 * t * n if has_res else 0     # bf16 residual tile
        o = 2 * out_bytes * t * n               # output tile
        return a + w + b + r + o

    for t in (1024, 512, 256, 128, 64, 32, 16, 8):
        if t <= cap and m % t == 0 and vmem_bytes(t) <= _VMEM_BUDGET:
            return t
    return 8


def fused_matmul(inputs, weights, bias, alpha, *, apply_prelu,
                 residual=None, res_sign=0.0, out_dtype=jnp.bfloat16):
    """Tiled MXU matmul over one or more (A_i, W_i) pairs with a fused
    bias + optional PReLU + optional +/- residual epilogue."""
    m = inputs[0].shape[0]
    n = weights[0].shape[1]
    ks = [w.shape[0] for w in weights]
    has_res = residual is not None
    tm = _pick_tm(m, ks, n, has_res, jnp.dtype(out_dtype).itemsize)

    kernel = functools.partial(_fused_mm_kernel, n_in=len(inputs),
                               apply_prelu=apply_prelu, has_res=has_res,
                               res_sign=res_sign)
    in_specs = ([pl.BlockSpec((tm, k), lambda i: (i, 0)) for k in ks]
                + [pl.BlockSpec((k, n), lambda i: (0, 0)) for k in ks]
                + [pl.BlockSpec((1, n), lambda i: (0, 0)),
                   pl.BlockSpec(memory_space=pltpu.SMEM)])   # PReLU alpha scalar
    args = (list(inputs) + list(weights)
            + [bias.reshape(1, n),
               jnp.asarray(alpha, jnp.float32).reshape(1, 1)])
    if has_res:
        in_specs.append(pl.BlockSpec((tm, n), lambda i: (i, 0)))
        args.append(residual)

    return pl.pallas_call(
        kernel,
        out_shape=jax.ShapeDtypeStruct((m, n), out_dtype),
        grid=(m // tm,),
        in_specs=in_specs,
        out_specs=pl.BlockSpec((tm, n), lambda i: (i, 0)),
        compiler_params=pltpu.CompilerParams(
            dimension_semantics=("parallel",),
            vmem_limit_bytes=_VMEM_LIMIT),
    )(*args)


# ----------------------------------------------------------------------------
# Patch builders (cheap XLA glue: 9 / 4 slices instead of the old 64) and
# the phase->spatial pixel shuffle.
# ----------------------------------------------------------------------------
def deconv_patches(x_low):
    """3x3 patches of the 1-padded low-res input -> (n*h*w, 9*c)."""
    n, h, w, c = x_low.shape
    xp = jnp.pad(x_low, ((0, 0), (1, 1), (1, 1), (0, 0)))
    cols = [xp[:, a:a + h, b:b + w, :] for a in range(3) for b in range(3)]
    return jnp.concatenate(cols, axis=-1).reshape(n * h * w, 9 * c)


def downconv_patches(x_full):
    """Exact 8x8/stride-4/pad-2 conv patches via space-to-depth:
    (n, 4h, 4w, c) -> (n*h*w, 64*c)."""
    n, hh, ww, c = x_full.shape
    xp = jnp.pad(x_full, ((0, 0), (2, 2), (2, 2), (0, 0)))
    hs, ws = hh // 4 + 1, ww // 4 + 1
    xs = xp.reshape(n, hs, 4, ws, 4, c)
    xs = jnp.transpose(xs, (0, 1, 3, 2, 4, 5)).reshape(n, hs, ws, 16 * c)
    ho, wo = hh // 4, ww // 4
    cols = [xs[:, a:a + ho, b:b + wo, :] for a in range(2) for b in range(2)]
    return jnp.concatenate(cols, axis=-1).reshape(n * ho * wo, 64 * c)


def phase_to_spatial(y_phase, n, h, w, ch):
    """(n*h*w, 16*ch) phase layout -> (n, 4h, 4w, ch) spatial (pixel shuffle)."""
    y = y_phase.reshape(n, h, w, 4, 4, ch)
    y = jnp.transpose(y, (0, 1, 3, 2, 4, 5))
    return y.reshape(n, 4 * h, 4 * w, ch)


# ----------------------------------------------------------------------------
# EUPU / EDPU (DBPN up/down projection units) and SISR_Block
# ----------------------------------------------------------------------------
def eupu(p, x_low):
    """Up-projection.  Returns the full-res output in (spatial, phase) layouts."""
    n, h, w, cp = x_low.shape
    ch = p["up1"]["w"].shape[1] // 16
    # h0 = PReLU(deconv(x))                 (phase layout, lane-dense 16*ch cols)
    h0_p = fused_matmul([deconv_patches(x_low)], [p["up1"]["w"]],
                        p["up1"]["b"], p["a1"], apply_prelu=True)
    h0_s = phase_to_spatial(h0_p, n, h, w, ch)
    # l0 - x = PReLU(conv(h0)) - x          (residual fused in the epilogue)
    l0r = fused_matmul([downconv_patches(h0_s)], [p["down2"]["w"]],
                       p["down2"]["b"], p["a2"], apply_prelu=True,
                       residual=x_low.reshape(n * h * w, cp), res_sign=-1.0)
    # h1 + h0 = PReLU(deconv(l0 - x)) + h0  (residual fused, phase layout)
    out_p = fused_matmul([deconv_patches(l0r.reshape(n, h, w, cp))],
                         [p["up3"]["w"]], p["up3"]["b"], p["a3"],
                         apply_prelu=True, residual=h0_p, res_sign=1.0)
    return phase_to_spatial(out_p, n, h, w, ch), out_p


def edpu(p, x_s, x_p):
    """Down-projection.  Takes the full-res input in both spatial and phase
    layouts so the (h0 - x) residual fuses into the deconv epilogue for free."""
    n, hh, ww, ch = x_s.shape
    h, w = hh // 4, ww // 4
    # l0 = PReLU(conv(x))
    l0 = fused_matmul([downconv_patches(x_s)], [p["down1"]["w"]],
                      p["down1"]["b"], p["a1"], apply_prelu=True)
    cp = l0.shape[1]
    # h0 - x = PReLU(deconv(l0)) - x        (residual fused, phase layout)
    h0r_p = fused_matmul([deconv_patches(l0.reshape(n, h, w, cp))],
                         [p["up2"]["w"]], p["up2"]["b"], p["a2"],
                         apply_prelu=True, residual=x_p, res_sign=-1.0)
    h0r_s = phase_to_spatial(h0r_p, n, h, w, ch)
    # l1 + l0 = PReLU(conv(h0 - x)) + l0    (residual fused)
    out = fused_matmul([downconv_patches(h0r_s)], [p["down3"]["w"]],
                       p["down3"]["b"], p["a3"], apply_prelu=True,
                       residual=l0, res_sign=1.0)
    return out.reshape(n, h, w, cp)


def sisr_block(params, x_nchw):
    n, cl, h, w = x_nchw.shape
    ch = params["rec_w1"].shape[0]
    x = jnp.transpose(x_nchw, (0, 2, 3, 1)).astype(jnp.bfloat16)   # NHWC bf16
    # pre_deal 1x1 conv + PReLU (output zero-padded to 128 lanes)
    x_low = fused_matmul([x.reshape(n * h * w, cl)], [params["pre_w"]],
                         params["pre_b"], params["pre_alpha"], apply_prelu=True)
    x_low = x_low.reshape(n, h, w, -1)

    h1_s, h1_p = eupu(params["upu1"], x_low)
    h2_s, h2_p = eupu(params["upu2"], edpu(params["dpu1"], h1_s, h1_p))
    h3_s, _ = eupu(params["upu3"], edpu(params["dpu2"], h2_s, h2_p))

    # reconstruction: 1x1 conv over torch.cat((h3, h2, h1), 1) WITHOUT
    # materializing the concat -- three A/W pairs accumulated in one kernel.
    m = n * 4 * h * 4 * w
    rec = fused_matmul(
        [h3_s.reshape(m, ch), h2_s.reshape(m, ch), h1_s.reshape(m, ch)],
        [params["rec_w3"], params["rec_w2"], params["rec_w1"]],
        params["rec_b"], 0.0, apply_prelu=False, out_dtype=jnp.float32)
    out = rec[:, :ch].reshape(n, 4 * h, 4 * w, ch)    # drop zero padding lanes
    return jnp.transpose(out, (0, 3, 1, 2))           # NHWC -> NCHW


# ----------------------------------------------------------------------------
# Parameter init: synthetic weights, pre-transformed once (phase / s2d layout,
# lane padding, bias tiling, bf16 cast) so the hot path does no relayout.
# ----------------------------------------------------------------------------
def _round_up(x, m):
    return (x + m - 1) // m * m


def _rand(key, shape, scale=0.05):
    return np.asarray(scale * jax.random.normal(key, shape, jnp.float32))


def _build_deconv_unit(key, cin_pad, ch):
    """ConvTranspose2d(ch, ch, 8, stride=4, padding=2) -> phase-decomposed
    matmul weight.  Taps wt[kh, kw, ci, co]; out[oh] = sum x[ih]*wt, with
    oh = 4*ih + kh - 2.  Column layout: p*ch + co, p = 4*uh + uw (shuffle order)."""
    kw_key, kb_key = jax.random.split(key)
    wt = _rand(kw_key, (8, 8, ch, ch))
    b = _rand(kb_key, (ch,))
    W = np.zeros((3, 3, cin_pad, 16, ch), np.float32)
    for uh in range(4):
        rh, dh = (uh + 2) % 4, (0 if uh < 2 else 1)
        for uw in range(4):
            rw, dw = (uw + 2) % 4, (0 if uw < 2 else 1)
            p = 4 * uh + uw
            for i in range(2):
                for j in range(2):
                    W[dh + i, dw + j, :ch, p, :] = wt[rh + 4 * (1 - i),
                                                      rw + 4 * (1 - j)]
    return {"w": jnp.asarray(W.reshape(9 * cin_pad, 16 * ch), jnp.bfloat16),
            "b": jnp.asarray(np.tile(b, 16), jnp.float32)}


def _build_conv_unit(key, ch, cout_pad):
    """Conv2d(ch, ch, 8, stride=4, padding=2) -> exact space-to-depth matmul
    weight, output channels zero-padded to cout_pad lanes."""
    kw_key, kb_key = jax.random.split(key)
    wc = _rand(kw_key, (8, 8, ch, ch))
    b = _rand(kb_key, (ch,))
    W = np.zeros((2, 2, 4, 4, ch, cout_pad), np.float32)
    for kh in range(8):
        for kw in range(8):
            W[kh // 4, kw // 4, kh % 4, kw % 4, :, :ch] = wc[kh, kw]
    bp = np.zeros((cout_pad,), np.float32)
    bp[:ch] = b
    return {"w": jnp.asarray(W.reshape(64 * ch, cout_pad), jnp.bfloat16),
            "b": jnp.asarray(bp, jnp.float32)}


def _init_eupu(key, cp, ch):
    k1, k2, k3 = jax.random.split(key, 3)
    return {"up1": _build_deconv_unit(k1, cp, ch),
            "down2": _build_conv_unit(k2, ch, cp),
            "up3": _build_deconv_unit(k3, cp, ch),
            "a1": 0.25, "a2": 0.25, "a3": 0.25}


def _init_edpu(key, cp, ch):
    k1, k2, k3 = jax.random.split(key, 3)
    return {"down1": _build_conv_unit(k1, ch, cp),
            "up2": _build_deconv_unit(k2, cp, ch),
            "down3": _build_conv_unit(k3, ch, cp),
            "a1": 0.25, "a2": 0.25, "a3": 0.25}


def init_params(key, cl, ch):
    assert ch % 8 == 0, "ch must be a multiple of 8 for lane-dense phase output"
    cp = _round_up(ch, LANE)          # low-res activations carry cp lanes
    keys = jax.random.split(key, 7)

    pre_w = np.zeros((cl, cp), np.float32)
    pre_w[:, :ch] = _rand(keys[0], (cl, ch))
    pre_b = np.zeros((cp,), np.float32)
    pre_b[:ch] = _rand(jax.random.fold_in(keys[0], 1), (ch,))

    rec_keys = jax.random.split(keys[1], 4)
    rec_ws = []
    for i in range(3):                # order matches torch.cat((h3, h2, h1), 1)
        wi = np.zeros((ch, cp), np.float32)
        wi[:, :ch] = _rand(rec_keys[i], (ch, ch))
        rec_ws.append(jnp.asarray(wi, jnp.bfloat16))
    rec_b = np.zeros((cp,), np.float32)
    rec_b[:ch] = _rand(rec_keys[3], (ch,))

    return {
        "pre_w": jnp.asarray(pre_w, jnp.bfloat16),
        "pre_b": jnp.asarray(pre_b, jnp.float32),
        "pre_alpha": 0.25,
        "rec_w3": rec_ws[0], "rec_w2": rec_ws[1], "rec_w1": rec_ws[2],
        "rec_b": jnp.asarray(rec_b, jnp.float32),
        "upu1": _init_eupu(keys[2], cp, ch),
        "upu2": _init_eupu(keys[3], cp, ch),
        "upu3": _init_eupu(keys[4], cp, ch),
        "dpu1": _init_edpu(keys[5], cp, ch),
        "dpu2": _init_edpu(keys[6], cp, ch),
    }


if __name__ == "__main__":
    cl, ch = 4, 8
    n, h, w = 2, 8, 8
    key = jax.random.PRNGKey(0)
    kx, kp = jax.random.split(key)
    x = jax.random.normal(kx, (n, cl, h, w), jnp.float32)   # NCHW like PyTorch
    params = init_params(kp, cl, ch)

    out = jax.jit(sisr_block)(params, x)
    out = jax.block_until_ready(out)

    assert out.shape == (n, ch, 4 * h, 4 * w), out.shape
    assert bool(jnp.all(jnp.isfinite(out)))
    print("KERNEL_OK")
</pallas_src>

<mosaic_0001>
module attributes {stable_mosaic.version = 11 : i64} {
  func.func @_fused_mm_kernel(%arg0: i32, %arg1: memref<32x4xbf16, #tpu.memory_space<vmem>>, %arg2: memref<4x128xbf16, #tpu.memory_space<vmem>>, %arg3: memref<1x128xf32, #tpu.memory_space<vmem>>, %arg4: memref<1x1xf32, #tpu.memory_space<smem>>, %arg5: memref<32x128xbf16, #tpu.memory_space<vmem>>) attributes {dimension_semantics = [#tpu.dimension_semantics<parallel>], iteration_bounds = array<i64: 4>, scalar_prefetch = 0 : i64, scratch_operands = 0 : i64, tpu.core_type = #tpu.core_type<tc>, window_params = [{transform_indices = @transform_0, window_bounds = array<i64: 32, 4>}, {pipeline_mode = #tpu.pipeline_mode<synchronous>, transform_indices = @transform_1, window_bounds = array<i64: 4, 128>}, {pipeline_mode = #tpu.pipeline_mode<synchronous>, transform_indices = @transform_2, window_bounds = array<i64: 1, 128>}, {transform_indices = @transform_3, window_bounds = array<i64: 1, 1>}, {transform_indices = @transform_4, window_bounds = array<i64: 32, 128>}]} {
    %c0 = arith.constant 0 : index
    %c0_0 = arith.constant 0 : index
    %0 = vector.load %arg1[%c0, %c0_0] : memref<32x4xbf16, #tpu.memory_space<vmem>>, vector<32x4xbf16>
    %c0_1 = arith.constant 0 : index
    %c0_2 = arith.constant 0 : index
    %1 = vector.load %arg2[%c0_1, %c0_2] : memref<4x128xbf16, #tpu.memory_space<vmem>>, vector<4x128xbf16>
    %cst = arith.constant dense<0.000000e+00> : vector<32x128xf32>
    %2 = tpu.matmul %0, %1, %cst {dimension_numbers = #tpu.dot_dimension_numbers<[1], [0], [0], [1], [0, 0, 1, 1], [], []>} : vector<32x4xbf16>, vector<4x128xbf16>, vector<32x128xf32> -> vector<32x128xf32>
    %c0_3 = arith.constant 0 : index
    %c0_4 = arith.constant 0 : index
    %3 = vector.load %arg3[%c0_3, %c0_4] : memref<1x128xf32, #tpu.memory_space<vmem>>, vector<1x128xf32>
    %4 = vector.broadcast %3 : vector<1x128xf32> to vector<32x128xf32>
    %5 = arith.addf %2, %4 : vector<32x128xf32>
    %c0_5 = arith.constant 0 : index
    %c0_6 = arith.constant 0 : index
    %6 = memref.load %arg4[%c0_5, %c0_6] : memref<1x1xf32, #tpu.memory_space<smem>>
    %cst_7 = arith.constant 0.000000e+00 : f32
    %7 = vector.broadcast %cst_7 : f32 to vector<32x128xf32>
    %8 = arith.cmpf oge, %5, %7 : vector<32x128xf32>
    %9 = vector.broadcast %6 : f32 to vector<32x128xf32>
    %10 = arith.mulf %9, %5 : vector<32x128xf32>
    %11 = arith.select %8, %5, %10 : vector<32x128xi1>, vector<32x128xf32>
    %12 = arith.truncf %11 : vector<32x128xf32> to vector<32x128xbf16>
    %c0_8 = arith.constant 0 : index
    %c0_9 = arith.constant 0 : index
    %13 = vector.load %arg5[%c0_8, %c0_9] : memref<32x128xbf16, #tpu.memory_space<vmem>>, vector<32x128xbf16>
    tpu.vector_store %arg5[%c0_8, %c0_9], %12 {strides = array<i32>} : memref<32x128xbf16, #tpu.memory_space<vmem>>, vector<32x128xbf16>,
    return
  }
  func.func @transform_0(%arg0: i32) -> (i32, i32) {
    %c0_i32 = arith.constant 0 : i32
    %c0_i32_0 = arith.constant 0 : i32
    return %arg0, %c0_i32 : i32, i32
  }
  func.func @transform_1(%arg0: i32) -> (i32, i32) {
    %c0_i32 = arith.constant 0 : i32
    %c0_i32_0 = arith.constant 0 : i32
    %c0_i32_1 = arith.constant 0 : i32
    return %c0_i32, %c0_i32_0 : i32, i32
  }
  func.func @transform_2(%arg0: i32) -> (i32, i32) {
    %c0_i32 = arith.constant 0 : i32
    %c0_i32_0 = arith.constant 0 : i32
    %c0_i32_1 = arith.constant 0 : i32
    return %c0_i32, %c0_i32_0 : i32, i32
  }
  func.func @transform_3(%arg0: i32) -> (i32, i32) {
    %c0_i32 = arith.constant 0 : i32
    %c0_i32_0 = arith.constant 0 : i32
    %c0_i32_1 = arith.constant 0 : i32
    return %c0_i32, %c0_i32_0 : i32, i32
  }
  func.func @transform_4(%arg0: i32) -> (i32, i32) {
    %c0_i32 = arith.constant 0 : i32
    %c0_i32_0 = arith.constant 0 : i32
    return %arg0, %c0_i32 : i32, i32
  }
}

module attributes {stable_mosaic.version = 11 : i64} {
  func.func @_fused_mm_kernel(%arg0: i32, %arg1: memref<32x1152xbf16, #tpu.memory_space<vmem>>, %arg2: memref<1152x128xbf16, #tpu.memory_space<vmem>>, %arg3: memref<1x128xf32, #tpu.memory_space<vmem>>, %arg4: memref<1x1xf32, #tpu.memory_space<smem>>, %arg5: memref<32x128xbf16, #tpu.memory_space<vmem>>) attributes {dimension_semantics = [#tpu.dimension_semantics<parallel>], iteration_bounds = array<i64: 4>, scalar_prefetch = 0 : i64, scratch_operands = 0 : i64, tpu.core_type = #tpu.core_type<tc>, window_params = [{transform_indices = @transform_0, window_bounds = array<i64: 32, 1152>}, {pipeline_mode = #tpu.pipeline_mode<synchronous>, transform_indices = @transform_1, window_bounds = array<i64: 1152, 128>}, {pipeline_mode = #tpu.pipeline_mode<synchronous>, transform_indices = @transform_2, window_bounds = array<i64: 1, 128>}, {transform_indices = @transform_3, window_bounds = array<i64: 1, 1>}, {transform_indices = @transform_4, window_bounds = array<i64: 32, 128>}]} {
    %c0 = arith.constant 0 : index
    %c0_0 = arith.constant 0 : index
    %0 = vector.load %arg1[%c0, %c0_0] : memref<32x1152xbf16, #tpu.memory_space<vmem>>, vector<32x1152xbf16>
    %c0_1 = arith.constant 0 : index
    %c0_2 = arith.constant 0 : index
    %1 = vector.load %arg2[%c0_1, %c0_2] : memref<1152x128xbf16, #tpu.memory_space<vmem>>, vector<1152x128xbf16>
    %cst = arith.constant dense<0.000000e+00> : vector<32x128xf32>
    %2 = tpu.matmul %0, %1, %cst {dimension_numbers = #tpu.dot_dimension_numbers<[1], [0], [0], [1], [0, 0, 1, 1], [], []>} : vector<32x1152xbf16>, vector<1152x128xbf16>, vector<32x128xf32> -> vector<32x128xf32>
    %c0_3 = arith.constant 0 : index
    %c0_4 = arith.constant 0 : index
    %3 = vector.load %arg3[%c0_3, %c0_4] : memref<1x128xf32, #tpu.memory_space<vmem>>, vector<1x128xf32>
    %4 = vector.broadcast %3 : vector<1x128xf32> to vector<32x128xf32>
    %5 = arith.addf %2, %4 : vector<32x128xf32>
    %c0_5 = arith.constant 0 : index
    %c0_6 = arith.constant 0 : index
    %6 = memref.load %arg4[%c0_5, %c0_6] : memref<1x1xf32, #tpu.memory_space<smem>>
    %cst_7 = arith.constant 0.000000e+00 : f32
    %7 = vector.broadcast %cst_7 : f32 to vector<32x128xf32>
    %8 = arith.cmpf oge, %5, %7 : vector<32x128xf32>
    %9 = vector.broadcast %6 : f32 to vector<32x128xf32>
    %10 = arith.mulf %9, %5 : vector<32x128xf32>
    %11 = arith.select %8, %5, %10 : vector<32x128xi1>, vector<32x128xf32>
    %12 = arith.truncf %11 : vector<32x128xf32> to vector<32x128xbf16>
    %c0_8 = arith.constant 0 : index
    %c0_9 = arith.constant 0 : index
    %13 = vector.load %arg5[%c0_8, %c0_9] : memref<32x128xbf16, #tpu.memory_space<vmem>>, vector<32x128xbf16>
    tpu.vector_store %arg5[%c0_8, %c0_9], %12 {strides = array<i32>} : memref<32x128xbf16, #tpu.memory_space<vmem>>, vector<32x128xbf16>,
    return
  }
  func.func @transform_0(%arg0: i32) -> (i32, i32) {
    %c0_i32 = arith.constant 0 : i32
    %c0_i32_0 = arith.constant 0 : i32
    return %arg0, %c0_i32 : i32, i32
  }
  func.func @transform_1(%arg0: i32) -> (i32, i32) {
    %c0_i32 = arith.constant 0 : i32
    %c0_i32_0 = arith.constant 0 : i32
    %c0_i32_1 = arith.constant 0 : i32
    return %c0_i32, %c0_i32_0 : i32, i32
  }
  func.func @transform_2(%arg0: i32) -> (i32, i32) {
    %c0_i32 = arith.constant 0 : i32
    %c0_i32_0 = arith.constant 0 : i32
    %c0_i32_1 = arith.constant 0 : i32
    return %c0_i32, %c0_i32_0 : i32, i32
  }
  func.func @transform_3(%arg0: i32) -> (i32, i32) {
    %c0_i32 = arith.constant 0 : i32
    %c0_i32_0 = arith.constant 0 : i32
    %c0_i32_1 = arith.constant 0 : i32
    return %c0_i32, %c0_i32_0 : i32, i32
  }
  func.func @transform_4(%arg0: i32) -> (i32, i32) {
    %c0_i32 = arith.constant 0 : i32
    %c0_i32_0 = arith.constant 0 : i32
    return %arg0, %c0_i32 : i32, i32
  }
}

module attributes {stable_mosaic.version = 11 : i64} {
  func.func @_fused_mm_kernel(%arg0: i32, %arg1: memref<32x512xbf16, #tpu.memory_space<vmem>>, %arg2: memref<512x128xbf16, #tpu.memory_space<vmem>>, %arg3: memref<1x128xf32, #tpu.memory_space<vmem>>, %arg4: memref<1x1xf32, #tpu.memory_space<smem>>, %arg5: memref<32x128xbf16, #tpu.memory_space<vmem>>, %arg6: memref<32x128xbf16, #tpu.memory_space<vmem>>) attributes {dimension_semantics = [#tpu.dimension_semantics<parallel>], iteration_bounds = array<i64: 4>, scalar_prefetch = 0 : i64, scratch_operands = 0 : i64, tpu.core_type = #tpu.core_type<tc>, window_params = [{transform_indices = @transform_0, window_bounds = array<i64: 32, 512>}, {pipeline_mode = #tpu.pipeline_mode<synchronous>, transform_indices = @transform_1, window_bounds = array<i64: 512, 128>}, {pipeline_mode = #tpu.pipeline_mode<synchronous>, transform_indices = @transform_2, window_bounds = array<i64: 1, 128>}, {transform_indices = @transform_3, window_bounds = array<i64: 1, 1>}, {transform_indices = @transform_4, window_bounds = array<i64: 32, 128>}, {transform_indices = @transform_5, window_bounds = array<i64: 32, 128>}]} {
    %c0 = arith.constant 0 : index
    %c0_0 = arith.constant 0 : index
    %0 = vector.load %arg1[%c0, %c0_0] : memref<32x512xbf16, #tpu.memory_space<vmem>>, vector<32x512xbf16>
    %c0_1 = arith.constant 0 : index
    %c0_2 = arith.constant 0 : index
    %1 = vector.load %arg2[%c0_1, %c0_2] : memref<512x128xbf16, #tpu.memory_space<vmem>>, vector<512x128xbf16>
    %cst = arith.constant dense<0.000000e+00> : vector<32x128xf32>
    %2 = tpu.matmul %0, %1, %cst {dimension_numbers = #tpu.dot_dimension_numbers<[1], [0], [0], [1], [0, 0, 1, 1], [], []>} : vector<32x512xbf16>, vector<512x128xbf16>, vector<32x128xf32> -> vector<32x128xf32>
    %c0_3 = arith.constant 0 : index
    %c0_4 = arith.constant 0 : index
    %3 = vector.load %arg3[%c0_3, %c0_4] : memref<1x128xf32, #tpu.memory_space<vmem>>, vector<1x128xf32>
    %4 = vector.broadcast %3 : vector<1x128xf32> to vector<32x128xf32>
    %5 = arith.addf %2, %4 : vector<32x128xf32>
    %c0_5 = arith.constant 0 : index
    %c0_6 = arith.constant 0 : index
    %6 = memref.load %arg4[%c0_5, %c0_6] : memref<1x1xf32, #tpu.memory_space<smem>>
    %cst_7 = arith.constant 0.000000e+00 : f32
    %7 = vector.broadcast %cst_7 : f32 to vector<32x128xf32>
    %8 = arith.cmpf oge, %5, %7 : vector<32x128xf32>
    %9 = vector.broadcast %6 : f32 to vector<32x128xf32>
    %10 = arith.mulf %9, %5 : vector<32x128xf32>
    %11 = arith.select %8, %5, %10 : vector<32x128xi1>, vector<32x128xf32>
    %c0_8 = arith.constant 0 : index
    %c0_9 = arith.constant 0 : index
    %12 = vector.load %arg5[%c0_8, %c0_9] : memref<32x128xbf16, #tpu.memory_space<vmem>>, vector<32x128xbf16>
    %13 = arith.extf %12 : vector<32x128xbf16> to vector<32x128xf32>
    %14 = arith.subf %11, %13 : vector<32x128xf32>
    %15 = arith.truncf %14 : vector<32x128xf32> to vector<32x128xbf16>
    %c0_10 = arith.constant 0 : index
    %c0_11 = arith.constant 0 : index
    %16 = vector.load %arg6[%c0_10, %c0_11] : memref<32x128xbf16, #tpu.memory_space<vmem>>, vector<32x128xbf16>
    tpu.vector_store %arg6[%c0_10, %c0_11], %15 {strides = array<i32>} : memref<32x128xbf16, #tpu.memory_space<vmem>>, vector<32x128xbf16>,
    return
  }
  func.func @transform_0(%arg0: i32) -> (i32, i32) {
    %c0_i32 = arith.constant 0 : i32
    %c0_i32_0 = arith.constant 0 : i32
    return %arg0, %c0_i32 : i32, i32
  }
  func.func @transform_1(%arg0: i32) -> (i32, i32) {
    %c0_i32 = arith.constant 0 : i32
    %c0_i32_0 = arith.constant 0 : i32
    %c0_i32_1 = arith.constant 0 : i32
    return %c0_i32, %c0_i32_0 : i32, i32
  }
  func.func @transform_2(%arg0: i32) -> (i32, i32) {
    %c0_i32 = arith.constant 0 : i32
    %c0_i32_0 = arith.constant 0 : i32
    %c0_i32_1 = arith.constant 0 : i32
    return %c0_i32, %c0_i32_0 : i32, i32
  }
  func.func @transform_3(%arg0: i32) -> (i32, i32) {
    %c0_i32 = arith.constant 0 : i32
    %c0_i32_0 = arith.constant 0 : i32
    %c0_i32_1 = arith.constant 0 : i32
    return %c0_i32, %c0_i32_0 : i32, i32
  }
  func.func @transform_4(%arg0: i32) -> (i32, i32) {
    %c0_i32 = arith.constant 0 : i32
    %c0_i32_0 = arith.constant 0 : i32
    return %arg0, %c0_i32 : i32, i32
  }
  func.func @transform_5(%arg0: i32) -> (i32, i32) {
    %c0_i32 = arith.constant 0 : i32
    %c0_i32_0 = arith.constant 0 : i32
    return %arg0, %c0_i32 : i32, i32
  }
}

module attributes {stable_mosaic.version = 11 : i64} {
  func.func @_fused_mm_kernel(%arg0: i32, %arg1: memref<32x1152xbf16, #tpu.memory_space<vmem>>, %arg2: memref<1152x128xbf16, #tpu.memory_space<vmem>>, %arg3: memref<1x128xf32, #tpu.memory_space<vmem>>, %arg4: memref<1x1xf32, #tpu.memory_space<smem>>, %arg5: memref<32x128xbf16, #tpu.memory_space<vmem>>, %arg6: memref<32x128xbf16, #tpu.memory_space<vmem>>) attributes {dimension_semantics = [#tpu.dimension_semantics<parallel>], iteration_bounds = array<i64: 4>, scalar_prefetch = 0 : i64, scratch_operands = 0 : i64, tpu.core_type = #tpu.core_type<tc>, window_params = [{transform_indices = @transform_0, window_bounds = array<i64: 32, 1152>}, {pipeline_mode = #tpu.pipeline_mode<synchronous>, transform_indices = @transform_1, window_bounds = array<i64: 1152, 128>}, {pipeline_mode = #tpu.pipeline_mode<synchronous>, transform_indices = @transform_2, window_bounds = array<i64: 1, 128>}, {transform_indices = @transform_3, window_bounds = array<i64: 1, 1>}, {transform_indices = @transform_4, window_bounds = array<i64: 32, 128>}, {transform_indices = @transform_5, window_bounds = array<i64: 32, 128>}]} {
    %c0 = arith.constant 0 : index
    %c0_0 = arith.constant 0 : index
    %0 = vector.load %arg1[%c0, %c0_0] : memref<32x1152xbf16, #tpu.memory_space<vmem>>, vector<32x1152xbf16>
    %c0_1 = arith.constant 0 : index
    %c0_2 = arith.constant 0 : index
    %1 = vector.load %arg2[%c0_1, %c0_2] : memref<1152x128xbf16, #tpu.memory_space<vmem>>, vector<1152x128xbf16>
    %cst = arith.constant dense<0.000000e+00> : vector<32x128xf32>
    %2 = tpu.matmul %0, %1, %cst {dimension_numbers = #tpu.dot_dimension_numbers<[1], [0], [0], [1], [0, 0, 1, 1], [], []>} : vector<32x1152xbf16>, vector<1152x128xbf16>, vector<32x128xf32> -> vector<32x128xf32>
    %c0_3 = arith.constant 0 : index
    %c0_4 = arith.constant 0 : index
    %3 = vector.load %arg3[%c0_3, %c0_4] : memref<1x128xf32, #tpu.memory_space<vmem>>, vector<1x128xf32>
    %4 = vector.broadcast %3 : vector<1x128xf32> to vector<32x128xf32>
    %5 = arith.addf %2, %4 : vector<32x128xf32>
    %c0_5 = arith.constant 0 : index
    %c0_6 = arith.constant 0 : index
    %6 = memref.load %arg4[%c0_5, %c0_6] : memref<1x1xf32, #tpu.memory_space<smem>>
    %cst_7 = arith.constant 0.000000e+00 : f32
    %7 = vector.broadcast %cst_7 : f32 to vector<32x128xf32>
    %8 = arith.cmpf oge, %5, %7 : vector<32x128xf32>
    %9 = vector.broadcast %6 : f32 to vector<32x128xf32>
    %10 = arith.mulf %9, %5 : vector<32x128xf32>
    %11 = arith.select %8, %5, %10 : vector<32x128xi1>, vector<32x128xf32>
    %c0_8 = arith.constant 0 : index
    %c0_9 = arith.constant 0 : index
    %12 = vector.load %arg5[%c0_8, %c0_9] : memref<32x128xbf16, #tpu.memory_space<vmem>>, vector<32x128xbf16>
    %13 = arith.extf %12 : vector<32x128xbf16> to vector<32x128xf32>
    %14 = arith.addf %11, %13 : vector<32x128xf32>
    %15 = arith.truncf %14 : vector<32x128xf32> to vector<32x128xbf16>
    %c0_10 = arith.constant 0 : index
    %c0_11 = arith.constant 0 : index
    %16 = vector.load %arg6[%c0_10, %c0_11] : memref<32x128xbf16, #tpu.memory_space<vmem>>, vector<32x128xbf16>
    tpu.vector_store %arg6[%c0_10, %c0_11], %15 {strides = array<i32>} : memref<32x128xbf16, #tpu.memory_space<vmem>>, vector<32x128xbf16>,
    return
  }
  func.func @transform_0(%arg0: i32) -> (i32, i32) {
    %c0_i32 = arith.constant 0 : i32
    %c0_i32_0 = arith.constant 0 : i32
    return %arg0, %c0_i32 : i32, i32
  }
  func.func @transform_1(%arg0: i32) -> (i32, i32) {
    %c0_i32 = arith.constant 0 : i32
    %c0_i32_0 = arith.constant 0 : i32
    %c0_i32_1 = arith.constant 0 : i32
    return %c0_i32, %c0_i32_0 : i32, i32
  }
  func.func @transform_2(%arg0: i32) -> (i32, i32) {
    %c0_i32 = arith.constant 0 : i32
    %c0_i32_0 = arith.constant 0 : i32
    %c0_i32_1 = arith.constant 0 : i32
    return %c0_i32, %c0_i32_0 : i32, i32
  }
  func.func @transform_3(%arg0: i32) -> (i32, i32) {
    %c0_i32 = arith.constant 0 : i32
    %c0_i32_0 = arith.constant 0 : i32
    %c0_i32_1 = arith.constant 0 : i32
    return %c0_i32, %c0_i32_0 : i32, i32
  }
  func.func @transform_4(%arg0: i32) -> (i32, i32) {
    %c0_i32 = arith.constant 0 : i32
    %c0_i32_0 = arith.constant 0 : i32
    return %arg0, %c0_i32 : i32, i32
  }
  func.func @transform_5(%arg0: i32) -> (i32, i32) {
    %c0_i32 = arith.constant 0 : i32
    %c0_i32_0 = arith.constant 0 : i32
    return %arg0, %c0_i32 : i32, i32
  }
}

module attributes {stable_mosaic.version = 11 : i64} {
  func.func @_fused_mm_kernel(%arg0: i32, %arg1: memref<32x512xbf16, #tpu.memory_space<vmem>>, %arg2: memref<512x128xbf16, #tpu.memory_space<vmem>>, %arg3: memref<1x128xf32, #tpu.memory_space<vmem>>, %arg4: memref<1x1xf32, #tpu.memory_space<smem>>, %arg5: memref<32x128xbf16, #tpu.memory_space<vmem>>) attributes {dimension_semantics = [#tpu.dimension_semantics<parallel>], iteration_bounds = array<i64: 4>, scalar_prefetch = 0 : i64, scratch_operands = 0 : i64, tpu.core_type = #tpu.core_type<tc>, window_params = [{transform_indices = @transform_0, window_bounds = array<i64: 32, 512>}, {pipeline_mode = #tpu.pipeline_mode<synchronous>, transform_indices = @transform_1, window_bounds = array<i64: 512, 128>}, {pipeline_mode = #tpu.pipeline_mode<synchronous>, transform_indices = @transform_2, window_bounds = array<i64: 1, 128>}, {transform_indices = @transform_3, window_bounds = array<i64: 1, 1>}, {transform_indices = @transform_4, window_bounds = array<i64: 32, 128>}]} {
    %c0 = arith.constant 0 : index
    %c0_0 = arith.constant 0 : index
    %0 = vector.load %arg1[%c0, %c0_0] : memref<32x512xbf16, #tpu.memory_space<vmem>>, vector<32x512xbf16>
    %c0_1 = arith.constant 0 : index
    %c0_2 = arith.constant 0 : index
    %1 = vector.load %arg2[%c0_1, %c0_2] : memref<512x128xbf16, #tpu.memory_space<vmem>>, vector<512x128xbf16>
    %cst = arith.constant dense<0.000000e+00> : vector<32x128xf32>
    %2 = tpu.matmul %0, %1, %cst {dimension_numbers = #tpu.dot_dimension_numbers<[1], [0], [0], [1], [0, 0, 1, 1], [], []>} : vector<32x512xbf16>, vector<512x128xbf16>, vector<32x128xf32> -> vector<32x128xf32>
    %c0_3 = arith.constant 0 : index
    %c0_4 = arith.constant 0 : index
    %3 = vector.load %arg3[%c0_3, %c0_4] : memref<1x128xf32, #tpu.memory_space<vmem>>, vector<1x128xf32>
    %4 = vector.broadcast %3 : vector<1x128xf32> to vector<32x128xf32>
    %5 = arith.addf %2, %4 : vector<32x128xf32>
    %c0_5 = arith.constant 0 : index
    %c0_6 = arith.constant 0 : index
    %6 = memref.load %arg4[%c0_5, %c0_6] : memref<1x1xf32, #tpu.memory_space<smem>>
    %cst_7 = arith.constant 0.000000e+00 : f32
    %7 = vector.broadcast %cst_7 : f32 to vector<32x128xf32>
    %8 = arith.cmpf oge, %5, %7 : vector<32x128xf32>
    %9 = vector.broadcast %6 : f32 to vector<32x128xf32>
    %10 = arith.mulf %9, %5 : vector<32x128xf32>
    %11 = arith.select %8, %5, %10 : vector<32x128xi1>, vector<32x128xf32>
    %12 = arith.truncf %11 : vector<32x128xf32> to vector<32x128xbf16>
    %c0_8 = arith.constant 0 : index
    %c0_9 = arith.constant 0 : index
    %13 = vector.load %arg5[%c0_8, %c0_9] : memref<32x128xbf16, #tpu.memory_space<vmem>>, vector<32x128xbf16>
    tpu.vector_store %arg5[%c0_8, %c0_9], %12 {strides = array<i32>} : memref<32x128xbf16, #tpu.memory_space<vmem>>, vector<32x128xbf16>,
    return
  }
  func.func @transform_0(%arg0: i32) -> (i32, i32) {
    %c0_i32 = arith.constant 0 : i32
    %c0_i32_0 = arith.constant 0 : i32
    return %arg0, %c0_i32 : i32, i32
  }
  func.func @transform_1(%arg0: i32) -> (i32, i32) {
    %c0_i32 = arith.constant 0 : i32
    %c0_i32_0 = arith.constant 0 : i32
    %c0_i32_1 = arith.constant 0 : i32
    return %c0_i32, %c0_i32_0 : i32, i32
  }
  func.func @transform_2(%arg0: i32) -> (i32, i32) {
    %c0_i32 = arith.constant 0 : i32
    %c0_i32_0 = arith.constant 0 : i32
    %c0_i32_1 = arith.constant 0 : i32
    return %c0_i32, %c0_i32_0 : i32, i32
  }
  func.func @transform_3(%arg0: i32) -> (i32, i32) {
    %c0_i32 = arith.constant 0 : i32
    %c0_i32_0 = arith.constant 0 : i32
    %c0_i32_1 = arith.constant 0 : i32
    return %c0_i32, %c0_i32_0 : i32, i32
  }
  func.func @transform_4(%arg0: i32) -> (i32, i32) {
    %c0_i32 = arith.constant 0 : i32
    %c0_i32_0 = arith.constant 0 : i32
    return %arg0, %c0_i32 : i32, i32
  }
}

module attributes {stable_mosaic.version = 11 : i64} {
  func.func @_fused_mm_kernel(%arg0: i32, %arg1: memref<32x1152xbf16, #tpu.memory_space<vmem>>, %arg2: memref<1152x128xbf16, #tpu.memory_space<vmem>>, %arg3: memref<1x128xf32, #tpu.memory_space<vmem>>, %arg4: memref<1x1xf32, #tpu.memory_space<smem>>, %arg5: memref<32x128xbf16, #tpu.memory_space<vmem>>, %arg6: memref<32x128xbf16, #tpu.memory_space<vmem>>) attributes {dimension_semantics = [#tpu.dimension_semantics<parallel>], iteration_bounds = array<i64: 4>, scalar_prefetch = 0 : i64, scratch_operands = 0 : i64, tpu.core_type = #tpu.core_type<tc>, window_params = [{transform_indices = @transform_0, window_bounds = array<i64: 32, 1152>}, {pipeline_mode = #tpu.pipeline_mode<synchronous>, transform_indices = @transform_1, window_bounds = array<i64: 1152, 128>}, {pipeline_mode = #tpu.pipeline_mode<synchronous>, transform_indices = @transform_2, window_bounds = array<i64: 1, 128>}, {transform_indices = @transform_3, window_bounds = array<i64: 1, 1>}, {transform_indices = @transform_4, window_bounds = array<i64: 32, 128>}, {transform_indices = @transform_5, window_bounds = array<i64: 32, 128>}]} {
    %c0 = arith.constant 0 : index
    %c0_0 = arith.constant 0 : index
    %0 = vector.load %arg1[%c0, %c0_0] : memref<32x1152xbf16, #tpu.memory_space<vmem>>, vector<32x1152xbf16>
    %c0_1 = arith.constant 0 : index
    %c0_2 = arith.constant 0 : index
    %1 = vector.load %arg2[%c0_1, %c0_2] : memref<1152x128xbf16, #tpu.memory_space<vmem>>, vector<1152x128xbf16>
    %cst = arith.constant dense<0.000000e+00> : vector<32x128xf32>
    %2 = tpu.matmul %0, %1, %cst {dimension_numbers = #tpu.dot_dimension_numbers<[1], [0], [0], [1], [0, 0, 1, 1], [], []>} : vector<32x1152xbf16>, vector<1152x128xbf16>, vector<32x128xf32> -> vector<32x128xf32>
    %c0_3 = arith.constant 0 : index
    %c0_4 = arith.constant 0 : index
    %3 = vector.load %arg3[%c0_3, %c0_4] : memref<1x128xf32, #tpu.memory_space<vmem>>, vector<1x128xf32>
    %4 = vector.broadcast %3 : vector<1x128xf32> to vector<32x128xf32>
    %5 = arith.addf %2, %4 : vector<32x128xf32>
    %c0_5 = arith.constant 0 : index
    %c0_6 = arith.constant 0 : index
    %6 = memref.load %arg4[%c0_5, %c0_6] : memref<1x1xf32, #tpu.memory_space<smem>>
    %cst_7 = arith.constant 0.000000e+00 : f32
    %7 = vector.broadcast %cst_7 : f32 to vector<32x128xf32>
    %8 = arith.cmpf oge, %5, %7 : vector<32x128xf32>
    %9 = vector.broadcast %6 : f32 to vector<32x128xf32>
    %10 = arith.mulf %9, %5 : vector<32x128xf32>
    %11 = arith.select %8, %5, %10 : vector<32x128xi1>, vector<32x128xf32>
    %c0_8 = arith.constant 0 : index
    %c0_9 = arith.constant 0 : index
    %12 = vector.load %arg5[%c0_8, %c0_9] : memref<32x128xbf16, #tpu.memory_space<vmem>>, vector<32x128xbf16>
    %13 = arith.extf %12 : vector<32x128xbf16> to vector<32x128xf32>
    %14 = arith.subf %11, %13 : vector<32x128xf32>
    %15 = arith.truncf %14 : vector<32x128xf32> to vector<32x128xbf16>
    %c0_10 = arith.constant 0 : index
    %c0_11 = arith.constant 0 : index
    %16 = vector.load %arg6[%c0_10, %c0_11] : memref<32x128xbf16, #tpu.memory_space<vmem>>, vector<32x128xbf16>
    tpu.vector_store %arg6[%c0_10, %c0_11], %15 {strides = array<i32>} : memref<32x128xbf16, #tpu.memory_space<vmem>>, vector<32x128xbf16>,
    return
  }
  func.func @transform_0(%arg0: i32) -> (i32, i32) {
    %c0_i32 = arith.constant 0 : i32
    %c0_i32_0 = arith.constant 0 : i32
    return %arg0, %c0_i32 : i32, i32
  }
  func.func @transform_1(%arg0: i32) -> (i32, i32) {
    %c0_i32 = arith.constant 0 : i32
    %c0_i32_0 = arith.constant 0 : i32
    %c0_i32_1 = arith.constant 0 : i32
    return %c0_i32, %c0_i32_0 : i32, i32
  }
  func.func @transform_2(%arg0: i32) -> (i32, i32) {
    %c0_i32 = arith.constant 0 : i32
    %c0_i32_0 = arith.constant 0 : i32
    %c0_i32_1 = arith.constant 0 : i32
    return %c0_i32, %c0_i32_0 : i32, i32
  }
  func.func @transform_3(%arg0: i32) -> (i32, i32) {
    %c0_i32 = arith.constant 0 : i32
    %c0_i32_0 = arith.constant 0 : i32
    %c0_i32_1 = arith.constant 0 : i32
    return %c0_i32, %c0_i32_0 : i32, i32
  }
  func.func @transform_4(%arg0: i32) -> (i32, i32) {
    %c0_i32 = arith.constant 0 : i32
    %c0_i32_0 = arith.constant 0 : i32
    return %arg0, %c0_i32 : i32, i32
  }
  func.func @transform_5(%arg0: i32) -> (i32, i32) {
    %c0_i32 = arith.constant 0 : i32
    %c0_i32_0 = arith.constant 0 : i32
    return %arg0, %c0_i32 : i32, i32
  }
}

module attributes {stable_mosaic.version = 11 : i64} {
  func.func @_fused_mm_kernel(%arg0: i32, %arg1: memref<32x512xbf16, #tpu.memory_space<vmem>>, %arg2: memref<512x128xbf16, #tpu.memory_space<vmem>>, %arg3: memref<1x128xf32, #tpu.memory_space<vmem>>, %arg4: memref<1x1xf32, #tpu.memory_space<smem>>, %arg5: memref<32x128xbf16, #tpu.memory_space<vmem>>, %arg6: memref<32x128xbf16, #tpu.memory_space<vmem>>) attributes {dimension_semantics = [#tpu.dimension_semantics<parallel>], iteration_bounds = array<i64: 4>, scalar_prefetch = 0 : i64, scratch_operands = 0 : i64, tpu.core_type = #tpu.core_type<tc>, window_params = [{transform_indices = @transform_0, window_bounds = array<i64: 32, 512>}, {pipeline_mode = #tpu.pipeline_mode<synchronous>, transform_indices = @transform_1, window_bounds = array<i64: 512, 128>}, {pipeline_mode = #tpu.pipeline_mode<synchronous>, transform_indices = @transform_2, window_bounds = array<i64: 1, 128>}, {transform_indices = @transform_3, window_bounds = array<i64: 1, 1>}, {transform_indices = @transform_4, window_bounds = array<i64: 32, 128>}, {transform_indices = @transform_5, window_bounds = array<i64: 32, 128>}]} {
    %c0 = arith.constant 0 : index
    %c0_0 = arith.constant 0 : index
    %0 = vector.load %arg1[%c0, %c0_0] : memref<32x512xbf16, #tpu.memory_space<vmem>>, vector<32x512xbf16>
    %c0_1 = arith.constant 0 : index
    %c0_2 = arith.constant 0 : index
    %1 = vector.load %arg2[%c0_1, %c0_2] : memref<512x128xbf16, #tpu.memory_space<vmem>>, vector<512x128xbf16>
    %cst = arith.constant dense<0.000000e+00> : vector<32x128xf32>
    %2 = tpu.matmul %0, %1, %cst {dimension_numbers = #tpu.dot_dimension_numbers<[1], [0], [0], [1], [0, 0, 1, 1], [], []>} : vector<32x512xbf16>, vector<512x128xbf16>, vector<32x128xf32> -> vector<32x128xf32>
    %c0_3 = arith.constant 0 : index
    %c0_4 = arith.constant 0 : index
    %3 = vector.load %arg3[%c0_3, %c0_4] : memref<1x128xf32, #tpu.memory_space<vmem>>, vector<1x128xf32>
    %4 = vector.broadcast %3 : vector<1x128xf32> to vector<32x128xf32>
    %5 = arith.addf %2, %4 : vector<32x128xf32>
    %c0_5 = arith.constant 0 : index
    %c0_6 = arith.constant 0 : index
    %6 = memref.load %arg4[%c0_5, %c0_6] : memref<1x1xf32, #tpu.memory_space<smem>>
    %cst_7 = arith.constant 0.000000e+00 : f32
    %7 = vector.broadcast %cst_7 : f32 to vector<32x128xf32>
    %8 = arith.cmpf oge, %5, %7 : vector<32x128xf32>
    %9 = vector.broadcast %6 : f32 to vector<32x128xf32>
    %10 = arith.mulf %9, %5 : vector<32x128xf32>
    %11 = arith.select %8, %5, %10 : vector<32x128xi1>, vector<32x128xf32>
    %c0_8 = arith.constant 0 : index
    %c0_9 = arith.constant 0 : index
    %12 = vector.load %arg5[%c0_8, %c0_9] : memref<32x128xbf16, #tpu.memory_space<vmem>>, vector<32x128xbf16>
    %13 = arith.extf %12 : vector<32x128xbf16> to vector<32x128xf32>
    %14 = arith.addf %11, %13 : vector<32x128xf32>
    %15 = arith.truncf %14 : vector<32x128xf32> to vector<32x128xbf16>
    %c0_10 = arith.constant 0 : index
    %c0_11 = arith.constant 0 : index
    %16 = vector.load %arg6[%c0_10, %c0_11] : memref<32x128xbf16, #tpu.memory_space<vmem>>, vector<32x128xbf16>
    tpu.vector_store %arg6[%c0_10, %c0_11], %15 {strides = array<i32>} : memref<32x128xbf16, #tpu.memory_space<vmem>>, vector<32x128xbf16>,
    return
  }
  func.func @transform_0(%arg0: i32) -> (i32, i32) {
    %c0_i32 = arith.constant 0 : i32
    %c0_i32_0 = arith.constant 0 : i32
    return %arg0, %c0_i32 : i32, i32
  }
  func.func @transform_1(%arg0: i32) -> (i32, i32) {
    %c0_i32 = arith.constant 0 : i32
    %c0_i32_0 = arith.constant 0 : i32
    %c0_i32_1 = arith.constant 0 : i32
    return %c0_i32, %c0_i32_0 : i32, i32
  }
  func.func @transform_2(%arg0: i32) -> (i32, i32) {
    %c0_i32 = arith.constant 0 : i32
    %c0_i32_0 = arith.constant 0 : i32
    %c0_i32_1 = arith.constant 0 : i32
    return %c0_i32, %c0_i32_0 : i32, i32
  }
  func.func @transform_3(%arg0: i32) -> (i32, i32) {
    %c0_i32 = arith.constant 0 : i32
    %c0_i32_0 = arith.constant 0 : i32
    %c0_i32_1 = arith.constant 0 : i32
    return %c0_i32, %c0_i32_0 : i32, i32
  }
  func.func @transform_4(%arg0: i32) -> (i32, i32) {
    %c0_i32 = arith.constant 0 : i32
    %c0_i32_0 = arith.constant 0 : i32
    return %arg0, %c0_i32 : i32, i32
  }
  func.func @transform_5(%arg0: i32) -> (i32, i32) {
    %c0_i32 = arith.constant 0 : i32
    %c0_i32_0 = arith.constant 0 : i32
    return %arg0, %c0_i32 : i32, i32
  }
}

module attributes {stable_mosaic.version = 11 : i64} {
  func.func @_fused_mm_kernel(%arg0: i32, %arg1: memref<512x8xbf16, #tpu.memory_space<vmem>>, %arg2: memref<512x8xbf16, #tpu.memory_space<vmem>>, %arg3: memref<512x8xbf16, #tpu.memory_space<vmem>>, %arg4: memref<8x128xbf16, #tpu.memory_space<vmem>>, %arg5: memref<8x128xbf16, #tpu.memory_space<vmem>>, %arg6: memref<8x128xbf16, #tpu.memory_space<vmem>>, %arg7: memref<1x128xf32, #tpu.memory_space<vmem>>, %arg8: memref<1x1xf32, #tpu.memory_space<smem>>, %arg9: memref<512x128xf32, #tpu.memory_space<vmem>>) attributes {dimension_semantics = [#tpu.dimension_semantics<parallel>], iteration_bounds = array<i64: 4>, scalar_prefetch = 0 : i64, scratch_operands = 0 : i64, tpu.core_type = #tpu.core_type<tc>, window_params = [{transform_indices = @transform_0, window_bounds = array<i64: 512, 8>}, {transform_indices = @transform_1, window_bounds = array<i64: 512, 8>}, {transform_indices = @transform_2, window_bounds = array<i64: 512, 8>}, {pipeline_mode = #tpu.pipeline_mode<synchronous>, transform_indices = @transform_3, window_bounds = array<i64: 8, 128>}, {pipeline_mode = #tpu.pipeline_mode<synchronous>, transform_indices = @transform_4, window_bounds = array<i64: 8, 128>}, {pipeline_mode = #tpu.pipeline_mode<synchronous>, transform_indices = @transform_5, window_bounds = array<i64: 8, 128>}, {pipeline_mode = #tpu.pipeline_mode<synchronous>, transform_indices = @transform_6, window_bounds = array<i64: 1, 128>}, {transform_indices = @transform_7, window_bounds = array<i64: 1, 1>}, {transform_indices = @transform_8, window_bounds = array<i64: 512, 128>}]} {
    %c0 = arith.constant 0 : index
    %c0_0 = arith.constant 0 : index
    %0 = vector.load %arg1[%c0, %c0_0] : memref<512x8xbf16, #tpu.memory_space<vmem>>, vector<512x8xbf16>
    %c0_1 = arith.constant 0 : index
    %c0_2 = arith.constant 0 : index
    %1 = vector.load %arg4[%c0_1, %c0_2] : memref<8x128xbf16, #tpu.memory_space<vmem>>, vector<8x128xbf16>
    %cst = arith.constant dense<0.000000e+00> : vector<512x128xf32>
    %2 = tpu.matmul %0, %1, %cst {dimension_numbers = #tpu.dot_dimension_numbers<[1], [0], [0], [1], [0, 0, 1, 1], [], []>} : vector<512x8xbf16>, vector<8x128xbf16>, vector<512x128xf32> -> vector<512x128xf32>
    %c0_3 = arith.constant 0 : index
    %c0_4 = arith.constant 0 : index
    %3 = vector.load %arg2[%c0_3, %c0_4] : memref<512x8xbf16, #tpu.memory_space<vmem>>, vector<512x8xbf16>
    %c0_5 = arith.constant 0 : index
    %c0_6 = arith.constant 0 : index
    %4 = vector.load %arg5[%c0_5, %c0_6] : memref<8x128xbf16, #tpu.memory_space<vmem>>, vector<8x128xbf16>
    %cst_7 = arith.constant dense<0.000000e+00> : vector<512x128xf32>
    %5 = tpu.matmul %3, %4, %cst_7 {dimension_numbers = #tpu.dot_dimension_numbers<[1], [0], [0], [1], [0, 0, 1, 1], [], []>} : vector<512x8xbf16>, vector<8x128xbf16>, vector<512x128xf32> -> vector<512x128xf32>
    %6 = arith.addf %2, %5 : vector<512x128xf32>
    %c0_8 = arith.constant 0 : index
    %c0_9 = arith.constant 0 : index
    %7 = vector.load %arg3[%c0_8, %c0_9] : memref<512x8xbf16, #tpu.memory_space<vmem>>, vector<512x8xbf16>
    %c0_10 = arith.constant 0 : index
    %c0_11 = arith.constant 0 : index
    %8 = vector.load %arg6[%c0_10, %c0_11] : memref<8x128xbf16, #tpu.memory_space<vmem>>, vector<8x128xbf16>
    %cst_12 = arith.constant dense<0.000000e+00> : vector<512x128xf32>
    %9 = tpu.matmul %7, %8, %cst_12 {dimension_numbers = #tpu.dot_dimension_numbers<[1], [0], [0], [1], [0, 0, 1, 1], [], []>} : vector<512x8xbf16>, vector<8x128xbf16>, vector<512x128xf32> -> vector<512x128xf32>
    %10 = arith.addf %6, %9 : vector<512x128xf32>
    %c0_13 = arith.constant 0 : index
    %c0_14 = arith.constant 0 : index
    %11 = vector.load %arg7[%c0_13, %c0_14] : memref<1x128xf32, #tpu.memory_space<vmem>>, vector<1x128xf32>
    %12 = vector.broadcast %11 : vector<1x128xf32> to vector<512x128xf32>
    %13 = arith.addf %10, %12 : vector<512x128xf32>
    %c0_15 = arith.constant 0 : index
    %c0_16 = arith.constant 0 : index
    %14 = vector.load %arg9[%c0_15, %c0_16] : memref<512x128xf32, #tpu.memory_space<vmem>>, vector<512x128xf32>
    tpu.vector_store %arg9[%c0_15, %c0_16], %13 {strides = array<i32>} : memref<512x128xf32, #tpu.memory_space<vmem>>, vector<512x128xf32>,
    return
  }
  func.func @transform_0(%arg0: i32) -> (i32, i32) {
    %c0_i32 = arith.constant 0 : i32
    %c0_i32_0 = arith.constant 0 : i32
    return %arg0, %c0_i32 : i32, i32
  }
  func.func @transform_1(%arg0: i32) -> (i32, i32) {
    %c0_i32 = arith.constant 0 : i32
    %c0_i32_0 = arith.constant 0 : i32
    return %arg0, %c0_i32 : i32, i32
  }
  func.func @transform_2(%arg0: i32) -> (i32, i32) {
    %c0_i32 = arith.constant 0 : i32
    %c0_i32_0 = arith.constant 0 : i32
    return %arg0, %c0_i32 : i32, i32
  }
  func.func @transform_3(%arg0: i32) -> (i32, i32) {
    %c0_i32 = arith.constant 0 : i32
    %c0_i32_0 = arith.constant 0 : i32
    %c0_i32_1 = arith.constant 0 : i32
    return %c0_i32, %c0_i32_0 : i32, i32
  }
  func.func @transform_4(%arg0: i32) -> (i32, i32) {
    %c0_i32 = arith.constant 0 : i32
    %c0_i32_0 = arith.constant 0 : i32
    %c0_i32_1 = arith.constant 0 : i32
    return %c0_i32, %c0_i32_0 : i32, i32
  }
  func.func @transform_5(%arg0: i32) -> (i32, i32) {
    %c0_i32 = arith.constant 0 : i32
    %c0_i32_0 = arith.constant 0 : i32
    %c0_i32_1 = arith.constant 0 : i32
    return %c0_i32, %c0_i32_0 : i32, i32
  }
  func.func @transform_6(%arg0: i32) -> (i32, i32) {
    %c0_i32 = arith.constant 0 : i32
    %c0_i32_0 = arith.constant 0 : i32
    %c0_i32_1 = arith.constant 0 : i32
    return %c0_i32, %c0_i32_0 : i32, i32
  }
  func.func @transform_7(%arg0: i32) -> (i32, i32) {
    %c0_i32 = arith.constant 0 : i32
    %c0_i32_0 = arith.constant 0 : i32
    %c0_i32_1 = arith.constant 0 : i32
    return %c0_i32, %c0_i32_0 : i32, i32
  }
  func.func @transform_8(%arg0: i32) -> (i32, i32) {
    %c0_i32 = arith.constant 0 : i32
    %c0_i32_0 = arith.constant 0 : i32
    return %arg0, %c0_i32 : i32, i32
  }
}

</mosaic_0001>

<llo_original>
// kernel: sisr_block.17
$region0: #{sisr_block.17}
  #allocation0 [shape = 'u32[]', space=smem, size = 0x4, offset = 0x4, fixed_abs, tag = 'smem constant byte address 0x4 - core index']
  #allocation1 [shape = 'u32[72,128]{1,0:T(1,128)}', space=vmem, size = 0x9000, scoped, tag = 'internal scratch']
  #allocation2 [shape = 'f32[1,1]{1,0:T(1,128)S(6)}', space=smem, size = 0x200, scoped, tag = 'scoped memory for sisr_block.17']
  %s0 = inlined_call_operand.vmem [shape: bf16[128,4], index: 0, kind: input, shape index: {}]
  %s1 = inlined_call_operand.vmem [shape: bf16[4,128], index: 1, kind: input, shape index: {}]
  %s2 = inlined_call_operand.vmem [shape: f32[1,128], index: 2, kind: input, shape index: {}]
  %s3 = inlined_call_operand.<no memory space> [shape: f32[1,1], index: 3, kind: input, shape index: {}]
  %s4 = inlined_call_operand.vmem [shape: bf16[128,128], index: 4, kind: output, shape index: {}]
  %s5 = sld [smem:[#allocation0]]
  $region49: #{sisr_block.17} parent=0
    _
  %s7 = ssub.s32 1, %s5
  %s8 = scalar_select 0, %s7, %s5
  %9 = sst [smem:[#allocation2]] %s3
  loop: start=0, step=1, limit=6
  $region2: #{sisr_block.17} parent=0 // loop_pre_header
    _
  $region3: #{sisr_block.17} parent=0 // loop_header
    %s11 = sphi 0, %s15
    %p12 = scmp.ge.s32.totalorder %s11, 6
    %s21 = sphi 0, %s23
    %s24 = sphi 0, %s21
    %s25 = sphi 0, %s24
    %s41 = sphi 0, %s25
    %s45 = sphi 0, %s45
    %s47 = sphi 0, %s45
    %s48 = sphi 0, %s47
    %s62 = sphi 0, %s48
    %s66 = sphi 0, %s66
    %s68 = sphi 0, %s66
    %s69 = sphi 0, %s68
    %s83 = sphi 0, %s69
    %s87 = sphi 0, %s87
    %s89 = sphi 0, %s87
    %s90 = sphi 0, %s89
    %s104 = sphi 0, %s90
    %s110 = sphi 0, %s112
    %s113 = sphi 0, %s110
    %s114 = sphi 0, %s113
    %s130 = sphi 0, %s114
  $region4: #{sisr_block.17} parent=0 // loop_header_branch
    %14 = sbr.rel (%p12) target = $region8
  $region5: #{sisr_block.17} parent=0 // loop_body
    %s16 = ssub.s32 %s11, 1
    %s17 = ssub.s32 %s11, 2
    %s18 = sadd.s32 %s11, 1
    %s19 = ssub.s32 %s11, %s18
    %p20 = scmp.eq.s32.totalorder %s19, 0
    %s22 = sadd.s32 %s21, 1
    %s23 = scalar_select %p20, %s21, %s22
    %p26 = pneg %p20
    %p27 = scmp.eq.s32.totalorder %s11, 3
    %p28 = por %p26, %p27
    %p29 = scmp.ne.s32.totalorder %s21, %s24
    %p30 = scmp.eq.s32.totalorder %s11, 0
    %p31 = por %p29, %p30
    %p32 = scmp.ne.s32.totalorder %s21, %s24
    %p33 = scmp.eq.s32.totalorder %s16, 3
    %p34 = por %p32, %p33
    %p35 = scmp.ne.s32.totalorder %s24, %s25
    %p36 = scmp.eq.s32.totalorder %s16, 0
    %p37 = por %p35, %p36
    %p38 = scmp.ne.s32.totalorder %s24, %s25
    %p39 = scmp.eq.s32.totalorder %s17, 3
    %p40 = por %p38, %p39
    %p42 = scmp.ne.s32.totalorder %s25, %s41
    %p43 = scmp.eq.s32.totalorder %s17, 0
    %p44 = por %p42, %p43
    %s46 = sadd.s32 %s45, 1
    %p49 = scmp.eq.s32.totalorder %s11, 3
    %p50 = scmp.ne.s32.totalorder %s45, %s47
    %p51 = scmp.eq.s32.totalorder %s11, 0
    %p52 = por %p50, %p51
    %p53 = scmp.ne.s32.totalorder %s45, %s47
    %p54 = scmp.eq.s32.totalorder %s16, 3
    %p55 = por %p53, %p54
    %p56 = scmp.ne.s32.totalorder %s47, %s48
    %p57 = scmp.eq.s32.totalorder %s16, 0
    %p58 = por %p56, %p57
    %p59 = scmp.ne.s32.totalorder %s47, %s48
    %p60 = scmp.eq.s32.totalorder %s17, 3
    %p61 = por %p59, %p60
    %p63 = scmp.ne.s32.totalorder %s48, %s62
    %p64 = scmp.eq.s32.totalorder %s17, 0
    %p65 = por %p63, %p64
    %s67 = sadd.s32 %s66, 1
    %p70 = scmp.eq.s32.totalorder %s11, 3
    %p71 = scmp.ne.s32.totalorder %s66, %s68
    %p72 = scmp.eq.s32.totalorder %s11, 0
    %p73 = por %p71, %p72
    %p74 = scmp.ne.s32.totalorder %s66, %s68
    %p75 = scmp.eq.s32.totalorder %s16, 3
    %p76 = por %p74, %p75
    %p77 = scmp.ne.s32.totalorder %s68, %s69
    %p78 = scmp.eq.s32.totalorder %s16, 0
    %p79 = por %p77, %p78
    %p80 = scmp.ne.s32.totalorder %s68, %s69
    %p81 = scmp.eq.s32.totalorder %s17, 3
    %p82 = por %p80, %p81
    %p84 = scmp.ne.s32.totalorder %s69, %s83
    %p85 = scmp.eq.s32.totalorder %s17, 0
    %p86 = por %p84, %p85
    %s88 = sadd.s32 %s87, 1
    %p91 = scmp.eq.s32.totalorder %s11, 3
    %p92 = scmp.ne.s32.totalorder %s87, %s89
    %p93 = scmp.eq.s32.totalorder %s11, 0
    %p94 = por %p92, %p93
    %p95 = scmp.ne.s32.totalorder %s87, %s89
    %p96 = scmp.eq.s32.totalorder %s16, 3
    %p97 = por %p95, %p96
    %p98 = scmp.ne.s32.totalorder %s89, %s90
    %p99 = scmp.eq.s32.totalorder %s16, 0
    %p100 = por %p98, %p99
    %p101 = scmp.ne.s32.totalorder %s89, %s90
    %p102 = scmp.eq.s32.totalorder %s17, 3
    %p103 = por %p101, %p102
    %p105 = scmp.ne.s32.totalorder %s90, %s104
    %p106 = scmp.eq.s32.totalorder %s17, 0
    %p107 = por %p105, %p106
    %s108 = ssub.s32 %s11, %s18
    %p109 = scmp.eq.s32.totalorder %s108, 0
    %s111 = sadd.s32 %s110, 1
    %s112 = scalar_select %p109, %s110, %s111
    %p115 = pneg %p109
    %p116 = scmp.eq.s32.totalorder %s11, 3
    %p117 = por %p115, %p116
    %p118 = scmp.ne.s32.totalorder %s110, %s113
    %p119 = scmp.eq.s32.totalorder %s11, 0
    %p120 = por %p118, %p119
    %p121 = scmp.ne.s32.totalorder %s110, %s113
    %p122 = scmp.eq.s32.totalorder %s16, 3
    %p123 = por %p121, %p122
    %p124 = scmp.ne.s32.totalorder %s113, %s114
    %p125 = scmp.eq.s32.totalorder %s16, 0
    %p126 = por %p124, %p125
    %p127 = scmp.ne.s32.totalorder %s113, %s114
    %p128 = scmp.eq.s32.totalorder %s17, 3
    %p129 = por %p127, %p128
    %p131 = scmp.ne.s32.totalorder %s114, %s130
    %p132 = scmp.eq.s32.totalorder %s17, 0
    %p133 = por %p131, %p132
    %p134 = scmp.le.s32.totalorder 1, %s11
    %p135 = scmp.lt.s32.totalorder %s11, 5
    %p136 = pnand %p134, %p135
    %p137 = pneg %p136
    // Predicated region
    $region9: #{sisr_block.17} parent=5 // pred_check
      _
    $region10: #{sisr_block.17} parent=5 // pred_check_branch
      %139 = sbr.rel (%p136) target = $region12
    $region11: #{sisr_block.17} parent=5 // pred_region
      %s140 = ssub.s32 %s11, 1
      // Predicated region
      $region13: #{sisr_block.17} parent=11 // pred_check
        %p141 = pneg %p58
      $region14: #{sisr_block.17} parent=11 // pred_check_branch
        %143 = sbr.rel (%p141) target = $region16
      $region15: #{sisr_block.17} parent=11 // pred_region
        _
      $region16: #{sisr_block.17} parent=11 // pred_fallthru
        _
      // Predicated region
      $region17: #{sisr_block.17} parent=11 // pred_check
        %p144 = pneg %p79
      $region18: #{sisr_block.17} parent=11 // pred_check_branch
        %146 = sbr.rel (%p144) target = $region20
      $region19: #{sisr_block.17} parent=11 // pred_region
        _
      $region20: #{sisr_block.17} parent=11 // pred_fallthru
        _
      // Predicated region
      $region21: #{sisr_block.17} parent=11 // pred_check
        %p147 = pneg %p100
      $region22: #{sisr_block.17} parent=11 // pred_check_branch
        %149 = sbr.rel (%p147) target = $region24
      $region23: #{sisr_block.17} parent=11 // pred_region
        _
      $region24: #{sisr_block.17} parent=11 // pred_fallthru
        _
    $region12: #{sisr_block.17} parent=5 // pred_fallthru
      _
    %p150 = scmp.lt.s32.totalorder %s11, 4
    // Predicated region
    $region25: #{sisr_block.17} parent=5 // pred_check
      %p151 = pneg %p150
    $region26: #{sisr_block.17} parent=5 // pred_check_branch
      %153 = sbr.rel (%p151) target = $region28
    $region27: #{sisr_block.17} parent=5 // pred_region
      // Predicated region
      $region29: #{sisr_block.17} parent=27 // pred_check
        %p154 = pneg %p31
      $region30: #{sisr_block.17} parent=27 // pred_check_branch
        %156 = sbr.rel (%p154) target = $region32
      $region31: #{sisr_block.17} parent=27 // pred_region
        %s157 = smul.u32 4, %s11
        %p158 = scmp.lt.s32.totalorder %s157, 15
        %s159 = scalar_select %p158, %s157, 15
        %s160 = smul.addr %s159, 4
        %s161 = scalar_lea.vmem %s0, %s160
        %s162 = smul.u32 4, %s11
      $region32: #{sisr_block.17} parent=27 // pred_fallthru
        _
    $region28: #{sisr_block.17} parent=5 // pred_fallthru
      _
    %p163 = scmp.le.s32.totalorder 1, %s11
    %p164 = scmp.lt.s32.totalorder %s11, 5
    %p165 = pnand %p163, %p164
    %p166 = pneg %p165
    // Predicated region
    $region33: #{sisr_block.17} parent=5 // pred_check
      _
    $region34: #{sisr_block.17} parent=5 // pred_check_branch
      %168 = sbr.rel (%p165) target = $region36
    $region35: #{sisr_block.17} parent=5 // pred_region
      %s169 = ssub.s32 %s11, 1
      %s170 = smul.u32 4, %s16
      %p171 = scmp.lt.s32.totalorder %s170, 15
      %s172 = scalar_select %p171, %s170, 15
      %s173 = smul.addr %s172, 4
      %s174 = scalar_lea.vmem %s0, %s173
      %p175 = pneg %p37
      %p176 = pneg %p34
      %p177 = pneg %p58
      %p178 = pneg %p55
      %p179 = pneg %p79
      %p180 = pneg %p76
      %p181 = pneg %p100
      %p182 = pneg %p97
      %p183 = pneg %p126
      %p184 = pneg %p123
      %s185 = smul.u32 4, %s16
      %p186 = scmp.lt.s32.totalorder %s185, 15
      %s187 = scalar_select %p186, %s185, 15
      %s188 = smul.addr %s187, 4
      %s189 = scalar_lea.vmem %s4, %s188
      %s190 = smul.u32 4, %s16
      %p191 = scmp.lt.s32.totalorder %s190, 15
      %s192 = scalar_select %p191, %s190, 15
      %s193 = smul.addr %s192, 4
      %s194 = scalar_lea.vmem %s0, %s193
      %s195 = smul.u32 4, %s16
      %s196 = smul.u32 4, %s16
      %p197 = scmp.lt.s32.totalorder %s196, 15
      %s198 = scalar_select %p197, %s196, 15
      %s199 = smul.addr %s198, 4
      %s200 = scalar_lea.vmem %s4, %s199
      %s201 = smul.u32 4, %s16
      %v203 = vld [vmem:[%s194] sm:$0xf]
      %v204 = vld [vmem:[%s194 + $0x4] sm:$0xf]
      %v205 = vld [vmem:[%s194 + $0x8] sm:$0xf]
      %v206 = vld [vmem:[%s194 + $0xc] sm:$0xf]
      %v207 = vld [vmem:[%s1] sm:$0x3]
      %v208 = vld [vmem:[%s2] sm:$0x1]
      %v210 = vperm.slane %v208, 0
      %v216 = vunpack.c.l.b16 %v203
      %v217 = vunpack.c.l.b16 %v204
      %v218 = vunpack.c.l.b16 %v205
      %v219 = vunpack.c.l.b16 %v206
      %v220 = vpack.c.b16 %v217, %v216
      %v221 = vpack.c.b16 %v219, %v218
      %vm222 = vcmask 31744
      %v224 = vsel %vm222, %v220, 0
      %v227 = vsel %vm222, %v221, 0
      %vm229 = vcmask 1041408
      %v231 = vsel %vm229, %v207, 0
      %233 = vmatpush.bf16.msra.mxu0 0
      %234 = vmatpush.bf16.msra.mxu0 0
      %235 = vmatpush.bf16.msra.mxu0 0
      %236 = vmatpush.bf16.msra.mxu0 0
      %237 = vmatpush.bf16.msra.mxu0 0
      %238 = vmatpush.bf16.msra.mxu0 0
      %239 = vmatpush.bf16.msra.mxu0 0
      %240 = vmatpush.bf16.msra.mxu0 %v231
      %241 = vmatmul.bf16.gmra.mxu0 %v224
      %v242 = vpop.f32.mrf.mxu0
      %v243 = vadd.f32 %v210, %v242
      %v244 = vpop.f32.mrf.mxu0
      %v245 = vadd.f32 %v210, %v244
      %246 = vmatmul.bf16.gmra.mxu0 %v227
      %v247 = vpop.f32.mrf.mxu0
      %v248 = vadd.f32 %v210, %v247
      %v249 = vpop.f32.mrf.mxu0
      %v250 = vadd.f32 %v210, %v249
      %251 = vdwg.mxu0
      %s252 = sld [smem:[#allocation2]]
      %vm253 = vcmp.ge.f32.partialorder %v243, 0.0
      %vm254 = vcmp.ge.f32.partialorder %v245, 0.0
      %vm255 = vcmp.ge.f32.partialorder %v248, 0.0
      %vm256 = vcmp.ge.f32.partialorder %v250, 0.0
      %v257 = vstv %s252
      %v258 = vmul.f32 %v257, %v243
      %v259 = vmul.f32 %v257, %v245
      %v260 = vmul.f32 %v257, %v248
      %v261 = vmul.f32 %v257, %v250
      %v262 = vsel %vm253, %v243, %v258
      %v263 = vsel %vm254, %v245, %v259
      %v264 = vsel %vm255, %v248, %v260
      %v265 = vsel %vm256, %v250, %v261
      %v266 = vpack.c.bf16 %v262, %v262
      %v267 = vpack.c.bf16 %v263, %v263
      %v268 = vpack.c.bf16 %v264, %v264
      %v269 = vpack.c.bf16 %v265, %v265
      %270 = vst [vmem:[%s200] sm:$0xf] %v266
      %271 = vst [vmem:[%s200 + $0x4] sm:$0xf] %v267
      %272 = vst [vmem:[%s200 + $0x8] sm:$0xf] %v268
      %273 = vst [vmem:[%s200 + $0xc] sm:$0xf] %v269
      %s274 = smul.u32 4, %s16
      %p275 = scmp.lt.s32.totalorder %s274, 15
      %s276 = scalar_select %p275, %s274, 15
      %s277 = smul.addr %s276, 4
      %s278 = scalar_lea.vmem %s4, %s277
      // Predicated region
      $region37: #{sisr_block.17} parent=35 // pred_check
        %p279 = pneg %p123
      $region38: #{sisr_block.17} parent=35 // pred_check_branch
        %281 = sbr.rel (%p279) target = $region40
      $region39: #{sisr_block.17} parent=35 // pred_region
        %s282 = smul.u32 4, %s16
      $region40: #{sisr_block.17} parent=35 // pred_fallthru
        _
    $region36: #{sisr_block.17} parent=5 // pred_fallthru
      _
    %p283 = scmp.le.s32.totalorder 2, %s11
    // Predicated region
    $region41: #{sisr_block.17} parent=5 // pred_check
      %p284 = pneg %p283
    $region42: #{sisr_block.17} parent=5 // pred_check_branch
      %286 = sbr.rel (%p284) target = $region44
    $region43: #{sisr_block.17} parent=5 // pred_region
      %s287 = ssub.s32 %s11, 2
      // Predicated region
      $region45: #{sisr_block.17} parent=43 // pred_check
        %p288 = pneg %p129
      $region46: #{sisr_block.17} parent=43 // pred_check_branch
        %290 = sbr.rel (%p288) target = $region48
      $region47: #{sisr_block.17} parent=43 // pred_region
        %s291 = smul.u32 4, %s17
        %p292 = scmp.lt.s32.totalorder %s291, 15
        %s293 = scalar_select %p292, %s291, 15
        %s294 = smul.addr %s293, 4
        %s295 = scalar_lea.vmem %s4, %s294
      $region48: #{sisr_block.17} parent=43 // pred_fallthru
        _
    $region44: #{sisr_block.17} parent=5 // pred_fallthru
      _
  $region6: #{sisr_block.17} parent=0 // loop_footer
    %s15 = sadd.s32 1, %s11
  $region7: #{sisr_block.17} parent=0 // loop_footer_branch
    %10 = sbr.rel target = $region3
  $region8: #{sisr_block.17} parent=0 // loop_exit
    _

// kernel: sisr_block.18
$region0: #{sisr_block.18}
  #allocation0 [shape = 'u32[]', space=smem, size = 0x4, offset = 0x4, fixed_abs, tag = 'smem constant byte address 0x4 - core index']
  #allocation1 [shape = 'u32[72,128]{1,0:T(1,128)}', space=vmem, size = 0x9000, scoped, tag = 'internal scratch']
  #allocation2 [shape = 'f32[1,1]{1,0:T(1,128)S(6)}', space=smem, size = 0x200, scoped, tag = 'scoped memory for sisr_block.18']
  %s0 = inlined_call_operand.vmem [shape: bf16[128,1152], index: 0, kind: input, shape index: {}]
  %s1 = inlined_call_operand.vmem [shape: bf16[1152,128], index: 1, kind: input, shape index: {}]
  %s2 = inlined_call_operand.vmem [shape: f32[1,128], index: 2, kind: input, shape index: {}]
  %s3 = inlined_call_operand.<no memory space> [shape: f32[1,1], index: 3, kind: input, shape index: {}]
  %s4 = inlined_call_operand.vmem [shape: bf16[128,128], index: 4, kind: output, shape index: {}]
  %s5 = sld [smem:[#allocation0]]
  $region49: #{sisr_block.18} parent=0
    _
  %s7 = ssub.s32 1, %s5
  %s8 = scalar_select 0, %s7, %s5
  %9 = sst [smem:[#allocation2]] %s3
  loop: start=0, step=1, limit=6
  $region2: #{sisr_block.18} parent=0 // loop_pre_header
    _
  $region3: #{sisr_block.18} parent=0 // loop_header
    %s11 = sphi 0, %s15
    %p12 = scmp.ge.s32.totalorder %s11, 6
    %s21 = sphi 0, %s23
    %s24 = sphi 0, %s21
    %s25 = sphi 0, %s24
    %s41 = sphi 0, %s25
    %s45 = sphi 0, %s45
    %s47 = sphi 0, %s45
    %s48 = sphi 0, %s47
    %s62 = sphi 0, %s48
    %s66 = sphi 0, %s66
    %s68 = sphi 0, %s66
    %s69 = sphi 0, %s68
    %s83 = sphi 0, %s69
    %s87 = sphi 0, %s87
    %s89 = sphi 0, %s87
    %s90 = sphi 0, %s89
    %s104 = sphi 0, %s90
    %s110 = sphi 0, %s112
    %s113 = sphi 0, %s110
    %s114 = sphi 0, %s113
    %s130 = sphi 0, %s114
  $region4: #{sisr_block.18} parent=0 // loop_header_branch
    %14 = sbr.rel (%p12) target = $region8
  $region5: #{sisr_block.18} parent=0 // loop_body
    %s16 = ssub.s32 %s11, 1
    %s17 = ssub.s32 %s11, 2
    %s18 = sadd.s32 %s11, 1
    %s19 = ssub.s32 %s11, %s18
    %p20 = scmp.eq.s32.totalorder %s19, 0
    %s22 = sadd.s32 %s21, 1
    %s23 = scalar_select %p20, %s21, %s22
    %p26 = pneg %p20
    %p27 = scmp.eq.s32.totalorder %s11, 3
    %p28 = por %p26, %p27
    %p29 = scmp.ne.s32.totalorder %s21, %s24
    %p30 = scmp.eq.s32.totalorder %s11, 0
    %p31 = por %p29, %p30
    %p32 = scmp.ne.s32.totalorder %s21, %s24
    %p33 = scmp.eq.s32.totalorder %s16, 3
    %p34 = por %p32, %p33
    %p35 = scmp.ne.s32.totalorder %s24, %s25
    %p36 = scmp.eq.s32.totalorder %s16, 0
    %p37 = por %p35, %p36
    %p38 = scmp.ne.s32.totalorder %s24, %s25
    %p39 = scmp.eq.s32.totalorder %s17, 3
    %p40 = por %p38, %p39
    %p42 = scmp.ne.s32.totalorder %s25, %s41
    %p43 = scmp.eq.s32.totalorder %s17, 0
    %p44 = por %p42, %p43
    %s46 = sadd.s32 %s45, 1
    %p49 = scmp.eq.s32.totalorder %s11, 3
    %p50 = scmp.ne.s32.totalorder %s45, %s47
    %p51 = scmp.eq.s32.totalorder %s11, 0
    %p52 = por %p50, %p51
    %p53 = scmp.ne.s32.totalorder %s45, %s47
    %p54 = scmp.eq.s32.totalorder %s16, 3
    %p55 = por %p53, %p54
    %p56 = scmp.ne.s32.totalorder %s47, %s48
    %p57 = scmp.eq.s32.totalorder %s16, 0
    %p58 = por %p56, %p57
    %p59 = scmp.ne.s32.totalorder %s47, %s48
    %p60 = scmp.eq.s32.totalorder %s17, 3
    %p61 = por %p59, %p60
    %p63 = scmp.ne.s32.totalorder %s48, %s62
    %p64 = scmp.eq.s32.totalorder %s17, 0
    %p65 = por %p63, %p64
    %s67 = sadd.s32 %s66, 1
    %p70 = scmp.eq.s32.totalorder %s11, 3
    %p71 = scmp.ne.s32.totalorder %s66, %s68
    %p72 = scmp.eq.s32.totalorder %s11, 0
    %p73 = por %p71, %p72
    %p74 = scmp.ne.s32.totalorder %s66, %s68
    %p75 = scmp.eq.s32.totalorder %s16, 3
    %p76 = por %p74, %p75
    %p77 = scmp.ne.s32.totalorder %s68, %s69
    %p78 = scmp.eq.s32.totalorder %s16, 0
    %p79 = por %p77, %p78
    %p80 = scmp.ne.s32.totalorder %s68, %s69
    %p81 = scmp.eq.s32.totalorder %s17, 3
    %p82 = por %p80, %p81
    %p84 = scmp.ne.s32.totalorder %s69, %s83
    %p85 = scmp.eq.s32.totalorder %s17, 0
    %p86 = por %p84, %p85
    %s88 = sadd.s32 %s87, 1
    %p91 = scmp.eq.s32.totalorder %s11, 3
    %p92 = scmp.ne.s32.totalorder %s87, %s89
    %p93 = scmp.eq.s32.totalorder %s11, 0
    %p94 = por %p92, %p93
    %p95 = scmp.ne.s32.totalorder %s87, %s89
    %p96 = scmp.eq.s32.totalorder %s16, 3
    %p97 = por %p95, %p96
    %p98 = scmp.ne.s32.totalorder %s89, %s90
    %p99 = scmp.eq.s32.totalorder %s16, 0
    %p100 = por %p98, %p99
    %p101 = scmp.ne.s32.totalorder %s89, %s90
    %p102 = scmp.eq.s32.totalorder %s17, 3
    %p103 = por %p101, %p102
    %p105 = scmp.ne.s32.totalorder %s90, %s104
    %p106 = scmp.eq.s32.totalorder %s17, 0
    %p107 = por %p105, %p106
    %s108 = ssub.s32 %s11, %s18
    %p109 = scmp.eq.s32.totalorder %s108, 0
    %s111 = sadd.s32 %s110, 1
    %s112 = scalar_select %p109, %s110, %s111
    %p115 = pneg %p109
    %p116 = scmp.eq.s32.totalorder %s11, 3
    %p117 = por %p115, %p116
    %p118 = scmp.ne.s32.totalorder %s110, %s113
    %p119 = scmp.eq.s32.totalorder %s11, 0
    %p120 = por %p118, %p119
    %p121 = scmp.ne.s32.totalorder %s110, %s113
    %p122 = scmp.eq.s32.totalorder %s16, 3
    %p123 = por %p121, %p122
    %p124 = scmp.ne.s32.totalorder %s113, %s114
    %p125 = scmp.eq.s32.totalorder %s16, 0
    %p126 = por %p124, %p125
    %p127 = scmp.ne.s32.totalorder %s113, %s114
    %p128 = scmp.eq.s32.totalorder %s17, 3
    %p129 = por %p127, %p128
    %p131 = scmp.ne.s32.totalorder %s114, %s130
    %p132 = scmp.eq.s32.totalorder %s17, 0
    %p133 = por %p131, %p132
    %p134 = scmp.le.s32.totalorder 1, %s11
    %p135 = scmp.lt.s32.totalorder %s11, 5
    %p136 = pnand %p134, %p135
    %p137 = pneg %p136
    // Predicated region
    $region9: #{sisr_block.18} parent=5 // pred_check
      _
    $region10: #{sisr_block.18} parent=5 // pred_check_branch
      %139 = sbr.rel (%p136) target = $region12
    $region11: #{sisr_block.18} parent=5 // pred_region
      %s140 = ssub.s32 %s11, 1
      // Predicated region
      $region13: #{sisr_block.18} parent=11 // pred_check
        %p141 = pneg %p58
      $region14: #{sisr_block.18} parent=11 // pred_check_branch
        %143 = sbr.rel (%p141) target = $region16
      $region15: #{sisr_block.18} parent=11 // pred_region
        _
      $region16: #{sisr_block.18} parent=11 // pred_fallthru
        _
      // Predicated region
      $region17: #{sisr_block.18} parent=11 // pred_check
        %p144 = pneg %p79
      $region18: #{sisr_block.18} parent=11 // pred_check_branch
        %146 = sbr.rel (%p144) target = $region20
      $region19: #{sisr_block.18} parent=11 // pred_region
        _
      $region20: #{sisr_block.18} parent=11 // pred_fallthru
        _
      // Predicated region
      $region21: #{sisr_block.18} parent=11 // pred_check
        %p147 = pneg %p100
      $region22: #{sisr_block.18} parent=11 // pred_check_branch
        %149 = sbr.rel (%p147) target = $region24
      $region23: #{sisr_block.18} parent=11 // pred_region
        _
      $region24: #{sisr_block.18} parent=11 // pred_fallthru
        _
    $region12: #{sisr_block.18} parent=5 // pred_fallthru
      _
    %p150 = scmp.lt.s32.totalorder %s11, 4
    // Predicated region
    $region25: #{sisr_block.18} parent=5 // pred_check
      %p151 = pneg %p150
    $region26: #{sisr_block.18} parent=5 // pred_check_branch
      %153 = sbr.rel (%p151) target = $region28
    $region27: #{sisr_block.18} parent=5 // pred_region
      // Predicated region
      $region29: #{sisr_block.18} parent=27 // pred_check
        %p154 = pneg %p31
      $region30: #{sisr_block.18} parent=27 // pred_check_branch
        %156 = sbr.rel (%p154) target = $region32
      $region31: #{sisr_block.18} parent=27 // pred_region
        %s157 = smul.u32 4, %s11
        %p158 = scmp.lt.s32.totalorder %s157, 15
        %s159 = scalar_select %p158, %s157, 15
        %s160 = smul.addr %s159, 9
        %s161 = smul.addr %s160, 4
        %s162 = scalar_lea.vmem %s0, %s161
        %s163 = smul.u32 4, %s11
      $region32: #{sisr_block.18} parent=27 // pred_fallthru
        _
    $region28: #{sisr_block.18} parent=5 // pred_fallthru
      _
    %p164 = scmp.le.s32.totalorder 1, %s11
    %p165 = scmp.lt.s32.totalorder %s11, 5
    %p166 = pnand %p164, %p165
    %p167 = pneg %p166
    // Predicated region
    $region33: #{sisr_block.18} parent=5 // pred_check
      _
    $region34: #{sisr_block.18} parent=5 // pred_check_branch
      %169 = sbr.rel (%p166) target = $region36
    $region35: #{sisr_block.18} parent=5 // pred_region
      %s170 = ssub.s32 %s11, 1
      %s171 = smul.u32 4, %s16
      %p172 = scmp.lt.s32.totalorder %s171, 15
      %s173 = scalar_select %p172, %s171, 15
      %s174 = smul.addr %s173, 9
      %s175 = smul.addr %s174, 4
      %s176 = scalar_lea.vmem %s0, %s175
      %p177 = pneg %p37
      %p178 = pneg %p34
      %p179 = pneg %p58
      %p180 = pneg %p55
      %p181 = pneg %p79
      %p182 = pneg %p76
      %p183 = pneg %p100
      %p184 = pneg %p97
      %p185 = pneg %p126
      %p186 = pneg %p123
      %s187 = smul.u32 4, %s16
      %p188 = scmp.lt.s32.totalorder %s187, 15
      %s189 = scalar_select %p188, %s187, 15
      %s190 = smul.addr %s189, 4
      %s191 = scalar_lea.vmem %s4, %s190
      %s192 = smul.u32 4, %s16
      %p193 = scmp.lt.s32.totalorder %s192, 15
      %s194 = scalar_select %p193, %s192, 15
      %s195 = smul.addr %s194, 9
      %s196 = smul.addr %s195, 4
      %s197 = scalar_lea.vmem %s0, %s196
      %s198 = smul.u32 4, %s16
      %s199 = smul.u32 4, %s16
      %p200 = scmp.lt.s32.totalorder %s199, 15
      %s201 = scalar_select %p200, %s199, 15
      %s202 = smul.addr %s201, 4
      %s203 = scalar_lea.vmem %s4, %s202
      %s204 = smul.u32 4, %s16
      %v205 = vld [vmem:[%s197] sm:$0xff]
      %v206 = vld [vmem:[%s197 + $0x8] sm:$0xff]
      %v207 = vld [vmem:[%s197 + $0x10] sm:$0xff]
      %v208 = vld [vmem:[%s197 + $0x18] sm:$0xff]
      %v209 = vld [vmem:[%s197 + $0x20] sm:$0xf]
      %v210 = vld [vmem:[%s197 + $0x24] sm:$0xff]
      %v211 = vld [vmem:[%s197 + $0x2c] sm:$0xff]
      %v212 = vld [vmem:[%s197 + $0x34] sm:$0xff]
      %v213 = vld [vmem:[%s197 + $0x3c] sm:$0xff]
      %v214 = vld [vmem:[%s197 + $0x44] sm:$0xf]
      %v215 = vld [vmem:[%s197 + $0x48] sm:$0xff]
      %v216 = vld [vmem:[%s197 + $0x50] sm:$0xff]
      %v217 = vld [vmem:[%s197 + $0x58] sm:$0xff]
      %v218 = vld [vmem:[%s197 + $0x60] sm:$0xff]
      %v219 = vld [vmem:[%s197 + $0x68] sm:$0xf]
      %v220 = vld [vmem:[%s197 + $0x6c] sm:$0xff]
      %v221 = vld [vmem:[%s197 + $0x74] sm:$0xff]
      %v222 = vld [vmem:[%s197 + $0x7c] sm:$0xff]
      %v223 = vld [vmem:[%s197 + $0x84] sm:$0xff]
      %v224 = vld [vmem:[%s197 + $0x8c] sm:$0xf]
      %v225 = vld [vmem:[%s1] sm:$0xf]
      %v226 = vld [vmem:[%s1 + $0x4] sm:$0xf]
      %v227 = vld [vmem:[%s1 + $0x8] sm:$0xf]
      %v228 = vld [vmem:[%s1 + $0xc] sm:$0xf]
      %v229 = vld [vmem:[%s1 + $0x10] sm:$0xf]
      %v230 = vld [vmem:[%s1 + $0x14] sm:$0xf]
      %v231 = vld [vmem:[%s1 + $0x18] sm:$0xf]
      %v232 = vld [vmem:[%s1 + $0x1c] sm:$0xf]
      %v233 = vld [vmem:[%s1 + $0x20] sm:$0xf]
      %v234 = vld [vmem:[%s1 + $0x24] sm:$0xf]
      %v235 = vld [vmem:[%s1 + $0x28] sm:$0xf]
      %v236 = vld [vmem:[%s1 + $0x2c] sm:$0xf]
      %v237 = vld [vmem:[%s1 + $0x30] sm:$0xf]
      %v238 = vld [vmem:[%s1 + $0x34] sm:$0xf]
      %v239 = vld [vmem:[%s1 + $0x38] sm:$0xf]
      %v240 = vld [vmem:[%s1 + $0x3c] sm:$0xf]
      %v241 = vld [vmem:[%s1 + $0x40] sm:$0xf]
      %v242 = vld [vmem:[%s1 + $0x44] sm:$0xf]
      %v243 = vld [vmem:[%s1 + $0x48] sm:$0xf]
      %v244 = vld [vmem:[%s1 + $0x4c] sm:$0xf]
      %v245 = vld [vmem:[%s1 + $0x50] sm:$0xf]
      %v246 = vld [vmem:[%s1 + $0x54] sm:$0xf]
      %v247 = vld [vmem:[%s1 + $0x58] sm:$0xf]
      %v248 = vld [vmem:[%s1 + $0x5c] sm:$0xf]
      %v249 = vld [vmem:[%s1 + $0x60] sm:$0xf]
      %v250 = vld [vmem:[%s1 + $0x64] sm:$0xf]
      %v251 = vld [vmem:[%s1 + $0x68] sm:$0xf]
      %v252 = vld [vmem:[%s1 + $0x6c] sm:$0xf]
      %v253 = vld [vmem:[%s1 + $0x70] sm:$0xf]
      %v254 = vld [vmem:[%s1 + $0x74] sm:$0xf]
      %v255 = vld [vmem:[%s1 + $0x78] sm:$0xf]
      %v256 = vld [vmem:[%s1 + $0x7c] sm:$0xf]
      %v257 = vld [vmem:[%s1 + $0x80] sm:$0xf]
      %v258 = vld [vmem:[%s1 + $0x84] sm:$0xf]
      %v259 = vld [vmem:[%s1 + $0x88] sm:$0xf]
      %v260 = vld [vmem:[%s1 + $0x8c] sm:$0xf]
      %v261 = vld [vmem:[%s1 + $0x90] sm:$0xf]
      %v262 = vld [vmem:[%s1 + $0x94] sm:$0xf]
      %v263 = vld [vmem:[%s1 + $0x98] sm:$0xf]
      %v264 = vld [vmem:[%s1 + $0x9c] sm:$0xf]
      %v265 = vld [vmem:[%s1 + $0xa0] sm:$0xf]
      %v266 = vld [vmem:[%s1 + $0xa4] sm:$0xf]
      %v267 = vld [vmem:[%s1 + $0xa8] sm:$0xf]
      %v268 = vld [vmem:[%s1 + $0xac] sm:$0xf]
      %v269 = vld [vmem:[%s1 + $0xb0] sm:$0xf]
      %v270 = vld [vmem:[%s1 + $0xb4] sm:$0xf]
      %v271 = vld [vmem:[%s1 + $0xb8] sm:$0xf]
      %v272 = vld [vmem:[%s1 + $0xbc] sm:$0xf]
      %v273 = vld [vmem:[%s1 + $0xc0] sm:$0xf]
      %v274 = vld [vmem:[%s1 + $0xc4] sm:$0xf]
      %v275 = vld [vmem:[%s1 + $0xc8] sm:$0xf]
      %v276 = vld [vmem:[%s1 + $0xcc] sm:$0xf]
      %v277 = vld [vmem:[%s1 + $0xd0] sm:$0xf]
      %v278 = vld [vmem:[%s1 + $0xd4] sm:$0xf]
      %v279 = vld [vmem:[%s1 + $0xd8] sm:$0xf]
      %v280 = vld [vmem:[%s1 + $0xdc] sm:$0xf]
      %v281 = vld [vmem:[%s1 + $0xe0] sm:$0xf]
      %v282 = vld [vmem:[%s1 + $0xe4] sm:$0xf]
      %v283 = vld [vmem:[%s1 + $0xe8] sm:$0xf]
      %v284 = vld [vmem:[%s1 + $0xec] sm:$0xf]
      %v285 = vld [vmem:[%s1 + $0xf0] sm:$0xf]
      %v286 = vld [vmem:[%s1 + $0xf4] sm:$0xf]
      %v287 = vld [vmem:[%s1 + $0xf8] sm:$0xf]
      %v288 = vld [vmem:[%s1 + $0xfc] sm:$0xf]
      %v289 = vld [vmem:[%s1 + $0x100] sm:$0xf]
      %v290 = vld [vmem:[%s1 + $0x104] sm:$0xf]
      %v291 = vld [vmem:[%s1 + $0x108] sm:$0xf]
      %v292 = vld [vmem:[%s1 + $0x10c] sm:$0xf]
      %v293 = vld [vmem:[%s1 + $0x110] sm:$0xf]
      %v294 = vld [vmem:[%s1 + $0x114] sm:$0xf]
      %v295 = vld [vmem:[%s1 + $0x118] sm:$0xf]
      %v296 = vld [vmem:[%s1 + $0x11c] sm:$0xf]
      %v297 = vld [vmem:[%s1 + $0x120] sm:$0xf]
      %v298 = vld [vmem:[%s1 + $0x124] sm:$0xf]
      %v299 = vld [vmem:[%s1 + $0x128] sm:$0xf]
      %v300 = vld [vmem:[%s1 + $0x12c] sm:$0xf]
      %v301 = vld [vmem:[%s1 + $0x130] sm:$0xf]
      %v302 = vld [vmem:[%s1 + $0x134] sm:$0xf]
      %v303 = vld [vmem:[%s1 + $0x138] sm:$0xf]
      %v304 = vld [vmem:[%s1 + $0x13c] sm:$0xf]
      %v305 = vld [vmem:[%s1 + $0x140] sm:$0xf]
      %v306 = vld [vmem:[%s1 + $0x144] sm:$0xf]
      %v307 = vld [vmem:[%s1 + $0x148] sm:$0xf]
      %v308 = vld [vmem:[%s1 + $0x14c] sm:$0xf]
      %v309 = vld [vmem:[%s1 + $0x150] sm:$0xf]
      %v310 = vld [vmem:[%s1 + $0x154] sm:$0xf]
      %v311 = vld [vmem:[%s1 + $0x158] sm:$0xf]
      %v312 = vld [vmem:[%s1 + $0x15c] sm:$0xf]
      %v313 = vld [vmem:[%s1 + $0x160] sm:$0xf]
      %v314 = vld [vmem:[%s1 + $0x164] sm:$0xf]
      %v315 = vld [vmem:[%s1 + $0x168] sm:$0xf]
      %v316 = vld [vmem:[%s1 + $0x16c] sm:$0xf]
      %v317 = vld [vmem:[%s1 + $0x170] sm:$0xf]
      %v318 = vld [vmem:[%s1 + $0x174] sm:$0xf]
      %v319 = vld [vmem:[%s1 + $0x178] sm:$0xf]
      %v320 = vld [vmem:[%s1 + $0x17c] sm:$0xf]
      %v321 = vld [vmem:[%s1 + $0x180] sm:$0xf]
      %v322 = vld [vmem:[%s1 + $0x184] sm:$0xf]
      %v323 = vld [vmem:[%s1 + $0x188] sm:$0xf]
      %v324 = vld [vmem:[%s1 + $0x18c] sm:$0xf]
      %v325 = vld [vmem:[%s1 + $0x190] sm:$0xf]
      %v326 = vld [vmem:[%s1 + $0x194] sm:$0xf]
      %v327 = vld [vmem:[%s1 + $0x198] sm:$0xf]
      %v328 = vld [vmem:[%s1 + $0x19c] sm:$0xf]
      %v329 = vld [vmem:[%s1 + $0x1a0] sm:$0xf]
      %v330 = vld [vmem:[%s1 + $0x1a4] sm:$0xf]
      %v331 = vld [vmem:[%s1 + $0x1a8] sm:$0xf]
      %v332 = vld [vmem:[%s1 + $0x1ac] sm:$0xf]
      %v333 = vld [vmem:[%s1 + $0x1b0] sm:$0xf]
      %v334 = vld [vmem:[%s1 + $0x1b4] sm:$0xf]
      %v335 = vld [vmem:[%s1 + $0x1b8] sm:$0xf]
      %v336 = vld [vmem:[%s1 + $0x1bc] sm:$0xf]
      %v337 = vld [vmem:[%s1 + $0x1c0] sm:$0xf]
      %v338 = vld [vmem:[%s1 + $0x1c4] sm:$0xf]
      %v339 = vld [vmem:[%s1 + $0x1c8] sm:$0xf]
      %v340 = vld [vmem:[%s1 + $0x1cc] sm:$0xf]
      %v341 = vld [vmem:[%s1 + $0x1d0] sm:$0xf]
      %v342 = vld [vmem:[%s1 + $0x1d4] sm:$0xf]
      %v343 = vld [vmem:[%s1 + $0x1d8] sm:$0xf]
      %v344 = vld [vmem:[%s1 + $0x1dc] sm:$0xf]
      %v345 = vld [vmem:[%s1 + $0x1e0] sm:$0xf]
      %v346 = vld [vmem:[%s1 + $0x1e4] sm:$0xf]
      %v347 = vld [vmem:[%s1 + $0x1e8] sm:$0xf]
      %v348 = vld [vmem:[%s1 + $0x1ec] sm:$0xf]
      %v349 = vld [vmem:[%s1 + $0x1f0] sm:$0xf]
      %v350 = vld [vmem:[%s1 + $0x1f4] sm:$0xf]
      %v351 = vld [vmem:[%s1 + $0x1f8] sm:$0xf]
      %v352 = vld [vmem:[%s1 + $0x1fc] sm:$0xf]
      %v353 = vld [vmem:[%s1 + $0x200] sm:$0xf]
      %v354 = vld [vmem:[%s1 + $0x204] sm:$0xf]
      %v355 = vld [vmem:[%s1 + $0x208] sm:$0xf]
      %v356 = vld [vmem:[%s1 + $0x20c] sm:$0xf]
      %v357 = vld [vmem:[%s1 + $0x210] sm:$0xf]
      %v358 = vld [vmem:[%s1 + $0x214] sm:$0xf]
      %v359 = vld [vmem:[%s1 + $0x218] sm:$0xf]
      %v360 = vld [vmem:[%s1 + $0x21c] sm:$0xf]
      %v361 = vld [vmem:[%s1 + $0x220] sm:$0xf]
      %v362 = vld [vmem:[%s1 + $0x224] sm:$0xf]
      %v363 = vld [vmem:[%s1 + $0x228] sm:$0xf]
      %v364 = vld [vmem:[%s1 + $0x22c] sm:$0xf]
      %v365 = vld [vmem:[%s1 + $0x230] sm:$0xf]
      %v366 = vld [vmem:[%s1 + $0x234] sm:$0xf]
      %v367 = vld [vmem:[%s1 + $0x238] sm:$0xf]
      %v368 = vld [vmem:[%s1 + $0x23c] sm:$0xf]
      %v369 = vld [vmem:[%s2] sm:$0x1]
      %v371 = vperm.slane %v369, 0
      %v393 = vunpack.c.l.b16 %v205
      %v394 = vunpack.c.h.b16 %v205
      %v395 = vunpack.c.l.b16 %v206
      %v396 = vunpack.c.h.b16 %v206
      %v397 = vunpack.c.l.b16 %v207
      %v398 = vunpack.c.h.b16 %v207
      %v399 = vunpack.c.l.b16 %v208
      %v400 = vunpack.c.h.b16 %v208
      %v401 = vunpack.c.l.b16 %v209
      %v402 = vunpack.c.l.b16 %v210
      %v403 = vunpack.c.h.b16 %v210
      %v404 = vunpack.c.l.b16 %v211
      %v405 = vunpack.c.h.b16 %v211
      %v406 = vunpack.c.l.b16 %v212
      %v407 = vunpack.c.h.b16 %v212
      %v408 = vunpack.c.l.b16 %v213
      %v409 = vunpack.c.h.b16 %v213
      %v410 = vunpack.c.l.b16 %v214
      %v411 = vunpack.c.l.b16 %v215
      %v412 = vunpack.c.h.b16 %v215
      %v413 = vunpack.c.l.b16 %v216
      %v414 = vunpack.c.h.b16 %v216
      %v415 = vunpack.c.l.b16 %v217
      %v416 = vunpack.c.h.b16 %v217
      %v417 = vunpack.c.l.b16 %v218
      %v418 = vunpack.c.h.b16 %v218
      %v419 = vunpack.c.l.b16 %v219
      %v420 = vunpack.c.l.b16 %v220
      %v421 = vunpack.c.h.b16 %v220
      %v422 = vunpack.c.l.b16 %v221
      %v423 = vunpack.c.h.b16 %v221
      %v424 = vunpack.c.l.b16 %v222
      %v425 = vunpack.c.h.b16 %v222
      %v426 = vunpack.c.l.b16 %v223
      %v427 = vunpack.c.h.b16 %v223
      %v428 = vunpack.c.l.b16 %v224
      %v429 = vpack.c.b16 %v402, %v393
      %v430 = vpack.c.b16 %v403, %v394
      %v431 = vpack.c.b16 %v404, %v395
      %v432 = vpack.c.b16 %v405, %v396
      %v433 = vpack.c.b16 %v406, %v397
      %v434 = vpack.c.b16 %v407, %v398
      %v435 = vpack.c.b16 %v408, %v399
      %v436 = vpack.c.b16 %v409, %v400
      %v437 = vpack.c.b16 %v410, %v401
      %v438 = vpack.c.b16 %v420, %v411
      %v439 = vpack.c.b16 %v421, %v412
      %v440 = vpack.c.b16 %v422, %v413
      %v441 = vpack.c.b16 %v423, %v414
      %v442 = vpack.c.b16 %v424, %v415
      %v443 = vpack.c.b16 %v425, %v416
      %v444 = vpack.c.b16 %v426, %v417
      %v445 = vpack.c.b16 %v427, %v418
      %v446 = vpack.c.b16 %v428, %v419
      %v609 = vunpack.c.l.b16 %v225
      %v610 = vunpack.c.l.b16 %v226
      %v611 = vunpack.c.l.b16 %v227
      %v612 = vunpack.c.l.b16 %v228
      %v613 = vunpack.c.l.b16 %v229
      %v614 = vunpack.c.l.b16 %v230
      %v615 = vunpack.c.l.b16 %v231
      %v616 = vunpack.c.l.b16 %v232
      %v617 = vunpack.c.l.b16 %v233
      %v618 = vunpack.c.l.b16 %v234
      %v619 = vunpack.c.l.b16 %v235
      %v620 = vunpack.c.l.b16 %v236
      %v621 = vunpack.c.l.b16 %v237
      %v622 = vunpack.c.l.b16 %v238
      %v623 = vunpack.c.l.b16 %v239
      %v624 = vunpack.c.l.b16 %v240
      %v625 = vunpack.c.l.b16 %v241
      %v626 = vunpack.c.l.b16 %v242
      %v627 = vunpack.c.l.b16 %v243
      %v628 = vunpack.c.l.b16 %v244
      %v629 = vunpack.c.l.b16 %v245
      %v630 = vunpack.c.l.b16 %v246
      %v631 = vunpack.c.l.b16 %v247
      %v632 = vunpack.c.l.b16 %v248
      %v633 = vunpack.c.l.b16 %v249
      %v634 = vunpack.c.l.b16 %v250
      %v635 = vunpack.c.l.b16 %v251
      %v636 = vunpack.c.l.b16 %v252
      %v637 = vunpack.c.l.b16 %v253
      %v638 = vunpack.c.l.b16 %v254
      %v639 = vunpack.c.l.b16 %v255
      %v640 = vunpack.c.l.b16 %v256
      %v641 = vunpack.c.l.b16 %v257
      %v642 = vunpack.c.l.b16 %v258
      %v643 = vunpack.c.l.b16 %v259
      %v644 = vunpack.c.l.b16 %v260
      %v645 = vunpack.c.l.b16 %v261
      %v646 = vunpack.c.l.b16 %v262
      %v647 = vunpack.c.l.b16 %v263
      %v648 = vunpack.c.l.b16 %v264
      %v649 = vunpack.c.l.b16 %v265
      %v650 = vunpack.c.l.b16 %v266
      %v651 = vunpack.c.l.b16 %v267
      %v652 = vunpack.c.l.b16 %v268
      %v653 = vunpack.c.l.b16 %v269
      %v654 = vunpack.c.l.b16 %v270
      %v655 = vunpack.c.l.b16 %v271
      %v656 = vunpack.c.l.b16 %v272
      %v657 = vunpack.c.l.b16 %v273
      %v658 = vunpack.c.l.b16 %v274
      %v659 = vunpack.c.l.b16 %v275
      %v660 = vunpack.c.l.b16 %v276
      %v661 = vunpack.c.l.b16 %v277
      %v662 = vunpack.c.l.b16 %v278
      %v663 = vunpack.c.l.b16 %v279
      %v664 = vunpack.c.l.b16 %v280
      %v665 = vunpack.c.l.b16 %v281
      %v666 = vunpack.c.l.b16 %v282
      %v667 = vunpack.c.l.b16 %v283
      %v668 = vunpack.c.l.b16 %v284
      %v669 = vunpack.c.l.b16 %v285
      %v670 = vunpack.c.l.b16 %v286
      %v671 = vunpack.c.l.b16 %v287
      %v672 = vunpack.c.l.b16 %v288
      %v673 = vunpack.c.l.b16 %v289
      %v674 = vunpack.c.l.b16 %v290
      %v675 = vunpack.c.l.b16 %v291
      %v676 = vunpack.c.l.b16 %v292
      %v677 = vunpack.c.l.b16 %v293
      %v678 = vunpack.c.l.b16 %v294
      %v679 = vunpack.c.l.b16 %v295
      %v680 = vunpack.c.l.b16 %v296
      %v681 = vunpack.c.l.b16 %v297
      %v682 = vunpack.c.l.b16 %v298
      %v683 = vunpack.c.l.b16 %v299
      %v684 = vunpack.c.l.b16 %v300
      %v685 = vunpack.c.l.b16 %v301
      %v686 = vunpack.c.l.b16 %v302
      %v687 = vunpack.c.l.b16 %v303
      %v688 = vunpack.c.l.b16 %v304
      %v689 = vunpack.c.l.b16 %v305
      %v690 = vunpack.c.l.b16 %v306
      %v691 = vunpack.c.l.b16 %v307
      %v692 = vunpack.c.l.b16 %v308
      %v693 = vunpack.c.l.b16 %v309
      %v694 = vunpack.c.l.b16 %v310
      %v695 = vunpack.c.l.b16 %v311
      %v696 = vunpack.c.l.b16 %v312
      %v697 = vunpack.c.l.b16 %v313
      %v698 = vunpack.c.l.b16 %v314
      %v699 = vunpack.c.l.b16 %v315
      %v700 = vunpack.c.l.b16 %v316
      %v701 = vunpack.c.l.b16 %v317
      %v702 = vunpack.c.l.b16 %v318
      %v703 = vunpack.c.l.b16 %v319
      %v704 = vunpack.c.l.b16 %v320
      %v705 = vunpack.c.l.b16 %v321
      %v706 = vunpack.c.l.b16 %v322
      %v707 = vunpack.c.l.b16 %v323
      %v708 = vunpack.c.l.b16 %v324
      %v709 = vunpack.c.l.b16 %v325
      %v710 = vunpack.c.l.b16 %v326
      %v711 = vunpack.c.l.b16 %v327
      %v712 = vunpack.c.l.b16 %v328
      %v713 = vunpack.c.l.b16 %v329
      %v714 = vunpack.c.l.b16 %v330
      %v715 = vunpack.c.l.b16 %v331
      %v716 = vunpack.c.l.b16 %v332
      %v717 = vunpack.c.l.b16 %v333
      %v718 = vunpack.c.l.b16 %v334
      %v719 = vunpack.c.l.b16 %v335
      %v720 = vunpack.c.l.b16 %v336
      %v721 = vunpack.c.l.b16 %v337
      %v722 = vunpack.c.l.b16 %v338
      %v723 = vunpack.c.l.b16 %v339
      %v724 = vunpack.c.l.b16 %v340
      %v725 = vunpack.c.l.b16 %v341
      %v726 = vunpack.c.l.b16 %v342
      %v727 = vunpack.c.l.b16 %v343
      %v728 = vunpack.c.l.b16 %v344
      %v729 = vunpack.c.l.b16 %v345
      %v730 = vunpack.c.l.b16 %v346
      %v731 = vunpack.c.l.b16 %v347
      %v732 = vunpack.c.l.b16 %v348
      %v733 = vunpack.c.l.b16 %v349
      %v734 = vunpack.c.l.b16 %v350
      %v735 = vunpack.c.l.b16 %v351
      %v736 = vunpack.c.l.b16 %v352
      %v737 = vunpack.c.l.b16 %v353
      %v738 = vunpack.c.l.b16 %v354
      %v739 = vunpack.c.l.b16 %v355
      %v740 = vunpack.c.l.b16 %v356
      %v741 = vunpack.c.l.b16 %v357
      %v742 = vunpack.c.l.b16 %v358
      %v743 = vunpack.c.l.b16 %v359
      %v744 = vunpack.c.l.b16 %v360
      %v745 = vunpack.c.l.b16 %v361
      %v746 = vunpack.c.l.b16 %v362
      %v747 = vunpack.c.l.b16 %v363
      %v748 = vunpack.c.l.b16 %v364
      %v749 = vunpack.c.l.b16 %v365
      %v750 = vunpack.c.l.b16 %v366
      %v751 = vunpack.c.l.b16 %v367
      %v752 = vunpack.c.l.b16 %v368
      %v753 = vpack.c.b16 %v610, %v609
      %v754 = vpack.c.b16 %v612, %v611
      %v755 = vpack.c.b16 %v614, %v613
      %v756 = vpack.c.b16 %v616, %v615
      %v757 = vpack.c.b16 %v618, %v617
      %v758 = vpack.c.b16 %v620, %v619
      %v759 = vpack.c.b16 %v622, %v621
      %v760 = vpack.c.b16 %v624, %v623
      %v761 = vpack.c.b16 %v626, %v625
      %v762 = vpack.c.b16 %v628, %v627
      %v763 = vpack.c.b16 %v630, %v629
      %v764 = vpack.c.b16 %v632, %v631
      %v765 = vpack.c.b16 %v634, %v633
      %v766 = vpack.c.b16 %v636, %v635
      %v767 = vpack.c.b16 %v638, %v637
      %v768 = vpack.c.b16 %v640, %v639
      %v769 = vpack.c.b16 %v642, %v641
      %v770 = vpack.c.b16 %v644, %v643
      %v771 = vpack.c.b16 %v646, %v645
      %v772 = vpack.c.b16 %v648, %v647
      %v773 = vpack.c.b16 %v650, %v649
      %v774 = vpack.c.b16 %v652, %v651
      %v775 = vpack.c.b16 %v654, %v653
      %v776 = vpack.c.b16 %v656, %v655
      %v777 = vpack.c.b16 %v658, %v657
      %v778 = vpack.c.b16 %v660, %v659
      %v779 = vpack.c.b16 %v662, %v661
      %v780 = vpack.c.b16 %v664, %v663
      %v781 = vpack.c.b16 %v666, %v665
      %v782 = vpack.c.b16 %v668, %v667
      %v783 = vpack.c.b16 %v670, %v669
      %v784 = vpack.c.b16 %v672, %v671
      %v785 = vpack.c.b16 %v674, %v673
      %v786 = vpack.c.b16 %v676, %v675
      %v787 = vpack.c.b16 %v678, %v677
      %v788 = vpack.c.b16 %v680, %v679
      %v789 = vpack.c.b16 %v682, %v681
      %v790 = vpack.c.b16 %v684, %v683
      %v791 = vpack.c.b16 %v686, %v685
      %v792 = vpack.c.b16 %v688, %v687
      %v793 = vpack.c.b16 %v690, %v689
      %v794 = vpack.c.b16 %v692, %v691
      %v795 = vpack.c.b16 %v694, %v693
      %v796 = vpack.c.b16 %v696, %v695
      %v797 = vpack.c.b16 %v698, %v697
      %v798 = vpack.c.b16 %v700, %v699
      %v799 = vpack.c.b16 %v702, %v701
      %v800 = vpack.c.b16 %v704, %v703
      %v801 = vpack.c.b16 %v706, %v705
      %v802 = vpack.c.b16 %v708, %v707
      %v803 = vpack.c.b16 %v710, %v709
      %v804 = vpack.c.b16 %v712, %v711
      %v805 = vpack.c.b16 %v714, %v713
      %v806 = vpack.c.b16 %v716, %v715
      %v807 = vpack.c.b16 %v718, %v717
      %v808 = vpack.c.b16 %v720, %v719
      %v809 = vpack.c.b16 %v722, %v721
      %v810 = vpack.c.b16 %v724, %v723
      %v811 = vpack.c.b16 %v726, %v725
      %v812 = vpack.c.b16 %v728, %v727
      %v813 = vpack.c.b16 %v730, %v729
      %v814 = vpack.c.b16 %v732, %v731
      %v815 = vpack.c.b16 %v734, %v733
      %v816 = vpack.c.b16 %v736, %v735
      %v817 = vpack.c.b16 %v738, %v737
      %v818 = vpack.c.b16 %v740, %v739
      %v819 = vpack.c.b16 %v742, %v741
      %v820 = vpack.c.b16 %v744, %v743
      %v821 = vpack.c.b16 %v746, %v745
      %v822 = vpack.c.b16 %v748, %v747
      %v823 = vpack.c.b16 %v750, %v749
      %v824 = vpack.c.b16 %v752, %v751
      %897 = vmatpush.bf16.msra.mxu0 %v760
      %898 = vmatpush.bf16.msra.mxu0 %v759
      %899 = vmatpush.bf16.msra.mxu0 %v758
      %900 = vmatpush.bf16.msra.mxu0 %v757
      %901 = vmatpush.bf16.msra.mxu0 %v756
      %902 = vmatpush.bf16.msra.mxu0 %v755
      %903 = vmatpush.bf16.msra.mxu0 %v754
      %904 = vmatpush.bf16.msra.mxu0 %v753
      %905 = vmatmul.bf16.gmra.mxu0 %v429
      %v906 = vpop.f32.mrf.mxu0
      %v907 = vadd.f32 %v371, %v906
      %v908 = vpop.f32.mrf.mxu0
      %v909 = vadd.f32 %v371, %v908
      %910 = vmatmul.bf16.gmra.mxu0 %v438
      %v911 = vpop.f32.mrf.mxu0
      %v912 = vadd.f32 %v371, %v911
      %v913 = vpop.f32.mrf.mxu0
      %v914 = vadd.f32 %v371, %v913
      %915 = vdwg.mxu0
      %916 = vmatpush.bf16.msra.mxu0 %v768
      %917 = vmatpush.bf16.msra.mxu0 %v767
      %918 = vmatpush.bf16.msra.mxu0 %v766
      %919 = vmatpush.bf16.msra.mxu0 %v765
      %920 = vmatpush.bf16.msra.mxu0 %v764
      %921 = vmatpush.bf16.msra.mxu0 %v763
      %922 = vmatpush.bf16.msra.mxu0 %v762
      %923 = vmatpush.bf16.msra.mxu0 %v761
      %924 = vmatmul.bf16.gmra.mxu0 %v430
      %v925 = vpop.f32.mrf.mxu0
      %v926 = vadd.f32 %v907, %v925
      %v927 = vpop.f32.mrf.mxu0
      %v928 = vadd.f32 %v909, %v927
      %929 = vmatmul.bf16.gmra.mxu0 %v439
      %v930 = vpop.f32.mrf.mxu0
      %v931 = vadd.f32 %v912, %v930
      %v932 = vpop.f32.mrf.mxu0
      %v933 = vadd.f32 %v914, %v932
      %934 = vdwg.mxu0
      %935 = vmatpush.bf16.msra.mxu0 %v776
      %936 = vmatpush.bf16.msra.mxu0 %v775
      %937 = vmatpush.bf16.msra.mxu0 %v774
      %938 = vmatpush.bf16.msra.mxu0 %v773
      %939 = vmatpush.bf16.msra.mxu0 %v772
      %940 = vmatpush.bf16.msra.mxu0 %v771
      %941 = vmatpush.bf16.msra.mxu0 %v770
      %942 = vmatpush.bf16.msra.mxu0 %v769
      %943 = vmatmul.bf16.gmra.mxu0 %v431
      %v944 = vpop.f32.mrf.mxu0
      %v945 = vadd.f32 %v926, %v944
      %v946 = vpop.f32.mrf.mxu0
      %v947 = vadd.f32 %v928, %v946
      %948 = vmatmul.bf16.gmra.mxu0 %v440
      %v949 = vpop.f32.mrf.mxu0
      %v950 = vadd.f32 %v931, %v949
      %v951 = vpop.f32.mrf.mxu0
      %v952 = vadd.f32 %v933, %v951
      %953 = vdwg.mxu0
      %954 = vmatpush.bf16.msra.mxu0 %v784
      %955 = vmatpush.bf16.msra.mxu0 %v783
      %956 = vmatpush.bf16.msra.mxu0 %v782
      %957 = vmatpush.bf16.msra.mxu0 %v781
      %958 = vmatpush.bf16.msra.mxu0 %v780
      %959 = vmatpush.bf16.msra.mxu0 %v779
      %960 = vmatpush.bf16.msra.mxu0 %v778
      %961 = vmatpush.bf16.msra.mxu0 %v777
      %962 = vmatmul.bf16.gmra.mxu0 %v432
      %v963 = vpop.f32.mrf.mxu0
      %v964 = vadd.f32 %v945, %v963
      %v965 = vpop.f32.mrf.mxu0
      %v966 = vadd.f32 %v947, %v965
      %967 = vmatmul.bf16.gmra.mxu0 %v441
      %v968 = vpop.f32.mrf.mxu0
      %v969 = vadd.f32 %v950, %v968
      %v970 = vpop.f32.mrf.mxu0
      %v971 = vadd.f32 %v952, %v970
      %972 = vdwg.mxu0
      %973 = vmatpush.bf16.msra.mxu0 %v792
      %974 = vmatpush.bf16.msra.mxu0 %v791
      %975 = vmatpush.bf16.msra.mxu0 %v790
      %976 = vmatpush.bf16.msra.mxu0 %v789
      %977 = vmatpush.bf16.msra.mxu0 %v788
      %978 = vmatpush.bf16.msra.mxu0 %v787
      %979 = vmatpush.bf16.msra.mxu0 %v786
      %980 = vmatpush.bf16.msra.mxu0 %v785
      %981 = vmatmul.bf16.gmra.mxu0 %v433
      %v982 = vpop.f32.mrf.mxu0
      %v983 = vadd.f32 %v964, %v982
      %v984 = vpop.f32.mrf.mxu0
      %v985 = vadd.f32 %v966, %v984
      %986 = vmatmul.bf16.gmra.mxu0 %v442
      %v987 = vpop.f32.mrf.mxu0
      %v988 = vadd.f32 %v969, %v987
      %v989 = vpop.f32.mrf.mxu0
      %v990 = vadd.f32 %v971, %v989
      %991 = vdwg.mxu0
      %992 = vmatpush.bf16.msra.mxu0 %v800
      %993 = vmatpush.bf16.msra.mxu0 %v799
      %994 = vmatpush.bf16.msra.mxu0 %v798
      %995 = vmatpush.bf16.msra.mxu0 %v797
      %996 = vmatpush.bf16.msra.mxu0 %v796
      %997 = vmatpush.bf16.msra.mxu0 %v795
      %998 = vmatpush.bf16.msra.mxu0 %v794
      %999 = vmatpush.bf16.msra.mxu0 %v793
      %1000 = vmatmul.bf16.gmra.mxu0 %v434
      %v1001 = vpop.f32.mrf.mxu0
      %v1002 = vadd.f32 %v983, %v1001
      %v1003 = vpop.f32.mrf.mxu0
      %v1004 = vadd.f32 %v985, %v1003
      %1005 = vmatmul.bf16.gmra.mxu0 %v443
      %v1006 = vpop.f32.mrf.mxu0
      %v1007 = vadd.f32 %v988, %v1006
      %v1008 = vpop.f32.mrf.mxu0
      %v1009 = vadd.f32 %v990, %v1008
      %1010 = vdwg.mxu0
      %1011 = vmatpush.bf16.msra.mxu0 %v808
      %1012 = vmatpush.bf16.msra.mxu0 %v807
      %1013 = vmatpush.bf16.msra.mxu0 %v806
      %1014 = vmatpush.bf16.msra.mxu0 %v805
      %1015 = vmatpush.bf16.msra.mxu0 %v804
      %1016 = vmatpush.bf16.msra.mxu0 %v803
      %1017 = vmatpush.bf16.msra.mxu0 %v802
      %1018 = vmatpush.bf16.msra.mxu0 %v801
      %1019 = vmatmul.bf16.gmra.mxu0 %v435
      %v1020 = vpop.f32.mrf.mxu0
      %v1021 = vadd.f32 %v1002, %v1020
      %v1022 = vpop.f32.mrf.mxu0
      %v1023 = vadd.f32 %v1004, %v1022
      %1024 = vmatmul.bf16.gmra.mxu0 %v444
      %v1025 = vpop.f32.mrf.mxu0
      %v1026 = vadd.f32 %v1007, %v1025
      %v1027 = vpop.f32.mrf.mxu0
      %v1028 = vadd.f32 %v1009, %v1027
      %1029 = vdwg.mxu0
      %1030 = vmatpush.bf16.msra.mxu0 %v816
      %1031 = vmatpush.bf16.msra.mxu0 %v815
      %1032 = vmatpush.bf16.msra.mxu0 %v814
      %1033 = vmatpush.bf16.msra.mxu0 %v813
      %1034 = vmatpush.bf16.msra.mxu0 %v812
      %1035 = vmatpush.bf16.msra.mxu0 %v811
      %1036 = vmatpush.bf16.msra.mxu0 %v810
      %1037 = vmatpush.bf16.msra.mxu0 %v809
      %1038 = vmatmul.bf16.gmra.mxu0 %v436
      %v1039 = vpop.f32.mrf.mxu0
      %v1040 = vadd.f32 %v1021, %v1039
      %v1041 = vpop.f32.mrf.mxu0
      %v1042 = vadd.f32 %v1023, %v1041
      %1043 = vmatmul.bf16.gmra.mxu0 %v445
      %v1044 = vpop.f32.mrf.mxu0
      %v1045 = vadd.f32 %v1026, %v1044
      %v1046 = vpop.f32.mrf.mxu0
      %v1047 = vadd.f32 %v1028, %v1046
      %1048 = vdwg.mxu0
      %1049 = vmatpush.bf16.msra.mxu0 %v824
      %1050 = vmatpush.bf16.msra.mxu0 %v823
      %1051 = vmatpush.bf16.msra.mxu0 %v822
      %1052 = vmatpush.bf16.msra.mxu0 %v821
      %1053 = vmatpush.bf16.msra.mxu0 %v820
      %1054 = vmatpush.bf16.msra.mxu0 %v819
      %1055 = vmatpush.bf16.msra.mxu0 %v818
      %1056 = vmatpush.bf16.msra.mxu0 %v817
      %1057 = vmatmul.bf16.gmra.mxu0 %v437
      %v1058 = vpop.f32.mrf.mxu0
      %v1059 = vadd.f32 %v1040, %v1058
      %v1060 = vpop.f32.mrf.mxu0
      %v1061 = vadd.f32 %v1042, %v1060
      %1062 = vmatmul.bf16.gmra.mxu0 %v446
      %v1063 = vpop.f32.mrf.mxu0
      %v1064 = vadd.f32 %v1045, %v1063
      %v1065 = vpop.f32.mrf.mxu0
      %v1066 = vadd.f32 %v1047, %v1065
      %1067 = vdwg.mxu0
      %s1068 = sld [smem:[#allocation2]]
      %vm1069 = vcmp.ge.f32.partialorder %v1059, 0.0
      %vm1070 = vcmp.ge.f32.partialorder %v1061, 0.0
      %vm1071 = vcmp.ge.f32.partialorder %v1064, 0.0
      %vm1072 = vcmp.ge.f32.partialorder %v1066, 0.0
      %v1073 = vstv %s1068
      %v1074 = vmul.f32 %v1073, %v1059
      %v1075 = vmul.f32 %v1073, %v1061
      %v1076 = vmul.f32 %v1073, %v1064
      %v1077 = vmul.f32 %v1073, %v1066
      %v1078 = vsel %vm1069, %v1059, %v1074
      %v1079 = vsel %vm1070, %v1061, %v1075
      %v1080 = vsel %vm1071, %v1064, %v1076
      %v1081 = vsel %vm1072, %v1066, %v1077
      %v1082 = vpack.c.bf16 %v1078, %v1078
      %v1083 = vpack.c.bf16 %v1079, %v1079
      %v1084 = vpack.c.bf16 %v1080, %v1080
      %v1085 = vpack.c.bf16 %v1081, %v1081
      %1086 = vst [vmem:[%s203] sm:$0xf] %v1082
      %1087 = vst [vmem:[%s203 + $0x4] sm:$0xf] %v1083
      %1088 = vst [vmem:[%s203 + $0x8] sm:$0xf] %v1084
      %1089 = vst [vmem:[%s203 + $0xc] sm:$0xf] %v1085
      %s1090 = smul.u32 4, %s16
      %p1091 = scmp.lt.s32.totalorder %s1090, 15
      %s1092 = scalar_select %p1091, %s1090, 15
      %s1093 = smul.addr %s1092, 4
      %s1094 = scalar_lea.vmem %s4, %s1093
      // Predicated region
      $region37: #{sisr_block.18} parent=35 // pred_check
        %p1095 = pneg %p123
      $region38: #{sisr_block.18} parent=35 // pred_check_branch
        %1097 = sbr.rel (%p1095) target = $region40
      $region39: #{sisr_block.18} parent=35 // pred_region
        %s1098 = smul.u32 4, %s16
      $region40: #{sisr_block.18} parent=35 // pred_fallthru
        _
    $region36: #{sisr_block.18} parent=5 // pred_fallthru
      _
    %p1099 = scmp.le.s32.totalorder 2, %s11
    // Predicated region
    $region41: #{sisr_block.18} parent=5 // pred_check
      %p1100 = pneg %p1099
    $region42: #{sisr_block.18} parent=5 // pred_check_branch
      %1102 = sbr.rel (%p1100) target = $region44
    $region43: #{sisr_block.18} parent=5 // pred_region
      %s1103 = ssub.s32 %s11, 2
      // Predicated region
      $region45: #{sisr_block.18} parent=43 // pred_check
        %p1104 = pneg %p129
      $region46: #{sisr_block.18} parent=43 // pred_check_branch
        %1106 = sbr.rel (%p1104) target = $region48
      $region47: #{sisr_block.18} parent=43 // pred_region
        %s1107 = smul.u32 4, %s17
        %p1108 = scmp.lt.s32.totalorder %s1107, 15
        %s1109 = scalar_select %p1108, %s1107, 15
        %s1110 = smul.addr %s1109, 4
        %s1111 = scalar_lea.vmem %s4, %s1110
      $region48: #{sisr_block.18} parent=43 // pred_fallthru
        _
    $region44: #{sisr_block.18} parent=5 // pred_fallthru
      _
  $region6: #{sisr_block.18} parent=0 // loop_footer
    %s15 = sadd.s32 1, %s11
  $region7: #{sisr_block.18} parent=0 // loop_footer_branch
    %10 = sbr.rel target = $region3
  $region8: #{sisr_block.18} parent=0 // loop_exit
    _

// kernel: sisr_block.19
$region0: #{sisr_block.19}
  #allocation0 [shape = 'u32[]', space=smem, size = 0x4, offset = 0x4, fixed_abs, tag = 'smem constant byte address 0x4 - core index']
  #allocation1 [shape = 'u32[72,128]{1,0:T(1,128)}', space=vmem, size = 0x9000, scoped, tag = 'internal scratch']
  #allocation2 [shape = 'f32[1,1]{1,0:T(1,128)S(6)}', space=smem, size = 0x200, scoped, tag = 'scoped memory for sisr_block.19']
  %s0 = inlined_call_operand.vmem [shape: bf16[128,512], index: 0, kind: input, shape index: {}]
  %s1 = inlined_call_operand.vmem [shape: bf16[512,128], index: 1, kind: input, shape index: {}]
  %s2 = inlined_call_operand.vmem [shape: f32[1,128], index: 2, kind: input, shape index: {}]
  %s3 = inlined_call_operand.<no memory space> [shape: f32[1,1], index: 3, kind: input, shape index: {}]
  %s4 = inlined_call_operand.vmem [shape: bf16[128,128], index: 4, kind: input, shape index: {}]
  %s5 = inlined_call_operand.vmem [shape: bf16[128,128], index: 5, kind: output, shape index: {}]
  %s6 = sld [smem:[#allocation0]]
  $region53: #{sisr_block.19} parent=0
    _
  %s8 = ssub.s32 1, %s6
  %s9 = scalar_select 0, %s8, %s6
  %10 = sst [smem:[#allocation2]] %s3
  loop: start=0, step=1, limit=6
  $region2: #{sisr_block.19} parent=0 // loop_pre_header
    _
  $region3: #{sisr_block.19} parent=0 // loop_header
    %s12 = sphi 0, %s16
    %p13 = scmp.ge.s32.totalorder %s12, 6
    %s22 = sphi 0, %s24
    %s25 = sphi 0, %s22
    %s26 = sphi 0, %s25
    %s42 = sphi 0, %s26
    %s46 = sphi 0, %s46
    %s48 = sphi 0, %s46
    %s49 = sphi 0, %s48
    %s63 = sphi 0, %s49
    %s67 = sphi 0, %s67
    %s69 = sphi 0, %s67
    %s70 = sphi 0, %s69
    %s84 = sphi 0, %s70
    %s88 = sphi 0, %s88
    %s90 = sphi 0, %s88
    %s91 = sphi 0, %s90
    %s105 = sphi 0, %s91
    %s111 = sphi 0, %s113
    %s114 = sphi 0, %s111
    %s115 = sphi 0, %s114
    %s131 = sphi 0, %s115
    %s137 = sphi 0, %s139
    %s140 = sphi 0, %s137
    %s141 = sphi 0, %s140
    %s157 = sphi 0, %s141
  $region4: #{sisr_block.19} parent=0 // loop_header_branch
    %15 = sbr.rel (%p13) target = $region8
  $region5: #{sisr_block.19} parent=0 // loop_body
    %s17 = ssub.s32 %s12, 1
    %s18 = ssub.s32 %s12, 2
    %s19 = sadd.s32 %s12, 1
    %s20 = ssub.s32 %s12, %s19
    %p21 = scmp.eq.s32.totalorder %s20, 0
    %s23 = sadd.s32 %s22, 1
    %s24 = scalar_select %p21, %s22, %s23
    %p27 = pneg %p21
    %p28 = scmp.eq.s32.totalorder %s12, 3
    %p29 = por %p27, %p28
    %p30 = scmp.ne.s32.totalorder %s22, %s25
    %p31 = scmp.eq.s32.totalorder %s12, 0
    %p32 = por %p30, %p31
    %p33 = scmp.ne.s32.totalorder %s22, %s25
    %p34 = scmp.eq.s32.totalorder %s17, 3
    %p35 = por %p33, %p34
    %p36 = scmp.ne.s32.totalorder %s25, %s26
    %p37 = scmp.eq.s32.totalorder %s17, 0
    %p38 = por %p36, %p37
    %p39 = scmp.ne.s32.totalorder %s25, %s26
    %p40 = scmp.eq.s32.totalorder %s18, 3
    %p41 = por %p39, %p40
    %p43 = scmp.ne.s32.totalorder %s26, %s42
    %p44 = scmp.eq.s32.totalorder %s18, 0
    %p45 = por %p43, %p44
    %s47 = sadd.s32 %s46, 1
    %p50 = scmp.eq.s32.totalorder %s12, 3
    %p51 = scmp.ne.s32.totalorder %s46, %s48
    %p52 = scmp.eq.s32.totalorder %s12, 0
    %p53 = por %p51, %p52
    %p54 = scmp.ne.s32.totalorder %s46, %s48
    %p55 = scmp.eq.s32.totalorder %s17, 3
    %p56 = por %p54, %p55
    %p57 = scmp.ne.s32.totalorder %s48, %s49
    %p58 = scmp.eq.s32.totalorder %s17, 0
    %p59 = por %p57, %p58
    %p60 = scmp.ne.s32.totalorder %s48, %s49
    %p61 = scmp.eq.s32.totalorder %s18, 3
    %p62 = por %p60, %p61
    %p64 = scmp.ne.s32.totalorder %s49, %s63
    %p65 = scmp.eq.s32.totalorder %s18, 0
    %p66 = por %p64, %p65
    %s68 = sadd.s32 %s67, 1
    %p71 = scmp.eq.s32.totalorder %s12, 3
    %p72 = scmp.ne.s32.totalorder %s67, %s69
    %p73 = scmp.eq.s32.totalorder %s12, 0
    %p74 = por %p72, %p73
    %p75 = scmp.ne.s32.totalorder %s67, %s69
    %p76 = scmp.eq.s32.totalorder %s17, 3
    %p77 = por %p75, %p76
    %p78 = scmp.ne.s32.totalorder %s69, %s70
    %p79 = scmp.eq.s32.totalorder %s17, 0
    %p80 = por %p78, %p79
    %p81 = scmp.ne.s32.totalorder %s69, %s70
    %p82 = scmp.eq.s32.totalorder %s18, 3
    %p83 = por %p81, %p82
    %p85 = scmp.ne.s32.totalorder %s70, %s84
    %p86 = scmp.eq.s32.totalorder %s18, 0
    %p87 = por %p85, %p86
    %s89 = sadd.s32 %s88, 1
    %p92 = scmp.eq.s32.totalorder %s12, 3
    %p93 = scmp.ne.s32.totalorder %s88, %s90
    %p94 = scmp.eq.s32.totalorder %s12, 0
    %p95 = por %p93, %p94
    %p96 = scmp.ne.s32.totalorder %s88, %s90
    %p97 = scmp.eq.s32.totalorder %s17, 3
    %p98 = por %p96, %p97
    %p99 = scmp.ne.s32.totalorder %s90, %s91
    %p100 = scmp.eq.s32.totalorder %s17, 0
    %p101 = por %p99, %p100
    %p102 = scmp.ne.s32.totalorder %s90, %s91
    %p103 = scmp.eq.s32.totalorder %s18, 3
    %p104 = por %p102, %p103
    %p106 = scmp.ne.s32.totalorder %s91, %s105
    %p107 = scmp.eq.s32.totalorder %s18, 0
    %p108 = por %p106, %p107
    %s109 = ssub.s32 %s12, %s19
    %p110 = scmp.eq.s32.totalorder %s109, 0
    %s112 = sadd.s32 %s111, 1
    %s113 = scalar_select %p110, %s111, %s112
    %p116 = pneg %p110
    %p117 = scmp.eq.s32.totalorder %s12, 3
    %p118 = por %p116, %p117
    %p119 = scmp.ne.s32.totalorder %s111, %s114
    %p120 = scmp.eq.s32.totalorder %s12, 0
    %p121 = por %p119, %p120
    %p122 = scmp.ne.s32.totalorder %s111, %s114
    %p123 = scmp.eq.s32.totalorder %s17, 3
    %p124 = por %p122, %p123
    %p125 = scmp.ne.s32.totalorder %s114, %s115
    %p126 = scmp.eq.s32.totalorder %s17, 0
    %p127 = por %p125, %p126
    %p128 = scmp.ne.s32.totalorder %s114, %s115
    %p129 = scmp.eq.s32.totalorder %s18, 3
    %p130 = por %p128, %p129
    %p132 = scmp.ne.s32.totalorder %s115, %s131
    %p133 = scmp.eq.s32.totalorder %s18, 0
    %p134 = por %p132, %p133
    %s135 = ssub.s32 %s12, %s19
    %p136 = scmp.eq.s32.totalorder %s135, 0
    %s138 = sadd.s32 %s137, 1
    %s139 = scalar_select %p136, %s137, %s138
    %p142 = pneg %p136
    %p143 = scmp.eq.s32.totalorder %s12, 3
    %p144 = por %p142, %p143
    %p145 = scmp.ne.s32.totalorder %s137, %s140
    %p146 = scmp.eq.s32.totalorder %s12, 0
    %p147 = por %p145, %p146
    %p148 = scmp.ne.s32.totalorder %s137, %s140
    %p149 = scmp.eq.s32.totalorder %s17, 3
    %p150 = por %p148, %p149
    %p151 = scmp.ne.s32.totalorder %s140, %s141
    %p152 = scmp.eq.s32.totalorder %s17, 0
    %p153 = por %p151, %p152
    %p154 = scmp.ne.s32.totalorder %s140, %s141
    %p155 = scmp.eq.s32.totalorder %s18, 3
    %p156 = por %p154, %p155
    %p158 = scmp.ne.s32.totalorder %s141, %s157
    %p159 = scmp.eq.s32.totalorder %s18, 0
    %p160 = por %p158, %p159
    %p161 = scmp.le.s32.totalorder 1, %s12
    %p162 = scmp.lt.s32.totalorder %s12, 5
    %p163 = pnand %p161, %p162
    %p164 = pneg %p163
    // Predicated region
    $region9: #{sisr_block.19} parent=5 // pred_check
      _
    $region10: #{sisr_block.19} parent=5 // pred_check_branch
      %166 = sbr.rel (%p163) target = $region12
    $region11: #{sisr_block.19} parent=5 // pred_region
      %s167 = ssub.s32 %s12, 1
      // Predicated region
      $region13: #{sisr_block.19} parent=11 // pred_check
        %p168 = pneg %p59
      $region14: #{sisr_block.19} parent=11 // pred_check_branch
        %170 = sbr.rel (%p168) target = $region16
      $region15: #{sisr_block.19} parent=11 // pred_region
        _
      $region16: #{sisr_block.19} parent=11 // pred_fallthru
        _
      // Predicated region
      $region17: #{sisr_block.19} parent=11 // pred_check
        %p171 = pneg %p80
      $region18: #{sisr_block.19} parent=11 // pred_check_branch
        %173 = sbr.rel (%p171) target = $region20
      $region19: #{sisr_block.19} parent=11 // pred_region
        _
      $region20: #{sisr_block.19} parent=11 // pred_fallthru
        _
      // Predicated region
      $region21: #{sisr_block.19} parent=11 // pred_check
        %p174 = pneg %p101
      $region22: #{sisr_block.19} parent=11 // pred_check_branch
        %176 = sbr.rel (%p174) target = $region24
      $region23: #{sisr_block.19} parent=11 // pred_region
        _
      $region24: #{sisr_block.19} parent=11 // pred_fallthru
        _
    $region12: #{sisr_block.19} parent=5 // pred_fallthru
      _
    %p177 = scmp.lt.s32.totalorder %s12, 4
    // Predicated region
    $region25: #{sisr_block.19} parent=5 // pred_check
      %p178 = pneg %p177
    $region26: #{sisr_block.19} parent=5 // pred_check_branch
      %180 = sbr.rel (%p178) target = $region28
    $region27: #{sisr_block.19} parent=5 // pred_region
      // Predicated region
      $region29: #{sisr_block.19} parent=27 // pred_check
        %p181 = pneg %p32
      $region30: #{sisr_block.19} parent=27 // pred_check_branch
        %183 = sbr.rel (%p181) target = $region32
      $region31: #{sisr_block.19} parent=27 // pred_region
        %s184 = smul.u32 4, %s12
        %p185 = scmp.lt.s32.totalorder %s184, 15
        %s186 = scalar_select %p185, %s184, 15
        %s187 = smul.addr %s186, 4
        %s188 = smul.addr %s187, 4
        %s189 = scalar_lea.vmem %s0, %s188
        %s190 = smul.u32 4, %s12
      $region32: #{sisr_block.19} parent=27 // pred_fallthru
        _
      // Predicated region
      $region33: #{sisr_block.19} parent=27 // pred_check
        %p191 = pneg %p121
      $region34: #{sisr_block.19} parent=27 // pred_check_branch
        %193 = sbr.rel (%p191) target = $region36
      $region35: #{sisr_block.19} parent=27 // pred_region
        %s194 = smul.u32 4, %s12
        %p195 = scmp.lt.s32.totalorder %s194, 15
        %s196 = scalar_select %p195, %s194, 15
        %s197 = smul.addr %s196, 4
        %s198 = scalar_lea.vmem %s4, %s197
        %s199 = smul.u32 4, %s12
      $region36: #{sisr_block.19} parent=27 // pred_fallthru
        _
    $region28: #{sisr_block.19} parent=5 // pred_fallthru
      _
    %p200 = scmp.le.s32.totalorder 1, %s12
    %p201 = scmp.lt.s32.totalorder %s12, 5
    %p202 = pnand %p200, %p201
    %p203 = pneg %p202
    // Predicated region
    $region37: #{sisr_block.19} parent=5 // pred_check
      _
    $region38: #{sisr_block.19} parent=5 // pred_check_branch
      %205 = sbr.rel (%p202) target = $region40
    $region39: #{sisr_block.19} parent=5 // pred_region
      %s206 = ssub.s32 %s12, 1
      %s207 = smul.u32 4, %s17
      %p208 = scmp.lt.s32.totalorder %s207, 15
      %s209 = scalar_select %p208, %s207, 15
      %s210 = smul.addr %s209, 4
      %s211 = smul.addr %s210, 4
      %s212 = scalar_lea.vmem %s0, %s211
      %p213 = pneg %p38
      %p214 = pneg %p35
      %p215 = pneg %p59
      %p216 = pneg %p56
      %p217 = pneg %p80
      %p218 = pneg %p77
      %p219 = pneg %p101
      %p220 = pneg %p98
      %s221 = smul.u32 4, %s17
      %p222 = scmp.lt.s32.totalorder %s221, 15
      %s223 = scalar_select %p222, %s221, 15
      %s224 = smul.addr %s223, 4
      %s225 = scalar_lea.vmem %s4, %s224
      %p226 = pneg %p127
      %p227 = pneg %p124
      %p228 = pneg %p153
      %p229 = pneg %p150
      %s230 = smul.u32 4, %s17
      %p231 = scmp.lt.s32.totalorder %s230, 15
      %s232 = scalar_select %p231, %s230, 15
      %s233 = smul.addr %s232, 4
      %s234 = scalar_lea.vmem %s5, %s233
      %s235 = smul.u32 4, %s17
      %p236 = scmp.lt.s32.totalorder %s235, 15
      %s237 = scalar_select %p236, %s235, 15
      %s238 = smul.addr %s237, 4
      %s239 = smul.addr %s238, 4
      %s240 = scalar_lea.vmem %s0, %s239
      %s241 = smul.u32 4, %s17
      %s242 = smul.u32 4, %s17
      %p243 = scmp.lt.s32.totalorder %s242, 15
      %s244 = scalar_select %p243, %s242, 15
      %s245 = smul.addr %s244, 4
      %s246 = scalar_lea.vmem %s4, %s245
      %s247 = smul.u32 4, %s17
      %s248 = smul.u32 4, %s17
      %p249 = scmp.lt.s32.totalorder %s248, 15
      %s250 = scalar_select %p249, %s248, 15
      %s251 = smul.addr %s250, 4
      %s252 = scalar_lea.vmem %s5, %s251
      %s253 = smul.u32 4, %s17
      %v254 = vld [vmem:[%s240] sm:$0xff]
      %v255 = vld [vmem:[%s240 + $0x8] sm:$0xff]
      %v256 = vld [vmem:[%s240 + $0x10] sm:$0xff]
      %v257 = vld [vmem:[%s240 + $0x18] sm:$0xff]
      %v258 = vld [vmem:[%s240 + $0x20] sm:$0xff]
      %v259 = vld [vmem:[%s240 + $0x28] sm:$0xff]
      %v260 = vld [vmem:[%s240 + $0x30] sm:$0xff]
      %v261 = vld [vmem:[%s240 + $0x38] sm:$0xff]
      %v262 = vld [vmem:[%s1] sm:$0xf]
      %v263 = vld [vmem:[%s1 + $0x4] sm:$0xf]
      %v264 = vld [vmem:[%s1 + $0x8] sm:$0xf]
      %v265 = vld [vmem:[%s1 + $0xc] sm:$0xf]
      %v266 = vld [vmem:[%s1 + $0x10] sm:$0xf]
      %v267 = vld [vmem:[%s1 + $0x14] sm:$0xf]
      %v268 = vld [vmem:[%s1 + $0x18] sm:$0xf]
      %v269 = vld [vmem:[%s1 + $0x1c] sm:$0xf]
      %v270 = vld [vmem:[%s1 + $0x20] sm:$0xf]
      %v271 = vld [vmem:[%s1 + $0x24] sm:$0xf]
      %v272 = vld [vmem:[%s1 + $0x28] sm:$0xf]
      %v273 = vld [vmem:[%s1 + $0x2c] sm:$0xf]
      %v274 = vld [vmem:[%s1 + $0x30] sm:$0xf]
      %v275 = vld [vmem:[%s1 + $0x34] sm:$0xf]
      %v276 = vld [vmem:[%s1 + $0x38] sm:$0xf]
      %v277 = vld [vmem:[%s1 + $0x3c] sm:$0xf]
      %v278 = vld [vmem:[%s1 + $0x40] sm:$0xf]
      %v279 = vld [vmem:[%s1 + $0x44] sm:$0xf]
      %v280 = vld [vmem:[%s1 + $0x48] sm:$0xf]
      %v281 = vld [vmem:[%s1 + $0x4c] sm:$0xf]
      %v282 = vld [vmem:[%s1 + $0x50] sm:$0xf]
      %v283 = vld [vmem:[%s1 + $0x54] sm:$0xf]
      %v284 = vld [vmem:[%s1 + $0x58] sm:$0xf]
      %v285 = vld [vmem:[%s1 + $0x5c] sm:$0xf]
      %v286 = vld [vmem:[%s1 + $0x60] sm:$0xf]
      %v287 = vld [vmem:[%s1 + $0x64] sm:$0xf]
      %v288 = vld [vmem:[%s1 + $0x68] sm:$0xf]
      %v289 = vld [vmem:[%s1 + $0x6c] sm:$0xf]
      %v290 = vld [vmem:[%s1 + $0x70] sm:$0xf]
      %v291 = vld [vmem:[%s1 + $0x74] sm:$0xf]
      %v292 = vld [vmem:[%s1 + $0x78] sm:$0xf]
      %v293 = vld [vmem:[%s1 + $0x7c] sm:$0xf]
      %v294 = vld [vmem:[%s1 + $0x80] sm:$0xf]
      %v295 = vld [vmem:[%s1 + $0x84] sm:$0xf]
      %v296 = vld [vmem:[%s1 + $0x88] sm:$0xf]
      %v297 = vld [vmem:[%s1 + $0x8c] sm:$0xf]
      %v298 = vld [vmem:[%s1 + $0x90] sm:$0xf]
      %v299 = vld [vmem:[%s1 + $0x94] sm:$0xf]
      %v300 = vld [vmem:[%s1 + $0x98] sm:$0xf]
      %v301 = vld [vmem:[%s1 + $0x9c] sm:$0xf]
      %v302 = vld [vmem:[%s1 + $0xa0] sm:$0xf]
      %v303 = vld [vmem:[%s1 + $0xa4] sm:$0xf]
      %v304 = vld [vmem:[%s1 + $0xa8] sm:$0xf]
      %v305 = vld [vmem:[%s1 + $0xac] sm:$0xf]
      %v306 = vld [vmem:[%s1 + $0xb0] sm:$0xf]
      %v307 = vld [vmem:[%s1 + $0xb4] sm:$0xf]
      %v308 = vld [vmem:[%s1 + $0xb8] sm:$0xf]
      %v309 = vld [vmem:[%s1 + $0xbc] sm:$0xf]
      %v310 = vld [vmem:[%s1 + $0xc0] sm:$0xf]
      %v311 = vld [vmem:[%s1 + $0xc4] sm:$0xf]
      %v312 = vld [vmem:[%s1 + $0xc8] sm:$0xf]
      %v313 = vld [vmem:[%s1 + $0xcc] sm:$0xf]
      %v314 = vld [vmem:[%s1 + $0xd0] sm:$0xf]
      %v315 = vld [vmem:[%s1 + $0xd4] sm:$0xf]
      %v316 = vld [vmem:[%s1 + $0xd8] sm:$0xf]
      %v317 = vld [vmem:[%s1 + $0xdc] sm:$0xf]
      %v318 = vld [vmem:[%s1 + $0xe0] sm:$0xf]
      %v319 = vld [vmem:[%s1 + $0xe4] sm:$0xf]
      %v320 = vld [vmem:[%s1 + $0xe8] sm:$0xf]
      %v321 = vld [vmem:[%s1 + $0xec] sm:$0xf]
      %v322 = vld [vmem:[%s1 + $0xf0] sm:$0xf]
      %v323 = vld [vmem:[%s1 + $0xf4] sm:$0xf]
      %v324 = vld [vmem:[%s1 + $0xf8] sm:$0xf]
      %v325 = vld [vmem:[%s1 + $0xfc] sm:$0xf]
      %v326 = vld [vmem:[%s2] sm:$0x1]
      %v328 = vperm.slane %v326, 0
      %v338 = vunpack.c.l.b16 %v254
      %v339 = vunpack.c.h.b16 %v254
      %v340 = vunpack.c.l.b16 %v255
      %v341 = vunpack.c.h.b16 %v255
      %v342 = vunpack.c.l.b16 %v256
      %v343 = vunpack.c.h.b16 %v256
      %v344 = vunpack.c.l.b16 %v257
      %v345 = vunpack.c.h.b16 %v257
      %v346 = vunpack.c.l.b16 %v258
      %v347 = vunpack.c.h.b16 %v258
      %v348 = vunpack.c.l.b16 %v259
      %v349 = vunpack.c.h.b16 %v259
      %v350 = vunpack.c.l.b16 %v260
      %v351 = vunpack.c.h.b16 %v260
      %v352 = vunpack.c.l.b16 %v261
      %v353 = vunpack.c.h.b16 %v261
      %v354 = vpack.c.b16 %v342, %v338
      %v355 = vpack.c.b16 %v343, %v339
      %v356 = vpack.c.b16 %v344, %v340
      %v357 = vpack.c.b16 %v345, %v341
      %v358 = vpack.c.b16 %v350, %v346
      %v359 = vpack.c.b16 %v351, %v347
      %v360 = vpack.c.b16 %v352, %v348
      %v361 = vpack.c.b16 %v353, %v349
      %v434 = vunpack.c.l.b16 %v262
      %v435 = vunpack.c.l.b16 %v263
      %v436 = vunpack.c.l.b16 %v264
      %v437 = vunpack.c.l.b16 %v265
      %v438 = vunpack.c.l.b16 %v266
      %v439 = vunpack.c.l.b16 %v267
      %v440 = vunpack.c.l.b16 %v268
      %v441 = vunpack.c.l.b16 %v269
      %v442 = vunpack.c.l.b16 %v270
      %v443 = vunpack.c.l.b16 %v271
      %v444 = vunpack.c.l.b16 %v272
      %v445 = vunpack.c.l.b16 %v273
      %v446 = vunpack.c.l.b16 %v274
      %v447 = vunpack.c.l.b16 %v275
      %v448 = vunpack.c.l.b16 %v276
      %v449 = vunpack.c.l.b16 %v277
      %v450 = vunpack.c.l.b16 %v278
      %v451 = vunpack.c.l.b16 %v279
      %v452 = vunpack.c.l.b16 %v280
      %v453 = vunpack.c.l.b16 %v281
      %v454 = vunpack.c.l.b16 %v282
      %v455 = vunpack.c.l.b16 %v283
      %v456 = vunpack.c.l.b16 %v284
      %v457 = vunpack.c.l.b16 %v285
      %v458 = vunpack.c.l.b16 %v286
      %v459 = vunpack.c.l.b16 %v287
      %v460 = vunpack.c.l.b16 %v288
      %v461 = vunpack.c.l.b16 %v289
      %v462 = vunpack.c.l.b16 %v290
      %v463 = vunpack.c.l.b16 %v291
      %v464 = vunpack.c.l.b16 %v292
      %v465 = vunpack.c.l.b16 %v293
      %v466 = vunpack.c.l.b16 %v294
      %v467 = vunpack.c.l.b16 %v295
      %v468 = vunpack.c.l.b16 %v296
      %v469 = vunpack.c.l.b16 %v297
      %v470 = vunpack.c.l.b16 %v298
      %v471 = vunpack.c.l.b16 %v299
      %v472 = vunpack.c.l.b16 %v300
      %v473 = vunpack.c.l.b16 %v301
      %v474 = vunpack.c.l.b16 %v302
      %v475 = vunpack.c.l.b16 %v303
      %v476 = vunpack.c.l.b16 %v304
      %v477 = vunpack.c.l.b16 %v305
      %v478 = vunpack.c.l.b16 %v306
      %v479 = vunpack.c.l.b16 %v307
      %v480 = vunpack.c.l.b16 %v308
      %v481 = vunpack.c.l.b16 %v309
      %v482 = vunpack.c.l.b16 %v310
      %v483 = vunpack.c.l.b16 %v311
      %v484 = vunpack.c.l.b16 %v312
      %v485 = vunpack.c.l.b16 %v313
      %v486 = vunpack.c.l.b16 %v314
      %v487 = vunpack.c.l.b16 %v315
      %v488 = vunpack.c.l.b16 %v316
      %v489 = vunpack.c.l.b16 %v317
      %v490 = vunpack.c.l.b16 %v318
      %v491 = vunpack.c.l.b16 %v319
      %v492 = vunpack.c.l.b16 %v320
      %v493 = vunpack.c.l.b16 %v321
      %v494 = vunpack.c.l.b16 %v322
      %v495 = vunpack.c.l.b16 %v323
      %v496 = vunpack.c.l.b16 %v324
      %v497 = vunpack.c.l.b16 %v325
      %v498 = vpack.c.b16 %v435, %v434
      %v499 = vpack.c.b16 %v437, %v436
      %v500 = vpack.c.b16 %v439, %v438
      %v501 = vpack.c.b16 %v441, %v440
      %v502 = vpack.c.b16 %v443, %v442
      %v503 = vpack.c.b16 %v445, %v444
      %v504 = vpack.c.b16 %v447, %v446
      %v505 = vpack.c.b16 %v449, %v448
      %v506 = vpack.c.b16 %v451, %v450
      %v507 = vpack.c.b16 %v453, %v452
      %v508 = vpack.c.b16 %v455, %v454
      %v509 = vpack.c.b16 %v457, %v456
      %v510 = vpack.c.b16 %v459, %v458
      %v511 = vpack.c.b16 %v461, %v460
      %v512 = vpack.c.b16 %v463, %v462
      %v513 = vpack.c.b16 %v465, %v464
      %v514 = vpack.c.b16 %v467, %v466
      %v515 = vpack.c.b16 %v469, %v468
      %v516 = vpack.c.b16 %v471, %v470
      %v517 = vpack.c.b16 %v473, %v472
      %v518 = vpack.c.b16 %v475, %v474
      %v519 = vpack.c.b16 %v477, %v476
      %v520 = vpack.c.b16 %v479, %v478
      %v521 = vpack.c.b16 %v481, %v480
      %v522 = vpack.c.b16 %v483, %v482
      %v523 = vpack.c.b16 %v485, %v484
      %v524 = vpack.c.b16 %v487, %v486
      %v525 = vpack.c.b16 %v489, %v488
      %v526 = vpack.c.b16 %v491, %v490
      %v527 = vpack.c.b16 %v493, %v492
      %v528 = vpack.c.b16 %v495, %v494
      %v529 = vpack.c.b16 %v497, %v496
      %562 = vmatpush.bf16.msra.mxu0 %v505
      %563 = vmatpush.bf16.msra.mxu0 %v504
      %564 = vmatpush.bf16.msra.mxu0 %v503
      %565 = vmatpush.bf16.msra.mxu0 %v502
      %566 = vmatpush.bf16.msra.mxu0 %v501
      %567 = vmatpush.bf16.msra.mxu0 %v500
      %568 = vmatpush.bf16.msra.mxu0 %v499
      %569 = vmatpush.bf16.msra.mxu0 %v498
      %570 = vmatmul.bf16.gmra.mxu0 %v354
      %v571 = vpop.f32.mrf.mxu0
      %v572 = vadd.f32 %v328, %v571
      %v573 = vpop.f32.mrf.mxu0
      %v574 = vadd.f32 %v328, %v573
      %575 = vmatmul.bf16.gmra.mxu0 %v358
      %v576 = vpop.f32.mrf.mxu0
      %v577 = vadd.f32 %v328, %v576
      %v578 = vpop.f32.mrf.mxu0
      %v579 = vadd.f32 %v328, %v578
      %580 = vdwg.mxu0
      %581 = vmatpush.bf16.msra.mxu0 %v513
      %582 = vmatpush.bf16.msra.mxu0 %v512
      %583 = vmatpush.bf16.msra.mxu0 %v511
      %584 = vmatpush.bf16.msra.mxu0 %v510
      %585 = vmatpush.bf16.msra.mxu0 %v509
      %586 = vmatpush.bf16.msra.mxu0 %v508
      %587 = vmatpush.bf16.msra.mxu0 %v507
      %588 = vmatpush.bf16.msra.mxu0 %v506
      %589 = vmatmul.bf16.gmra.mxu0 %v355
      %v590 = vpop.f32.mrf.mxu0
      %v591 = vadd.f32 %v572, %v590
      %v592 = vpop.f32.mrf.mxu0
      %v593 = vadd.f32 %v574, %v592
      %594 = vmatmul.bf16.gmra.mxu0 %v359
      %v595 = vpop.f32.mrf.mxu0
      %v596 = vadd.f32 %v577, %v595
      %v597 = vpop.f32.mrf.mxu0
      %v598 = vadd.f32 %v579, %v597
      %599 = vdwg.mxu0
      %600 = vmatpush.bf16.msra.mxu0 %v521
      %601 = vmatpush.bf16.msra.mxu0 %v520
      %602 = vmatpush.bf16.msra.mxu0 %v519
      %603 = vmatpush.bf16.msra.mxu0 %v518
      %604 = vmatpush.bf16.msra.mxu0 %v517
      %605 = vmatpush.bf16.msra.mxu0 %v516
      %606 = vmatpush.bf16.msra.mxu0 %v515
      %607 = vmatpush.bf16.msra.mxu0 %v514
      %608 = vmatmul.bf16.gmra.mxu0 %v356
      %v609 = vpop.f32.mrf.mxu0
      %v610 = vadd.f32 %v591, %v609
      %v611 = vpop.f32.mrf.mxu0
      %v612 = vadd.f32 %v593, %v611
      %613 = vmatmul.bf16.gmra.mxu0 %v360
      %v614 = vpop.f32.mrf.mxu0
      %v615 = vadd.f32 %v596, %v614
      %v616 = vpop.f32.mrf.mxu0
      %v617 = vadd.f32 %v598, %v616
      %618 = vdwg.mxu0
      %619 = vmatpush.bf16.msra.mxu0 %v529
      %620 = vmatpush.bf16.msra.mxu0 %v528
      %621 = vmatpush.bf16.msra.mxu0 %v527
      %622 = vmatpush.bf16.msra.mxu0 %v526
      %623 = vmatpush.bf16.msra.mxu0 %v525
      %624 = vmatpush.bf16.msra.mxu0 %v524
      %625 = vmatpush.bf16.msra.mxu0 %v523
      %626 = vmatpush.bf16.msra.mxu0 %v522
      %627 = vmatmul.bf16.gmra.mxu0 %v357
      %v628 = vpop.f32.mrf.mxu0
      %v629 = vadd.f32 %v610, %v628
      %v630 = vpop.f32.mrf.mxu0
      %v631 = vadd.f32 %v612, %v630
      %632 = vmatmul.bf16.gmra.mxu0 %v361
      %v633 = vpop.f32.mrf.mxu0
      %v634 = vadd.f32 %v615, %v633
      %v635 = vpop.f32.mrf.mxu0
      %v636 = vadd.f32 %v617, %v635
      %637 = vdwg.mxu0
      %s638 = sld [smem:[#allocation2]]
      %vm639 = vcmp.ge.f32.partialorder %v629, 0.0
      %vm640 = vcmp.ge.f32.partialorder %v631, 0.0
      %vm641 = vcmp.ge.f32.partialorder %v634, 0.0
      %vm642 = vcmp.ge.f32.partialorder %v636, 0.0
      %v643 = vstv %s638
      %v644 = vmul.f32 %v643, %v629
      %v645 = vmul.f32 %v643, %v631
      %v646 = vmul.f32 %v643, %v634
      %v647 = vmul.f32 %v643, %v636
      %v648 = vsel %vm639, %v629, %v644
      %v649 = vsel %vm640, %v631, %v645
      %v650 = vsel %vm641, %v634, %v646
      %v651 = vsel %vm642, %v636, %v647
      %v652 = vld [vmem:[%s246] sm:$0xf]
      %v653 = vld [vmem:[%s246 + $0x4] sm:$0xf]
      %v654 = vld [vmem:[%s246 + $0x8] sm:$0xf]
      %v655 = vld [vmem:[%s246 + $0xc] sm:$0xf]
      %v656 = vunpack.c.l.bf16 %v652
      %v657 = vunpack.c.l.bf16 %v653
      %v658 = vunpack.c.l.bf16 %v654
      %v659 = vunpack.c.l.bf16 %v655
      %v660 = vsub.f32 %v648, %v656
      %v661 = vsub.f32 %v649, %v657
      %v662 = vsub.f32 %v650, %v658
      %v663 = vsub.f32 %v651, %v659
      %v664 = vpack.c.bf16 %v660, %v660
      %v665 = vpack.c.bf16 %v661, %v661
      %v666 = vpack.c.bf16 %v662, %v662
      %v667 = vpack.c.bf16 %v663, %v663
      %668 = vst [vmem:[%s252] sm:$0xf] %v664
      %669 = vst [vmem:[%s252 + $0x4] sm:$0xf] %v665
      %670 = vst [vmem:[%s252 + $0x8] sm:$0xf] %v666
      %671 = vst [vmem:[%s252 + $0xc] sm:$0xf] %v667
      %s672 = smul.u32 4, %s17
      %p673 = scmp.lt.s32.totalorder %s672, 15
      %s674 = scalar_select %p673, %s672, 15
      %s675 = smul.addr %s674, 4
      %s676 = scalar_lea.vmem %s5, %s675
      // Predicated region
      $region41: #{sisr_block.19} parent=39 // pred_check
        %p677 = pneg %p150
      $region42: #{sisr_block.19} parent=39 // pred_check_branch
        %679 = sbr.rel (%p677) target = $region44
      $region43: #{sisr_block.19} parent=39 // pred_region
        %s680 = smul.u32 4, %s17
      $region44: #{sisr_block.19} parent=39 // pred_fallthru
        _
    $region40: #{sisr_block.19} parent=5 // pred_fallthru
      _
    %p681 = scmp.le.s32.totalorder 2, %s12
    // Predicated region
    $region45: #{sisr_block.19} parent=5 // pred_check
      %p682 = pneg %p681
    $region46: #{sisr_block.19} parent=5 // pred_check_branch
      %684 = sbr.rel (%p682) target = $region48
    $region47: #{sisr_block.19} parent=5 // pred_region
      %s685 = ssub.s32 %s12, 2
      // Predicated region
      $region49: #{sisr_block.19} parent=47 // pred_check
        %p686 = pneg %p156
      $region50: #{sisr_block.19} parent=47 // pred_check_branch
        %688 = sbr.rel (%p686) target = $region52
      $region51: #{sisr_block.19} parent=47 // pred_region
        %s689 = smul.u32 4, %s18
        %p690 = scmp.lt.s32.totalorder %s689, 15
        %s691 = scalar_select %p690, %s689, 15
        %s692 = smul.addr %s691, 4
        %s693 = scalar_lea.vmem %s5, %s692
      $region52: #{sisr_block.19} parent=47 // pred_fallthru
        _
    $region48: #{sisr_block.19} parent=5 // pred_fallthru
      _
  $region6: #{sisr_block.19} parent=0 // loop_footer
    %s16 = sadd.s32 1, %s12
  $region7: #{sisr_block.19} parent=0 // loop_footer_branch
    %11 = sbr.rel target = $region3
  $region8: #{sisr_block.19} parent=0 // loop_exit
    _

// kernel: sisr_block.20
$region0: #{sisr_block.20}
  #allocation0 [shape = 'u32[]', space=smem, size = 0x4, offset = 0x4, fixed_abs, tag = 'smem constant byte address 0x4 - core index']
  #allocation1 [shape = 'u32[72,128]{1,0:T(1,128)}', space=vmem, size = 0x9000, scoped, tag = 'internal scratch']
  #allocation2 [shape = 'f32[1,1]{1,0:T(1,128)S(6)}', space=smem, size = 0x200, scoped, tag = 'scoped memory for sisr_block.20']
  %s0 = inlined_call_operand.vmem [shape: bf16[128,1152], index: 0, kind: input, shape index: {}]
  %s1 = inlined_call_operand.vmem [shape: bf16[1152,128], index: 1, kind: input, shape index: {}]
  %s2 = inlined_call_operand.vmem [shape: f32[1,128], index: 2, kind: input, shape index: {}]
  %s3 = inlined_call_operand.<no memory space> [shape: f32[1,1], index: 3, kind: input, shape index: {}]
  %s4 = inlined_call_operand.vmem [shape: bf16[128,128], index: 4, kind: input, shape index: {}]
  %s5 = inlined_call_operand.vmem [shape: bf16[128,128], index: 5, kind: output, shape index: {}]
  %s6 = sld [smem:[#allocation0]]
  $region53: #{sisr_block.20} parent=0
    _
  %s8 = ssub.s32 1, %s6
  %s9 = scalar_select 0, %s8, %s6
  %10 = sst [smem:[#allocation2]] %s3
  loop: start=0, step=1, limit=6
  $region2: #{sisr_block.20} parent=0 // loop_pre_header
    _
  $region3: #{sisr_block.20} parent=0 // loop_header
    %s12 = sphi 0, %s16
    %p13 = scmp.ge.s32.totalorder %s12, 6
    %s22 = sphi 0, %s24
    %s25 = sphi 0, %s22
    %s26 = sphi 0, %s25
    %s42 = sphi 0, %s26
    %s46 = sphi 0, %s46
    %s48 = sphi 0, %s46
    %s49 = sphi 0, %s48
    %s63 = sphi 0, %s49
    %s67 = sphi 0, %s67
    %s69 = sphi 0, %s67
    %s70 = sphi 0, %s69
    %s84 = sphi 0, %s70
    %s88 = sphi 0, %s88
    %s90 = sphi 0, %s88
    %s91 = sphi 0, %s90
    %s105 = sphi 0, %s91
    %s111 = sphi 0, %s113
    %s114 = sphi 0, %s111
    %s115 = sphi 0, %s114
    %s131 = sphi 0, %s115
    %s137 = sphi 0, %s139
    %s140 = sphi 0, %s137
    %s141 = sphi 0, %s140
    %s157 = sphi 0, %s141
  $region4: #{sisr_block.20} parent=0 // loop_header_branch
    %15 = sbr.rel (%p13) target = $region8
  $region5: #{sisr_block.20} parent=0 // loop_body
    %s17 = ssub.s32 %s12, 1
    %s18 = ssub.s32 %s12, 2
    %s19 = sadd.s32 %s12, 1
    %s20 = ssub.s32 %s12, %s19
    %p21 = scmp.eq.s32.totalorder %s20, 0
    %s23 = sadd.s32 %s22, 1
    %s24 = scalar_select %p21, %s22, %s23
    %p27 = pneg %p21
    %p28 = scmp.eq.s32.totalorder %s12, 3
    %p29 = por %p27, %p28
    %p30 = scmp.ne.s32.totalorder %s22, %s25
    %p31 = scmp.eq.s32.totalorder %s12, 0
    %p32 = por %p30, %p31
    %p33 = scmp.ne.s32.totalorder %s22, %s25
    %p34 = scmp.eq.s32.totalorder %s17, 3
    %p35 = por %p33, %p34
    %p36 = scmp.ne.s32.totalorder %s25, %s26
    %p37 = scmp.eq.s32.totalorder %s17, 0
    %p38 = por %p36, %p37
    %p39 = scmp.ne.s32.totalorder %s25, %s26
    %p40 = scmp.eq.s32.totalorder %s18, 3
    %p41 = por %p39, %p40
    %p43 = scmp.ne.s32.totalorder %s26, %s42
    %p44 = scmp.eq.s32.totalorder %s18, 0
    %p45 = por %p43, %p44
    %s47 = sadd.s32 %s46, 1
    %p50 = scmp.eq.s32.totalorder %s12, 3
    %p51 = scmp.ne.s32.totalorder %s46, %s48
    %p52 = scmp.eq.s32.totalorder %s12, 0
    %p53 = por %p51, %p52
    %p54 = scmp.ne.s32.totalorder %s46, %s48
    %p55 = scmp.eq.s32.totalorder %s17, 3
    %p56 = por %p54, %p55
    %p57 = scmp.ne.s32.totalorder %s48, %s49
    %p58 = scmp.eq.s32.totalorder %s17, 0
    %p59 = por %p57, %p58
    %p60 = scmp.ne.s32.totalorder %s48, %s49
    %p61 = scmp.eq.s32.totalorder %s18, 3
    %p62 = por %p60, %p61
    %p64 = scmp.ne.s32.totalorder %s49, %s63
    %p65 = scmp.eq.s32.totalorder %s18, 0
    %p66 = por %p64, %p65
    %s68 = sadd.s32 %s67, 1
    %p71 = scmp.eq.s32.totalorder %s12, 3
    %p72 = scmp.ne.s32.totalorder %s67, %s69
    %p73 = scmp.eq.s32.totalorder %s12, 0
    %p74 = por %p72, %p73
    %p75 = scmp.ne.s32.totalorder %s67, %s69
    %p76 = scmp.eq.s32.totalorder %s17, 3
    %p77 = por %p75, %p76
    %p78 = scmp.ne.s32.totalorder %s69, %s70
    %p79 = scmp.eq.s32.totalorder %s17, 0
    %p80 = por %p78, %p79
    %p81 = scmp.ne.s32.totalorder %s69, %s70
    %p82 = scmp.eq.s32.totalorder %s18, 3
    %p83 = por %p81, %p82
    %p85 = scmp.ne.s32.totalorder %s70, %s84
    %p86 = scmp.eq.s32.totalorder %s18, 0
    %p87 = por %p85, %p86
    %s89 = sadd.s32 %s88, 1
    %p92 = scmp.eq.s32.totalorder %s12, 3
    %p93 = scmp.ne.s32.totalorder %s88, %s90
    %p94 = scmp.eq.s32.totalorder %s12, 0
    %p95 = por %p93, %p94
    %p96 = scmp.ne.s32.totalorder %s88, %s90
    %p97 = scmp.eq.s32.totalorder %s17, 3
    %p98 = por %p96, %p97
    %p99 = scmp.ne.s32.totalorder %s90, %s91
    %p100 = scmp.eq.s32.totalorder %s17, 0
    %p101 = por %p99, %p100
    %p102 = scmp.ne.s32.totalorder %s90, %s91
    %p103 = scmp.eq.s32.totalorder %s18, 3
    %p104 = por %p102, %p103
    %p106 = scmp.ne.s32.totalorder %s91, %s105
    %p107 = scmp.eq.s32.totalorder %s18, 0
    %p108 = por %p106, %p107
    %s109 = ssub.s32 %s12, %s19
    %p110 = scmp.eq.s32.totalorder %s109, 0
    %s112 = sadd.s32 %s111, 1
    %s113 = scalar_select %p110, %s111, %s112
    %p116 = pneg %p110
    %p117 = scmp.eq.s32.totalorder %s12, 3
    %p118 = por %p116, %p117
    %p119 = scmp.ne.s32.totalorder %s111, %s114
    %p120 = scmp.eq.s32.totalorder %s12, 0
    %p121 = por %p119, %p120
    %p122 = scmp.ne.s32.totalorder %s111, %s114
    %p123 = scmp.eq.s32.totalorder %s17, 3
    %p124 = por %p122, %p123
    %p125 = scmp.ne.s32.totalorder %s114, %s115
    %p126 = scmp.eq.s32.totalorder %s17, 0
    %p127 = por %p125, %p126
    %p128 = scmp.ne.s32.totalorder %s114, %s115
    %p129 = scmp.eq.s32.totalorder %s18, 3
    %p130 = por %p128, %p129
    %p132 = scmp.ne.s32.totalorder %s115, %s131
    %p133 = scmp.eq.s32.totalorder %s18, 0
    %p134 = por %p132, %p133
    %s135 = ssub.s32 %s12, %s19
    %p136 = scmp.eq.s32.totalorder %s135, 0
    %s138 = sadd.s32 %s137, 1
    %s139 = scalar_select %p136, %s137, %s138
    %p142 = pneg %p136
    %p143 = scmp.eq.s32.totalorder %s12, 3
    %p144 = por %p142, %p143
    %p145 = scmp.ne.s32.totalorder %s137, %s140
    %p146 = scmp.eq.s32.totalorder %s12, 0
    %p147 = por %p145, %p146
    %p148 = scmp.ne.s32.totalorder %s137, %s140
    %p149 = scmp.eq.s32.totalorder %s17, 3
    %p150 = por %p148, %p149
    %p151 = scmp.ne.s32.totalorder %s140, %s141
    %p152 = scmp.eq.s32.totalorder %s17, 0
    %p153 = por %p151, %p152
    %p154 = scmp.ne.s32.totalorder %s140, %s141
    %p155 = scmp.eq.s32.totalorder %s18, 3
    %p156 = por %p154, %p155
    %p158 = scmp.ne.s32.totalorder %s141, %s157
    %p159 = scmp.eq.s32.totalorder %s18, 0
    %p160 = por %p158, %p159
    %p161 = scmp.le.s32.totalorder 1, %s12
    %p162 = scmp.lt.s32.totalorder %s12, 5
    %p163 = pnand %p161, %p162
    %p164 = pneg %p163
    // Predicated region
    $region9: #{sisr_block.20} parent=5 // pred_check
      _
    $region10: #{sisr_block.20} parent=5 // pred_check_branch
      %166 = sbr.rel (%p163) target = $region12
    $region11: #{sisr_block.20} parent=5 // pred_region
      %s167 = ssub.s32 %s12, 1
      // Predicated region
      $region13: #{sisr_block.20} parent=11 // pred_check
        %p168 = pneg %p59
      $region14: #{sisr_block.20} parent=11 // pred_check_branch
        %170 = sbr.rel (%p168) target = $region16
      $region15: #{sisr_block.20} parent=11 // pred_region
        _
      $region16: #{sisr_block.20} parent=11 // pred_fallthru
        _
      // Predicated region
      $region17: #{sisr_block.20} parent=11 // pred_check
        %p171 = pneg %p80
      $region18: #{sisr_block.20} parent=11 // pred_check_branch
        %173 = sbr.rel (%p171) target = $region20
      $region19: #{sisr_block.20} parent=11 // pred_region
        _
      $region20: #{sisr_block.20} parent=11 // pred_fallthru
        _
      // Predicated region
      $region21: #{sisr_block.20} parent=11 // pred_check
        %p174 = pneg %p101
      $region22: #{sisr_block.20} parent=11 // pred_check_branch
        %176 = sbr.rel (%p174) target = $region24
      $region23: #{sisr_block.20} parent=11 // pred_region
        _
      $region24: #{sisr_block.20} parent=11 // pred_fallthru
        _
    $region12: #{sisr_block.20} parent=5 // pred_fallthru
      _
    %p177 = scmp.lt.s32.totalorder %s12, 4
    // Predicated region
    $region25: #{sisr_block.20} parent=5 // pred_check
      %p178 = pneg %p177
    $region26: #{sisr_block.20} parent=5 // pred_check_branch
      %180 = sbr.rel (%p178) target = $region28
    $region27: #{sisr_block.20} parent=5 // pred_region
      // Predicated region
      $region29: #{sisr_block.20} parent=27 // pred_check
        %p181 = pneg %p32
      $region30: #{sisr_block.20} parent=27 // pred_check_branch
        %183 = sbr.rel (%p181) target = $region32
      $region31: #{sisr_block.20} parent=27 // pred_region
        %s184 = smul.u32 4, %s12
        %p185 = scmp.lt.s32.totalorder %s184, 15
        %s186 = scalar_select %p185, %s184, 15
        %s187 = smul.addr %s186, 9
        %s188 = smul.addr %s187, 4
        %s189 = scalar_lea.vmem %s0, %s188
        %s190 = smul.u32 4, %s12
      $region32: #{sisr_block.20} parent=27 // pred_fallthru
        _
      // Predicated region
      $region33: #{sisr_block.20} parent=27 // pred_check
        %p191 = pneg %p121
      $region34: #{sisr_block.20} parent=27 // pred_check_branch
        %193 = sbr.rel (%p191) target = $region36
      $region35: #{sisr_block.20} parent=27 // pred_region
        %s194 = smul.u32 4, %s12
        %p195 = scmp.lt.s32.totalorder %s194, 15
        %s196 = scalar_select %p195, %s194, 15
        %s197 = smul.addr %s196, 4
        %s198 = scalar_lea.vmem %s4, %s197
        %s199 = smul.u32 4, %s12
      $region36: #{sisr_block.20} parent=27 // pred_fallthru
        _
    $region28: #{sisr_block.20} parent=5 // pred_fallthru
      _
    %p200 = scmp.le.s32.totalorder 1, %s12
    %p201 = scmp.lt.s32.totalorder %s12, 5
    %p202 = pnand %p200, %p201
    %p203 = pneg %p202
    // Predicated region
    $region37: #{sisr_block.20} parent=5 // pred_check
      _
    $region38: #{sisr_block.20} parent=5 // pred_check_branch
      %205 = sbr.rel (%p202) target = $region40
    $region39: #{sisr_block.20} parent=5 // pred_region
      %s206 = ssub.s32 %s12, 1
      %s207 = smul.u32 4, %s17
      %p208 = scmp.lt.s32.totalorder %s207, 15
      %s209 = scalar_select %p208, %s207, 15
      %s210 = smul.addr %s209, 9
      %s211 = smul.addr %s210, 4
      %s212 = scalar_lea.vmem %s0, %s211
      %p213 = pneg %p38
      %p214 = pneg %p35
      %p215 = pneg %p59
      %p216 = pneg %p56
      %p217 = pneg %p80
      %p218 = pneg %p77
      %p219 = pneg %p101
      %p220 = pneg %p98
      %s221 = smul.u32 4, %s17
      %p222 = scmp.lt.s32.totalorder %s221, 15
      %s223 = scalar_select %p222, %s221, 15
      %s224 = smul.addr %s223, 4
      %s225 = scalar_lea.vmem %s4, %s224
      %p226 = pneg %p127
      %p227 = pneg %p124
      %p228 = pneg %p153
      %p229 = pneg %p150
      %s230 = smul.u32 4, %s17
      %p231 = scmp.lt.s32.totalorder %s230, 15
      %s232 = scalar_select %p231, %s230, 15
      %s233 = smul.addr %s232, 4
      %s234 = scalar_lea.vmem %s5, %s233
      %s235 = smul.u32 4, %s17
      %p236 = scmp.lt.s32.totalorder %s235, 15
      %s237 = scalar_select %p236, %s235, 15
      %s238 = smul.addr %s237, 9
      %s239 = smul.addr %s238, 4
      %s240 = scalar_lea.vmem %s0, %s239
      %s241 = smul.u32 4, %s17
      %s242 = smul.u32 4, %s17
      %p243 = scmp.lt.s32.totalorder %s242, 15
      %s244 = scalar_select %p243, %s242, 15
      %s245 = smul.addr %s244, 4
      %s246 = scalar_lea.vmem %s4, %s245
      %s247 = smul.u32 4, %s17
      %s248 = smul.u32 4, %s17
      %p249 = scmp.lt.s32.totalorder %s248, 15
      %s250 = scalar_select %p249, %s248, 15
      %s251 = smul.addr %s250, 4
      %s252 = scalar_lea.vmem %s5, %s251
      %s253 = smul.u32 4, %s17
      %v254 = vld [vmem:[%s240] sm:$0xff]
      %v255 = vld [vmem:[%s240 + $0x8] sm:$0xff]
      %v256 = vld [vmem:[%s240 + $0x10] sm:$0xff]
      %v257 = vld [vmem:[%s240 + $0x18] sm:$0xff]
      %v258 = vld [vmem:[%s240 + $0x20] sm:$0xf]
      %v259 = vld [vmem:[%s240 + $0x24] sm:$0xff]
      %v260 = vld [vmem:[%s240 + $0x2c] sm:$0xff]
      %v261 = vld [vmem:[%s240 + $0x34] sm:$0xff]
      %v262 = vld [vmem:[%s240 + $0x3c] sm:$0xff]
      %v263 = vld [vmem:[%s240 + $0x44] sm:$0xf]
      %v264 = vld [vmem:[%s240 + $0x48] sm:$0xff]
      %v265 = vld [vmem:[%s240 + $0x50] sm:$0xff]
      %v266 = vld [vmem:[%s240 + $0x58] sm:$0xff]
      %v267 = vld [vmem:[%s240 + $0x60] sm:$0xff]
      %v268 = vld [vmem:[%s240 + $0x68] sm:$0xf]
      %v269 = vld [vmem:[%s240 + $0x6c] sm:$0xff]
      %v270 = vld [vmem:[%s240 + $0x74] sm:$0xff]
      %v271 = vld [vmem:[%s240 + $0x7c] sm:$0xff]
      %v272 = vld [vmem:[%s240 + $0x84] sm:$0xff]
      %v273 = vld [vmem:[%s240 + $0x8c] sm:$0xf]
      %v274 = vld [vmem:[%s1] sm:$0xf]
      %v275 = vld [vmem:[%s1 + $0x4] sm:$0xf]
      %v276 = vld [vmem:[%s1 + $0x8] sm:$0xf]
      %v277 = vld [vmem:[%s1 + $0xc] sm:$0xf]
      %v278 = vld [vmem:[%s1 + $0x10] sm:$0xf]
      %v279 = vld [vmem:[%s1 + $0x14] sm:$0xf]
      %v280 = vld [vmem:[%s1 + $0x18] sm:$0xf]
      %v281 = vld [vmem:[%s1 + $0x1c] sm:$0xf]
      %v282 = vld [vmem:[%s1 + $0x20] sm:$0xf]
      %v283 = vld [vmem:[%s1 + $0x24] sm:$0xf]
      %v284 = vld [vmem:[%s1 + $0x28] sm:$0xf]
      %v285 = vld [vmem:[%s1 + $0x2c] sm:$0xf]
      %v286 = vld [vmem:[%s1 + $0x30] sm:$0xf]
      %v287 = vld [vmem:[%s1 + $0x34] sm:$0xf]
      %v288 = vld [vmem:[%s1 + $0x38] sm:$0xf]
      %v289 = vld [vmem:[%s1 + $0x3c] sm:$0xf]
      %v290 = vld [vmem:[%s1 + $0x40] sm:$0xf]
      %v291 = vld [vmem:[%s1 + $0x44] sm:$0xf]
      %v292 = vld [vmem:[%s1 + $0x48] sm:$0xf]
      %v293 = vld [vmem:[%s1 + $0x4c] sm:$0xf]
      %v294 = vld [vmem:[%s1 + $0x50] sm:$0xf]
      %v295 = vld [vmem:[%s1 + $0x54] sm:$0xf]
      %v296 = vld [vmem:[%s1 + $0x58] sm:$0xf]
      %v297 = vld [vmem:[%s1 + $0x5c] sm:$0xf]
      %v298 = vld [vmem:[%s1 + $0x60] sm:$0xf]
      %v299 = vld [vmem:[%s1 + $0x64] sm:$0xf]
      %v300 = vld [vmem:[%s1 + $0x68] sm:$0xf]
      %v301 = vld [vmem:[%s1 + $0x6c] sm:$0xf]
      %v302 = vld [vmem:[%s1 + $0x70] sm:$0xf]
      %v303 = vld [vmem:[%s1 + $0x74] sm:$0xf]
      %v304 = vld [vmem:[%s1 + $0x78] sm:$0xf]
      %v305 = vld [vmem:[%s1 + $0x7c] sm:$0xf]
      %v306 = vld [vmem:[%s1 + $0x80] sm:$0xf]
      %v307 = vld [vmem:[%s1 + $0x84] sm:$0xf]
      %v308 = vld [vmem:[%s1 + $0x88] sm:$0xf]
      %v309 = vld [vmem:[%s1 + $0x8c] sm:$0xf]
      %v310 = vld [vmem:[%s1 + $0x90] sm:$0xf]
      %v311 = vld [vmem:[%s1 + $0x94] sm:$0xf]
      %v312 = vld [vmem:[%s1 + $0x98] sm:$0xf]
      %v313 = vld [vmem:[%s1 + $0x9c] sm:$0xf]
      %v314 = vld [vmem:[%s1 + $0xa0] sm:$0xf]
      %v315 = vld [vmem:[%s1 + $0xa4] sm:$0xf]
      %v316 = vld [vmem:[%s1 + $0xa8] sm:$0xf]
      %v317 = vld [vmem:[%s1 + $0xac] sm:$0xf]
      %v318 = vld [vmem:[%s1 + $0xb0] sm:$0xf]
      %v319 = vld [vmem:[%s1 + $0xb4] sm:$0xf]
      %v320 = vld [vmem:[%s1 + $0xb8] sm:$0xf]
      %v321 = vld [vmem:[%s1 + $0xbc] sm:$0xf]
      %v322 = vld [vmem:[%s1 + $0xc0] sm:$0xf]
      %v323 = vld [vmem:[%s1 + $0xc4] sm:$0xf]
      %v324 = vld [vmem:[%s1 + $0xc8] sm:$0xf]
      %v325 = vld [vmem:[%s1 + $0xcc] sm:$0xf]
      %v326 = vld [vmem:[%s1 + $0xd0] sm:$0xf]
      %v327 = vld [vmem:[%s1 + $0xd4] sm:$0xf]
      %v328 = vld [vmem:[%s1 + $0xd8] sm:$0xf]
      %v329 = vld [vmem:[%s1 + $0xdc] sm:$0xf]
      %v330 = vld [vmem:[%s1 + $0xe0] sm:$0xf]
      %v331 = vld [vmem:[%s1 + $0xe4] sm:$0xf]
      %v332 = vld [vmem:[%s1 + $0xe8] sm:$0xf]
      %v333 = vld [vmem:[%s1 + $0xec] sm:$0xf]
      %v334 = vld [vmem:[%s1 + $0xf0] sm:$0xf]
      %v335 = vld [vmem:[%s1 + $0xf4] sm:$0xf]
      %v336 = vld [vmem:[%s1 + $0xf8] sm:$0xf]
      %v337 = vld [vmem:[%s1 + $0xfc] sm:$0xf]
      %v338 = vld [vmem:[%s1 + $0x100] sm:$0xf]
      %v339 = vld [vmem:[%s1 + $0x104] sm:$0xf]
      %v340 = vld [vmem:[%s1 + $0x108] sm:$0xf]
      %v341 = vld [vmem:[%s1 + $0x10c] sm:$0xf]
      %v342 = vld [vmem:[%s1 + $0x110] sm:$0xf]
      %v343 = vld [vmem:[%s1 + $0x114] sm:$0xf]
      %v344 = vld [vmem:[%s1 + $0x118] sm:$0xf]
      %v345 = vld [vmem:[%s1 + $0x11c] sm:$0xf]
      %v346 = vld [vmem:[%s1 + $0x120] sm:$0xf]
      %v347 = vld [vmem:[%s1 + $0x124] sm:$0xf]
      %v348 = vld [vmem:[%s1 + $0x128] sm:$0xf]
      %v349 = vld [vmem:[%s1 + $0x12c] sm:$0xf]
      %v350 = vld [vmem:[%s1 + $0x130] sm:$0xf]
      %v351 = vld [vmem:[%s1 + $0x134] sm:$0xf]
      %v352 = vld [vmem:[%s1 + $0x138] sm:$0xf]
      %v353 = vld [vmem:[%s1 + $0x13c] sm:$0xf]
      %v354 = vld [vmem:[%s1 + $0x140] sm:$0xf]
      %v355 = vld [vmem:[%s1 + $0x144] sm:$0xf]
      %v356 = vld [vmem:[%s1 + $0x148] sm:$0xf]
      %v357 = vld [vmem:[%s1 + $0x14c] sm:$0xf]
      %v358 = vld [vmem:[%s1 + $0x150] sm:$0xf]
      %v359 = vld [vmem:[%s1 + $0x154] sm:$0xf]
      %v360 = vld [vmem:[%s1 + $0x158] sm:$0xf]
      %v361 = vld [vmem:[%s1 + $0x15c] sm:$0xf]
      %v362 = vld [vmem:[%s1 + $0x160] sm:$0xf]
      %v363 = vld [vmem:[%s1 + $0x164] sm:$0xf]
      %v364 = vld [vmem:[%s1 + $0x168] sm:$0xf]
      %v365 = vld [vmem:[%s1 + $0x16c] sm:$0xf]
      %v366 = vld [vmem:[%s1 + $0x170] sm:$0xf]
      %v367 = vld [vmem:[%s1 + $0x174] sm:$0xf]
      %v368 = vld [vmem:[%s1 + $0x178] sm:$0xf]
      %v369 = vld [vmem:[%s1 + $0x17c] sm:$0xf]
      %v370 = vld [vmem:[%s1 + $0x180] sm:$0xf]
      %v371 = vld [vmem:[%s1 + $0x184] sm:$0xf]
      %v372 = vld [vmem:[%s1 + $0x188] sm:$0xf]
      %v373 = vld [vmem:[%s1 + $0x18c] sm:$0xf]
      %v374 = vld [vmem:[%s1 + $0x190] sm:$0xf]
      %v375 = vld [vmem:[%s1 + $0x194] sm:$0xf]
      %v376 = vld [vmem:[%s1 + $0x198] sm:$0xf]
      %v377 = vld [vmem:[%s1 + $0x19c] sm:$0xf]
      %v378 = vld [vmem:[%s1 + $0x1a0] sm:$0xf]
      %v379 = vld [vmem:[%s1 + $0x1a4] sm:$0xf]
      %v380 = vld [vmem:[%s1 + $0x1a8] sm:$0xf]
      %v381 = vld [vmem:[%s1 + $0x1ac] sm:$0xf]
      %v382 = vld [vmem:[%s1 + $0x1b0] sm:$0xf]
      %v383 = vld [vmem:[%s1 + $0x1b4] sm:$0xf]
      %v384 = vld [vmem:[%s1 + $0x1b8] sm:$0xf]
      %v385 = vld [vmem:[%s1 + $0x1bc] sm:$0xf]
      %v386 = vld [vmem:[%s1 + $0x1c0] sm:$0xf]
      %v387 = vld [vmem:[%s1 + $0x1c4] sm:$0xf]
      %v388 = vld [vmem:[%s1 + $0x1c8] sm:$0xf]
      %v389 = vld [vmem:[%s1 + $0x1cc] sm:$0xf]
      %v390 = vld [vmem:[%s1 + $0x1d0] sm:$0xf]
      %v391 = vld [vmem:[%s1 + $0x1d4] sm:$0xf]
      %v392 = vld [vmem:[%s1 + $0x1d8] sm:$0xf]
      %v393 = vld [vmem:[%s1 + $0x1dc] sm:$0xf]
      %v394 = vld [vmem:[%s1 + $0x1e0] sm:$0xf]
      %v395 = vld [vmem:[%s1 + $0x1e4] sm:$0xf]
      %v396 = vld [vmem:[%s1 + $0x1e8] sm:$0xf]
      %v397 = vld [vmem:[%s1 + $0x1ec] sm:$0xf]
      %v398 = vld [vmem:[%s1 + $0x1f0] sm:$0xf]
      %v399 = vld [vmem:[%s1 + $0x1f4] sm:$0xf]
      %v400 = vld [vmem:[%s1 + $0x1f8] sm:$0xf]
      %v401 = vld [vmem:[%s1 + $0x1fc] sm:$0xf]
      %v402 = vld [vmem:[%s1 + $0x200] sm:$0xf]
      %v403 = vld [vmem:[%s1 + $0x204] sm:$0xf]
      %v404 = vld [vmem:[%s1 + $0x208] sm:$0xf]
      %v405 = vld [vmem:[%s1 + $0x20c] sm:$0xf]
      %v406 = vld [vmem:[%s1 + $0x210] sm:$0xf]
      %v407 = vld [vmem:[%s1 + $0x214] sm:$0xf]
      %v408 = vld [vmem:[%s1 + $0x218] sm:$0xf]
      %v409 = vld [vmem:[%s1 + $0x21c] sm:$0xf]
      %v410 = vld [vmem:[%s1 + $0x220] sm:$0xf]
      %v411 = vld [vmem:[%s1 + $0x224] sm:$0xf]
      %v412 = vld [vmem:[%s1 + $0x228] sm:$0xf]
      %v413 = vld [vmem:[%s1 + $0x22c] sm:$0xf]
      %v414 = vld [vmem:[%s1 + $0x230] sm:$0xf]
      %v415 = vld [vmem:[%s1 + $0x234] sm:$0xf]
      %v416 = vld [vmem:[%s1 + $0x238] sm:$0xf]
      %v417 = vld [vmem:[%s1 + $0x23c] sm:$0xf]
      %v418 = vld [vmem:[%s2] sm:$0x1]
      %v420 = vperm.slane %v418, 0
      %v442 = vunpack.c.l.b16 %v254
      %v443 = vunpack.c.h.b16 %v254
      %v444 = vunpack.c.l.b16 %v255
      %v445 = vunpack.c.h.b16 %v255
      %v446 = vunpack.c.l.b16 %v256
      %v447 = vunpack.c.h.b16 %v256
      %v448 = vunpack.c.l.b16 %v257
      %v449 = vunpack.c.h.b16 %v257
      %v450 = vunpack.c.l.b16 %v258
      %v451 = vunpack.c.l.b16 %v259
      %v452 = vunpack.c.h.b16 %v259
      %v453 = vunpack.c.l.b16 %v260
      %v454 = vunpack.c.h.b16 %v260
      %v455 = vunpack.c.l.b16 %v261
      %v456 = vunpack.c.h.b16 %v261
      %v457 = vunpack.c.l.b16 %v262
      %v458 = vunpack.c.h.b16 %v262
      %v459 = vunpack.c.l.b16 %v263
      %v460 = vunpack.c.l.b16 %v264
      %v461 = vunpack.c.h.b16 %v264
      %v462 = vunpack.c.l.b16 %v265
      %v463 = vunpack.c.h.b16 %v265
      %v464 = vunpack.c.l.b16 %v266
      %v465 = vunpack.c.h.b16 %v266
      %v466 = vunpack.c.l.b16 %v267
      %v467 = vunpack.c.h.b16 %v267
      %v468 = vunpack.c.l.b16 %v268
      %v469 = vunpack.c.l.b16 %v269
      %v470 = vunpack.c.h.b16 %v269
      %v471 = vunpack.c.l.b16 %v270
      %v472 = vunpack.c.h.b16 %v270
      %v473 = vunpack.c.l.b16 %v271
      %v474 = vunpack.c.h.b16 %v271
      %v475 = vunpack.c.l.b16 %v272
      %v476 = vunpack.c.h.b16 %v272
      %v477 = vunpack.c.l.b16 %v273
      %v478 = vpack.c.b16 %v451, %v442
      %v479 = vpack.c.b16 %v452, %v443
      %v480 = vpack.c.b16 %v453, %v444
      %v481 = vpack.c.b16 %v454, %v445
      %v482 = vpack.c.b16 %v455, %v446
      %v483 = vpack.c.b16 %v456, %v447
      %v484 = vpack.c.b16 %v457, %v448
      %v485 = vpack.c.b16 %v458, %v449
      %v486 = vpack.c.b16 %v459, %v450
      %v487 = vpack.c.b16 %v469, %v460
      %v488 = vpack.c.b16 %v470, %v461
      %v489 = vpack.c.b16 %v471, %v462
      %v490 = vpack.c.b16 %v472, %v463
      %v491 = vpack.c.b16 %v473, %v464
      %v492 = vpack.c.b16 %v474, %v465
      %v493 = vpack.c.b16 %v475, %v466
      %v494 = vpack.c.b16 %v476, %v467
      %v495 = vpack.c.b16 %v477, %v468
      %v658 = vunpack.c.l.b16 %v274
      %v659 = vunpack.c.l.b16 %v275
      %v660 = vunpack.c.l.b16 %v276
      %v661 = vunpack.c.l.b16 %v277
      %v662 = vunpack.c.l.b16 %v278
      %v663 = vunpack.c.l.b16 %v279
      %v664 = vunpack.c.l.b16 %v280
      %v665 = vunpack.c.l.b16 %v281
      %v666 = vunpack.c.l.b16 %v282
      %v667 = vunpack.c.l.b16 %v283
      %v668 = vunpack.c.l.b16 %v284
      %v669 = vunpack.c.l.b16 %v285
      %v670 = vunpack.c.l.b16 %v286
      %v671 = vunpack.c.l.b16 %v287
      %v672 = vunpack.c.l.b16 %v288
      %v673 = vunpack.c.l.b16 %v289
      %v674 = vunpack.c.l.b16 %v290
      %v675 = vunpack.c.l.b16 %v291
      %v676 = vunpack.c.l.b16 %v292
      %v677 = vunpack.c.l.b16 %v293
      %v678 = vunpack.c.l.b16 %v294
      %v679 = vunpack.c.l.b16 %v295
      %v680 = vunpack.c.l.b16 %v296
      %v681 = vunpack.c.l.b16 %v297
      %v682 = vunpack.c.l.b16 %v298
      %v683 = vunpack.c.l.b16 %v299
      %v684 = vunpack.c.l.b16 %v300
      %v685 = vunpack.c.l.b16 %v301
      %v686 = vunpack.c.l.b16 %v302
      %v687 = vunpack.c.l.b16 %v303
      %v688 = vunpack.c.l.b16 %v304
      %v689 = vunpack.c.l.b16 %v305
      %v690 = vunpack.c.l.b16 %v306
      %v691 = vunpack.c.l.b16 %v307
      %v692 = vunpack.c.l.b16 %v308
      %v693 = vunpack.c.l.b16 %v309
      %v694 = vunpack.c.l.b16 %v310
      %v695 = vunpack.c.l.b16 %v311
      %v696 = vunpack.c.l.b16 %v312
      %v697 = vunpack.c.l.b16 %v313
      %v698 = vunpack.c.l.b16 %v314
      %v699 = vunpack.c.l.b16 %v315
      %v700 = vunpack.c.l.b16 %v316
      %v701 = vunpack.c.l.b16 %v317
      %v702 = vunpack.c.l.b16 %v318
      %v703 = vunpack.c.l.b16 %v319
      %v704 = vunpack.c.l.b16 %v320
      %v705 = vunpack.c.l.b16 %v321
      %v706 = vunpack.c.l.b16 %v322
      %v707 = vunpack.c.l.b16 %v323
      %v708 = vunpack.c.l.b16 %v324
      %v709 = vunpack.c.l.b16 %v325
      %v710 = vunpack.c.l.b16 %v326
      %v711 = vunpack.c.l.b16 %v327
      %v712 = vunpack.c.l.b16 %v328
      %v713 = vunpack.c.l.b16 %v329
      %v714 = vunpack.c.l.b16 %v330
      %v715 = vunpack.c.l.b16 %v331
      %v716 = vunpack.c.l.b16 %v332
      %v717 = vunpack.c.l.b16 %v333
      %v718 = vunpack.c.l.b16 %v334
      %v719 = vunpack.c.l.b16 %v335
      %v720 = vunpack.c.l.b16 %v336
      %v721 = vunpack.c.l.b16 %v337
      %v722 = vunpack.c.l.b16 %v338
      %v723 = vunpack.c.l.b16 %v339
      %v724 = vunpack.c.l.b16 %v340
      %v725 = vunpack.c.l.b16 %v341
      %v726 = vunpack.c.l.b16 %v342
      %v727 = vunpack.c.l.b16 %v343
      %v728 = vunpack.c.l.b16 %v344
      %v729 = vunpack.c.l.b16 %v345
      %v730 = vunpack.c.l.b16 %v346
      %v731 = vunpack.c.l.b16 %v347
      %v732 = vunpack.c.l.b16 %v348
      %v733 = vunpack.c.l.b16 %v349
      %v734 = vunpack.c.l.b16 %v350
      %v735 = vunpack.c.l.b16 %v351
      %v736 = vunpack.c.l.b16 %v352
      %v737 = vunpack.c.l.b16 %v353
      %v738 = vunpack.c.l.b16 %v354
      %v739 = vunpack.c.l.b16 %v355
      %v740 = vunpack.c.l.b16 %v356
      %v741 = vunpack.c.l.b16 %v357
      %v742 = vunpack.c.l.b16 %v358
      %v743 = vunpack.c.l.b16 %v359
      %v744 = vunpack.c.l.b16 %v360
      %v745 = vunpack.c.l.b16 %v361
      %v746 = vunpack.c.l.b16 %v362
      %v747 = vunpack.c.l.b16 %v363
      %v748 = vunpack.c.l.b16 %v364
      %v749 = vunpack.c.l.b16 %v365
      %v750 = vunpack.c.l.b16 %v366
      %v751 = vunpack.c.l.b16 %v367
      %v752 = vunpack.c.l.b16 %v368
      %v753 = vunpack.c.l.b16 %v369
      %v754 = vunpack.c.l.b16 %v370
      %v755 = vunpack.c.l.b16 %v371
      %v756 = vunpack.c.l.b16 %v372
      %v757 = vunpack.c.l.b16 %v373
      %v758 = vunpack.c.l.b16 %v374
      %v759 = vunpack.c.l.b16 %v375
      %v760 = vunpack.c.l.b16 %v376
      %v761 = vunpack.c.l.b16 %v377
      %v762 = vunpack.c.l.b16 %v378
      %v763 = vunpack.c.l.b16 %v379
      %v764 = vunpack.c.l.b16 %v380
      %v765 = vunpack.c.l.b16 %v381
      %v766 = vunpack.c.l.b16 %v382
      %v767 = vunpack.c.l.b16 %v383
      %v768 = vunpack.c.l.b16 %v384
      %v769 = vunpack.c.l.b16 %v385
      %v770 = vunpack.c.l.b16 %v386
      %v771 = vunpack.c.l.b16 %v387
      %v772 = vunpack.c.l.b16 %v388
      %v773 = vunpack.c.l.b16 %v389
      %v774 = vunpack.c.l.b16 %v390
      %v775 = vunpack.c.l.b16 %v391
      %v776 = vunpack.c.l.b16 %v392
      %v777 = vunpack.c.l.b16 %v393
      %v778 = vunpack.c.l.b16 %v394
      %v779 = vunpack.c.l.b16 %v395
      %v780 = vunpack.c.l.b16 %v396
      %v781 = vunpack.c.l.b16 %v397
      %v782 = vunpack.c.l.b16 %v398
      %v783 = vunpack.c.l.b16 %v399
      %v784 = vunpack.c.l.b16 %v400
      %v785 = vunpack.c.l.b16 %v401
      %v786 = vunpack.c.l.b16 %v402
      %v787 = vunpack.c.l.b16 %v403
      %v788 = vunpack.c.l.b16 %v404
      %v789 = vunpack.c.l.b16 %v405
      %v790 = vunpack.c.l.b16 %v406
      %v791 = vunpack.c.l.b16 %v407
      %v792 = vunpack.c.l.b16 %v408
      %v793 = vunpack.c.l.b16 %v409
      %v794 = vunpack.c.l.b16 %v410
      %v795 = vunpack.c.l.b16 %v411
      %v796 = vunpack.c.l.b16 %v412
      %v797 = vunpack.c.l.b16 %v413
      %v798 = vunpack.c.l.b16 %v414
      %v799 = vunpack.c.l.b16 %v415
      %v800 = vunpack.c.l.b16 %v416
      %v801 = vunpack.c.l.b16 %v417
      %v802 = vpack.c.b16 %v659, %v658
      %v803 = vpack.c.b16 %v661, %v660
      %v804 = vpack.c.b16 %v663, %v662
      %v805 = vpack.c.b16 %v665, %v664
      %v806 = vpack.c.b16 %v667, %v666
      %v807 = vpack.c.b16 %v669, %v668
      %v808 = vpack.c.b16 %v671, %v670
      %v809 = vpack.c.b16 %v673, %v672
      %v810 = vpack.c.b16 %v675, %v674
      %v811 = vpack.c.b16 %v677, %v676
      %v812 = vpack.c.b16 %v679, %v678
      %v813 = vpack.c.b16 %v681, %v680
      %v814 = vpack.c.b16 %v683, %v682
      %v815 = vpack.c.b16 %v685, %v684
      %v816 = vpack.c.b16 %v687, %v686
      %v817 = vpack.c.b16 %v689, %v688
      %v818 = vpack.c.b16 %v691, %v690
      %v819 = vpack.c.b16 %v693, %v692
      %v820 = vpack.c.b16 %v695, %v694
      %v821 = vpack.c.b16 %v697, %v696
      %v822 = vpack.c.b16 %v699, %v698
      %v823 = vpack.c.b16 %v701, %v700
      %v824 = vpack.c.b16 %v703, %v702
      %v825 = vpack.c.b16 %v705, %v704
      %v826 = vpack.c.b16 %v707, %v706
      %v827 = vpack.c.b16 %v709, %v708
      %v828 = vpack.c.b16 %v711, %v710
      %v829 = vpack.c.b16 %v713, %v712
      %v830 = vpack.c.b16 %v715, %v714
      %v831 = vpack.c.b16 %v717, %v716
      %v832 = vpack.c.b16 %v719, %v718
      %v833 = vpack.c.b16 %v721, %v720
      %v834 = vpack.c.b16 %v723, %v722
      %v835 = vpack.c.b16 %v725, %v724
      %v836 = vpack.c.b16 %v727, %v726
      %v837 = vpack.c.b16 %v729, %v728
      %v838 = vpack.c.b16 %v731, %v730
      %v839 = vpack.c.b16 %v733, %v732
      %v840 = vpack.c.b16 %v735, %v734
      %v841 = vpack.c.b16 %v737, %v736
      %v842 = vpack.c.b16 %v739, %v738
      %v843 = vpack.c.b16 %v741, %v740
      %v844 = vpack.c.b16 %v743, %v742
      %v845 = vpack.c.b16 %v745, %v744
      %v846 = vpack.c.b16 %v747, %v746
      %v847 = vpack.c.b16 %v749, %v748
      %v848 = vpack.c.b16 %v751, %v750
      %v849 = vpack.c.b16 %v753, %v752
      %v850 = vpack.c.b16 %v755, %v754
      %v851 = vpack.c.b16 %v757, %v756
      %v852 = vpack.c.b16 %v759, %v758
      %v853 = vpack.c.b16 %v761, %v760
      %v854 = vpack.c.b16 %v763, %v762
      %v855 = vpack.c.b16 %v765, %v764
      %v856 = vpack.c.b16 %v767, %v766
      %v857 = vpack.c.b16 %v769, %v768
      %v858 = vpack.c.b16 %v771, %v770
      %v859 = vpack.c.b16 %v773, %v772
      %v860 = vpack.c.b16 %v775, %v774
      %v861 = vpack.c.b16 %v777, %v776
      %v862 = vpack.c.b16 %v779, %v778
      %v863 = vpack.c.b16 %v781, %v780
      %v864 = vpack.c.b16 %v783, %v782
      %v865 = vpack.c.b16 %v785, %v784
      %v866 = vpack.c.b16 %v787, %v786
      %v867 = vpack.c.b16 %v789, %v788
      %v868 = vpack.c.b16 %v791, %v790
      %v869 = vpack.c.b16 %v793, %v792
      %v870 = vpack.c.b16 %v795, %v794
      %v871 = vpack.c.b16 %v797, %v796
      %v872 = vpack.c.b16 %v799, %v798
      %v873 = vpack.c.b16 %v801, %v800
      %946 = vmatpush.bf16.msra.mxu0 %v809
      %947 = vmatpush.bf16.msra.mxu0 %v808
      %948 = vmatpush.bf16.msra.mxu0 %v807
      %949 = vmatpush.bf16.msra.mxu0 %v806
      %950 = vmatpush.bf16.msra.mxu0 %v805
      %951 = vmatpush.bf16.msra.mxu0 %v804
      %952 = vmatpush.bf16.msra.mxu0 %v803
      %953 = vmatpush.bf16.msra.mxu0 %v802
      %954 = vmatmul.bf16.gmra.mxu0 %v478
      %v955 = vpop.f32.mrf.mxu0
      %v956 = vadd.f32 %v420, %v955
      %v957 = vpop.f32.mrf.mxu0
      %v958 = vadd.f32 %v420, %v957
      %959 = vmatmul.bf16.gmra.mxu0 %v487
      %v960 = vpop.f32.mrf.mxu0
      %v961 = vadd.f32 %v420, %v960
      %v962 = vpop.f32.mrf.mxu0
      %v963 = vadd.f32 %v420, %v962
      %964 = vdwg.mxu0
      %965 = vmatpush.bf16.msra.mxu0 %v817
      %966 = vmatpush.bf16.msra.mxu0 %v816
      %967 = vmatpush.bf16.msra.mxu0 %v815
      %968 = vmatpush.bf16.msra.mxu0 %v814
      %969 = vmatpush.bf16.msra.mxu0 %v813
      %970 = vmatpush.bf16.msra.mxu0 %v812
      %971 = vmatpush.bf16.msra.mxu0 %v811
      %972 = vmatpush.bf16.msra.mxu0 %v810
      %973 = vmatmul.bf16.gmra.mxu0 %v479
      %v974 = vpop.f32.mrf.mxu0
      %v975 = vadd.f32 %v956, %v974
      %v976 = vpop.f32.mrf.mxu0
      %v977 = vadd.f32 %v958, %v976
      %978 = vmatmul.bf16.gmra.mxu0 %v488
      %v979 = vpop.f32.mrf.mxu0
      %v980 = vadd.f32 %v961, %v979
      %v981 = vpop.f32.mrf.mxu0
      %v982 = vadd.f32 %v963, %v981
      %983 = vdwg.mxu0
      %984 = vmatpush.bf16.msra.mxu0 %v825
      %985 = vmatpush.bf16.msra.mxu0 %v824
      %986 = vmatpush.bf16.msra.mxu0 %v823
      %987 = vmatpush.bf16.msra.mxu0 %v822
      %988 = vmatpush.bf16.msra.mxu0 %v821
      %989 = vmatpush.bf16.msra.mxu0 %v820
      %990 = vmatpush.bf16.msra.mxu0 %v819
      %991 = vmatpush.bf16.msra.mxu0 %v818
      %992 = vmatmul.bf16.gmra.mxu0 %v480
      %v993 = vpop.f32.mrf.mxu0
      %v994 = vadd.f32 %v975, %v993
      %v995 = vpop.f32.mrf.mxu0
      %v996 = vadd.f32 %v977, %v995
      %997 = vmatmul.bf16.gmra.mxu0 %v489
      %v998 = vpop.f32.mrf.mxu0
      %v999 = vadd.f32 %v980, %v998
      %v1000 = vpop.f32.mrf.mxu0
      %v1001 = vadd.f32 %v982, %v1000
      %1002 = vdwg.mxu0
      %1003 = vmatpush.bf16.msra.mxu0 %v833
      %1004 = vmatpush.bf16.msra.mxu0 %v832
      %1005 = vmatpush.bf16.msra.mxu0 %v831
      %1006 = vmatpush.bf16.msra.mxu0 %v830
      %1007 = vmatpush.bf16.msra.mxu0 %v829
      %1008 = vmatpush.bf16.msra.mxu0 %v828
      %1009 = vmatpush.bf16.msra.mxu0 %v827
      %1010 = vmatpush.bf16.msra.mxu0 %v826
      %1011 = vmatmul.bf16.gmra.mxu0 %v481
      %v1012 = vpop.f32.mrf.mxu0
      %v1013 = vadd.f32 %v994, %v1012
      %v1014 = vpop.f32.mrf.mxu0
      %v1015 = vadd.f32 %v996, %v1014
      %1016 = vmatmul.bf16.gmra.mxu0 %v490
      %v1017 = vpop.f32.mrf.mxu0
      %v1018 = vadd.f32 %v999, %v1017
      %v1019 = vpop.f32.mrf.mxu0
      %v1020 = vadd.f32 %v1001, %v1019
      %1021 = vdwg.mxu0
      %1022 = vmatpush.bf16.msra.mxu0 %v841
      %1023 = vmatpush.bf16.msra.mxu0 %v840
      %1024 = vmatpush.bf16.msra.mxu0 %v839
      %1025 = vmatpush.bf16.msra.mxu0 %v838
      %1026 = vmatpush.bf16.msra.mxu0 %v837
      %1027 = vmatpush.bf16.msra.mxu0 %v836
      %1028 = vmatpush.bf16.msra.mxu0 %v835
      %1029 = vmatpush.bf16.msra.mxu0 %v834
      %1030 = vmatmul.bf16.gmra.mxu0 %v482
      %v1031 = vpop.f32.mrf.mxu0
      %v1032 = vadd.f32 %v1013, %v1031
      %v1033 = vpop.f32.mrf.mxu0
      %v1034 = vadd.f32 %v1015, %v1033
      %1035 = vmatmul.bf16.gmra.mxu0 %v491
      %v1036 = vpop.f32.mrf.mxu0
      %v1037 = vadd.f32 %v1018, %v1036
      %v1038 = vpop.f32.mrf.mxu0
      %v1039 = vadd.f32 %v1020, %v1038
      %1040 = vdwg.mxu0
      %1041 = vmatpush.bf16.msra.mxu0 %v849
      %1042 = vmatpush.bf16.msra.mxu0 %v848
      %1043 = vmatpush.bf16.msra.mxu0 %v847
      %1044 = vmatpush.bf16.msra.mxu0 %v846
      %1045 = vmatpush.bf16.msra.mxu0 %v845
      %1046 = vmatpush.bf16.msra.mxu0 %v844
      %1047 = vmatpush.bf16.msra.mxu0 %v843
      %1048 = vmatpush.bf16.msra.mxu0 %v842
      %1049 = vmatmul.bf16.gmra.mxu0 %v483
      %v1050 = vpop.f32.mrf.mxu0
      %v1051 = vadd.f32 %v1032, %v1050
      %v1052 = vpop.f32.mrf.mxu0
      %v1053 = vadd.f32 %v1034, %v1052
      %1054 = vmatmul.bf16.gmra.mxu0 %v492
      %v1055 = vpop.f32.mrf.mxu0
      %v1056 = vadd.f32 %v1037, %v1055
      %v1057 = vpop.f32.mrf.mxu0
      %v1058 = vadd.f32 %v1039, %v1057
      %1059 = vdwg.mxu0
      %1060 = vmatpush.bf16.msra.mxu0 %v857
      %1061 = vmatpush.bf16.msra.mxu0 %v856
      %1062 = vmatpush.bf16.msra.mxu0 %v855
      %1063 = vmatpush.bf16.msra.mxu0 %v854
      %1064 = vmatpush.bf16.msra.mxu0 %v853
      %1065 = vmatpush.bf16.msra.mxu0 %v852
      %1066 = vmatpush.bf16.msra.mxu0 %v851
      %1067 = vmatpush.bf16.msra.mxu0 %v850
      %1068 = vmatmul.bf16.gmra.mxu0 %v484
      %v1069 = vpop.f32.mrf.mxu0
      %v1070 = vadd.f32 %v1051, %v1069
      %v1071 = vpop.f32.mrf.mxu0
      %v1072 = vadd.f32 %v1053, %v1071
      %1073 = vmatmul.bf16.gmra.mxu0 %v493
      %v1074 = vpop.f32.mrf.mxu0
      %v1075 = vadd.f32 %v1056, %v1074
      %v1076 = vpop.f32.mrf.mxu0
      %v1077 = vadd.f32 %v1058, %v1076
      %1078 = vdwg.mxu0
      %1079 = vmatpush.bf16.msra.mxu0 %v865
      %1080 = vmatpush.bf16.msra.mxu0 %v864
      %1081 = vmatpush.bf16.msra.mxu0 %v863
      %1082 = vmatpush.bf16.msra.mxu0 %v862
      %1083 = vmatpush.bf16.msra.mxu0 %v861
      %1084 = vmatpush.bf16.msra.mxu0 %v860
      %1085 = vmatpush.bf16.msra.mxu0 %v859
      %1086 = vmatpush.bf16.msra.mxu0 %v858
      %1087 = vmatmul.bf16.gmra.mxu0 %v485
      %v1088 = vpop.f32.mrf.mxu0
      %v1089 = vadd.f32 %v1070, %v1088
      %v1090 = vpop.f32.mrf.mxu0
      %v1091 = vadd.f32 %v1072, %v1090
      %1092 = vmatmul.bf16.gmra.mxu0 %v494
      %v1093 = vpop.f32.mrf.mxu0
      %v1094 = vadd.f32 %v1075, %v1093
      %v1095 = vpop.f32.mrf.mxu0
      %v1096 = vadd.f32 %v1077, %v1095
      %1097 = vdwg.mxu0
      %1098 = vmatpush.bf16.msra.mxu0 %v873
      %1099 = vmatpush.bf16.msra.mxu0 %v872
      %1100 = vmatpush.bf16.msra.mxu0 %v871
      %1101 = vmatpush.bf16.msra.mxu0 %v870
      %1102 = vmatpush.bf16.msra.mxu0 %v869
      %1103 = vmatpush.bf16.msra.mxu0 %v868
      %1104 = vmatpush.bf16.msra.mxu0 %v867
      %1105 = vmatpush.bf16.msra.mxu0 %v866
      %1106 = vmatmul.bf16.gmra.mxu0 %v486
      %v1107 = vpop.f32.mrf.mxu0
      %v1108 = vadd.f32 %v1089, %v1107
      %v1109 = vpop.f32.mrf.mxu0
      %v1110 = vadd.f32 %v1091, %v1109
      %1111 = vmatmul.bf16.gmra.mxu0 %v495
      %v1112 = vpop.f32.mrf.mxu0
      %v1113 = vadd.f32 %v1094, %v1112
      %v1114 = vpop.f32.mrf.mxu0
      %v1115 = vadd.f32 %v1096, %v1114
      %1116 = vdwg.mxu0
      %s1117 = sld [smem:[#allocation2]]
      %vm1118 = vcmp.ge.f32.partialorder %v1108, 0.0
      %vm1119 = vcmp.ge.f32.partialorder %v1110, 0.0
      %vm1120 = vcmp.ge.f32.partialorder %v1113, 0.0
      %vm1121 = vcmp.ge.f32.partialorder %v1115, 0.0
      %v1122 = vstv %s1117
      %v1123 = vmul.f32 %v1122, %v1108
      %v1124 = vmul.f32 %v1122, %v1110
      %v1125 = vmul.f32 %v1122, %v1113
      %v1126 = vmul.f32 %v1122, %v1115
      %v1127 = vsel %vm1118, %v1108, %v1123
      %v1128 = vsel %vm1119, %v1110, %v1124
      %v1129 = vsel %vm1120, %v1113, %v1125
      %v1130 = vsel %vm1121, %v1115, %v1126
      %v1131 = vld [vmem:[%s246] sm:$0xf]
      %v1132 = vld [vmem:[%s246 + $0x4] sm:$0xf]
      %v1133 = vld [vmem:[%s246 + $0x8] sm:$0xf]
      %v1134 = vld [vmem:[%s246 + $0xc] sm:$0xf]
      %v1135 = vunpack.c.l.bf16 %v1131
      %v1136 = vunpack.c.l.bf16 %v1132
      %v1137 = vunpack.c.l.bf16 %v1133
      %v1138 = vunpack.c.l.bf16 %v1134
      %v1139 = vadd.f32 %v1127, %v1135
      %v1140 = vadd.f32 %v1128, %v1136
      %v1141 = vadd.f32 %v1129, %v1137
      %v1142 = vadd.f32 %v1130, %v1138
      %v1143 = vpack.c.bf16 %v1139, %v1139
      %v1144 = vpack.c.bf16 %v1140, %v1140
      %v1145 = vpack.c.bf16 %v1141, %v1141
      %v1146 = vpack.c.bf16 %v1142, %v1142
      %1147 = vst [vmem:[%s252] sm:$0xf] %v1143
      %1148 = vst [vmem:[%s252 + $0x4] sm:$0xf] %v1144
      %1149 = vst [vmem:[%s252 + $0x8] sm:$0xf] %v1145
      %1150 = vst [vmem:[%s252 + $0xc] sm:$0xf] %v1146
      %s1151 = smul.u32 4, %s17
      %p1152 = scmp.lt.s32.totalorder %s1151, 15
      %s1153 = scalar_select %p1152, %s1151, 15
      %s1154 = smul.addr %s1153, 4
      %s1155 = scalar_lea.vmem %s5, %s1154
      // Predicated region
      $region41: #{sisr_block.20} parent=39 // pred_check
        %p1156 = pneg %p150
      $region42: #{sisr_block.20} parent=39 // pred_check_branch
        %1158 = sbr.rel (%p1156) target = $region44
      $region43: #{sisr_block.20} parent=39 // pred_region
        %s1159 = smul.u32 4, %s17
      $region44: #{sisr_block.20} parent=39 // pred_fallthru
        _
    $region40: #{sisr_block.20} parent=5 // pred_fallthru
      _
    %p1160 = scmp.le.s32.totalorder 2, %s12
    // Predicated region
    $region45: #{sisr_block.20} parent=5 // pred_check
      %p1161 = pneg %p1160
    $region46: #{sisr_block.20} parent=5 // pred_check_branch
      %1163 = sbr.rel (%p1161) target = $region48
    $region47: #{sisr_block.20} parent=5 // pred_region
      %s1164 = ssub.s32 %s12, 2
      // Predicated region
      $region49: #{sisr_block.20} parent=47 // pred_check
        %p1165 = pneg %p156
      $region50: #{sisr_block.20} parent=47 // pred_check_branch
        %1167 = sbr.rel (%p1165) target = $region52
      $region51: #{sisr_block.20} parent=47 // pred_region
        %s1168 = smul.u32 4, %s18
        %p1169 = scmp.lt.s32.totalorder %s1168, 15
        %s1170 = scalar_select %p1169, %s1168, 15
        %s1171 = smul.addr %s1170, 4
        %s1172 = scalar_lea.vmem %s5, %s1171
      $region52: #{sisr_block.20} parent=47 // pred_fallthru
        _
    $region48: #{sisr_block.20} parent=5 // pred_fallthru
      _
  $region6: #{sisr_block.20} parent=0 // loop_footer
    %s16 = sadd.s32 1, %s12
  $region7: #{sisr_block.20} parent=0 // loop_footer_branch
    %11 = sbr.rel target = $region3
  $region8: #{sisr_block.20} parent=0 // loop_exit
    _

// kernel: sisr_block.21
$region0: #{sisr_block.21}
  #allocation0 [shape = 'u32[]', space=smem, size = 0x4, offset = 0x4, fixed_abs, tag = 'smem constant byte address 0x4 - core index']
  #allocation1 [shape = 'u32[72,128]{1,0:T(1,128)}', space=vmem, size = 0x9000, scoped, tag = 'internal scratch']
  #allocation2 [shape = 'f32[1,1]{1,0:T(1,128)S(6)}', space=smem, size = 0x200, scoped, tag = 'scoped memory for sisr_block.21']
  %s0 = inlined_call_operand.vmem [shape: bf16[128,512], index: 0, kind: input, shape index: {}]
  %s1 = inlined_call_operand.vmem [shape: bf16[512,128], index: 1, kind: input, shape index: {}]
  %s2 = inlined_call_operand.vmem [shape: f32[1,128], index: 2, kind: input, shape index: {}]
  %s3 = inlined_call_operand.<no memory space> [shape: f32[1,1], index: 3, kind: input, shape index: {}]
  %s4 = inlined_call_operand.vmem [shape: bf16[128,128], index: 4, kind: output, shape index: {}]
  %s5 = sld [smem:[#allocation0]]
  $region49: #{sisr_block.21} parent=0
    _
  %s7 = ssub.s32 1, %s5
  %s8 = scalar_select 0, %s7, %s5
  %9 = sst [smem:[#allocation2]] %s3
  loop: start=0, step=1, limit=6
  $region2: #{sisr_block.21} parent=0 // loop_pre_header
    _
  $region3: #{sisr_block.21} parent=0 // loop_header
    %s11 = sphi 0, %s15
    %p12 = scmp.ge.s32.totalorder %s11, 6
    %s21 = sphi 0, %s23
    %s24 = sphi 0, %s21
    %s25 = sphi 0, %s24
    %s41 = sphi 0, %s25
    %s45 = sphi 0, %s45
    %s47 = sphi 0, %s45
    %s48 = sphi 0, %s47
    %s62 = sphi 0, %s48
    %s66 = sphi 0, %s66
    %s68 = sphi 0, %s66
    %s69 = sphi 0, %s68
    %s83 = sphi 0, %s69
    %s87 = sphi 0, %s87
    %s89 = sphi 0, %s87
    %s90 = sphi 0, %s89
    %s104 = sphi 0, %s90
    %s110 = sphi 0, %s112
    %s113 = sphi 0, %s110
    %s114 = sphi 0, %s113
    %s130 = sphi 0, %s114
  $region4: #{sisr_block.21} parent=0 // loop_header_branch
    %14 = sbr.rel (%p12) target = $region8
  $region5: #{sisr_block.21} parent=0 // loop_body
    %s16 = ssub.s32 %s11, 1
    %s17 = ssub.s32 %s11, 2
    %s18 = sadd.s32 %s11, 1
    %s19 = ssub.s32 %s11, %s18
    %p20 = scmp.eq.s32.totalorder %s19, 0
    %s22 = sadd.s32 %s21, 1
    %s23 = scalar_select %p20, %s21, %s22
    %p26 = pneg %p20
    %p27 = scmp.eq.s32.totalorder %s11, 3
    %p28 = por %p26, %p27
    %p29 = scmp.ne.s32.totalorder %s21, %s24
    %p30 = scmp.eq.s32.totalorder %s11, 0
    %p31 = por %p29, %p30
    %p32 = scmp.ne.s32.totalorder %s21, %s24
    %p33 = scmp.eq.s32.totalorder %s16, 3
    %p34 = por %p32, %p33
    %p35 = scmp.ne.s32.totalorder %s24, %s25
    %p36 = scmp.eq.s32.totalorder %s16, 0
    %p37 = por %p35, %p36
    %p38 = scmp.ne.s32.totalorder %s24, %s25
    %p39 = scmp.eq.s32.totalorder %s17, 3
    %p40 = por %p38, %p39
    %p42 = scmp.ne.s32.totalorder %s25, %s41
    %p43 = scmp.eq.s32.totalorder %s17, 0
    %p44 = por %p42, %p43
    %s46 = sadd.s32 %s45, 1
    %p49 = scmp.eq.s32.totalorder %s11, 3
    %p50 = scmp.ne.s32.totalorder %s45, %s47
    %p51 = scmp.eq.s32.totalorder %s11, 0
    %p52 = por %p50, %p51
    %p53 = scmp.ne.s32.totalorder %s45, %s47
    %p54 = scmp.eq.s32.totalorder %s16, 3
    %p55 = por %p53, %p54
    %p56 = scmp.ne.s32.totalorder %s47, %s48
    %p57 = scmp.eq.s32.totalorder %s16, 0
    %p58 = por %p56, %p57
    %p59 = scmp.ne.s32.totalorder %s47, %s48
    %p60 = scmp.eq.s32.totalorder %s17, 3
    %p61 = por %p59, %p60
    %p63 = scmp.ne.s32.totalorder %s48, %s62
    %p64 = scmp.eq.s32.totalorder %s17, 0
    %p65 = por %p63, %p64
    %s67 = sadd.s32 %s66, 1
    %p70 = scmp.eq.s32.totalorder %s11, 3
    %p71 = scmp.ne.s32.totalorder %s66, %s68
    %p72 = scmp.eq.s32.totalorder %s11, 0
    %p73 = por %p71, %p72
    %p74 = scmp.ne.s32.totalorder %s66, %s68
    %p75 = scmp.eq.s32.totalorder %s16, 3
    %p76 = por %p74, %p75
    %p77 = scmp.ne.s32.totalorder %s68, %s69
    %p78 = scmp.eq.s32.totalorder %s16, 0
    %p79 = por %p77, %p78
    %p80 = scmp.ne.s32.totalorder %s68, %s69
    %p81 = scmp.eq.s32.totalorder %s17, 3
    %p82 = por %p80, %p81
    %p84 = scmp.ne.s32.totalorder %s69, %s83
    %p85 = scmp.eq.s32.totalorder %s17, 0
    %p86 = por %p84, %p85
    %s88 = sadd.s32 %s87, 1
    %p91 = scmp.eq.s32.totalorder %s11, 3
    %p92 = scmp.ne.s32.totalorder %s87, %s89
    %p93 = scmp.eq.s32.totalorder %s11, 0
    %p94 = por %p92, %p93
    %p95 = scmp.ne.s32.totalorder %s87, %s89
    %p96 = scmp.eq.s32.totalorder %s16, 3
    %p97 = por %p95, %p96
    %p98 = scmp.ne.s32.totalorder %s89, %s90
    %p99 = scmp.eq.s32.totalorder %s16, 0
    %p100 = por %p98, %p99
    %p101 = scmp.ne.s32.totalorder %s89, %s90
    %p102 = scmp.eq.s32.totalorder %s17, 3
    %p103 = por %p101, %p102
    %p105 = scmp.ne.s32.totalorder %s90, %s104
    %p106 = scmp.eq.s32.totalorder %s17, 0
    %p107 = por %p105, %p106
    %s108 = ssub.s32 %s11, %s18
    %p109 = scmp.eq.s32.totalorder %s108, 0
    %s111 = sadd.s32 %s110, 1
    %s112 = scalar_select %p109, %s110, %s111
    %p115 = pneg %p109
    %p116 = scmp.eq.s32.totalorder %s11, 3
    %p117 = por %p115, %p116
    %p118 = scmp.ne.s32.totalorder %s110, %s113
    %p119 = scmp.eq.s32.totalorder %s11, 0
    %p120 = por %p118, %p119
    %p121 = scmp.ne.s32.totalorder %s110, %s113
    %p122 = scmp.eq.s32.totalorder %s16, 3
    %p123 = por %p121, %p122
    %p124 = scmp.ne.s32.totalorder %s113, %s114
    %p125 = scmp.eq.s32.totalorder %s16, 0
    %p126 = por %p124, %p125
    %p127 = scmp.ne.s32.totalorder %s113, %s114
    %p128 = scmp.eq.s32.totalorder %s17, 3
    %p129 = por %p127, %p128
    %p131 = scmp.ne.s32.totalorder %s114, %s130
    %p132 = scmp.eq.s32.totalorder %s17, 0
    %p133 = por %p131, %p132
    %p134 = scmp.le.s32.totalorder 1, %s11
    %p135 = scmp.lt.s32.totalorder %s11, 5
    %p136 = pnand %p134, %p135
    %p137 = pneg %p136
    // Predicated region
    $region9: #{sisr_block.21} parent=5 // pred_check
      _
    $region10: #{sisr_block.21} parent=5 // pred_check_branch
      %139 = sbr.rel (%p136) target = $region12
    $region11: #{sisr_block.21} parent=5 // pred_region
      %s140 = ssub.s32 %s11, 1
      // Predicated region
      $region13: #{sisr_block.21} parent=11 // pred_check
        %p141 = pneg %p58
      $region14: #{sisr_block.21} parent=11 // pred_check_branch
        %143 = sbr.rel (%p141) target = $region16
      $region15: #{sisr_block.21} parent=11 // pred_region
        _
      $region16: #{sisr_block.21} parent=11 // pred_fallthru
        _
      // Predicated region
      $region17: #{sisr_block.21} parent=11 // pred_check
        %p144 = pneg %p79
      $region18: #{sisr_block.21} parent=11 // pred_check_branch
        %146 = sbr.rel (%p144) target = $region20
      $region19: #{sisr_block.21} parent=11 // pred_region
        _
      $region20: #{sisr_block.21} parent=11 // pred_fallthru
        _
      // Predicated region
      $region21: #{sisr_block.21} parent=11 // pred_check
        %p147 = pneg %p100
      $region22: #{sisr_block.21} parent=11 // pred_check_branch
        %149 = sbr.rel (%p147) target = $region24
      $region23: #{sisr_block.21} parent=11 // pred_region
        _
      $region24: #{sisr_block.21} parent=11 // pred_fallthru
        _
    $region12: #{sisr_block.21} parent=5 // pred_fallthru
      _
    %p150 = scmp.lt.s32.totalorder %s11, 4
    // Predicated region
    $region25: #{sisr_block.21} parent=5 // pred_check
      %p151 = pneg %p150
    $region26: #{sisr_block.21} parent=5 // pred_check_branch
      %153 = sbr.rel (%p151) target = $region28
    $region27: #{sisr_block.21} parent=5 // pred_region
      // Predicated region
      $region29: #{sisr_block.21} parent=27 // pred_check
        %p154 = pneg %p31
      $region30: #{sisr_block.21} parent=27 // pred_check_branch
        %156 = sbr.rel (%p154) target = $region32
      $region31: #{sisr_block.21} parent=27 // pred_region
        %s157 = smul.u32 4, %s11
        %p158 = scmp.lt.s32.totalorder %s157, 15
        %s159 = scalar_select %p158, %s157, 15
        %s160 = smul.addr %s159, 4
        %s161 = smul.addr %s160, 4
        %s162 = scalar_lea.vmem %s0, %s161
        %s163 = smul.u32 4, %s11
      $region32: #{sisr_block.21} parent=27 // pred_fallthru
        _
    $region28: #{sisr_block.21} parent=5 // pred_fallthru
      _
    %p164 = scmp.le.s32.totalorder 1, %s11
    %p165 = scmp.lt.s32.totalorder %s11, 5
    %p166 = pnand %p164, %p165
    %p167 = pneg %p166
    // Predicated region
    $region33: #{sisr_block.21} parent=5 // pred_check
      _
    $region34: #{sisr_block.21} parent=5 // pred_check_branch
      %169 = sbr.rel (%p166) target = $region36
    $region35: #{sisr_block.21} parent=5 // pred_region
      %s170 = ssub.s32 %s11, 1
      %s171 = smul.u32 4, %s16
      %p172 = scmp.lt.s32.totalorder %s171, 15
      %s173 = scalar_select %p172, %s171, 15
      %s174 = smul.addr %s173, 4
      %s175 = smul.addr %s174, 4
      %s176 = scalar_lea.vmem %s0, %s175
      %p177 = pneg %p37
      %p178 = pneg %p34
      %p179 = pneg %p58
      %p180 = pneg %p55
      %p181 = pneg %p79
      %p182 = pneg %p76
      %p183 = pneg %p100
      %p184 = pneg %p97
      %p185 = pneg %p126
      %p186 = pneg %p123
      %s187 = smul.u32 4, %s16
      %p188 = scmp.lt.s32.totalorder %s187, 15
      %s189 = scalar_select %p188, %s187, 15
      %s190 = smul.addr %s189, 4
      %s191 = scalar_lea.vmem %s4, %s190
      %s192 = smul.u32 4, %s16
      %p193 = scmp.lt.s32.totalorder %s192, 15
      %s194 = scalar_select %p193, %s192, 15
      %s195 = smul.addr %s194, 4
      %s196 = smul.addr %s195, 4
      %s197 = scalar_lea.vmem %s0, %s196
      %s198 = smul.u32 4, %s16
      %s199 = smul.u32 4, %s16
      %p200 = scmp.lt.s32.totalorder %s199, 15
      %s201 = scalar_select %p200, %s199, 15
      %s202 = smul.addr %s201, 4
      %s203 = scalar_lea.vmem %s4, %s202
      %s204 = smul.u32 4, %s16
      %v205 = vld [vmem:[%s197] sm:$0xff]
      %v206 = vld [vmem:[%s197 + $0x8] sm:$0xff]
      %v207 = vld [vmem:[%s197 + $0x10] sm:$0xff]
      %v208 = vld [vmem:[%s197 + $0x18] sm:$0xff]
      %v209 = vld [vmem:[%s197 + $0x20] sm:$0xff]
      %v210 = vld [vmem:[%s197 + $0x28] sm:$0xff]
      %v211 = vld [vmem:[%s197 + $0x30] sm:$0xff]
      %v212 = vld [vmem:[%s197 + $0x38] sm:$0xff]
      %v213 = vld [vmem:[%s1] sm:$0xf]
      %v214 = vld [vmem:[%s1 + $0x4] sm:$0xf]
      %v215 = vld [vmem:[%s1 + $0x8] sm:$0xf]
      %v216 = vld [vmem:[%s1 + $0xc] sm:$0xf]
      %v217 = vld [vmem:[%s1 + $0x10] sm:$0xf]
      %v218 = vld [vmem:[%s1 + $0x14] sm:$0xf]
      %v219 = vld [vmem:[%s1 + $0x18] sm:$0xf]
      %v220 = vld [vmem:[%s1 + $0x1c] sm:$0xf]
      %v221 = vld [vmem:[%s1 + $0x20] sm:$0xf]
      %v222 = vld [vmem:[%s1 + $0x24] sm:$0xf]
      %v223 = vld [vmem:[%s1 + $0x28] sm:$0xf]
      %v224 = vld [vmem:[%s1 + $0x2c] sm:$0xf]
      %v225 = vld [vmem:[%s1 + $0x30] sm:$0xf]
      %v226 = vld [vmem:[%s1 + $0x34] sm:$0xf]
      %v227 = vld [vmem:[%s1 + $0x38] sm:$0xf]
      %v228 = vld [vmem:[%s1 + $0x3c] sm:$0xf]
      %v229 = vld [vmem:[%s1 + $0x40] sm:$0xf]
      %v230 = vld [vmem:[%s1 + $0x44] sm:$0xf]
      %v231 = vld [vmem:[%s1 + $0x48] sm:$0xf]
      %v232 = vld [vmem:[%s1 + $0x4c] sm:$0xf]
      %v233 = vld [vmem:[%s1 + $0x50] sm:$0xf]
      %v234 = vld [vmem:[%s1 + $0x54] sm:$0xf]
      %v235 = vld [vmem:[%s1 + $0x58] sm:$0xf]
      %v236 = vld [vmem:[%s1 + $0x5c] sm:$0xf]
      %v237 = vld [vmem:[%s1 + $0x60] sm:$0xf]
      %v238 = vld [vmem:[%s1 + $0x64] sm:$0xf]
      %v239 = vld [vmem:[%s1 + $0x68] sm:$0xf]
      %v240 = vld [vmem:[%s1 + $0x6c] sm:$0xf]
      %v241 = vld [vmem:[%s1 + $0x70] sm:$0xf]
      %v242 = vld [vmem:[%s1 + $0x74] sm:$0xf]
      %v243 = vld [vmem:[%s1 + $0x78] sm:$0xf]
      %v244 = vld [vmem:[%s1 + $0x7c] sm:$0xf]
      %v245 = vld [vmem:[%s1 + $0x80] sm:$0xf]
      %v246 = vld [vmem:[%s1 + $0x84] sm:$0xf]
      %v247 = vld [vmem:[%s1 + $0x88] sm:$0xf]
      %v248 = vld [vmem:[%s1 + $0x8c] sm:$0xf]
      %v249 = vld [vmem:[%s1 + $0x90] sm:$0xf]
      %v250 = vld [vmem:[%s1 + $0x94] sm:$0xf]
      %v251 = vld [vmem:[%s1 + $0x98] sm:$0xf]
      %v252 = vld [vmem:[%s1 + $0x9c] sm:$0xf]
      %v253 = vld [vmem:[%s1 + $0xa0] sm:$0xf]
      %v254 = vld [vmem:[%s1 + $0xa4] sm:$0xf]
      %v255 = vld [vmem:[%s1 + $0xa8] sm:$0xf]
      %v256 = vld [vmem:[%s1 + $0xac] sm:$0xf]
      %v257 = vld [vmem:[%s1 + $0xb0] sm:$0xf]
      %v258 = vld [vmem:[%s1 + $0xb4] sm:$0xf]
      %v259 = vld [vmem:[%s1 + $0xb8] sm:$0xf]
      %v260 = vld [vmem:[%s1 + $0xbc] sm:$0xf]
      %v261 = vld [vmem:[%s1 + $0xc0] sm:$0xf]
      %v262 = vld [vmem:[%s1 + $0xc4] sm:$0xf]
      %v263 = vld [vmem:[%s1 + $0xc8] sm:$0xf]
      %v264 = vld [vmem:[%s1 + $0xcc] sm:$0xf]
      %v265 = vld [vmem:[%s1 + $0xd0] sm:$0xf]
      %v266 = vld [vmem:[%s1 + $0xd4] sm:$0xf]
      %v267 = vld [vmem:[%s1 + $0xd8] sm:$0xf]
      %v268 = vld [vmem:[%s1 + $0xdc] sm:$0xf]
      %v269 = vld [vmem:[%s1 + $0xe0] sm:$0xf]
      %v270 = vld [vmem:[%s1 + $0xe4] sm:$0xf]
      %v271 = vld [vmem:[%s1 + $0xe8] sm:$0xf]
      %v272 = vld [vmem:[%s1 + $0xec] sm:$0xf]
      %v273 = vld [vmem:[%s1 + $0xf0] sm:$0xf]
      %v274 = vld [vmem:[%s1 + $0xf4] sm:$0xf]
      %v275 = vld [vmem:[%s1 + $0xf8] sm:$0xf]
      %v276 = vld [vmem:[%s1 + $0xfc] sm:$0xf]
      %v277 = vld [vmem:[%s2] sm:$0x1]
      %v279 = vperm.slane %v277, 0
      %v289 = vunpack.c.l.b16 %v205
      %v290 = vunpack.c.h.b16 %v205
      %v291 = vunpack.c.l.b16 %v206
      %v292 = vunpack.c.h.b16 %v206
      %v293 = vunpack.c.l.b16 %v207
      %v294 = vunpack.c.h.b16 %v207
      %v295 = vunpack.c.l.b16 %v208
      %v296 = vunpack.c.h.b16 %v208
      %v297 = vunpack.c.l.b16 %v209
      %v298 = vunpack.c.h.b16 %v209
      %v299 = vunpack.c.l.b16 %v210
      %v300 = vunpack.c.h.b16 %v210
      %v301 = vunpack.c.l.b16 %v211
      %v302 = vunpack.c.h.b16 %v211
      %v303 = vunpack.c.l.b16 %v212
      %v304 = vunpack.c.h.b16 %v212
      %v305 = vpack.c.b16 %v293, %v289
      %v306 = vpack.c.b16 %v294, %v290
      %v307 = vpack.c.b16 %v295, %v291
      %v308 = vpack.c.b16 %v296, %v292
      %v309 = vpack.c.b16 %v301, %v297
      %v310 = vpack.c.b16 %v302, %v298
      %v311 = vpack.c.b16 %v303, %v299
      %v312 = vpack.c.b16 %v304, %v300
      %v385 = vunpack.c.l.b16 %v213
      %v386 = vunpack.c.l.b16 %v214
      %v387 = vunpack.c.l.b16 %v215
      %v388 = vunpack.c.l.b16 %v216
      %v389 = vunpack.c.l.b16 %v217
      %v390 = vunpack.c.l.b16 %v218
      %v391 = vunpack.c.l.b16 %v219
      %v392 = vunpack.c.l.b16 %v220
      %v393 = vunpack.c.l.b16 %v221
      %v394 = vunpack.c.l.b16 %v222
      %v395 = vunpack.c.l.b16 %v223
      %v396 = vunpack.c.l.b16 %v224
      %v397 = vunpack.c.l.b16 %v225
      %v398 = vunpack.c.l.b16 %v226
      %v399 = vunpack.c.l.b16 %v227
      %v400 = vunpack.c.l.b16 %v228
      %v401 = vunpack.c.l.b16 %v229
      %v402 = vunpack.c.l.b16 %v230
      %v403 = vunpack.c.l.b16 %v231
      %v404 = vunpack.c.l.b16 %v232
      %v405 = vunpack.c.l.b16 %v233
      %v406 = vunpack.c.l.b16 %v234
      %v407 = vunpack.c.l.b16 %v235
      %v408 = vunpack.c.l.b16 %v236
      %v409 = vunpack.c.l.b16 %v237
      %v410 = vunpack.c.l.b16 %v238
      %v411 = vunpack.c.l.b16 %v239
      %v412 = vunpack.c.l.b16 %v240
      %v413 = vunpack.c.l.b16 %v241
      %v414 = vunpack.c.l.b16 %v242
      %v415 = vunpack.c.l.b16 %v243
      %v416 = vunpack.c.l.b16 %v244
      %v417 = vunpack.c.l.b16 %v245
      %v418 = vunpack.c.l.b16 %v246
      %v419 = vunpack.c.l.b16 %v247
      %v420 = vunpack.c.l.b16 %v248
      %v421 = vunpack.c.l.b16 %v249
      %v422 = vunpack.c.l.b16 %v250
      %v423 = vunpack.c.l.b16 %v251
      %v424 = vunpack.c.l.b16 %v252
      %v425 = vunpack.c.l.b16 %v253
      %v426 = vunpack.c.l.b16 %v254
      %v427 = vunpack.c.l.b16 %v255
      %v428 = vunpack.c.l.b16 %v256
      %v429 = vunpack.c.l.b16 %v257
      %v430 = vunpack.c.l.b16 %v258
      %v431 = vunpack.c.l.b16 %v259
      %v432 = vunpack.c.l.b16 %v260
      %v433 = vunpack.c.l.b16 %v261
      %v434 = vunpack.c.l.b16 %v262
      %v435 = vunpack.c.l.b16 %v263
      %v436 = vunpack.c.l.b16 %v264
      %v437 = vunpack.c.l.b16 %v265
      %v438 = vunpack.c.l.b16 %v266
      %v439 = vunpack.c.l.b16 %v267
      %v440 = vunpack.c.l.b16 %v268
      %v441 = vunpack.c.l.b16 %v269
      %v442 = vunpack.c.l.b16 %v270
      %v443 = vunpack.c.l.b16 %v271
      %v444 = vunpack.c.l.b16 %v272
      %v445 = vunpack.c.l.b16 %v273
      %v446 = vunpack.c.l.b16 %v274
      %v447 = vunpack.c.l.b16 %v275
      %v448 = vunpack.c.l.b16 %v276
      %v449 = vpack.c.b16 %v386, %v385
      %v450 = vpack.c.b16 %v388, %v387
      %v451 = vpack.c.b16 %v390, %v389
      %v452 = vpack.c.b16 %v392, %v391
      %v453 = vpack.c.b16 %v394, %v393
      %v454 = vpack.c.b16 %v396, %v395
      %v455 = vpack.c.b16 %v398, %v397
      %v456 = vpack.c.b16 %v400, %v399
      %v457 = vpack.c.b16 %v402, %v401
      %v458 = vpack.c.b16 %v404, %v403
      %v459 = vpack.c.b16 %v406, %v405
      %v460 = vpack.c.b16 %v408, %v407
      %v461 = vpack.c.b16 %v410, %v409
      %v462 = vpack.c.b16 %v412, %v411
      %v463 = vpack.c.b16 %v414, %v413
      %v464 = vpack.c.b16 %v416, %v415
      %v465 = vpack.c.b16 %v418, %v417
      %v466 = vpack.c.b16 %v420, %v419
      %v467 = vpack.c.b16 %v422, %v421
      %v468 = vpack.c.b16 %v424, %v423
      %v469 = vpack.c.b16 %v426, %v425
      %v470 = vpack.c.b16 %v428, %v427
      %v471 = vpack.c.b16 %v430, %v429
      %v472 = vpack.c.b16 %v432, %v431
      %v473 = vpack.c.b16 %v434, %v433
      %v474 = vpack.c.b16 %v436, %v435
      %v475 = vpack.c.b16 %v438, %v437
      %v476 = vpack.c.b16 %v440, %v439
      %v477 = vpack.c.b16 %v442, %v441
      %v478 = vpack.c.b16 %v444, %v443
      %v479 = vpack.c.b16 %v446, %v445
      %v480 = vpack.c.b16 %v448, %v447
      %513 = vmatpush.bf16.msra.mxu0 %v456
      %514 = vmatpush.bf16.msra.mxu0 %v455
      %515 = vmatpush.bf16.msra.mxu0 %v454
      %516 = vmatpush.bf16.msra.mxu0 %v453
      %517 = vmatpush.bf16.msra.mxu0 %v452
      %518 = vmatpush.bf16.msra.mxu0 %v451
      %519 = vmatpush.bf16.msra.mxu0 %v450
      %520 = vmatpush.bf16.msra.mxu0 %v449
      %521 = vmatmul.bf16.gmra.mxu0 %v305
      %v522 = vpop.f32.mrf.mxu0
      %v523 = vadd.f32 %v279, %v522
      %v524 = vpop.f32.mrf.mxu0
      %v525 = vadd.f32 %v279, %v524
      %526 = vmatmul.bf16.gmra.mxu0 %v309
      %v527 = vpop.f32.mrf.mxu0
      %v528 = vadd.f32 %v279, %v527
      %v529 = vpop.f32.mrf.mxu0
      %v530 = vadd.f32 %v279, %v529
      %531 = vdwg.mxu0
      %532 = vmatpush.bf16.msra.mxu0 %v464
      %533 = vmatpush.bf16.msra.mxu0 %v463
      %534 = vmatpush.bf16.msra.mxu0 %v462
      %535 = vmatpush.bf16.msra.mxu0 %v461
      %536 = vmatpush.bf16.msra.mxu0 %v460
      %537 = vmatpush.bf16.msra.mxu0 %v459
      %538 = vmatpush.bf16.msra.mxu0 %v458
      %539 = vmatpush.bf16.msra.mxu0 %v457
      %540 = vmatmul.bf16.gmra.mxu0 %v306
      %v541 = vpop.f32.mrf.mxu0
      %v542 = vadd.f32 %v523, %v541
      %v543 = vpop.f32.mrf.mxu0
      %v544 = vadd.f32 %v525, %v543
      %545 = vmatmul.bf16.gmra.mxu0 %v310
      %v546 = vpop.f32.mrf.mxu0
      %v547 = vadd.f32 %v528, %v546
      %v548 = vpop.f32.mrf.mxu0
      %v549 = vadd.f32 %v530, %v548
      %550 = vdwg.mxu0
      %551 = vmatpush.bf16.msra.mxu0 %v472
      %552 = vmatpush.bf16.msra.mxu0 %v471
      %553 = vmatpush.bf16.msra.mxu0 %v470
      %554 = vmatpush.bf16.msra.mxu0 %v469
      %555 = vmatpush.bf16.msra.mxu0 %v468
      %556 = vmatpush.bf16.msra.mxu0 %v467
      %557 = vmatpush.bf16.msra.mxu0 %v466
      %558 = vmatpush.bf16.msra.mxu0 %v465
      %559 = vmatmul.bf16.gmra.mxu0 %v307
      %v560 = vpop.f32.mrf.mxu0
      %v561 = vadd.f32 %v542, %v560
      %v562 = vpop.f32.mrf.mxu0
      %v563 = vadd.f32 %v544, %v562
      %564 = vmatmul.bf16.gmra.mxu0 %v311
      %v565 = vpop.f32.mrf.mxu0
      %v566 = vadd.f32 %v547, %v565
      %v567 = vpop.f32.mrf.mxu0
      %v568 = vadd.f32 %v549, %v567
      %569 = vdwg.mxu0
      %570 = vmatpush.bf16.msra.mxu0 %v480
      %571 = vmatpush.bf16.msra.mxu0 %v479
      %572 = vmatpush.bf16.msra.mxu0 %v478
      %573 = vmatpush.bf16.msra.mxu0 %v477
      %574 = vmatpush.bf16.msra.mxu0 %v476
      %575 = vmatpush.bf16.msra.mxu0 %v475
      %576 = vmatpush.bf16.msra.mxu0 %v474
      %577 = vmatpush.bf16.msra.mxu0 %v473
      %578 = vmatmul.bf16.gmra.mxu0 %v308
      %v579 = vpop.f32.mrf.mxu0
      %v580 = vadd.f32 %v561, %v579
      %v581 = vpop.f32.mrf.mxu0
      %v582 = vadd.f32 %v563, %v581
      %583 = vmatmul.bf16.gmra.mxu0 %v312
      %v584 = vpop.f32.mrf.mxu0
      %v585 = vadd.f32 %v566, %v584
      %v586 = vpop.f32.mrf.mxu0
      %v587 = vadd.f32 %v568, %v586
      %588 = vdwg.mxu0
      %s589 = sld [smem:[#allocation2]]
      %vm590 = vcmp.ge.f32.partialorder %v580, 0.0
      %vm591 = vcmp.ge.f32.partialorder %v582, 0.0
      %vm592 = vcmp.ge.f32.partialorder %v585, 0.0
      %vm593 = vcmp.ge.f32.partialorder %v587, 0.0
      %v594 = vstv %s589
      %v595 = vmul.f32 %v594, %v580
      %v596 = vmul.f32 %v594, %v582
      %v597 = vmul.f32 %v594, %v585
      %v598 = vmul.f32 %v594, %v587
      %v599 = vsel %vm590, %v580, %v595
      %v600 = vsel %vm591, %v582, %v596
      %v601 = vsel %vm592, %v585, %v597
      %v602 = vsel %vm593, %v587, %v598
      %v603 = vpack.c.bf16 %v599, %v599
      %v604 = vpack.c.bf16 %v600, %v600
      %v605 = vpack.c.bf16 %v601, %v601
      %v606 = vpack.c.bf16 %v602, %v602
      %607 = vst [vmem:[%s203] sm:$0xf] %v603
      %608 = vst [vmem:[%s203 + $0x4] sm:$0xf] %v604
      %609 = vst [vmem:[%s203 + $0x8] sm:$0xf] %v605
      %610 = vst [vmem:[%s203 + $0xc] sm:$0xf] %v606
      %s611 = smul.u32 4, %s16
      %p612 = scmp.lt.s32.totalorder %s611, 15
      %s613 = scalar_select %p612, %s611, 15
      %s614 = smul.addr %s613, 4
      %s615 = scalar_lea.vmem %s4, %s614
      // Predicated region
      $region37: #{sisr_block.21} parent=35 // pred_check
        %p616 = pneg %p123
      $region38: #{sisr_block.21} parent=35 // pred_check_branch
        %618 = sbr.rel (%p616) target = $region40
      $region39: #{sisr_block.21} parent=35 // pred_region
        %s619 = smul.u32 4, %s16
      $region40: #{sisr_block.21} parent=35 // pred_fallthru
        _
    $region36: #{sisr_block.21} parent=5 // pred_fallthru
      _
    %p620 = scmp.le.s32.totalorder 2, %s11
    // Predicated region
    $region41: #{sisr_block.21} parent=5 // pred_check
      %p621 = pneg %p620
    $region42: #{sisr_block.21} parent=5 // pred_check_branch
      %623 = sbr.rel (%p621) target = $region44
    $region43: #{sisr_block.21} parent=5 // pred_region
      %s624 = ssub.s32 %s11, 2
      // Predicated region
      $region45: #{sisr_block.21} parent=43 // pred_check
        %p625 = pneg %p129
      $region46: #{sisr_block.21} parent=43 // pred_check_branch
        %627 = sbr.rel (%p625) target = $region48
      $region47: #{sisr_block.21} parent=43 // pred_region
        %s628 = smul.u32 4, %s17
        %p629 = scmp.lt.s32.totalorder %s628, 15
        %s630 = scalar_select %p629, %s628, 15
        %s631 = smul.addr %s630, 4
        %s632 = scalar_lea.vmem %s4, %s631
      $region48: #{sisr_block.21} parent=43 // pred_fallthru
        _
    $region44: #{sisr_block.21} parent=5 // pred_fallthru
      _
  $region6: #{sisr_block.21} parent=0 // loop_footer
    %s15 = sadd.s32 1, %s11
  $region7: #{sisr_block.21} parent=0 // loop_footer_branch
    %10 = sbr.rel target = $region3
  $region8: #{sisr_block.21} parent=0 // loop_exit
    _

// kernel: sisr_block.23
$region0: #{sisr_block.23}
  #allocation0 [shape = 'u32[]', space=smem, size = 0x4, offset = 0x4, fixed_abs, tag = 'smem constant byte address 0x4 - core index']
  #allocation1 [shape = 'u32[72,128]{1,0:T(1,128)}', space=vmem, size = 0x9000, scoped, tag = 'internal scratch']
  #allocation2 [shape = 'f32[1,1]{1,0:T(1,128)S(6)}', space=smem, size = 0x200, scoped, tag = 'scoped memory for sisr_block.23']
  %s0 = inlined_call_operand.vmem [shape: bf16[128,512], index: 0, kind: input, shape index: {}]
  %s1 = inlined_call_operand.vmem [shape: bf16[512,128], index: 1, kind: input, shape index: {}]
  %s2 = inlined_call_operand.vmem [shape: f32[1,128], index: 2, kind: input, shape index: {}]
  %s3 = inlined_call_operand.<no memory space> [shape: f32[1,1], index: 3, kind: input, shape index: {}]
  %s4 = inlined_call_operand.vmem [shape: bf16[128,128], index: 4, kind: input, shape index: {}]
  %s5 = inlined_call_operand.vmem [shape: bf16[128,128], index: 5, kind: output, shape index: {}]
  %s6 = sld [smem:[#allocation0]]
  $region53: #{sisr_block.23} parent=0
    _
  %s8 = ssub.s32 1, %s6
  %s9 = scalar_select 0, %s8, %s6
  %10 = sst [smem:[#allocation2]] %s3
  loop: start=0, step=1, limit=6
  $region2: #{sisr_block.23} parent=0 // loop_pre_header
    _
  $region3: #{sisr_block.23} parent=0 // loop_header
    %s12 = sphi 0, %s16
    %p13 = scmp.ge.s32.totalorder %s12, 6
    %s22 = sphi 0, %s24
    %s25 = sphi 0, %s22
    %s26 = sphi 0, %s25
    %s42 = sphi 0, %s26
    %s46 = sphi 0, %s46
    %s48 = sphi 0, %s46
    %s49 = sphi 0, %s48
    %s63 = sphi 0, %s49
    %s67 = sphi 0, %s67
    %s69 = sphi 0, %s67
    %s70 = sphi 0, %s69
    %s84 = sphi 0, %s70
    %s88 = sphi 0, %s88
    %s90 = sphi 0, %s88
    %s91 = sphi 0, %s90
    %s105 = sphi 0, %s91
    %s111 = sphi 0, %s113
    %s114 = sphi 0, %s111
    %s115 = sphi 0, %s114
    %s131 = sphi 0, %s115
    %s137 = sphi 0, %s139
    %s140 = sphi 0, %s137
    %s141 = sphi 0, %s140
    %s157 = sphi 0, %s141
  $region4: #{sisr_block.23} parent=0 // loop_header_branch
    %15 = sbr.rel (%p13) target = $region8
  $region5: #{sisr_block.23} parent=0 // loop_body
    %s17 = ssub.s32 %s12, 1
    %s18 = ssub.s32 %s12, 2
    %s19 = sadd.s32 %s12, 1
    %s20 = ssub.s32 %s12, %s19
    %p21 = scmp.eq.s32.totalorder %s20, 0
    %s23 = sadd.s32 %s22, 1
    %s24 = scalar_select %p21, %s22, %s23
    %p27 = pneg %p21
    %p28 = scmp.eq.s32.totalorder %s12, 3
    %p29 = por %p27, %p28
    %p30 = scmp.ne.s32.totalorder %s22, %s25
    %p31 = scmp.eq.s32.totalorder %s12, 0
    %p32 = por %p30, %p31
    %p33 = scmp.ne.s32.totalorder %s22, %s25
    %p34 = scmp.eq.s32.totalorder %s17, 3
    %p35 = por %p33, %p34
    %p36 = scmp.ne.s32.totalorder %s25, %s26
    %p37 = scmp.eq.s32.totalorder %s17, 0
    %p38 = por %p36, %p37
    %p39 = scmp.ne.s32.totalorder %s25, %s26
    %p40 = scmp.eq.s32.totalorder %s18, 3
    %p41 = por %p39, %p40
    %p43 = scmp.ne.s32.totalorder %s26, %s42
    %p44 = scmp.eq.s32.totalorder %s18, 0
    %p45 = por %p43, %p44
    %s47 = sadd.s32 %s46, 1
    %p50 = scmp.eq.s32.totalorder %s12, 3
    %p51 = scmp.ne.s32.totalorder %s46, %s48
    %p52 = scmp.eq.s32.totalorder %s12, 0
    %p53 = por %p51, %p52
    %p54 = scmp.ne.s32.totalorder %s46, %s48
    %p55 = scmp.eq.s32.totalorder %s17, 3
    %p56 = por %p54, %p55
    %p57 = scmp.ne.s32.totalorder %s48, %s49
    %p58 = scmp.eq.s32.totalorder %s17, 0
    %p59 = por %p57, %p58
    %p60 = scmp.ne.s32.totalorder %s48, %s49
    %p61 = scmp.eq.s32.totalorder %s18, 3
    %p62 = por %p60, %p61
    %p64 = scmp.ne.s32.totalorder %s49, %s63
    %p65 = scmp.eq.s32.totalorder %s18, 0
    %p66 = por %p64, %p65
    %s68 = sadd.s32 %s67, 1
    %p71 = scmp.eq.s32.totalorder %s12, 3
    %p72 = scmp.ne.s32.totalorder %s67, %s69
    %p73 = scmp.eq.s32.totalorder %s12, 0
    %p74 = por %p72, %p73
    %p75 = scmp.ne.s32.totalorder %s67, %s69
    %p76 = scmp.eq.s32.totalorder %s17, 3
    %p77 = por %p75, %p76
    %p78 = scmp.ne.s32.totalorder %s69, %s70
    %p79 = scmp.eq.s32.totalorder %s17, 0
    %p80 = por %p78, %p79
    %p81 = scmp.ne.s32.totalorder %s69, %s70
    %p82 = scmp.eq.s32.totalorder %s18, 3
    %p83 = por %p81, %p82
    %p85 = scmp.ne.s32.totalorder %s70, %s84
    %p86 = scmp.eq.s32.totalorder %s18, 0
    %p87 = por %p85, %p86
    %s89 = sadd.s32 %s88, 1
    %p92 = scmp.eq.s32.totalorder %s12, 3
    %p93 = scmp.ne.s32.totalorder %s88, %s90
    %p94 = scmp.eq.s32.totalorder %s12, 0
    %p95 = por %p93, %p94
    %p96 = scmp.ne.s32.totalorder %s88, %s90
    %p97 = scmp.eq.s32.totalorder %s17, 3
    %p98 = por %p96, %p97
    %p99 = scmp.ne.s32.totalorder %s90, %s91
    %p100 = scmp.eq.s32.totalorder %s17, 0
    %p101 = por %p99, %p100
    %p102 = scmp.ne.s32.totalorder %s90, %s91
    %p103 = scmp.eq.s32.totalorder %s18, 3
    %p104 = por %p102, %p103
    %p106 = scmp.ne.s32.totalorder %s91, %s105
    %p107 = scmp.eq.s32.totalorder %s18, 0
    %p108 = por %p106, %p107
    %s109 = ssub.s32 %s12, %s19
    %p110 = scmp.eq.s32.totalorder %s109, 0
    %s112 = sadd.s32 %s111, 1
    %s113 = scalar_select %p110, %s111, %s112
    %p116 = pneg %p110
    %p117 = scmp.eq.s32.totalorder %s12, 3
    %p118 = por %p116, %p117
    %p119 = scmp.ne.s32.totalorder %s111, %s114
    %p120 = scmp.eq.s32.totalorder %s12, 0
    %p121 = por %p119, %p120
    %p122 = scmp.ne.s32.totalorder %s111, %s114
    %p123 = scmp.eq.s32.totalorder %s17, 3
    %p124 = por %p122, %p123
    %p125 = scmp.ne.s32.totalorder %s114, %s115
    %p126 = scmp.eq.s32.totalorder %s17, 0
    %p127 = por %p125, %p126
    %p128 = scmp.ne.s32.totalorder %s114, %s115
    %p129 = scmp.eq.s32.totalorder %s18, 3
    %p130 = por %p128, %p129
    %p132 = scmp.ne.s32.totalorder %s115, %s131
    %p133 = scmp.eq.s32.totalorder %s18, 0
    %p134 = por %p132, %p133
    %s135 = ssub.s32 %s12, %s19
    %p136 = scmp.eq.s32.totalorder %s135, 0
    %s138 = sadd.s32 %s137, 1
    %s139 = scalar_select %p136, %s137, %s138
    %p142 = pneg %p136
    %p143 = scmp.eq.s32.totalorder %s12, 3
    %p144 = por %p142, %p143
    %p145 = scmp.ne.s32.totalorder %s137, %s140
    %p146 = scmp.eq.s32.totalorder %s12, 0
    %p147 = por %p145, %p146
    %p148 = scmp.ne.s32.totalorder %s137, %s140
    %p149 = scmp.eq.s32.totalorder %s17, 3
    %p150 = por %p148, %p149
    %p151 = scmp.ne.s32.totalorder %s140, %s141
    %p152 = scmp.eq.s32.totalorder %s17, 0
    %p153 = por %p151, %p152
    %p154 = scmp.ne.s32.totalorder %s140, %s141
    %p155 = scmp.eq.s32.totalorder %s18, 3
    %p156 = por %p154, %p155
    %p158 = scmp.ne.s32.totalorder %s141, %s157
    %p159 = scmp.eq.s32.totalorder %s18, 0
    %p160 = por %p158, %p159
    %p161 = scmp.le.s32.totalorder 1, %s12
    %p162 = scmp.lt.s32.totalorder %s12, 5
    %p163 = pnand %p161, %p162
    %p164 = pneg %p163
    // Predicated region
    $region9: #{sisr_block.23} parent=5 // pred_check
      _
    $region10: #{sisr_block.23} parent=5 // pred_check_branch
      %166 = sbr.rel (%p163) target = $region12
    $region11: #{sisr_block.23} parent=5 // pred_region
      %s167 = ssub.s32 %s12, 1
      // Predicated region
      $region13: #{sisr_block.23} parent=11 // pred_check
        %p168 = pneg %p59
      $region14: #{sisr_block.23} parent=11 // pred_check_branch
        %170 = sbr.rel (%p168) target = $region16
      $region15: #{sisr_block.23} parent=11 // pred_region
        _
      $region16: #{sisr_block.23} parent=11 // pred_fallthru
        _
      // Predicated region
      $region17: #{sisr_block.23} parent=11 // pred_check
        %p171 = pneg %p80
      $region18: #{sisr_block.23} parent=11 // pred_check_branch
        %173 = sbr.rel (%p171) target = $region20
      $region19: #{sisr_block.23} parent=11 // pred_region
        _
      $region20: #{sisr_block.23} parent=11 // pred_fallthru
        _
      // Predicated region
      $region21: #{sisr_block.23} parent=11 // pred_check
        %p174 = pneg %p101
      $region22: #{sisr_block.23} parent=11 // pred_check_branch
        %176 = sbr.rel (%p174) target = $region24
      $region23: #{sisr_block.23} parent=11 // pred_region
        _
      $region24: #{sisr_block.23} parent=11 // pred_fallthru
        _
    $region12: #{sisr_block.23} parent=5 // pred_fallthru
      _
    %p177 = scmp.lt.s32.totalorder %s12, 4
    // Predicated region
    $region25: #{sisr_block.23} parent=5 // pred_check
      %p178 = pneg %p177
    $region26: #{sisr_block.23} parent=5 // pred_check_branch
      %180 = sbr.rel (%p178) target = $region28
    $region27: #{sisr_block.23} parent=5 // pred_region
      // Predicated region
      $region29: #{sisr_block.23} parent=27 // pred_check
        %p181 = pneg %p32
      $region30: #{sisr_block.23} parent=27 // pred_check_branch
        %183 = sbr.rel (%p181) target = $region32
      $region31: #{sisr_block.23} parent=27 // pred_region
        %s184 = smul.u32 4, %s12
        %p185 = scmp.lt.s32.totalorder %s184, 15
        %s186 = scalar_select %p185, %s184, 15
        %s187 = smul.addr %s186, 4
        %s188 = smul.addr %s187, 4
        %s189 = scalar_lea.vmem %s0, %s188
        %s190 = smul.u32 4, %s12
      $region32: #{sisr_block.23} parent=27 // pred_fallthru
        _
      // Predicated region
      $region33: #{sisr_block.23} parent=27 // pred_check
        %p191 = pneg %p121
      $region34: #{sisr_block.23} parent=27 // pred_check_branch
        %193 = sbr.rel (%p191) target = $region36
      $region35: #{sisr_block.23} parent=27 // pred_region
        %s194 = smul.u32 4, %s12
        %p195 = scmp.lt.s32.totalorder %s194, 15
        %s196 = scalar_select %p195, %s194, 15
        %s197 = smul.addr %s196, 4
        %s198 = scalar_lea.vmem %s4, %s197
        %s199 = smul.u32 4, %s12
      $region36: #{sisr_block.23} parent=27 // pred_fallthru
        _
    $region28: #{sisr_block.23} parent=5 // pred_fallthru
      _
    %p200 = scmp.le.s32.totalorder 1, %s12
    %p201 = scmp.lt.s32.totalorder %s12, 5
    %p202 = pnand %p200, %p201
    %p203 = pneg %p202
    // Predicated region
    $region37: #{sisr_block.23} parent=5 // pred_check
      _
    $region38: #{sisr_block.23} parent=5 // pred_check_branch
      %205 = sbr.rel (%p202) target = $region40
    $region39: #{sisr_block.23} parent=5 // pred_region
      %s206 = ssub.s32 %s12, 1
      %s207 = smul.u32 4, %s17
      %p208 = scmp.lt.s32.totalorder %s207, 15
      %s209 = scalar_select %p208, %s207, 15
      %s210 = smul.addr %s209, 4
      %s211 = smul.addr %s210, 4
      %s212 = scalar_lea.vmem %s0, %s211
      %p213 = pneg %p38
      %p214 = pneg %p35
      %p215 = pneg %p59
      %p216 = pneg %p56
      %p217 = pneg %p80
      %p218 = pneg %p77
      %p219 = pneg %p101
      %p220 = pneg %p98
      %s221 = smul.u32 4, %s17
      %p222 = scmp.lt.s32.totalorder %s221, 15
      %s223 = scalar_select %p222, %s221, 15
      %s224 = smul.addr %s223, 4
      %s225 = scalar_lea.vmem %s4, %s224
      %p226 = pneg %p127
      %p227 = pneg %p124
      %p228 = pneg %p153
      %p229 = pneg %p150
      %s230 = smul.u32 4, %s17
      %p231 = scmp.lt.s32.totalorder %s230, 15
      %s232 = scalar_select %p231, %s230, 15
      %s233 = smul.addr %s232, 4
      %s234 = scalar_lea.vmem %s5, %s233
      %s235 = smul.u32 4, %s17
      %p236 = scmp.lt.s32.totalorder %s235, 15
      %s237 = scalar_select %p236, %s235, 15
      %s238 = smul.addr %s237, 4
      %s239 = smul.addr %s238, 4
      %s240 = scalar_lea.vmem %s0, %s239
      %s241 = smul.u32 4, %s17
      %s242 = smul.u32 4, %s17
      %p243 = scmp.lt.s32.totalorder %s242, 15
      %s244 = scalar_select %p243, %s242, 15
      %s245 = smul.addr %s244, 4
      %s246 = scalar_lea.vmem %s4, %s245
      %s247 = smul.u32 4, %s17
      %s248 = smul.u32 4, %s17
      %p249 = scmp.lt.s32.totalorder %s248, 15
      %s250 = scalar_select %p249, %s248, 15
      %s251 = smul.addr %s250, 4
      %s252 = scalar_lea.vmem %s5, %s251
      %s253 = smul.u32 4, %s17
      %v254 = vld [vmem:[%s240] sm:$0xff]
      %v255 = vld [vmem:[%s240 + $0x8] sm:$0xff]
      %v256 = vld [vmem:[%s240 + $0x10] sm:$0xff]
      %v257 = vld [vmem:[%s240 + $0x18] sm:$0xff]
      %v258 = vld [vmem:[%s240 + $0x20] sm:$0xff]
      %v259 = vld [vmem:[%s240 + $0x28] sm:$0xff]
      %v260 = vld [vmem:[%s240 + $0x30] sm:$0xff]
      %v261 = vld [vmem:[%s240 + $0x38] sm:$0xff]
      %v262 = vld [vmem:[%s1] sm:$0xf]
      %v263 = vld [vmem:[%s1 + $0x4] sm:$0xf]
      %v264 = vld [vmem:[%s1 + $0x8] sm:$0xf]
      %v265 = vld [vmem:[%s1 + $0xc] sm:$0xf]
      %v266 = vld [vmem:[%s1 + $0x10] sm:$0xf]
      %v267 = vld [vmem:[%s1 + $0x14] sm:$0xf]
      %v268 = vld [vmem:[%s1 + $0x18] sm:$0xf]
      %v269 = vld [vmem:[%s1 + $0x1c] sm:$0xf]
      %v270 = vld [vmem:[%s1 + $0x20] sm:$0xf]
      %v271 = vld [vmem:[%s1 + $0x24] sm:$0xf]
      %v272 = vld [vmem:[%s1 + $0x28] sm:$0xf]
      %v273 = vld [vmem:[%s1 + $0x2c] sm:$0xf]
      %v274 = vld [vmem:[%s1 + $0x30] sm:$0xf]
      %v275 = vld [vmem:[%s1 + $0x34] sm:$0xf]
      %v276 = vld [vmem:[%s1 + $0x38] sm:$0xf]
      %v277 = vld [vmem:[%s1 + $0x3c] sm:$0xf]
      %v278 = vld [vmem:[%s1 + $0x40] sm:$0xf]
      %v279 = vld [vmem:[%s1 + $0x44] sm:$0xf]
      %v280 = vld [vmem:[%s1 + $0x48] sm:$0xf]
      %v281 = vld [vmem:[%s1 + $0x4c] sm:$0xf]
      %v282 = vld [vmem:[%s1 + $0x50] sm:$0xf]
      %v283 = vld [vmem:[%s1 + $0x54] sm:$0xf]
      %v284 = vld [vmem:[%s1 + $0x58] sm:$0xf]
      %v285 = vld [vmem:[%s1 + $0x5c] sm:$0xf]
      %v286 = vld [vmem:[%s1 + $0x60] sm:$0xf]
      %v287 = vld [vmem:[%s1 + $0x64] sm:$0xf]
      %v288 = vld [vmem:[%s1 + $0x68] sm:$0xf]
      %v289 = vld [vmem:[%s1 + $0x6c] sm:$0xf]
      %v290 = vld [vmem:[%s1 + $0x70] sm:$0xf]
      %v291 = vld [vmem:[%s1 + $0x74] sm:$0xf]
      %v292 = vld [vmem:[%s1 + $0x78] sm:$0xf]
      %v293 = vld [vmem:[%s1 + $0x7c] sm:$0xf]
      %v294 = vld [vmem:[%s1 + $0x80] sm:$0xf]
      %v295 = vld [vmem:[%s1 + $0x84] sm:$0xf]
      %v296 = vld [vmem:[%s1 + $0x88] sm:$0xf]
      %v297 = vld [vmem:[%s1 + $0x8c] sm:$0xf]
      %v298 = vld [vmem:[%s1 + $0x90] sm:$0xf]
      %v299 = vld [vmem:[%s1 + $0x94] sm:$0xf]
      %v300 = vld [vmem:[%s1 + $0x98] sm:$0xf]
      %v301 = vld [vmem:[%s1 + $0x9c] sm:$0xf]
      %v302 = vld [vmem:[%s1 + $0xa0] sm:$0xf]
      %v303 = vld [vmem:[%s1 + $0xa4] sm:$0xf]
      %v304 = vld [vmem:[%s1 + $0xa8] sm:$0xf]
      %v305 = vld [vmem:[%s1 + $0xac] sm:$0xf]
      %v306 = vld [vmem:[%s1 + $0xb0] sm:$0xf]
      %v307 = vld [vmem:[%s1 + $0xb4] sm:$0xf]
      %v308 = vld [vmem:[%s1 + $0xb8] sm:$0xf]
      %v309 = vld [vmem:[%s1 + $0xbc] sm:$0xf]
      %v310 = vld [vmem:[%s1 + $0xc0] sm:$0xf]
      %v311 = vld [vmem:[%s1 + $0xc4] sm:$0xf]
      %v312 = vld [vmem:[%s1 + $0xc8] sm:$0xf]
      %v313 = vld [vmem:[%s1 + $0xcc] sm:$0xf]
      %v314 = vld [vmem:[%s1 + $0xd0] sm:$0xf]
      %v315 = vld [vmem:[%s1 + $0xd4] sm:$0xf]
      %v316 = vld [vmem:[%s1 + $0xd8] sm:$0xf]
      %v317 = vld [vmem:[%s1 + $0xdc] sm:$0xf]
      %v318 = vld [vmem:[%s1 + $0xe0] sm:$0xf]
      %v319 = vld [vmem:[%s1 + $0xe4] sm:$0xf]
      %v320 = vld [vmem:[%s1 + $0xe8] sm:$0xf]
      %v321 = vld [vmem:[%s1 + $0xec] sm:$0xf]
      %v322 = vld [vmem:[%s1 + $0xf0] sm:$0xf]
      %v323 = vld [vmem:[%s1 + $0xf4] sm:$0xf]
      %v324 = vld [vmem:[%s1 + $0xf8] sm:$0xf]
      %v325 = vld [vmem:[%s1 + $0xfc] sm:$0xf]
      %v326 = vld [vmem:[%s2] sm:$0x1]
      %v328 = vperm.slane %v326, 0
      %v338 = vunpack.c.l.b16 %v254
      %v339 = vunpack.c.h.b16 %v254
      %v340 = vunpack.c.l.b16 %v255
      %v341 = vunpack.c.h.b16 %v255
      %v342 = vunpack.c.l.b16 %v256
      %v343 = vunpack.c.h.b16 %v256
      %v344 = vunpack.c.l.b16 %v257
      %v345 = vunpack.c.h.b16 %v257
      %v346 = vunpack.c.l.b16 %v258
      %v347 = vunpack.c.h.b16 %v258
      %v348 = vunpack.c.l.b16 %v259
      %v349 = vunpack.c.h.b16 %v259
      %v350 = vunpack.c.l.b16 %v260
      %v351 = vunpack.c.h.b16 %v260
      %v352 = vunpack.c.l.b16 %v261
      %v353 = vunpack.c.h.b16 %v261
      %v354 = vpack.c.b16 %v342, %v338
      %v355 = vpack.c.b16 %v343, %v339
      %v356 = vpack.c.b16 %v344, %v340
      %v357 = vpack.c.b16 %v345, %v341
      %v358 = vpack.c.b16 %v350, %v346
      %v359 = vpack.c.b16 %v351, %v347
      %v360 = vpack.c.b16 %v352, %v348
      %v361 = vpack.c.b16 %v353, %v349
      %v434 = vunpack.c.l.b16 %v262
      %v435 = vunpack.c.l.b16 %v263
      %v436 = vunpack.c.l.b16 %v264
      %v437 = vunpack.c.l.b16 %v265
      %v438 = vunpack.c.l.b16 %v266
      %v439 = vunpack.c.l.b16 %v267
      %v440 = vunpack.c.l.b16 %v268
      %v441 = vunpack.c.l.b16 %v269
      %v442 = vunpack.c.l.b16 %v270
      %v443 = vunpack.c.l.b16 %v271
      %v444 = vunpack.c.l.b16 %v272
      %v445 = vunpack.c.l.b16 %v273
      %v446 = vunpack.c.l.b16 %v274
      %v447 = vunpack.c.l.b16 %v275
      %v448 = vunpack.c.l.b16 %v276
      %v449 = vunpack.c.l.b16 %v277
      %v450 = vunpack.c.l.b16 %v278
      %v451 = vunpack.c.l.b16 %v279
      %v452 = vunpack.c.l.b16 %v280
      %v453 = vunpack.c.l.b16 %v281
      %v454 = vunpack.c.l.b16 %v282
      %v455 = vunpack.c.l.b16 %v283
      %v456 = vunpack.c.l.b16 %v284
      %v457 = vunpack.c.l.b16 %v285
      %v458 = vunpack.c.l.b16 %v286
      %v459 = vunpack.c.l.b16 %v287
      %v460 = vunpack.c.l.b16 %v288
      %v461 = vunpack.c.l.b16 %v289
      %v462 = vunpack.c.l.b16 %v290
      %v463 = vunpack.c.l.b16 %v291
      %v464 = vunpack.c.l.b16 %v292
      %v465 = vunpack.c.l.b16 %v293
      %v466 = vunpack.c.l.b16 %v294
      %v467 = vunpack.c.l.b16 %v295
      %v468 = vunpack.c.l.b16 %v296
      %v469 = vunpack.c.l.b16 %v297
      %v470 = vunpack.c.l.b16 %v298
      %v471 = vunpack.c.l.b16 %v299
      %v472 = vunpack.c.l.b16 %v300
      %v473 = vunpack.c.l.b16 %v301
      %v474 = vunpack.c.l.b16 %v302
      %v475 = vunpack.c.l.b16 %v303
      %v476 = vunpack.c.l.b16 %v304
      %v477 = vunpack.c.l.b16 %v305
      %v478 = vunpack.c.l.b16 %v306
      %v479 = vunpack.c.l.b16 %v307
      %v480 = vunpack.c.l.b16 %v308
      %v481 = vunpack.c.l.b16 %v309
      %v482 = vunpack.c.l.b16 %v310
      %v483 = vunpack.c.l.b16 %v311
      %v484 = vunpack.c.l.b16 %v312
      %v485 = vunpack.c.l.b16 %v313
      %v486 = vunpack.c.l.b16 %v314
      %v487 = vunpack.c.l.b16 %v315
      %v488 = vunpack.c.l.b16 %v316
      %v489 = vunpack.c.l.b16 %v317
      %v490 = vunpack.c.l.b16 %v318
      %v491 = vunpack.c.l.b16 %v319
      %v492 = vunpack.c.l.b16 %v320
      %v493 = vunpack.c.l.b16 %v321
      %v494 = vunpack.c.l.b16 %v322
      %v495 = vunpack.c.l.b16 %v323
      %v496 = vunpack.c.l.b16 %v324
      %v497 = vunpack.c.l.b16 %v325
      %v498 = vpack.c.b16 %v435, %v434
      %v499 = vpack.c.b16 %v437, %v436
      %v500 = vpack.c.b16 %v439, %v438
      %v501 = vpack.c.b16 %v441, %v440
      %v502 = vpack.c.b16 %v443, %v442
      %v503 = vpack.c.b16 %v445, %v444
      %v504 = vpack.c.b16 %v447, %v446
      %v505 = vpack.c.b16 %v449, %v448
      %v506 = vpack.c.b16 %v451, %v450
      %v507 = vpack.c.b16 %v453, %v452
      %v508 = vpack.c.b16 %v455, %v454
      %v509 = vpack.c.b16 %v457, %v456
      %v510 = vpack.c.b16 %v459, %v458
      %v511 = vpack.c.b16 %v461, %v460
      %v512 = vpack.c.b16 %v463, %v462
      %v513 = vpack.c.b16 %v465, %v464
      %v514 = vpack.c.b16 %v467, %v466
      %v515 = vpack.c.b16 %v469, %v468
      %v516 = vpack.c.b16 %v471, %v470
      %v517 = vpack.c.b16 %v473, %v472
      %v518 = vpack.c.b16 %v475, %v474
      %v519 = vpack.c.b16 %v477, %v476
      %v520 = vpack.c.b16 %v479, %v478
      %v521 = vpack.c.b16 %v481, %v480
      %v522 = vpack.c.b16 %v483, %v482
      %v523 = vpack.c.b16 %v485, %v484
      %v524 = vpack.c.b16 %v487, %v486
      %v525 = vpack.c.b16 %v489, %v488
      %v526 = vpack.c.b16 %v491, %v490
      %v527 = vpack.c.b16 %v493, %v492
      %v528 = vpack.c.b16 %v495, %v494
      %v529 = vpack.c.b16 %v497, %v496
      %562 = vmatpush.bf16.msra.mxu0 %v505
      %563 = vmatpush.bf16.msra.mxu0 %v504
      %564 = vmatpush.bf16.msra.mxu0 %v503
      %565 = vmatpush.bf16.msra.mxu0 %v502
      %566 = vmatpush.bf16.msra.mxu0 %v501
      %567 = vmatpush.bf16.msra.mxu0 %v500
      %568 = vmatpush.bf16.msra.mxu0 %v499
      %569 = vmatpush.bf16.msra.mxu0 %v498
      %570 = vmatmul.bf16.gmra.mxu0 %v354
      %v571 = vpop.f32.mrf.mxu0
      %v572 = vadd.f32 %v328, %v571
      %v573 = vpop.f32.mrf.mxu0
      %v574 = vadd.f32 %v328, %v573
      %575 = vmatmul.bf16.gmra.mxu0 %v358
      %v576 = vpop.f32.mrf.mxu0
      %v577 = vadd.f32 %v328, %v576
      %v578 = vpop.f32.mrf.mxu0
      %v579 = vadd.f32 %v328, %v578
      %580 = vdwg.mxu0
      %581 = vmatpush.bf16.msra.mxu0 %v513
      %582 = vmatpush.bf16.msra.mxu0 %v512
      %583 = vmatpush.bf16.msra.mxu0 %v511
      %584 = vmatpush.bf16.msra.mxu0 %v510
      %585 = vmatpush.bf16.msra.mxu0 %v509
      %586 = vmatpush.bf16.msra.mxu0 %v508
      %587 = vmatpush.bf16.msra.mxu0 %v507
      %588 = vmatpush.bf16.msra.mxu0 %v506
      %589 = vmatmul.bf16.gmra.mxu0 %v355
      %v590 = vpop.f32.mrf.mxu0
      %v591 = vadd.f32 %v572, %v590
      %v592 = vpop.f32.mrf.mxu0
      %v593 = vadd.f32 %v574, %v592
      %594 = vmatmul.bf16.gmra.mxu0 %v359
      %v595 = vpop.f32.mrf.mxu0
      %v596 = vadd.f32 %v577, %v595
      %v597 = vpop.f32.mrf.mxu0
      %v598 = vadd.f32 %v579, %v597
      %599 = vdwg.mxu0
      %600 = vmatpush.bf16.msra.mxu0 %v521
      %601 = vmatpush.bf16.msra.mxu0 %v520
      %602 = vmatpush.bf16.msra.mxu0 %v519
      %603 = vmatpush.bf16.msra.mxu0 %v518
      %604 = vmatpush.bf16.msra.mxu0 %v517
      %605 = vmatpush.bf16.msra.mxu0 %v516
      %606 = vmatpush.bf16.msra.mxu0 %v515
      %607 = vmatpush.bf16.msra.mxu0 %v514
      %608 = vmatmul.bf16.gmra.mxu0 %v356
      %v609 = vpop.f32.mrf.mxu0
      %v610 = vadd.f32 %v591, %v609
      %v611 = vpop.f32.mrf.mxu0
      %v612 = vadd.f32 %v593, %v611
      %613 = vmatmul.bf16.gmra.mxu0 %v360
      %v614 = vpop.f32.mrf.mxu0
      %v615 = vadd.f32 %v596, %v614
      %v616 = vpop.f32.mrf.mxu0
      %v617 = vadd.f32 %v598, %v616
      %618 = vdwg.mxu0
      %619 = vmatpush.bf16.msra.mxu0 %v529
      %620 = vmatpush.bf16.msra.mxu0 %v528
      %621 = vmatpush.bf16.msra.mxu0 %v527
      %622 = vmatpush.bf16.msra.mxu0 %v526
      %623 = vmatpush.bf16.msra.mxu0 %v525
      %624 = vmatpush.bf16.msra.mxu0 %v524
      %625 = vmatpush.bf16.msra.mxu0 %v523
      %626 = vmatpush.bf16.msra.mxu0 %v522
      %627 = vmatmul.bf16.gmra.mxu0 %v357
      %v628 = vpop.f32.mrf.mxu0
      %v629 = vadd.f32 %v610, %v628
      %v630 = vpop.f32.mrf.mxu0
      %v631 = vadd.f32 %v612, %v630
      %632 = vmatmul.bf16.gmra.mxu0 %v361
      %v633 = vpop.f32.mrf.mxu0
      %v634 = vadd.f32 %v615, %v633
      %v635 = vpop.f32.mrf.mxu0
      %v636 = vadd.f32 %v617, %v635
      %637 = vdwg.mxu0
      %s638 = sld [smem:[#allocation2]]
      %vm639 = vcmp.ge.f32.partialorder %v629, 0.0
      %vm640 = vcmp.ge.f32.partialorder %v631, 0.0
      %vm641 = vcmp.ge.f32.partialorder %v634, 0.0
      %vm642 = vcmp.ge.f32.partialorder %v636, 0.0
      %v643 = vstv %s638
      %v644 = vmul.f32 %v643, %v629
      %v645 = vmul.f32 %v643, %v631
      %v646 = vmul.f32 %v643, %v634
      %v647 = vmul.f32 %v643, %v636
      %v648 = vsel %vm639, %v629, %v644
      %v649 = vsel %vm640, %v631, %v645
      %v650 = vsel %vm641, %v634, %v646
      %v651 = vsel %vm642, %v636, %v647
      %v652 = vld [vmem:[%s246] sm:$0xf]
      %v653 = vld [vmem:[%s246 + $0x4] sm:$0xf]
      %v654 = vld [vmem:[%s246 + $0x8] sm:$0xf]
      %v655 = vld [vmem:[%s246 + $0xc] sm:$0xf]
      %v656 = vunpack.c.l.bf16 %v652
      %v657 = vunpack.c.l.bf16 %v653
      %v658 = vunpack.c.l.bf16 %v654
      %v659 = vunpack.c.l.bf16 %v655
      %v660 = vadd.f32 %v648, %v656
      %v661 = vadd.f32 %v649, %v657
      %v662 = vadd.f32 %v650, %v658
      %v663 = vadd.f32 %v651, %v659
      %v664 = vpack.c.bf16 %v660, %v660
      %v665 = vpack.c.bf16 %v661, %v661
      %v666 = vpack.c.bf16 %v662, %v662
      %v667 = vpack.c.bf16 %v663, %v663
      %668 = vst [vmem:[%s252] sm:$0xf] %v664
      %669 = vst [vmem:[%s252 + $0x4] sm:$0xf] %v665
      %670 = vst [vmem:[%s252 + $0x8] sm:$0xf] %v666
      %671 = vst [vmem:[%s252 + $0xc] sm:$0xf] %v667
      %s672 = smul.u32 4, %s17
      %p673 = scmp.lt.s32.totalorder %s672, 15
      %s674 = scalar_select %p673, %s672, 15
      %s675 = smul.addr %s674, 4
      %s676 = scalar_lea.vmem %s5, %s675
      // Predicated region
      $region41: #{sisr_block.23} parent=39 // pred_check
        %p677 = pneg %p150
      $region42: #{sisr_block.23} parent=39 // pred_check_branch
        %679 = sbr.rel (%p677) target = $region44
      $region43: #{sisr_block.23} parent=39 // pred_region
        %s680 = smul.u32 4, %s17
      $region44: #{sisr_block.23} parent=39 // pred_fallthru
        _
    $region40: #{sisr_block.23} parent=5 // pred_fallthru
      _
    %p681 = scmp.le.s32.totalorder 2, %s12
    // Predicated region
    $region45: #{sisr_block.23} parent=5 // pred_check
      %p682 = pneg %p681
    $region46: #{sisr_block.23} parent=5 // pred_check_branch
      %684 = sbr.rel (%p682) target = $region48
    $region47: #{sisr_block.23} parent=5 // pred_region
      %s685 = ssub.s32 %s12, 2
      // Predicated region
      $region49: #{sisr_block.23} parent=47 // pred_check
        %p686 = pneg %p156
      $region50: #{sisr_block.23} parent=47 // pred_check_branch
        %688 = sbr.rel (%p686) target = $region52
      $region51: #{sisr_block.23} parent=47 // pred_region
        %s689 = smul.u32 4, %s18
        %p690 = scmp.lt.s32.totalorder %s689, 15
        %s691 = scalar_select %p690, %s689, 15
        %s692 = smul.addr %s691, 4
        %s693 = scalar_lea.vmem %s5, %s692
      $region52: #{sisr_block.23} parent=47 // pred_fallthru
        _
    $region48: #{sisr_block.23} parent=5 // pred_fallthru
      _
  $region6: #{sisr_block.23} parent=0 // loop_footer
    %s16 = sadd.s32 1, %s12
  $region7: #{sisr_block.23} parent=0 // loop_footer_branch
    %11 = sbr.rel target = $region3
  $region8: #{sisr_block.23} parent=0 // loop_exit
    _

// kernel: sisr_block.22
$region0: #{sisr_block.22}
  #allocation0 [shape = 'u32[]', space=smem, size = 0x4, offset = 0x4, fixed_abs, tag = 'smem constant byte address 0x4 - core index']
  #allocation1 [shape = 'u32[72,128]{1,0:T(1,128)}', space=vmem, size = 0x9000, scoped, tag = 'internal scratch']
  #allocation2 [shape = 'f32[1,1]{1,0:T(1,128)S(6)}', space=smem, size = 0x200, scoped, tag = 'scoped memory for sisr_block.22']
  %s0 = inlined_call_operand.vmem [shape: bf16[128,1152], index: 0, kind: input, shape index: {}]
  %s1 = inlined_call_operand.vmem [shape: bf16[1152,128], index: 1, kind: input, shape index: {}]
  %s2 = inlined_call_operand.vmem [shape: f32[1,128], index: 2, kind: input, shape index: {}]
  %s3 = inlined_call_operand.<no memory space> [shape: f32[1,1], index: 3, kind: input, shape index: {}]
  %s4 = inlined_call_operand.vmem [shape: bf16[128,128], index: 4, kind: input, shape index: {}]
  %s5 = inlined_call_operand.vmem [shape: bf16[128,128], index: 5, kind: output, shape index: {}]
  %s6 = sld [smem:[#allocation0]]
  $region53: #{sisr_block.22} parent=0
    _
  %s8 = ssub.s32 1, %s6
  %s9 = scalar_select 0, %s8, %s6
  %10 = sst [smem:[#allocation2]] %s3
  loop: start=0, step=1, limit=6
  $region2: #{sisr_block.22} parent=0 // loop_pre_header
    _
  $region3: #{sisr_block.22} parent=0 // loop_header
    %s12 = sphi 0, %s16
    %p13 = scmp.ge.s32.totalorder %s12, 6
    %s22 = sphi 0, %s24
    %s25 = sphi 0, %s22
    %s26 = sphi 0, %s25
    %s42 = sphi 0, %s26
    %s46 = sphi 0, %s46
    %s48 = sphi 0, %s46
    %s49 = sphi 0, %s48
    %s63 = sphi 0, %s49
    %s67 = sphi 0, %s67
    %s69 = sphi 0, %s67
    %s70 = sphi 0, %s69
    %s84 = sphi 0, %s70
    %s88 = sphi 0, %s88
    %s90 = sphi 0, %s88
    %s91 = sphi 0, %s90
    %s105 = sphi 0, %s91
    %s111 = sphi 0, %s113
    %s114 = sphi 0, %s111
    %s115 = sphi 0, %s114
    %s131 = sphi 0, %s115
    %s137 = sphi 0, %s139
    %s140 = sphi 0, %s137
    %s141 = sphi 0, %s140
    %s157 = sphi 0, %s141
  $region4: #{sisr_block.22} parent=0 // loop_header_branch
    %15 = sbr.rel (%p13) target = $region8
  $region5: #{sisr_block.22} parent=0 // loop_body
    %s17 = ssub.s32 %s12, 1
    %s18 = ssub.s32 %s12, 2
    %s19 = sadd.s32 %s12, 1
    %s20 = ssub.s32 %s12, %s19
    %p21 = scmp.eq.s32.totalorder %s20, 0
    %s23 = sadd.s32 %s22, 1
    %s24 = scalar_select %p21, %s22, %s23
    %p27 = pneg %p21
    %p28 = scmp.eq.s32.totalorder %s12, 3
    %p29 = por %p27, %p28
    %p30 = scmp.ne.s32.totalorder %s22, %s25
    %p31 = scmp.eq.s32.totalorder %s12, 0
    %p32 = por %p30, %p31
    %p33 = scmp.ne.s32.totalorder %s22, %s25
    %p34 = scmp.eq.s32.totalorder %s17, 3
    %p35 = por %p33, %p34
    %p36 = scmp.ne.s32.totalorder %s25, %s26
    %p37 = scmp.eq.s32.totalorder %s17, 0
    %p38 = por %p36, %p37
    %p39 = scmp.ne.s32.totalorder %s25, %s26
    %p40 = scmp.eq.s32.totalorder %s18, 3
    %p41 = por %p39, %p40
    %p43 = scmp.ne.s32.totalorder %s26, %s42
    %p44 = scmp.eq.s32.totalorder %s18, 0
    %p45 = por %p43, %p44
    %s47 = sadd.s32 %s46, 1
    %p50 = scmp.eq.s32.totalorder %s12, 3
    %p51 = scmp.ne.s32.totalorder %s46, %s48
    %p52 = scmp.eq.s32.totalorder %s12, 0
    %p53 = por %p51, %p52
    %p54 = scmp.ne.s32.totalorder %s46, %s48
    %p55 = scmp.eq.s32.totalorder %s17, 3
    %p56 = por %p54, %p55
    %p57 = scmp.ne.s32.totalorder %s48, %s49
    %p58 = scmp.eq.s32.totalorder %s17, 0
    %p59 = por %p57, %p58
    %p60 = scmp.ne.s32.totalorder %s48, %s49
    %p61 = scmp.eq.s32.totalorder %s18, 3
    %p62 = por %p60, %p61
    %p64 = scmp.ne.s32.totalorder %s49, %s63
    %p65 = scmp.eq.s32.totalorder %s18, 0
    %p66 = por %p64, %p65
    %s68 = sadd.s32 %s67, 1
    %p71 = scmp.eq.s32.totalorder %s12, 3
    %p72 = scmp.ne.s32.totalorder %s67, %s69
    %p73 = scmp.eq.s32.totalorder %s12, 0
    %p74 = por %p72, %p73
    %p75 = scmp.ne.s32.totalorder %s67, %s69
    %p76 = scmp.eq.s32.totalorder %s17, 3
    %p77 = por %p75, %p76
    %p78 = scmp.ne.s32.totalorder %s69, %s70
    %p79 = scmp.eq.s32.totalorder %s17, 0
    %p80 = por %p78, %p79
    %p81 = scmp.ne.s32.totalorder %s69, %s70
    %p82 = scmp.eq.s32.totalorder %s18, 3
    %p83 = por %p81, %p82
    %p85 = scmp.ne.s32.totalorder %s70, %s84
    %p86 = scmp.eq.s32.totalorder %s18, 0
    %p87 = por %p85, %p86
    %s89 = sadd.s32 %s88, 1
    %p92 = scmp.eq.s32.totalorder %s12, 3
    %p93 = scmp.ne.s32.totalorder %s88, %s90
    %p94 = scmp.eq.s32.totalorder %s12, 0
    %p95 = por %p93, %p94
    %p96 = scmp.ne.s32.totalorder %s88, %s90
    %p97 = scmp.eq.s32.totalorder %s17, 3
    %p98 = por %p96, %p97
    %p99 = scmp.ne.s32.totalorder %s90, %s91
    %p100 = scmp.eq.s32.totalorder %s17, 0
    %p101 = por %p99, %p100
    %p102 = scmp.ne.s32.totalorder %s90, %s91
    %p103 = scmp.eq.s32.totalorder %s18, 3
    %p104 = por %p102, %p103
    %p106 = scmp.ne.s32.totalorder %s91, %s105
    %p107 = scmp.eq.s32.totalorder %s18, 0
    %p108 = por %p106, %p107
    %s109 = ssub.s32 %s12, %s19
    %p110 = scmp.eq.s32.totalorder %s109, 0
    %s112 = sadd.s32 %s111, 1
    %s113 = scalar_select %p110, %s111, %s112
    %p116 = pneg %p110
    %p117 = scmp.eq.s32.totalorder %s12, 3
    %p118 = por %p116, %p117
    %p119 = scmp.ne.s32.totalorder %s111, %s114
    %p120 = scmp.eq.s32.totalorder %s12, 0
    %p121 = por %p119, %p120
    %p122 = scmp.ne.s32.totalorder %s111, %s114
    %p123 = scmp.eq.s32.totalorder %s17, 3
    %p124 = por %p122, %p123
    %p125 = scmp.ne.s32.totalorder %s114, %s115
    %p126 = scmp.eq.s32.totalorder %s17, 0
    %p127 = por %p125, %p126
    %p128 = scmp.ne.s32.totalorder %s114, %s115
    %p129 = scmp.eq.s32.totalorder %s18, 3
    %p130 = por %p128, %p129
    %p132 = scmp.ne.s32.totalorder %s115, %s131
    %p133 = scmp.eq.s32.totalorder %s18, 0
    %p134 = por %p132, %p133
    %s135 = ssub.s32 %s12, %s19
    %p136 = scmp.eq.s32.totalorder %s135, 0
    %s138 = sadd.s32 %s137, 1
    %s139 = scalar_select %p136, %s137, %s138
    %p142 = pneg %p136
    %p143 = scmp.eq.s32.totalorder %s12, 3
    %p144 = por %p142, %p143
    %p145 = scmp.ne.s32.totalorder %s137, %s140
    %p146 = scmp.eq.s32.totalorder %s12, 0
    %p147 = por %p145, %p146
    %p148 = scmp.ne.s32.totalorder %s137, %s140
    %p149 = scmp.eq.s32.totalorder %s17, 3
    %p150 = por %p148, %p149
    %p151 = scmp.ne.s32.totalorder %s140, %s141
    %p152 = scmp.eq.s32.totalorder %s17, 0
    %p153 = por %p151, %p152
    %p154 = scmp.ne.s32.totalorder %s140, %s141
    %p155 = scmp.eq.s32.totalorder %s18, 3
    %p156 = por %p154, %p155
    %p158 = scmp.ne.s32.totalorder %s141, %s157
    %p159 = scmp.eq.s32.totalorder %s18, 0
    %p160 = por %p158, %p159
    %p161 = scmp.le.s32.totalorder 1, %s12
    %p162 = scmp.lt.s32.totalorder %s12, 5
    %p163 = pnand %p161, %p162
    %p164 = pneg %p163
    // Predicated region
    $region9: #{sisr_block.22} parent=5 // pred_check
      _
    $region10: #{sisr_block.22} parent=5 // pred_check_branch
      %166 = sbr.rel (%p163) target = $region12
    $region11: #{sisr_block.22} parent=5 // pred_region
      %s167 = ssub.s32 %s12, 1
      // Predicated region
      $region13: #{sisr_block.22} parent=11 // pred_check
        %p168 = pneg %p59
      $region14: #{sisr_block.22} parent=11 // pred_check_branch
        %170 = sbr.rel (%p168) target = $region16
      $region15: #{sisr_block.22} parent=11 // pred_region
        _
      $region16: #{sisr_block.22} parent=11 // pred_fallthru
        _
      // Predicated region
      $region17: #{sisr_block.22} parent=11 // pred_check
        %p171 = pneg %p80
      $region18: #{sisr_block.22} parent=11 // pred_check_branch
        %173 = sbr.rel (%p171) target = $region20
      $region19: #{sisr_block.22} parent=11 // pred_region
        _
      $region20: #{sisr_block.22} parent=11 // pred_fallthru
        _
      // Predicated region
      $region21: #{sisr_block.22} parent=11 // pred_check
        %p174 = pneg %p101
      $region22: #{sisr_block.22} parent=11 // pred_check_branch
        %176 = sbr.rel (%p174) target = $region24
      $region23: #{sisr_block.22} parent=11 // pred_region
        _
      $region24: #{sisr_block.22} parent=11 // pred_fallthru
        _
    $region12: #{sisr_block.22} parent=5 // pred_fallthru
      _
    %p177 = scmp.lt.s32.totalorder %s12, 4
    // Predicated region
    $region25: #{sisr_block.22} parent=5 // pred_check
      %p178 = pneg %p177
    $region26: #{sisr_block.22} parent=5 // pred_check_branch
      %180 = sbr.rel (%p178) target = $region28
    $region27: #{sisr_block.22} parent=5 // pred_region
      // Predicated region
      $region29: #{sisr_block.22} parent=27 // pred_check
        %p181 = pneg %p32
      $region30: #{sisr_block.22} parent=27 // pred_check_branch
        %183 = sbr.rel (%p181) target = $region32
      $region31: #{sisr_block.22} parent=27 // pred_region
        %s184 = smul.u32 4, %s12
        %p185 = scmp.lt.s32.totalorder %s184, 15
        %s186 = scalar_select %p185, %s184, 15
        %s187 = smul.addr %s186, 9
        %s188 = smul.addr %s187, 4
        %s189 = scalar_lea.vmem %s0, %s188
        %s190 = smul.u32 4, %s12
      $region32: #{sisr_block.22} parent=27 // pred_fallthru
        _
      // Predicated region
      $region33: #{sisr_block.22} parent=27 // pred_check
        %p191 = pneg %p121
      $region34: #{sisr_block.22} parent=27 // pred_check_branch
        %193 = sbr.rel (%p191) target = $region36
      $region35: #{sisr_block.22} parent=27 // pred_region
        %s194 = smul.u32 4, %s12
        %p195 = scmp.lt.s32.totalorder %s194, 15
        %s196 = scalar_select %p195, %s194, 15
        %s197 = smul.addr %s196, 4
        %s198 = scalar_lea.vmem %s4, %s197
        %s199 = smul.u32 4, %s12
      $region36: #{sisr_block.22} parent=27 // pred_fallthru
        _
    $region28: #{sisr_block.22} parent=5 // pred_fallthru
      _
    %p200 = scmp.le.s32.totalorder 1, %s12
    %p201 = scmp.lt.s32.totalorder %s12, 5
    %p202 = pnand %p200, %p201
    %p203 = pneg %p202
    // Predicated region
    $region37: #{sisr_block.22} parent=5 // pred_check
      _
    $region38: #{sisr_block.22} parent=5 // pred_check_branch
      %205 = sbr.rel (%p202) target = $region40
    $region39: #{sisr_block.22} parent=5 // pred_region
      %s206 = ssub.s32 %s12, 1
      %s207 = smul.u32 4, %s17
      %p208 = scmp.lt.s32.totalorder %s207, 15
      %s209 = scalar_select %p208, %s207, 15
      %s210 = smul.addr %s209, 9
      %s211 = smul.addr %s210, 4
      %s212 = scalar_lea.vmem %s0, %s211
      %p213 = pneg %p38
      %p214 = pneg %p35
      %p215 = pneg %p59
      %p216 = pneg %p56
      %p217 = pneg %p80
      %p218 = pneg %p77
      %p219 = pneg %p101
      %p220 = pneg %p98
      %s221 = smul.u32 4, %s17
      %p222 = scmp.lt.s32.totalorder %s221, 15
      %s223 = scalar_select %p222, %s221, 15
      %s224 = smul.addr %s223, 4
      %s225 = scalar_lea.vmem %s4, %s224
      %p226 = pneg %p127
      %p227 = pneg %p124
      %p228 = pneg %p153
      %p229 = pneg %p150
      %s230 = smul.u32 4, %s17
      %p231 = scmp.lt.s32.totalorder %s230, 15
      %s232 = scalar_select %p231, %s230, 15
      %s233 = smul.addr %s232, 4
      %s234 = scalar_lea.vmem %s5, %s233
      %s235 = smul.u32 4, %s17
      %p236 = scmp.lt.s32.totalorder %s235, 15
      %s237 = scalar_select %p236, %s235, 15
      %s238 = smul.addr %s237, 9
      %s239 = smul.addr %s238, 4
      %s240 = scalar_lea.vmem %s0, %s239
      %s241 = smul.u32 4, %s17
      %s242 = smul.u32 4, %s17
      %p243 = scmp.lt.s32.totalorder %s242, 15
      %s244 = scalar_select %p243, %s242, 15
      %s245 = smul.addr %s244, 4
      %s246 = scalar_lea.vmem %s4, %s245
      %s247 = smul.u32 4, %s17
      %s248 = smul.u32 4, %s17
      %p249 = scmp.lt.s32.totalorder %s248, 15
      %s250 = scalar_select %p249, %s248, 15
      %s251 = smul.addr %s250, 4
      %s252 = scalar_lea.vmem %s5, %s251
      %s253 = smul.u32 4, %s17
      %v254 = vld [vmem:[%s240] sm:$0xff]
      %v255 = vld [vmem:[%s240 + $0x8] sm:$0xff]
      %v256 = vld [vmem:[%s240 + $0x10] sm:$0xff]
      %v257 = vld [vmem:[%s240 + $0x18] sm:$0xff]
      %v258 = vld [vmem:[%s240 + $0x20] sm:$0xf]
      %v259 = vld [vmem:[%s240 + $0x24] sm:$0xff]
      %v260 = vld [vmem:[%s240 + $0x2c] sm:$0xff]
      %v261 = vld [vmem:[%s240 + $0x34] sm:$0xff]
      %v262 = vld [vmem:[%s240 + $0x3c] sm:$0xff]
      %v263 = vld [vmem:[%s240 + $0x44] sm:$0xf]
      %v264 = vld [vmem:[%s240 + $0x48] sm:$0xff]
      %v265 = vld [vmem:[%s240 + $0x50] sm:$0xff]
      %v266 = vld [vmem:[%s240 + $0x58] sm:$0xff]
      %v267 = vld [vmem:[%s240 + $0x60] sm:$0xff]
      %v268 = vld [vmem:[%s240 + $0x68] sm:$0xf]
      %v269 = vld [vmem:[%s240 + $0x6c] sm:$0xff]
      %v270 = vld [vmem:[%s240 + $0x74] sm:$0xff]
      %v271 = vld [vmem:[%s240 + $0x7c] sm:$0xff]
      %v272 = vld [vmem:[%s240 + $0x84] sm:$0xff]
      %v273 = vld [vmem:[%s240 + $0x8c] sm:$0xf]
      %v274 = vld [vmem:[%s1] sm:$0xf]
      %v275 = vld [vmem:[%s1 + $0x4] sm:$0xf]
      %v276 = vld [vmem:[%s1 + $0x8] sm:$0xf]
      %v277 = vld [vmem:[%s1 + $0xc] sm:$0xf]
      %v278 = vld [vmem:[%s1 + $0x10] sm:$0xf]
      %v279 = vld [vmem:[%s1 + $0x14] sm:$0xf]
      %v280 = vld [vmem:[%s1 + $0x18] sm:$0xf]
      %v281 = vld [vmem:[%s1 + $0x1c] sm:$0xf]
      %v282 = vld [vmem:[%s1 + $0x20] sm:$0xf]
      %v283 = vld [vmem:[%s1 + $0x24] sm:$0xf]
      %v284 = vld [vmem:[%s1 + $0x28] sm:$0xf]
      %v285 = vld [vmem:[%s1 + $0x2c] sm:$0xf]
      %v286 = vld [vmem:[%s1 + $0x30] sm:$0xf]
      %v287 = vld [vmem:[%s1 + $0x34] sm:$0xf]
      %v288 = vld [vmem:[%s1 + $0x38] sm:$0xf]
      %v289 = vld [vmem:[%s1 + $0x3c] sm:$0xf]
      %v290 = vld [vmem:[%s1 + $0x40] sm:$0xf]
      %v291 = vld [vmem:[%s1 + $0x44] sm:$0xf]
      %v292 = vld [vmem:[%s1 + $0x48] sm:$0xf]
      %v293 = vld [vmem:[%s1 + $0x4c] sm:$0xf]
      %v294 = vld [vmem:[%s1 + $0x50] sm:$0xf]
      %v295 = vld [vmem:[%s1 + $0x54] sm:$0xf]
      %v296 = vld [vmem:[%s1 + $0x58] sm:$0xf]
      %v297 = vld [vmem:[%s1 + $0x5c] sm:$0xf]
      %v298 = vld [vmem:[%s1 + $0x60] sm:$0xf]
      %v299 = vld [vmem:[%s1 + $0x64] sm:$0xf]
      %v300 = vld [vmem:[%s1 + $0x68] sm:$0xf]
      %v301 = vld [vmem:[%s1 + $0x6c] sm:$0xf]
      %v302 = vld [vmem:[%s1 + $0x70] sm:$0xf]
      %v303 = vld [vmem:[%s1 + $0x74] sm:$0xf]
      %v304 = vld [vmem:[%s1 + $0x78] sm:$0xf]
      %v305 = vld [vmem:[%s1 + $0x7c] sm:$0xf]
      %v306 = vld [vmem:[%s1 + $0x80] sm:$0xf]
      %v307 = vld [vmem:[%s1 + $0x84] sm:$0xf]
      %v308 = vld [vmem:[%s1 + $0x88] sm:$0xf]
      %v309 = vld [vmem:[%s1 + $0x8c] sm:$0xf]
      %v310 = vld [vmem:[%s1 + $0x90] sm:$0xf]
      %v311 = vld [vmem:[%s1 + $0x94] sm:$0xf]
      %v312 = vld [vmem:[%s1 + $0x98] sm:$0xf]
      %v313 = vld [vmem:[%s1 + $0x9c] sm:$0xf]
      %v314 = vld [vmem:[%s1 + $0xa0] sm:$0xf]
      %v315 = vld [vmem:[%s1 + $0xa4] sm:$0xf]
      %v316 = vld [vmem:[%s1 + $0xa8] sm:$0xf]
      %v317 = vld [vmem:[%s1 + $0xac] sm:$0xf]
      %v318 = vld [vmem:[%s1 + $0xb0] sm:$0xf]
      %v319 = vld [vmem:[%s1 + $0xb4] sm:$0xf]
      %v320 = vld [vmem:[%s1 + $0xb8] sm:$0xf]
      %v321 = vld [vmem:[%s1 + $0xbc] sm:$0xf]
      %v322 = vld [vmem:[%s1 + $0xc0] sm:$0xf]
      %v323 = vld [vmem:[%s1 + $0xc4] sm:$0xf]
      %v324 = vld [vmem:[%s1 + $0xc8] sm:$0xf]
      %v325 = vld [vmem:[%s1 + $0xcc] sm:$0xf]
      %v326 = vld [vmem:[%s1 + $0xd0] sm:$0xf]
      %v327 = vld [vmem:[%s1 + $0xd4] sm:$0xf]
      %v328 = vld [vmem:[%s1 + $0xd8] sm:$0xf]
      %v329 = vld [vmem:[%s1 + $0xdc] sm:$0xf]
      %v330 = vld [vmem:[%s1 + $0xe0] sm:$0xf]
      %v331 = vld [vmem:[%s1 + $0xe4] sm:$0xf]
      %v332 = vld [vmem:[%s1 + $0xe8] sm:$0xf]
      %v333 = vld [vmem:[%s1 + $0xec] sm:$0xf]
      %v334 = vld [vmem:[%s1 + $0xf0] sm:$0xf]
      %v335 = vld [vmem:[%s1 + $0xf4] sm:$0xf]
      %v336 = vld [vmem:[%s1 + $0xf8] sm:$0xf]
      %v337 = vld [vmem:[%s1 + $0xfc] sm:$0xf]
      %v338 = vld [vmem:[%s1 + $0x100] sm:$0xf]
      %v339 = vld [vmem:[%s1 + $0x104] sm:$0xf]
      %v340 = vld [vmem:[%s1 + $0x108] sm:$0xf]
      %v341 = vld [vmem:[%s1 + $0x10c] sm:$0xf]
      %v342 = vld [vmem:[%s1 + $0x110] sm:$0xf]
      %v343 = vld [vmem:[%s1 + $0x114] sm:$0xf]
      %v344 = vld [vmem:[%s1 + $0x118] sm:$0xf]
      %v345 = vld [vmem:[%s1 + $0x11c] sm:$0xf]
      %v346 = vld [vmem:[%s1 + $0x120] sm:$0xf]
      %v347 = vld [vmem:[%s1 + $0x124] sm:$0xf]
      %v348 = vld [vmem:[%s1 + $0x128] sm:$0xf]
      %v349 = vld [vmem:[%s1 + $0x12c] sm:$0xf]
      %v350 = vld [vmem:[%s1 + $0x130] sm:$0xf]
      %v351 = vld [vmem:[%s1 + $0x134] sm:$0xf]
      %v352 = vld [vmem:[%s1 + $0x138] sm:$0xf]
      %v353 = vld [vmem:[%s1 + $0x13c] sm:$0xf]
      %v354 = vld [vmem:[%s1 + $0x140] sm:$0xf]
      %v355 = vld [vmem:[%s1 + $0x144] sm:$0xf]
      %v356 = vld [vmem:[%s1 + $0x148] sm:$0xf]
      %v357 = vld [vmem:[%s1 + $0x14c] sm:$0xf]
      %v358 = vld [vmem:[%s1 + $0x150] sm:$0xf]
      %v359 = vld [vmem:[%s1 + $0x154] sm:$0xf]
      %v360 = vld [vmem:[%s1 + $0x158] sm:$0xf]
      %v361 = vld [vmem:[%s1 + $0x15c] sm:$0xf]
      %v362 = vld [vmem:[%s1 + $0x160] sm:$0xf]
      %v363 = vld [vmem:[%s1 + $0x164] sm:$0xf]
      %v364 = vld [vmem:[%s1 + $0x168] sm:$0xf]
      %v365 = vld [vmem:[%s1 + $0x16c] sm:$0xf]
      %v366 = vld [vmem:[%s1 + $0x170] sm:$0xf]
      %v367 = vld [vmem:[%s1 + $0x174] sm:$0xf]
      %v368 = vld [vmem:[%s1 + $0x178] sm:$0xf]
      %v369 = vld [vmem:[%s1 + $0x17c] sm:$0xf]
      %v370 = vld [vmem:[%s1 + $0x180] sm:$0xf]
      %v371 = vld [vmem:[%s1 + $0x184] sm:$0xf]
      %v372 = vld [vmem:[%s1 + $0x188] sm:$0xf]
      %v373 = vld [vmem:[%s1 + $0x18c] sm:$0xf]
      %v374 = vld [vmem:[%s1 + $0x190] sm:$0xf]
      %v375 = vld [vmem:[%s1 + $0x194] sm:$0xf]
      %v376 = vld [vmem:[%s1 + $0x198] sm:$0xf]
      %v377 = vld [vmem:[%s1 + $0x19c] sm:$0xf]
      %v378 = vld [vmem:[%s1 + $0x1a0] sm:$0xf]
      %v379 = vld [vmem:[%s1 + $0x1a4] sm:$0xf]
      %v380 = vld [vmem:[%s1 + $0x1a8] sm:$0xf]
      %v381 = vld [vmem:[%s1 + $0x1ac] sm:$0xf]
      %v382 = vld [vmem:[%s1 + $0x1b0] sm:$0xf]
      %v383 = vld [vmem:[%s1 + $0x1b4] sm:$0xf]
      %v384 = vld [vmem:[%s1 + $0x1b8] sm:$0xf]
      %v385 = vld [vmem:[%s1 + $0x1bc] sm:$0xf]
      %v386 = vld [vmem:[%s1 + $0x1c0] sm:$0xf]
      %v387 = vld [vmem:[%s1 + $0x1c4] sm:$0xf]
      %v388 = vld [vmem:[%s1 + $0x1c8] sm:$0xf]
      %v389 = vld [vmem:[%s1 + $0x1cc] sm:$0xf]
      %v390 = vld [vmem:[%s1 + $0x1d0] sm:$0xf]
      %v391 = vld [vmem:[%s1 + $0x1d4] sm:$0xf]
      %v392 = vld [vmem:[%s1 + $0x1d8] sm:$0xf]
      %v393 = vld [vmem:[%s1 + $0x1dc] sm:$0xf]
      %v394 = vld [vmem:[%s1 + $0x1e0] sm:$0xf]
      %v395 = vld [vmem:[%s1 + $0x1e4] sm:$0xf]
      %v396 = vld [vmem:[%s1 + $0x1e8] sm:$0xf]
      %v397 = vld [vmem:[%s1 + $0x1ec] sm:$0xf]
      %v398 = vld [vmem:[%s1 + $0x1f0] sm:$0xf]
      %v399 = vld [vmem:[%s1 + $0x1f4] sm:$0xf]
      %v400 = vld [vmem:[%s1 + $0x1f8] sm:$0xf]
      %v401 = vld [vmem:[%s1 + $0x1fc] sm:$0xf]
      %v402 = vld [vmem:[%s1 + $0x200] sm:$0xf]
      %v403 = vld [vmem:[%s1 + $0x204] sm:$0xf]
      %v404 = vld [vmem:[%s1 + $0x208] sm:$0xf]
      %v405 = vld [vmem:[%s1 + $0x20c] sm:$0xf]
      %v406 = vld [vmem:[%s1 + $0x210] sm:$0xf]
      %v407 = vld [vmem:[%s1 + $0x214] sm:$0xf]
      %v408 = vld [vmem:[%s1 + $0x218] sm:$0xf]
      %v409 = vld [vmem:[%s1 + $0x21c] sm:$0xf]
      %v410 = vld [vmem:[%s1 + $0x220] sm:$0xf]
      %v411 = vld [vmem:[%s1 + $0x224] sm:$0xf]
      %v412 = vld [vmem:[%s1 + $0x228] sm:$0xf]
      %v413 = vld [vmem:[%s1 + $0x22c] sm:$0xf]
      %v414 = vld [vmem:[%s1 + $0x230] sm:$0xf]
      %v415 = vld [vmem:[%s1 + $0x234] sm:$0xf]
      %v416 = vld [vmem:[%s1 + $0x238] sm:$0xf]
      %v417 = vld [vmem:[%s1 + $0x23c] sm:$0xf]
      %v418 = vld [vmem:[%s2] sm:$0x1]
      %v420 = vperm.slane %v418, 0
      %v442 = vunpack.c.l.b16 %v254
      %v443 = vunpack.c.h.b16 %v254
      %v444 = vunpack.c.l.b16 %v255
      %v445 = vunpack.c.h.b16 %v255
      %v446 = vunpack.c.l.b16 %v256
      %v447 = vunpack.c.h.b16 %v256
      %v448 = vunpack.c.l.b16 %v257
      %v449 = vunpack.c.h.b16 %v257
      %v450 = vunpack.c.l.b16 %v258
      %v451 = vunpack.c.l.b16 %v259
      %v452 = vunpack.c.h.b16 %v259
      %v453 = vunpack.c.l.b16 %v260
      %v454 = vunpack.c.h.b16 %v260
      %v455 = vunpack.c.l.b16 %v261
      %v456 = vunpack.c.h.b16 %v261
      %v457 = vunpack.c.l.b16 %v262
      %v458 = vunpack.c.h.b16 %v262
      %v459 = vunpack.c.l.b16 %v263
      %v460 = vunpack.c.l.b16 %v264
      %v461 = vunpack.c.h.b16 %v264
      %v462 = vunpack.c.l.b16 %v265
      %v463 = vunpack.c.h.b16 %v265
      %v464 = vunpack.c.l.b16 %v266
      %v465 = vunpack.c.h.b16 %v266
      %v466 = vunpack.c.l.b16 %v267
      %v467 = vunpack.c.h.b16 %v267
      %v468 = vunpack.c.l.b16 %v268
      %v469 = vunpack.c.l.b16 %v269
      %v470 = vunpack.c.h.b16 %v269
      %v471 = vunpack.c.l.b16 %v270
      %v472 = vunpack.c.h.b16 %v270
      %v473 = vunpack.c.l.b16 %v271
      %v474 = vunpack.c.h.b16 %v271
      %v475 = vunpack.c.l.b16 %v272
      %v476 = vunpack.c.h.b16 %v272
      %v477 = vunpack.c.l.b16 %v273
      %v478 = vpack.c.b16 %v451, %v442
      %v479 = vpack.c.b16 %v452, %v443
      %v480 = vpack.c.b16 %v453, %v444
      %v481 = vpack.c.b16 %v454, %v445
      %v482 = vpack.c.b16 %v455, %v446
      %v483 = vpack.c.b16 %v456, %v447
      %v484 = vpack.c.b16 %v457, %v448
      %v485 = vpack.c.b16 %v458, %v449
      %v486 = vpack.c.b16 %v459, %v450
      %v487 = vpack.c.b16 %v469, %v460
      %v488 = vpack.c.b16 %v470, %v461
      %v489 = vpack.c.b16 %v471, %v462
      %v490 = vpack.c.b16 %v472, %v463
      %v491 = vpack.c.b16 %v473, %v464
      %v492 = vpack.c.b16 %v474, %v465
      %v493 = vpack.c.b16 %v475, %v466
      %v494 = vpack.c.b16 %v476, %v467
      %v495 = vpack.c.b16 %v477, %v468
      %v658 = vunpack.c.l.b16 %v274
      %v659 = vunpack.c.l.b16 %v275
      %v660 = vunpack.c.l.b16 %v276
      %v661 = vunpack.c.l.b16 %v277
      %v662 = vunpack.c.l.b16 %v278
      %v663 = vunpack.c.l.b16 %v279
      %v664 = vunpack.c.l.b16 %v280
      %v665 = vunpack.c.l.b16 %v281
      %v666 = vunpack.c.l.b16 %v282
      %v667 = vunpack.c.l.b16 %v283
      %v668 = vunpack.c.l.b16 %v284
      %v669 = vunpack.c.l.b16 %v285
      %v670 = vunpack.c.l.b16 %v286
      %v671 = vunpack.c.l.b16 %v287
      %v672 = vunpack.c.l.b16 %v288
      %v673 = vunpack.c.l.b16 %v289
      %v674 = vunpack.c.l.b16 %v290
      %v675 = vunpack.c.l.b16 %v291
      %v676 = vunpack.c.l.b16 %v292
      %v677 = vunpack.c.l.b16 %v293
      %v678 = vunpack.c.l.b16 %v294
      %v679 = vunpack.c.l.b16 %v295
      %v680 = vunpack.c.l.b16 %v296
      %v681 = vunpack.c.l.b16 %v297
      %v682 = vunpack.c.l.b16 %v298
      %v683 = vunpack.c.l.b16 %v299
      %v684 = vunpack.c.l.b16 %v300
      %v685 = vunpack.c.l.b16 %v301
      %v686 = vunpack.c.l.b16 %v302
      %v687 = vunpack.c.l.b16 %v303
      %v688 = vunpack.c.l.b16 %v304
      %v689 = vunpack.c.l.b16 %v305
      %v690 = vunpack.c.l.b16 %v306
      %v691 = vunpack.c.l.b16 %v307
      %v692 = vunpack.c.l.b16 %v308
      %v693 = vunpack.c.l.b16 %v309
      %v694 = vunpack.c.l.b16 %v310
      %v695 = vunpack.c.l.b16 %v311
      %v696 = vunpack.c.l.b16 %v312
      %v697 = vunpack.c.l.b16 %v313
      %v698 = vunpack.c.l.b16 %v314
      %v699 = vunpack.c.l.b16 %v315
      %v700 = vunpack.c.l.b16 %v316
      %v701 = vunpack.c.l.b16 %v317
      %v702 = vunpack.c.l.b16 %v318
      %v703 = vunpack.c.l.b16 %v319
      %v704 = vunpack.c.l.b16 %v320
      %v705 = vunpack.c.l.b16 %v321
      %v706 = vunpack.c.l.b16 %v322
      %v707 = vunpack.c.l.b16 %v323
      %v708 = vunpack.c.l.b16 %v324
      %v709 = vunpack.c.l.b16 %v325
      %v710 = vunpack.c.l.b16 %v326
      %v711 = vunpack.c.l.b16 %v327
      %v712 = vunpack.c.l.b16 %v328
      %v713 = vunpack.c.l.b16 %v329
      %v714 = vunpack.c.l.b16 %v330
      %v715 = vunpack.c.l.b16 %v331
      %v716 = vunpack.c.l.b16 %v332
      %v717 = vunpack.c.l.b16 %v333
      %v718 = vunpack.c.l.b16 %v334
      %v719 = vunpack.c.l.b16 %v335
      %v720 = vunpack.c.l.b16 %v336
      %v721 = vunpack.c.l.b16 %v337
      %v722 = vunpack.c.l.b16 %v338
      %v723 = vunpack.c.l.b16 %v339
      %v724 = vunpack.c.l.b16 %v340
      %v725 = vunpack.c.l.b16 %v341
      %v726 = vunpack.c.l.b16 %v342
      %v727 = vunpack.c.l.b16 %v343
      %v728 = vunpack.c.l.b16 %v344
      %v729 = vunpack.c.l.b16 %v345
      %v730 = vunpack.c.l.b16 %v346
      %v731 = vunpack.c.l.b16 %v347
      %v732 = vunpack.c.l.b16 %v348
      %v733 = vunpack.c.l.b16 %v349
      %v734 = vunpack.c.l.b16 %v350
      %v735 = vunpack.c.l.b16 %v351
      %v736 = vunpack.c.l.b16 %v352
      %v737 = vunpack.c.l.b16 %v353
      %v738 = vunpack.c.l.b16 %v354
      %v739 = vunpack.c.l.b16 %v355
      %v740 = vunpack.c.l.b16 %v356
      %v741 = vunpack.c.l.b16 %v357
      %v742 = vunpack.c.l.b16 %v358
      %v743 = vunpack.c.l.b16 %v359
      %v744 = vunpack.c.l.b16 %v360
      %v745 = vunpack.c.l.b16 %v361
      %v746 = vunpack.c.l.b16 %v362
      %v747 = vunpack.c.l.b16 %v363
      %v748 = vunpack.c.l.b16 %v364
      %v749 = vunpack.c.l.b16 %v365
      %v750 = vunpack.c.l.b16 %v366
      %v751 = vunpack.c.l.b16 %v367
      %v752 = vunpack.c.l.b16 %v368
      %v753 = vunpack.c.l.b16 %v369
      %v754 = vunpack.c.l.b16 %v370
      %v755 = vunpack.c.l.b16 %v371
      %v756 = vunpack.c.l.b16 %v372
      %v757 = vunpack.c.l.b16 %v373
      %v758 = vunpack.c.l.b16 %v374
      %v759 = vunpack.c.l.b16 %v375
      %v760 = vunpack.c.l.b16 %v376
      %v761 = vunpack.c.l.b16 %v377
      %v762 = vunpack.c.l.b16 %v378
      %v763 = vunpack.c.l.b16 %v379
      %v764 = vunpack.c.l.b16 %v380
      %v765 = vunpack.c.l.b16 %v381
      %v766 = vunpack.c.l.b16 %v382
      %v767 = vunpack.c.l.b16 %v383
      %v768 = vunpack.c.l.b16 %v384
      %v769 = vunpack.c.l.b16 %v385
      %v770 = vunpack.c.l.b16 %v386
      %v771 = vunpack.c.l.b16 %v387
      %v772 = vunpack.c.l.b16 %v388
      %v773 = vunpack.c.l.b16 %v389
      %v774 = vunpack.c.l.b16 %v390
      %v775 = vunpack.c.l.b16 %v391
      %v776 = vunpack.c.l.b16 %v392
      %v777 = vunpack.c.l.b16 %v393
      %v778 = vunpack.c.l.b16 %v394
      %v779 = vunpack.c.l.b16 %v395
      %v780 = vunpack.c.l.b16 %v396
      %v781 = vunpack.c.l.b16 %v397
      %v782 = vunpack.c.l.b16 %v398
      %v783 = vunpack.c.l.b16 %v399
      %v784 = vunpack.c.l.b16 %v400
      %v785 = vunpack.c.l.b16 %v401
      %v786 = vunpack.c.l.b16 %v402
      %v787 = vunpack.c.l.b16 %v403
      %v788 = vunpack.c.l.b16 %v404
      %v789 = vunpack.c.l.b16 %v405
      %v790 = vunpack.c.l.b16 %v406
      %v791 = vunpack.c.l.b16 %v407
      %v792 = vunpack.c.l.b16 %v408
      %v793 = vunpack.c.l.b16 %v409
      %v794 = vunpack.c.l.b16 %v410
      %v795 = vunpack.c.l.b16 %v411
      %v796 = vunpack.c.l.b16 %v412
      %v797 = vunpack.c.l.b16 %v413
      %v798 = vunpack.c.l.b16 %v414
      %v799 = vunpack.c.l.b16 %v415
      %v800 = vunpack.c.l.b16 %v416
      %v801 = vunpack.c.l.b16 %v417
      %v802 = vpack.c.b16 %v659, %v658
      %v803 = vpack.c.b16 %v661, %v660
      %v804 = vpack.c.b16 %v663, %v662
      %v805 = vpack.c.b16 %v665, %v664
      %v806 = vpack.c.b16 %v667, %v666
      %v807 = vpack.c.b16 %v669, %v668
      %v808 = vpack.c.b16 %v671, %v670
      %v809 = vpack.c.b16 %v673, %v672
      %v810 = vpack.c.b16 %v675, %v674
      %v811 = vpack.c.b16 %v677, %v676
      %v812 = vpack.c.b16 %v679, %v678
      %v813 = vpack.c.b16 %v681, %v680
      %v814 = vpack.c.b16 %v683, %v682
      %v815 = vpack.c.b16 %v685, %v684
      %v816 = vpack.c.b16 %v687, %v686
      %v817 = vpack.c.b16 %v689, %v688
      %v818 = vpack.c.b16 %v691, %v690
      %v819 = vpack.c.b16 %v693, %v692
      %v820 = vpack.c.b16 %v695, %v694
      %v821 = vpack.c.b16 %v697, %v696
      %v822 = vpack.c.b16 %v699, %v698
      %v823 = vpack.c.b16 %v701, %v700
      %v824 = vpack.c.b16 %v703, %v702
      %v825 = vpack.c.b16 %v705, %v704
      %v826 = vpack.c.b16 %v707, %v706
      %v827 = vpack.c.b16 %v709, %v708
      %v828 = vpack.c.b16 %v711, %v710
      %v829 = vpack.c.b16 %v713, %v712
      %v830 = vpack.c.b16 %v715, %v714
      %v831 = vpack.c.b16 %v717, %v716
      %v832 = vpack.c.b16 %v719, %v718
      %v833 = vpack.c.b16 %v721, %v720
      %v834 = vpack.c.b16 %v723, %v722
      %v835 = vpack.c.b16 %v725, %v724
      %v836 = vpack.c.b16 %v727, %v726
      %v837 = vpack.c.b16 %v729, %v728
      %v838 = vpack.c.b16 %v731, %v730
      %v839 = vpack.c.b16 %v733, %v732
      %v840 = vpack.c.b16 %v735, %v734
      %v841 = vpack.c.b16 %v737, %v736
      %v842 = vpack.c.b16 %v739, %v738
      %v843 = vpack.c.b16 %v741, %v740
      %v844 = vpack.c.b16 %v743, %v742
      %v845 = vpack.c.b16 %v745, %v744
      %v846 = vpack.c.b16 %v747, %v746
      %v847 = vpack.c.b16 %v749, %v748
      %v848 = vpack.c.b16 %v751, %v750
      %v849 = vpack.c.b16 %v753, %v752
      %v850 = vpack.c.b16 %v755, %v754
      %v851 = vpack.c.b16 %v757, %v756
      %v852 = vpack.c.b16 %v759, %v758
      %v853 = vpack.c.b16 %v761, %v760
      %v854 = vpack.c.b16 %v763, %v762
      %v855 = vpack.c.b16 %v765, %v764
      %v856 = vpack.c.b16 %v767, %v766
      %v857 = vpack.c.b16 %v769, %v768
      %v858 = vpack.c.b16 %v771, %v770
      %v859 = vpack.c.b16 %v773, %v772
      %v860 = vpack.c.b16 %v775, %v774
      %v861 = vpack.c.b16 %v777, %v776
      %v862 = vpack.c.b16 %v779, %v778
      %v863 = vpack.c.b16 %v781, %v780
      %v864 = vpack.c.b16 %v783, %v782
      %v865 = vpack.c.b16 %v785, %v784
      %v866 = vpack.c.b16 %v787, %v786
      %v867 = vpack.c.b16 %v789, %v788
      %v868 = vpack.c.b16 %v791, %v790
      %v869 = vpack.c.b16 %v793, %v792
      %v870 = vpack.c.b16 %v795, %v794
      %v871 = vpack.c.b16 %v797, %v796
      %v872 = vpack.c.b16 %v799, %v798
      %v873 = vpack.c.b16 %v801, %v800
      %946 = vmatpush.bf16.msra.mxu0 %v809
      %947 = vmatpush.bf16.msra.mxu0 %v808
      %948 = vmatpush.bf16.msra.mxu0 %v807
      %949 = vmatpush.bf16.msra.mxu0 %v806
      %950 = vmatpush.bf16.msra.mxu0 %v805
      %951 = vmatpush.bf16.msra.mxu0 %v804
      %952 = vmatpush.bf16.msra.mxu0 %v803
      %953 = vmatpush.bf16.msra.mxu0 %v802
      %954 = vmatmul.bf16.gmra.mxu0 %v478
      %v955 = vpop.f32.mrf.mxu0
      %v956 = vadd.f32 %v420, %v955
      %v957 = vpop.f32.mrf.mxu0
      %v958 = vadd.f32 %v420, %v957
      %959 = vmatmul.bf16.gmra.mxu0 %v487
      %v960 = vpop.f32.mrf.mxu0
      %v961 = vadd.f32 %v420, %v960
      %v962 = vpop.f32.mrf.mxu0
      %v963 = vadd.f32 %v420, %v962
      %964 = vdwg.mxu0
      %965 = vmatpush.bf16.msra.mxu0 %v817
      %966 = vmatpush.bf16.msra.mxu0 %v816
      %967 = vmatpush.bf16.msra.mxu0 %v815
      %968 = vmatpush.bf16.msra.mxu0 %v814
      %969 = vmatpush.bf16.msra.mxu0 %v813
      %970 = vmatpush.bf16.msra.mxu0 %v812
      %971 = vmatpush.bf16.msra.mxu0 %v811
      %972 = vmatpush.bf16.msra.mxu0 %v810
      %973 = vmatmul.bf16.gmra.mxu0 %v479
      %v974 = vpop.f32.mrf.mxu0
      %v975 = vadd.f32 %v956, %v974
      %v976 = vpop.f32.mrf.mxu0
      %v977 = vadd.f32 %v958, %v976
      %978 = vmatmul.bf16.gmra.mxu0 %v488
      %v979 = vpop.f32.mrf.mxu0
      %v980 = vadd.f32 %v961, %v979
      %v981 = vpop.f32.mrf.mxu0
      %v982 = vadd.f32 %v963, %v981
      %983 = vdwg.mxu0
      %984 = vmatpush.bf16.msra.mxu0 %v825
      %985 = vmatpush.bf16.msra.mxu0 %v824
      %986 = vmatpush.bf16.msra.mxu0 %v823
      %987 = vmatpush.bf16.msra.mxu0 %v822
      %988 = vmatpush.bf16.msra.mxu0 %v821
      %989 = vmatpush.bf16.msra.mxu0 %v820
      %990 = vmatpush.bf16.msra.mxu0 %v819
      %991 = vmatpush.bf16.msra.mxu0 %v818
      %992 = vmatmul.bf16.gmra.mxu0 %v480
      %v993 = vpop.f32.mrf.mxu0
      %v994 = vadd.f32 %v975, %v993
      %v995 = vpop.f32.mrf.mxu0
      %v996 = vadd.f32 %v977, %v995
      %997 = vmatmul.bf16.gmra.mxu0 %v489
      %v998 = vpop.f32.mrf.mxu0
      %v999 = vadd.f32 %v980, %v998
      %v1000 = vpop.f32.mrf.mxu0
      %v1001 = vadd.f32 %v982, %v1000
      %1002 = vdwg.mxu0
      %1003 = vmatpush.bf16.msra.mxu0 %v833
      %1004 = vmatpush.bf16.msra.mxu0 %v832
      %1005 = vmatpush.bf16.msra.mxu0 %v831
      %1006 = vmatpush.bf16.msra.mxu0 %v830
      %1007 = vmatpush.bf16.msra.mxu0 %v829
      %1008 = vmatpush.bf16.msra.mxu0 %v828
      %1009 = vmatpush.bf16.msra.mxu0 %v827
      %1010 = vmatpush.bf16.msra.mxu0 %v826
      %1011 = vmatmul.bf16.gmra.mxu0 %v481
      %v1012 = vpop.f32.mrf.mxu0
      %v1013 = vadd.f32 %v994, %v1012
      %v1014 = vpop.f32.mrf.mxu0
      %v1015 = vadd.f32 %v996, %v1014
      %1016 = vmatmul.bf16.gmra.mxu0 %v490
      %v1017 = vpop.f32.mrf.mxu0
      %v1018 = vadd.f32 %v999, %v1017
      %v1019 = vpop.f32.mrf.mxu0
      %v1020 = vadd.f32 %v1001, %v1019
      %1021 = vdwg.mxu0
      %1022 = vmatpush.bf16.msra.mxu0 %v841
      %1023 = vmatpush.bf16.msra.mxu0 %v840
      %1024 = vmatpush.bf16.msra.mxu0 %v839
      %1025 = vmatpush.bf16.msra.mxu0 %v838
      %1026 = vmatpush.bf16.msra.mxu0 %v837
      %1027 = vmatpush.bf16.msra.mxu0 %v836
      %1028 = vmatpush.bf16.msra.mxu0 %v835
      %1029 = vmatpush.bf16.msra.mxu0 %v834
      %1030 = vmatmul.bf16.gmra.mxu0 %v482
      %v1031 = vpop.f32.mrf.mxu0
      %v1032 = vadd.f32 %v1013, %v1031
      %v1033 = vpop.f32.mrf.mxu0
      %v1034 = vadd.f32 %v1015, %v1033
      %1035 = vmatmul.bf16.gmra.mxu0 %v491
      %v1036 = vpop.f32.mrf.mxu0
      %v1037 = vadd.f32 %v1018, %v1036
      %v1038 = vpop.f32.mrf.mxu0
      %v1039 = vadd.f32 %v1020, %v1038
      %1040 = vdwg.mxu0
      %1041 = vmatpush.bf16.msra.mxu0 %v849
      %1042 = vmatpush.bf16.msra.mxu0 %v848
      %1043 = vmatpush.bf16.msra.mxu0 %v847
      %1044 = vmatpush.bf16.msra.mxu0 %v846
      %1045 = vmatpush.bf16.msra.mxu0 %v845
      %1046 = vmatpush.bf16.msra.mxu0 %v844
      %1047 = vmatpush.bf16.msra.mxu0 %v843
      %1048 = vmatpush.bf16.msra.mxu0 %v842
      %1049 = vmatmul.bf16.gmra.mxu0 %v483
      %v1050 = vpop.f32.mrf.mxu0
      %v1051 = vadd.f32 %v1032, %v1050
      %v1052 = vpop.f32.mrf.mxu0
      %v1053 = vadd.f32 %v1034, %v1052
      %1054 = vmatmul.bf16.gmra.mxu0 %v492
      %v1055 = vpop.f32.mrf.mxu0
      %v1056 = vadd.f32 %v1037, %v1055
      %v1057 = vpop.f32.mrf.mxu0
      %v1058 = vadd.f32 %v1039, %v1057
      %1059 = vdwg.mxu0
      %1060 = vmatpush.bf16.msra.mxu0 %v857
      %1061 = vmatpush.bf16.msra.mxu0 %v856
      %1062 = vmatpush.bf16.msra.mxu0 %v855
      %1063 = vmatpush.bf16.msra.mxu0 %v854
      %1064 = vmatpush.bf16.msra.mxu0 %v853
      %1065 = vmatpush.bf16.msra.mxu0 %v852
      %1066 = vmatpush.bf16.msra.mxu0 %v851
      %1067 = vmatpush.bf16.msra.mxu0 %v850
      %1068 = vmatmul.bf16.gmra.mxu0 %v484
      %v1069 = vpop.f32.mrf.mxu0
      %v1070 = vadd.f32 %v1051, %v1069
      %v1071 = vpop.f32.mrf.mxu0
      %v1072 = vadd.f32 %v1053, %v1071
      %1073 = vmatmul.bf16.gmra.mxu0 %v493
      %v1074 = vpop.f32.mrf.mxu0
      %v1075 = vadd.f32 %v1056, %v1074
      %v1076 = vpop.f32.mrf.mxu0
      %v1077 = vadd.f32 %v1058, %v1076
      %1078 = vdwg.mxu0
      %1079 = vmatpush.bf16.msra.mxu0 %v865
      %1080 = vmatpush.bf16.msra.mxu0 %v864
      %1081 = vmatpush.bf16.msra.mxu0 %v863
      %1082 = vmatpush.bf16.msra.mxu0 %v862
      %1083 = vmatpush.bf16.msra.mxu0 %v861
      %1084 = vmatpush.bf16.msra.mxu0 %v860
      %1085 = vmatpush.bf16.msra.mxu0 %v859
      %1086 = vmatpush.bf16.msra.mxu0 %v858
      %1087 = vmatmul.bf16.gmra.mxu0 %v485
      %v1088 = vpop.f32.mrf.mxu0
      %v1089 = vadd.f32 %v1070, %v1088
      %v1090 = vpop.f32.mrf.mxu0
      %v1091 = vadd.f32 %v1072, %v1090
      %1092 = vmatmul.bf16.gmra.mxu0 %v494
      %v1093 = vpop.f32.mrf.mxu0
      %v1094 = vadd.f32 %v1075, %v1093
      %v1095 = vpop.f32.mrf.mxu0
      %v1096 = vadd.f32 %v1077, %v1095
      %1097 = vdwg.mxu0
      %1098 = vmatpush.bf16.msra.mxu0 %v873
      %1099 = vmatpush.bf16.msra.mxu0 %v872
      %1100 = vmatpush.bf16.msra.mxu0 %v871
      %1101 = vmatpush.bf16.msra.mxu0 %v870
      %1102 = vmatpush.bf16.msra.mxu0 %v869
      %1103 = vmatpush.bf16.msra.mxu0 %v868
      %1104 = vmatpush.bf16.msra.mxu0 %v867
      %1105 = vmatpush.bf16.msra.mxu0 %v866
      %1106 = vmatmul.bf16.gmra.mxu0 %v486
      %v1107 = vpop.f32.mrf.mxu0
      %v1108 = vadd.f32 %v1089, %v1107
      %v1109 = vpop.f32.mrf.mxu0
      %v1110 = vadd.f32 %v1091, %v1109
      %1111 = vmatmul.bf16.gmra.mxu0 %v495
      %v1112 = vpop.f32.mrf.mxu0
      %v1113 = vadd.f32 %v1094, %v1112
      %v1114 = vpop.f32.mrf.mxu0
      %v1115 = vadd.f32 %v1096, %v1114
      %1116 = vdwg.mxu0
      %s1117 = sld [smem:[#allocation2]]
      %vm1118 = vcmp.ge.f32.partialorder %v1108, 0.0
      %vm1119 = vcmp.ge.f32.partialorder %v1110, 0.0
      %vm1120 = vcmp.ge.f32.partialorder %v1113, 0.0
      %vm1121 = vcmp.ge.f32.partialorder %v1115, 0.0
      %v1122 = vstv %s1117
      %v1123 = vmul.f32 %v1122, %v1108
      %v1124 = vmul.f32 %v1122, %v1110
      %v1125 = vmul.f32 %v1122, %v1113
      %v1126 = vmul.f32 %v1122, %v1115
      %v1127 = vsel %vm1118, %v1108, %v1123
      %v1128 = vsel %vm1119, %v1110, %v1124
      %v1129 = vsel %vm1120, %v1113, %v1125
      %v1130 = vsel %vm1121, %v1115, %v1126
      %v1131 = vld [vmem:[%s246] sm:$0xf]
      %v1132 = vld [vmem:[%s246 + $0x4] sm:$0xf]
      %v1133 = vld [vmem:[%s246 + $0x8] sm:$0xf]
      %v1134 = vld [vmem:[%s246 + $0xc] sm:$0xf]
      %v1135 = vunpack.c.l.bf16 %v1131
      %v1136 = vunpack.c.l.bf16 %v1132
      %v1137 = vunpack.c.l.bf16 %v1133
      %v1138 = vunpack.c.l.bf16 %v1134
      %v1139 = vsub.f32 %v1127, %v1135
      %v1140 = vsub.f32 %v1128, %v1136
      %v1141 = vsub.f32 %v1129, %v1137
      %v1142 = vsub.f32 %v1130, %v1138
      %v1143 = vpack.c.bf16 %v1139, %v1139
      %v1144 = vpack.c.bf16 %v1140, %v1140
      %v1145 = vpack.c.bf16 %v1141, %v1141
      %v1146 = vpack.c.bf16 %v1142, %v1142
      %1147 = vst [vmem:[%s252] sm:$0xf] %v1143
      %1148 = vst [vmem:[%s252 + $0x4] sm:$0xf] %v1144
      %1149 = vst [vmem:[%s252 + $0x8] sm:$0xf] %v1145
      %1150 = vst [vmem:[%s252 + $0xc] sm:$0xf] %v1146
      %s1151 = smul.u32 4, %s17
      %p1152 = scmp.lt.s32.totalorder %s1151, 15
      %s1153 = scalar_select %p1152, %s1151, 15
      %s1154 = smul.addr %s1153, 4
      %s1155 = scalar_lea.vmem %s5, %s1154
      // Predicated region
      $region41: #{sisr_block.22} parent=39 // pred_check
        %p1156 = pneg %p150
      $region42: #{sisr_block.22} parent=39 // pred_check_branch
        %1158 = sbr.rel (%p1156) target = $region44
      $region43: #{sisr_block.22} parent=39 // pred_region
        %s1159 = smul.u32 4, %s17
      $region44: #{sisr_block.22} parent=39 // pred_fallthru
        _
    $region40: #{sisr_block.22} parent=5 // pred_fallthru
      _
    %p1160 = scmp.le.s32.totalorder 2, %s12
    // Predicated region
    $region45: #{sisr_block.22} parent=5 // pred_check
      %p1161 = pneg %p1160
    $region46: #{sisr_block.22} parent=5 // pred_check_branch
      %1163 = sbr.rel (%p1161) target = $region48
    $region47: #{sisr_block.22} parent=5 // pred_region
      %s1164 = ssub.s32 %s12, 2
      // Predicated region
      $region49: #{sisr_block.22} parent=47 // pred_check
        %p1165 = pneg %p156
      $region50: #{sisr_block.22} parent=47 // pred_check_branch
        %1167 = sbr.rel (%p1165) target = $region52
      $region51: #{sisr_block.22} parent=47 // pred_region
        %s1168 = smul.u32 4, %s18
        %p1169 = scmp.lt.s32.totalorder %s1168, 15
        %s1170 = scalar_select %p1169, %s1168, 15
        %s1171 = smul.addr %s1170, 4
        %s1172 = scalar_lea.vmem %s5, %s1171
      $region52: #{sisr_block.22} parent=47 // pred_fallthru
        _
    $region48: #{sisr_block.22} parent=5 // pred_fallthru
      _
  $region6: #{sisr_block.22} parent=0 // loop_footer
    %s16 = sadd.s32 1, %s12
  $region7: #{sisr_block.22} parent=0 // loop_footer_branch
    %11 = sbr.rel target = $region3
  $region8: #{sisr_block.22} parent=0 // loop_exit
    _

// kernel: sisr_block.33
$region0: #{sisr_block.33}
  #allocation0 [shape = 'u32[]', space=smem, size = 0x4, offset = 0x4, fixed_abs, tag = 'smem constant byte address 0x4 - core index']
  #allocation1 [shape = 'u32[72,128]{1,0:T(1,128)}', space=vmem, size = 0x9000, scoped, tag = 'internal scratch']
  #allocation2 [shape = 'f32[1,1]{1,0:T(1,128)S(6)}', space=smem, size = 0x200, scoped, tag = 'scoped memory for sisr_block.33']
  %s0 = inlined_call_operand.vmem [shape: bf16[2048,8], index: 0, kind: input, shape index: {}]
  %s1 = inlined_call_operand.vmem [shape: bf16[2048,8], index: 1, kind: input, shape index: {}]
  %s2 = inlined_call_operand.vmem [shape: bf16[2048,8], index: 2, kind: input, shape index: {}]
  %s3 = inlined_call_operand.vmem [shape: bf16[8,128], index: 3, kind: input, shape index: {}]
  %s4 = inlined_call_operand.vmem [shape: bf16[8,128], index: 4, kind: input, shape index: {}]
  %s5 = inlined_call_operand.vmem [shape: bf16[8,128], index: 5, kind: input, shape index: {}]
  %s6 = inlined_call_operand.vmem [shape: f32[1,128], index: 6, kind: input, shape index: {}]
  %s7 = inlined_call_operand.<no memory space> [shape: f32[1,1], index: 7, kind: input, shape index: {}]
  %s8 = inlined_call_operand.vmem [shape: f32[2048,128], index: 8, kind: output, shape index: {}]
  %s9 = sld [smem:[#allocation0]]
  $region65: #{sisr_block.33} parent=0
    _
  %s11 = ssub.s32 1, %s9
  %s12 = scalar_select 0, %s11, %s9
  %13 = sst [smem:[#allocation2]] %s7
  loop: start=0, step=1, limit=6
  $region2: #{sisr_block.33} parent=0 // loop_pre_header
    _
  $region3: #{sisr_block.33} parent=0 // loop_header
    %s15 = sphi 0, %s19
    %p16 = scmp.ge.s32.totalorder %s15, 6
    %s25 = sphi 0, %s27
    %s28 = sphi 0, %s25
    %s29 = sphi 0, %s28
    %s45 = sphi 0, %s29
    %s51 = sphi 0, %s53
    %s54 = sphi 0, %s51
    %s55 = sphi 0, %s54
    %s71 = sphi 0, %s55
    %s77 = sphi 0, %s79
    %s80 = sphi 0, %s77
    %s81 = sphi 0, %s80
    %s97 = sphi 0, %s81
    %s101 = sphi 0, %s101
    %s103 = sphi 0, %s101
    %s104 = sphi 0, %s103
    %s118 = sphi 0, %s104
    %s122 = sphi 0, %s122
    %s124 = sphi 0, %s122
    %s125 = sphi 0, %s124
    %s139 = sphi 0, %s125
    %s143 = sphi 0, %s143
    %s145 = sphi 0, %s143
    %s146 = sphi 0, %s145
    %s160 = sphi 0, %s146
    %s164 = sphi 0, %s164
    %s166 = sphi 0, %s164
    %s167 = sphi 0, %s166
    %s181 = sphi 0, %s167
    %s185 = sphi 0, %s185
    %s187 = sphi 0, %s185
    %s188 = sphi 0, %s187
    %s202 = sphi 0, %s188
    %s208 = sphi 0, %s210
    %s211 = sphi 0, %s208
    %s212 = sphi 0, %s211
    %s228 = sphi 0, %s212
  $region4: #{sisr_block.33} parent=0 // loop_header_branch
    %18 = sbr.rel (%p16) target = $region8
  $region5: #{sisr_block.33} parent=0 // loop_body
    %s20 = ssub.s32 %s15, 1
    %s21 = ssub.s32 %s15, 2
    %s22 = sadd.s32 %s15, 1
    %s23 = ssub.s32 %s15, %s22
    %p24 = scmp.eq.s32.totalorder %s23, 0
    %s26 = sadd.s32 %s25, 1
    %s27 = scalar_select %p24, %s25, %s26
    %p30 = pneg %p24
    %p31 = scmp.eq.s32.totalorder %s15, 3
    %p32 = por %p30, %p31
    %p33 = scmp.ne.s32.totalorder %s25, %s28
    %p34 = scmp.eq.s32.totalorder %s15, 0
    %p35 = por %p33, %p34
    %p36 = scmp.ne.s32.totalorder %s25, %s28
    %p37 = scmp.eq.s32.totalorder %s20, 3
    %p38 = por %p36, %p37
    %p39 = scmp.ne.s32.totalorder %s28, %s29
    %p40 = scmp.eq.s32.totalorder %s20, 0
    %p41 = por %p39, %p40
    %p42 = scmp.ne.s32.totalorder %s28, %s29
    %p43 = scmp.eq.s32.totalorder %s21, 3
    %p44 = por %p42, %p43
    %p46 = scmp.ne.s32.totalorder %s29, %s45
    %p47 = scmp.eq.s32.totalorder %s21, 0
    %p48 = por %p46, %p47
    %s49 = ssub.s32 %s15, %s22
    %p50 = scmp.eq.s32.totalorder %s49, 0
    %s52 = sadd.s32 %s51, 1
    %s53 = scalar_select %p50, %s51, %s52
    %p56 = pneg %p50
    %p57 = scmp.eq.s32.totalorder %s15, 3
    %p58 = por %p56, %p57
    %p59 = scmp.ne.s32.totalorder %s51, %s54
    %p60 = scmp.eq.s32.totalorder %s15, 0
    %p61 = por %p59, %p60
    %p62 = scmp.ne.s32.totalorder %s51, %s54
    %p63 = scmp.eq.s32.totalorder %s20, 3
    %p64 = por %p62, %p63
    %p65 = scmp.ne.s32.totalorder %s54, %s55
    %p66 = scmp.eq.s32.totalorder %s20, 0
    %p67 = por %p65, %p66
    %p68 = scmp.ne.s32.totalorder %s54, %s55
    %p69 = scmp.eq.s32.totalorder %s21, 3
    %p70 = por %p68, %p69
    %p72 = scmp.ne.s32.totalorder %s55, %s71
    %p73 = scmp.eq.s32.totalorder %s21, 0
    %p74 = por %p72, %p73
    %s75 = ssub.s32 %s15, %s22
    %p76 = scmp.eq.s32.totalorder %s75, 0
    %s78 = sadd.s32 %s77, 1
    %s79 = scalar_select %p76, %s77, %s78
    %p82 = pneg %p76
    %p83 = scmp.eq.s32.totalorder %s15, 3
    %p84 = por %p82, %p83
    %p85 = scmp.ne.s32.totalorder %s77, %s80
    %p86 = scmp.eq.s32.totalorder %s15, 0
    %p87 = por %p85, %p86
    %p88 = scmp.ne.s32.totalorder %s77, %s80
    %p89 = scmp.eq.s32.totalorder %s20, 3
    %p90 = por %p88, %p89
    %p91 = scmp.ne.s32.totalorder %s80, %s81
    %p92 = scmp.eq.s32.totalorder %s20, 0
    %p93 = por %p91, %p92
    %p94 = scmp.ne.s32.totalorder %s80, %s81
    %p95 = scmp.eq.s32.totalorder %s21, 3
    %p96 = por %p94, %p95
    %p98 = scmp.ne.s32.totalorder %s81, %s97
    %p99 = scmp.eq.s32.totalorder %s21, 0
    %p100 = por %p98, %p99
    %s102 = sadd.s32 %s101, 1
    %p105 = scmp.eq.s32.totalorder %s15, 3
    %p106 = scmp.ne.s32.totalorder %s101, %s103
    %p107 = scmp.eq.s32.totalorder %s15, 0
    %p108 = por %p106, %p107
    %p109 = scmp.ne.s32.totalorder %s101, %s103
    %p110 = scmp.eq.s32.totalorder %s20, 3
    %p111 = por %p109, %p110
    %p112 = scmp.ne.s32.totalorder %s103, %s104
    %p113 = scmp.eq.s32.totalorder %s20, 0
    %p114 = por %p112, %p113
    %p115 = scmp.ne.s32.totalorder %s103, %s104
    %p116 = scmp.eq.s32.totalorder %s21, 3
    %p117 = por %p115, %p116
    %p119 = scmp.ne.s32.totalorder %s104, %s118
    %p120 = scmp.eq.s32.totalorder %s21, 0
    %p121 = por %p119, %p120
    %s123 = sadd.s32 %s122, 1
    %p126 = scmp.eq.s32.totalorder %s15, 3
    %p127 = scmp.ne.s32.totalorder %s122, %s124
    %p128 = scmp.eq.s32.totalorder %s15, 0
    %p129 = por %p127, %p128
    %p130 = scmp.ne.s32.totalorder %s122, %s124
    %p131 = scmp.eq.s32.totalorder %s20, 3
    %p132 = por %p130, %p131
    %p133 = scmp.ne.s32.totalorder %s124, %s125
    %p134 = scmp.eq.s32.totalorder %s20, 0
    %p135 = por %p133, %p134
    %p136 = scmp.ne.s32.totalorder %s124, %s125
    %p137 = scmp.eq.s32.totalorder %s21, 3
    %p138 = por %p136, %p137
    %p140 = scmp.ne.s32.totalorder %s125, %s139
    %p141 = scmp.eq.s32.totalorder %s21, 0
    %p142 = por %p140, %p141
    %s144 = sadd.s32 %s143, 1
    %p147 = scmp.eq.s32.totalorder %s15, 3
    %p148 = scmp.ne.s32.totalorder %s143, %s145
    %p149 = scmp.eq.s32.totalorder %s15, 0
    %p150 = por %p148, %p149
    %p151 = scmp.ne.s32.totalorder %s143, %s145
    %p152 = scmp.eq.s32.totalorder %s20, 3
    %p153 = por %p151, %p152
    %p154 = scmp.ne.s32.totalorder %s145, %s146
    %p155 = scmp.eq.s32.totalorder %s20, 0
    %p156 = por %p154, %p155
    %p157 = scmp.ne.s32.totalorder %s145, %s146
    %p158 = scmp.eq.s32.totalorder %s21, 3
    %p159 = por %p157, %p158
    %p161 = scmp.ne.s32.totalorder %s146, %s160
    %p162 = scmp.eq.s32.totalorder %s21, 0
    %p163 = por %p161, %p162
    %s165 = sadd.s32 %s164, 1
    %p168 = scmp.eq.s32.totalorder %s15, 3
    %p169 = scmp.ne.s32.totalorder %s164, %s166
    %p170 = scmp.eq.s32.totalorder %s15, 0
    %p171 = por %p169, %p170
    %p172 = scmp.ne.s32.totalorder %s164, %s166
    %p173 = scmp.eq.s32.totalorder %s20, 3
    %p174 = por %p172, %p173
    %p175 = scmp.ne.s32.totalorder %s166, %s167
    %p176 = scmp.eq.s32.totalorder %s20, 0
    %p177 = por %p175, %p176
    %p178 = scmp.ne.s32.totalorder %s166, %s167
    %p179 = scmp.eq.s32.totalorder %s21, 3
    %p180 = por %p178, %p179
    %p182 = scmp.ne.s32.totalorder %s167, %s181
    %p183 = scmp.eq.s32.totalorder %s21, 0
    %p184 = por %p182, %p183
    %s186 = sadd.s32 %s185, 1
    %p189 = scmp.eq.s32.totalorder %s15, 3
    %p190 = scmp.ne.s32.totalorder %s185, %s187
    %p191 = scmp.eq.s32.totalorder %s15, 0
    %p192 = por %p190, %p191
    %p193 = scmp.ne.s32.totalorder %s185, %s187
    %p194 = scmp.eq.s32.totalorder %s20, 3
    %p195 = por %p193, %p194
    %p196 = scmp.ne.s32.totalorder %s187, %s188
    %p197 = scmp.eq.s32.totalorder %s20, 0
    %p198 = por %p196, %p197
    %p199 = scmp.ne.s32.totalorder %s187, %s188
    %p200 = scmp.eq.s32.totalorder %s21, 3
    %p201 = por %p199, %p200
    %p203 = scmp.ne.s32.totalorder %s188, %s202
    %p204 = scmp.eq.s32.totalorder %s21, 0
    %p205 = por %p203, %p204
    %s206 = ssub.s32 %s15, %s22
    %p207 = scmp.eq.s32.totalorder %s206, 0
    %s209 = sadd.s32 %s208, 1
    %s210 = scalar_select %p207, %s208, %s209
    %p213 = pneg %p207
    %p214 = scmp.eq.s32.totalorder %s15, 3
    %p215 = por %p213, %p214
    %p216 = scmp.ne.s32.totalorder %s208, %s211
    %p217 = scmp.eq.s32.totalorder %s15, 0
    %p218 = por %p216, %p217
    %p219 = scmp.ne.s32.totalorder %s208, %s211
    %p220 = scmp.eq.s32.totalorder %s20, 3
    %p221 = por %p219, %p220
    %p222 = scmp.ne.s32.totalorder %s211, %s212
    %p223 = scmp.eq.s32.totalorder %s20, 0
    %p224 = por %p222, %p223
    %p225 = scmp.ne.s32.totalorder %s211, %s212
    %p226 = scmp.eq.s32.totalorder %s21, 3
    %p227 = por %p225, %p226
    %p229 = scmp.ne.s32.totalorder %s212, %s228
    %p230 = scmp.eq.s32.totalorder %s21, 0
    %p231 = por %p229, %p230
    %p232 = scmp.le.s32.totalorder 1, %s15
    %p233 = scmp.lt.s32.totalorder %s15, 5
    %p234 = pnand %p232, %p233
    %p235 = pneg %p234
    // Predicated region
    $region9: #{sisr_block.33} parent=5 // pred_check
      _
    $region10: #{sisr_block.33} parent=5 // pred_check_branch
      %237 = sbr.rel (%p234) target = $region12
    $region11: #{sisr_block.33} parent=5 // pred_region
      %s238 = ssub.s32 %s15, 1
      // Predicated region
      $region13: #{sisr_block.33} parent=11 // pred_check
        %p239 = pneg %p114
      $region14: #{sisr_block.33} parent=11 // pred_check_branch
        %241 = sbr.rel (%p239) target = $region16
      $region15: #{sisr_block.33} parent=11 // pred_region
        _
      $region16: #{sisr_block.33} parent=11 // pred_fallthru
        _
      // Predicated region
      $region17: #{sisr_block.33} parent=11 // pred_check
        %p242 = pneg %p135
      $region18: #{sisr_block.33} parent=11 // pred_check_branch
        %244 = sbr.rel (%p242) target = $region20
      $region19: #{sisr_block.33} parent=11 // pred_region
        _
      $region20: #{sisr_block.33} parent=11 // pred_fallthru
        _
      // Predicated region
      $region21: #{sisr_block.33} parent=11 // pred_check
        %p245 = pneg %p156
      $region22: #{sisr_block.33} parent=11 // pred_check_branch
        %247 = sbr.rel (%p245) target = $region24
      $region23: #{sisr_block.33} parent=11 // pred_region
        _
      $region24: #{sisr_block.33} parent=11 // pred_fallthru
        _
      // Predicated region
      $region25: #{sisr_block.33} parent=11 // pred_check
        %p248 = pneg %p177
      $region26: #{sisr_block.33} parent=11 // pred_check_branch
        %250 = sbr.rel (%p248) target = $region28
      $region27: #{sisr_block.33} parent=11 // pred_region
        _
      $region28: #{sisr_block.33} parent=11 // pred_fallthru
        _
      // Predicated region
      $region29: #{sisr_block.33} parent=11 // pred_check
        %p251 = pneg %p198
      $region30: #{sisr_block.33} parent=11 // pred_check_branch
        %253 = sbr.rel (%p251) target = $region32
      $region31: #{sisr_block.33} parent=11 // pred_region
        _
      $region32: #{sisr_block.33} parent=11 // pred_fallthru
        _
    $region12: #{sisr_block.33} parent=5 // pred_fallthru
      _
    %p254 = scmp.lt.s32.totalorder %s15, 4
    // Predicated region
    $region33: #{sisr_block.33} parent=5 // pred_check
      %p255 = pneg %p254
    $region34: #{sisr_block.33} parent=5 // pred_check_branch
      %257 = sbr.rel (%p255) target = $region36
    $region35: #{sisr_block.33} parent=5 // pred_region
      // Predicated region
      $region37: #{sisr_block.33} parent=35 // pred_check
        %p258 = pneg %p35
      $region38: #{sisr_block.33} parent=35 // pred_check_branch
        %260 = sbr.rel (%p258) target = $region40
      $region39: #{sisr_block.33} parent=35 // pred_region
        %s261 = smul.u32 64, %s15
        %p262 = scmp.lt.s32.totalorder %s261, 255
        %s263 = scalar_select %p262, %s261, 255
        %s264 = smul.addr %s263, 4
        %s265 = scalar_lea.vmem %s0, %s264
        %s266 = smul.u32 64, %s15
      $region40: #{sisr_block.33} parent=35 // pred_fallthru
        _
      // Predicated region
      $region41: #{sisr_block.33} parent=35 // pred_check
        %p267 = pneg %p61
      $region42: #{sisr_block.33} parent=35 // pred_check_branch
        %269 = sbr.rel (%p267) target = $region44
      $region43: #{sisr_block.33} parent=35 // pred_region
        %s270 = smul.u32 64, %s15
        %p271 = scmp.lt.s32.totalorder %s270, 255
        %s272 = scalar_select %p271, %s270, 255
        %s273 = smul.addr %s272, 4
        %s274 = scalar_lea.vmem %s1, %s273
        %s275 = smul.u32 64, %s15
      $region44: #{sisr_block.33} parent=35 // pred_fallthru
        _
      // Predicated region
      $region45: #{sisr_block.33} parent=35 // pred_check
        %p276 = pneg %p87
      $region46: #{sisr_block.33} parent=35 // pred_check_branch
        %278 = sbr.rel (%p276) target = $region48
      $region47: #{sisr_block.33} parent=35 // pred_region
        %s279 = smul.u32 64, %s15
        %p280 = scmp.lt.s32.totalorder %s279, 255
        %s281 = scalar_select %p280, %s279, 255
        %s282 = smul.addr %s281, 4
        %s283 = scalar_lea.vmem %s2, %s282
        %s284 = smul.u32 64, %s15
      $region48: #{sisr_block.33} parent=35 // pred_fallthru
        _
    $region36: #{sisr_block.33} parent=5 // pred_fallthru
      _
    %p285 = scmp.le.s32.totalorder 1, %s15
    %p286 = scmp.lt.s32.totalorder %s15, 5
    %p287 = pnand %p285, %p286
    %p288 = pneg %p287
    // Predicated region
    $region49: #{sisr_block.33} parent=5 // pred_check
      _
    $region50: #{sisr_block.33} parent=5 // pred_check_branch
      %290 = sbr.rel (%p287) target = $region52
    $region51: #{sisr_block.33} parent=5 // pred_region
      %s291 = ssub.s32 %s15, 1
      %s292 = smul.u32 64, %s20
      %p293 = scmp.lt.s32.totalorder %s292, 255
      %s294 = scalar_select %p293, %s292, 255
      %s295 = smul.addr %s294, 4
      %s296 = scalar_lea.vmem %s0, %s295
      %p297 = pneg %p41
      %p298 = pneg %p38
      %s299 = smul.u32 64, %s20
      %p300 = scmp.lt.s32.totalorder %s299, 255
      %s301 = scalar_select %p300, %s299, 255
      %s302 = smul.addr %s301, 4
      %s303 = scalar_lea.vmem %s1, %s302
      %p304 = pneg %p67
      %p305 = pneg %p64
      %s306 = smul.u32 64, %s20
      %p307 = scmp.lt.s32.totalorder %s306, 255
      %s308 = scalar_select %p307, %s306, 255
      %s309 = smul.addr %s308, 4
      %s310 = scalar_lea.vmem %s2, %s309
      %p311 = pneg %p93
      %p312 = pneg %p90
      %p313 = pneg %p114
      %p314 = pneg %p111
      %p315 = pneg %p135
      %p316 = pneg %p132
      %p317 = pneg %p156
      %p318 = pneg %p153
      %p319 = pneg %p177
      %p320 = pneg %p174
      %p321 = pneg %p198
      %p322 = pneg %p195
      %p323 = pneg %p224
      %p324 = pneg %p221
      %s325 = smul.u32 64, %s20
      %p326 = scmp.lt.s32.totalorder %s325, 255
      %s327 = scalar_select %p326, %s325, 255
      %s328 = smul.addr %s327, 8
      %s329 = scalar_lea.vmem %s8, %s328
      %s330 = smul.u32 64, %s20
      %p331 = scmp.lt.s32.totalorder %s330, 255
      %s332 = scalar_select %p331, %s330, 255
      %s333 = smul.addr %s332, 4
      %s334 = scalar_lea.vmem %s0, %s333
      %s335 = smul.u32 64, %s20
      %s336 = smul.u32 64, %s20
      %p337 = scmp.lt.s32.totalorder %s336, 255
      %s338 = scalar_select %p337, %s336, 255
      %s339 = smul.addr %s338, 4
      %s340 = scalar_lea.vmem %s1, %s339
      %s341 = smul.u32 64, %s20
      %s342 = smul.u32 64, %s20
      %p343 = scmp.lt.s32.totalorder %s342, 255
      %s344 = scalar_select %p343, %s342, 255
      %s345 = smul.addr %s344, 4
      %s346 = scalar_lea.vmem %s2, %s345
      %s347 = smul.u32 64, %s20
      %s348 = smul.u32 64, %s20
      %p349 = scmp.lt.s32.totalorder %s348, 255
      %s350 = scalar_select %p349, %s348, 255
      %s351 = smul.addr %s350, 8
      %s352 = scalar_lea.vmem %s8, %s351
      %s353 = smul.u32 64, %s20
      %v355 = vld [vmem:[%s334] sm:$0xf]
      %v356 = vld [vmem:[%s334 + $0x4] sm:$0xf]
      %v357 = vld [vmem:[%s334 + $0x8] sm:$0xf]
      %v358 = vld [vmem:[%s334 + $0xc] sm:$0xf]
      %v359 = vld [vmem:[%s334 + $0x10] sm:$0xf]
      %v360 = vld [vmem:[%s334 + $0x14] sm:$0xf]
      %v361 = vld [vmem:[%s334 + $0x18] sm:$0xf]
      %v362 = vld [vmem:[%s334 + $0x1c] sm:$0xf]
      %v363 = vld [vmem:[%s334 + $0x20] sm:$0xf]
      %v364 = vld [vmem:[%s334 + $0x24] sm:$0xf]
      %v365 = vld [vmem:[%s334 + $0x28] sm:$0xf]
      %v366 = vld [vmem:[%s334 + $0x2c] sm:$0xf]
      %v367 = vld [vmem:[%s334 + $0x30] sm:$0xf]
      %v368 = vld [vmem:[%s334 + $0x34] sm:$0xf]
      %v369 = vld [vmem:[%s334 + $0x38] sm:$0xf]
      %v370 = vld [vmem:[%s334 + $0x3c] sm:$0xf]
      %v371 = vld [vmem:[%s334 + $0x40] sm:$0xf]
      %v372 = vld [vmem:[%s334 + $0x44] sm:$0xf]
      %v373 = vld [vmem:[%s334 + $0x48] sm:$0xf]
      %v374 = vld [vmem:[%s334 + $0x4c] sm:$0xf]
      %v375 = vld [vmem:[%s334 + $0x50] sm:$0xf]
      %v376 = vld [vmem:[%s334 + $0x54] sm:$0xf]
      %v377 = vld [vmem:[%s334 + $0x58] sm:$0xf]
      %v378 = vld [vmem:[%s334 + $0x5c] sm:$0xf]
      %v379 = vld [vmem:[%s334 + $0x60] sm:$0xf]
      %v380 = vld [vmem:[%s334 + $0x64] sm:$0xf]
      %v381 = vld [vmem:[%s334 + $0x68] sm:$0xf]
      %v382 = vld [vmem:[%s334 + $0x6c] sm:$0xf]
      %v383 = vld [vmem:[%s334 + $0x70] sm:$0xf]
      %v384 = vld [vmem:[%s334 + $0x74] sm:$0xf]
      %v385 = vld [vmem:[%s334 + $0x78] sm:$0xf]
      %v386 = vld [vmem:[%s334 + $0x7c] sm:$0xf]
      %v387 = vld [vmem:[%s334 + $0x80] sm:$0xf]
      %v388 = vld [vmem:[%s334 + $0x84] sm:$0xf]
      %v389 = vld [vmem:[%s334 + $0x88] sm:$0xf]
      %v390 = vld [vmem:[%s334 + $0x8c] sm:$0xf]
      %v391 = vld [vmem:[%s334 + $0x90] sm:$0xf]
      %v392 = vld [vmem:[%s334 + $0x94] sm:$0xf]
      %v393 = vld [vmem:[%s334 + $0x98] sm:$0xf]
      %v394 = vld [vmem:[%s334 + $0x9c] sm:$0xf]
      %v395 = vld [vmem:[%s334 + $0xa0] sm:$0xf]
      %v396 = vld [vmem:[%s334 + $0xa4] sm:$0xf]
      %v397 = vld [vmem:[%s334 + $0xa8] sm:$0xf]
      %v398 = vld [vmem:[%s334 + $0xac] sm:$0xf]
      %v399 = vld [vmem:[%s334 + $0xb0] sm:$0xf]
      %v400 = vld [vmem:[%s334 + $0xb4] sm:$0xf]
      %v401 = vld [vmem:[%s334 + $0xb8] sm:$0xf]
      %v402 = vld [vmem:[%s334 + $0xbc] sm:$0xf]
      %v403 = vld [vmem:[%s334 + $0xc0] sm:$0xf]
      %v404 = vld [vmem:[%s334 + $0xc4] sm:$0xf]
      %v405 = vld [vmem:[%s334 + $0xc8] sm:$0xf]
      %v406 = vld [vmem:[%s334 + $0xcc] sm:$0xf]
      %v407 = vld [vmem:[%s334 + $0xd0] sm:$0xf]
      %v408 = vld [vmem:[%s334 + $0xd4] sm:$0xf]
      %v409 = vld [vmem:[%s334 + $0xd8] sm:$0xf]
      %v410 = vld [vmem:[%s334 + $0xdc] sm:$0xf]
      %v411 = vld [vmem:[%s334 + $0xe0] sm:$0xf]
      %v412 = vld [vmem:[%s334 + $0xe4] sm:$0xf]
      %v413 = vld [vmem:[%s334 + $0xe8] sm:$0xf]
      %v414 = vld [vmem:[%s334 + $0xec] sm:$0xf]
      %v415 = vld [vmem:[%s334 + $0xf0] sm:$0xf]
      %v416 = vld [vmem:[%s334 + $0xf4] sm:$0xf]
      %v417 = vld [vmem:[%s334 + $0xf8] sm:$0xf]
      %v418 = vld [vmem:[%s334 + $0xfc] sm:$0xf]
      %v419 = vld [vmem:[%s3] sm:$0xf]
      %v420 = vld [vmem:[%s340] sm:$0xf]
      %v421 = vld [vmem:[%s340 + $0x4] sm:$0xf]
      %v422 = vld [vmem:[%s340 + $0x8] sm:$0xf]
      %v423 = vld [vmem:[%s340 + $0xc] sm:$0xf]
      %v424 = vld [vmem:[%s340 + $0x10] sm:$0xf]
      %v425 = vld [vmem:[%s340 + $0x14] sm:$0xf]
      %v426 = vld [vmem:[%s340 + $0x18] sm:$0xf]
      %v427 = vld [vmem:[%s340 + $0x1c] sm:$0xf]
      %v428 = vld [vmem:[%s340 + $0x20] sm:$0xf]
      %v429 = vld [vmem:[%s340 + $0x24] sm:$0xf]
      %v430 = vld [vmem:[%s340 + $0x28] sm:$0xf]
      %v431 = vld [vmem:[%s340 + $0x2c] sm:$0xf]
      %v432 = vld [vmem:[%s340 + $0x30] sm:$0xf]
      %v433 = vld [vmem:[%s340 + $0x34] sm:$0xf]
      %v434 = vld [vmem:[%s340 + $0x38] sm:$0xf]
      %v435 = vld [vmem:[%s340 + $0x3c] sm:$0xf]
      %v436 = vld [vmem:[%s340 + $0x40] sm:$0xf]
      %v437 = vld [vmem:[%s340 + $0x44] sm:$0xf]
      %v438 = vld [vmem:[%s340 + $0x48] sm:$0xf]
      %v439 = vld [vmem:[%s340 + $0x4c] sm:$0xf]
      %v440 = vld [vmem:[%s340 + $0x50] sm:$0xf]
      %v441 = vld [vmem:[%s340 + $0x54] sm:$0xf]
      %v442 = vld [vmem:[%s340 + $0x58] sm:$0xf]
      %v443 = vld [vmem:[%s340 + $0x5c] sm:$0xf]
      %v444 = vld [vmem:[%s340 + $0x60] sm:$0xf]
      %v445 = vld [vmem:[%s340 + $0x64] sm:$0xf]
      %v446 = vld [vmem:[%s340 + $0x68] sm:$0xf]
      %v447 = vld [vmem:[%s340 + $0x6c] sm:$0xf]
      %v448 = vld [vmem:[%s340 + $0x70] sm:$0xf]
      %v449 = vld [vmem:[%s340 + $0x74] sm:$0xf]
      %v450 = vld [vmem:[%s340 + $0x78] sm:$0xf]
      %v451 = vld [vmem:[%s340 + $0x7c] sm:$0xf]
      %v452 = vld [vmem:[%s340 + $0x80] sm:$0xf]
      %v453 = vld [vmem:[%s340 + $0x84] sm:$0xf]
      %v454 = vld [vmem:[%s340 + $0x88] sm:$0xf]
      %v455 = vld [vmem:[%s340 + $0x8c] sm:$0xf]
      %v456 = vld [vmem:[%s340 + $0x90] sm:$0xf]
      %v457 = vld [vmem:[%s340 + $0x94] sm:$0xf]
      %v458 = vld [vmem:[%s340 + $0x98] sm:$0xf]
      %v459 = vld [vmem:[%s340 + $0x9c] sm:$0xf]
      %v460 = vld [vmem:[%s340 + $0xa0] sm:$0xf]
      %v461 = vld [vmem:[%s340 + $0xa4] sm:$0xf]
      %v462 = vld [vmem:[%s340 + $0xa8] sm:$0xf]
      %v463 = vld [vmem:[%s340 + $0xac] sm:$0xf]
      %v464 = vld [vmem:[%s340 + $0xb0] sm:$0xf]
      %v465 = vld [vmem:[%s340 + $0xb4] sm:$0xf]
      %v466 = vld [vmem:[%s340 + $0xb8] sm:$0xf]
      %v467 = vld [vmem:[%s340 + $0xbc] sm:$0xf]
      %v468 = vld [vmem:[%s340 + $0xc0] sm:$0xf]
      %v469 = vld [vmem:[%s340 + $0xc4] sm:$0xf]
      %v470 = vld [vmem:[%s340 + $0xc8] sm:$0xf]
      %v471 = vld [vmem:[%s340 + $0xcc] sm:$0xf]
      %v472 = vld [vmem:[%s340 + $0xd0] sm:$0xf]
      %v473 = vld [vmem:[%s340 + $0xd4] sm:$0xf]
      %v474 = vld [vmem:[%s340 + $0xd8] sm:$0xf]
      %v475 = vld [vmem:[%s340 + $0xdc] sm:$0xf]
      %v476 = vld [vmem:[%s340 + $0xe0] sm:$0xf]
      %v477 = vld [vmem:[%s340 + $0xe4] sm:$0xf]
      %v478 = vld [vmem:[%s340 + $0xe8] sm:$0xf]
      %v479 = vld [vmem:[%s340 + $0xec] sm:$0xf]
      %v480 = vld [vmem:[%s340 + $0xf0] sm:$0xf]
      %v481 = vld [vmem:[%s340 + $0xf4] sm:$0xf]
      %v482 = vld [vmem:[%s340 + $0xf8] sm:$0xf]
      %v483 = vld [vmem:[%s340 + $0xfc] sm:$0xf]
      %v484 = vld [vmem:[%s4] sm:$0xf]
      %v549 = vunpack.c.l.b16 %v420
      %v550 = vunpack.c.l.b16 %v421
      %v551 = vunpack.c.l.b16 %v422
      %v552 = vunpack.c.l.b16 %v423
      %v553 = vunpack.c.l.b16 %v424
      %v554 = vunpack.c.l.b16 %v425
      %v555 = vunpack.c.l.b16 %v426
      %v556 = vunpack.c.l.b16 %v427
      %v557 = vunpack.c.l.b16 %v428
      %v558 = vunpack.c.l.b16 %v429
      %v559 = vunpack.c.l.b16 %v430
      %v560 = vunpack.c.l.b16 %v431
      %v561 = vunpack.c.l.b16 %v432
      %v562 = vunpack.c.l.b16 %v433
      %v563 = vunpack.c.l.b16 %v434
      %v564 = vunpack.c.l.b16 %v435
      %v565 = vunpack.c.l.b16 %v436
      %v566 = vunpack.c.l.b16 %v437
      %v567 = vunpack.c.l.b16 %v438
      %v568 = vunpack.c.l.b16 %v439
      %v569 = vunpack.c.l.b16 %v440
      %v570 = vunpack.c.l.b16 %v441
      %v571 = vunpack.c.l.b16 %v442
      %v572 = vunpack.c.l.b16 %v443
      %v573 = vunpack.c.l.b16 %v444
      %v574 = vunpack.c.l.b16 %v445
      %v575 = vunpack.c.l.b16 %v446
      %v576 = vunpack.c.l.b16 %v447
      %v577 = vunpack.c.l.b16 %v448
      %v578 = vunpack.c.l.b16 %v449
      %v579 = vunpack.c.l.b16 %v450
      %v580 = vunpack.c.l.b16 %v451
      %v581 = vunpack.c.l.b16 %v452
      %v582 = vunpack.c.l.b16 %v453
      %v583 = vunpack.c.l.b16 %v454
      %v584 = vunpack.c.l.b16 %v455
      %v585 = vunpack.c.l.b16 %v456
      %v586 = vunpack.c.l.b16 %v457
      %v587 = vunpack.c.l.b16 %v458
      %v588 = vunpack.c.l.b16 %v459
      %v589 = vunpack.c.l.b16 %v460
      %v590 = vunpack.c.l.b16 %v461
      %v591 = vunpack.c.l.b16 %v462
      %v592 = vunpack.c.l.b16 %v463
      %v593 = vunpack.c.l.b16 %v464
      %v594 = vunpack.c.l.b16 %v465
      %v595 = vunpack.c.l.b16 %v466
      %v596 = vunpack.c.l.b16 %v467
      %v597 = vunpack.c.l.b16 %v468
      %v598 = vunpack.c.l.b16 %v469
      %v599 = vunpack.c.l.b16 %v470
      %v600 = vunpack.c.l.b16 %v471
      %v601 = vunpack.c.l.b16 %v472
      %v602 = vunpack.c.l.b16 %v473
      %v603 = vunpack.c.l.b16 %v474
      %v604 = vunpack.c.l.b16 %v475
      %v605 = vunpack.c.l.b16 %v476
      %v606 = vunpack.c.l.b16 %v477
      %v607 = vunpack.c.l.b16 %v478
      %v608 = vunpack.c.l.b16 %v479
      %v609 = vunpack.c.l.b16 %v480
      %v610 = vunpack.c.l.b16 %v481
      %v611 = vunpack.c.l.b16 %v482
      %v612 = vunpack.c.l.b16 %v483
      %v613 = vpack.c.b16 %v550, %v549
      %v614 = vpack.c.b16 %v552, %v551
      %v615 = vpack.c.b16 %v554, %v553
      %v616 = vpack.c.b16 %v556, %v555
      %v617 = vpack.c.b16 %v558, %v557
      %v618 = vpack.c.b16 %v560, %v559
      %v619 = vpack.c.b16 %v562, %v561
      %v620 = vpack.c.b16 %v564, %v563
      %v621 = vpack.c.b16 %v566, %v565
      %v622 = vpack.c.b16 %v568, %v567
      %v623 = vpack.c.b16 %v570, %v569
      %v624 = vpack.c.b16 %v572, %v571
      %v625 = vpack.c.b16 %v574, %v573
      %v626 = vpack.c.b16 %v576, %v575
      %v627 = vpack.c.b16 %v578, %v577
      %v628 = vpack.c.b16 %v580, %v579
      %v629 = vpack.c.b16 %v582, %v581
      %v630 = vpack.c.b16 %v584, %v583
      %v631 = vpack.c.b16 %v586, %v585
      %v632 = vpack.c.b16 %v588, %v587
      %v633 = vpack.c.b16 %v590, %v589
      %v634 = vpack.c.b16 %v592, %v591
      %v635 = vpack.c.b16 %v594, %v593
      %v636 = vpack.c.b16 %v596, %v595
      %v637 = vpack.c.b16 %v598, %v597
      %v638 = vpack.c.b16 %v600, %v599
      %v639 = vpack.c.b16 %v602, %v601
      %v640 = vpack.c.b16 %v604, %v603
      %v641 = vpack.c.b16 %v606, %v605
      %v642 = vpack.c.b16 %v608, %v607
      %v643 = vpack.c.b16 %v610, %v609
      %v644 = vpack.c.b16 %v612, %v611
      %vm645 = vcmask 64512
      %v647 = vsel %vm645, %v613, 0
      %v650 = vsel %vm645, %v614, 0
      %v653 = vsel %vm645, %v615, 0
      %v656 = vsel %vm645, %v616, 0
      %v659 = vsel %vm645, %v617, 0
      %v662 = vsel %vm645, %v618, 0
      %v665 = vsel %vm645, %v619, 0
      %v668 = vsel %vm645, %v620, 0
      %v671 = vsel %vm645, %v621, 0
      %v674 = vsel %vm645, %v622, 0
      %v677 = vsel %vm645, %v623, 0
      %v680 = vsel %vm645, %v624, 0
      %v683 = vsel %vm645, %v625, 0
      %v686 = vsel %vm645, %v626, 0
      %v689 = vsel %vm645, %v627, 0
      %v692 = vsel %vm645, %v628, 0
      %v695 = vsel %vm645, %v629, 0
      %v698 = vsel %vm645, %v630, 0
      %v701 = vsel %vm645, %v631, 0
      %v704 = vsel %vm645, %v632, 0
      %v707 = vsel %vm645, %v633, 0
      %v710 = vsel %vm645, %v634, 0
      %v713 = vsel %vm645, %v635, 0
      %v716 = vsel %vm645, %v636, 0
      %v719 = vsel %vm645, %v637, 0
      %v722 = vsel %vm645, %v638, 0
      %v725 = vsel %vm645, %v639, 0
      %v728 = vsel %vm645, %v640, 0
      %v731 = vsel %vm645, %v641, 0
      %v734 = vsel %vm645, %v642, 0
      %v737 = vsel %vm645, %v643, 0
      %v740 = vsel %vm645, %v644, 0
      %vm742 = vcmask 1043456
      %v744 = vsel %vm742, %v484, 0
      %746 = vmatpush.bf16.msra.mxu0 0
      %747 = vmatpush.bf16.msra.mxu0 0
      %748 = vmatpush.bf16.msra.mxu0 0
      %749 = vmatpush.bf16.msra.mxu0 0
      %750 = vmatpush.bf16.msra.mxu0 0
      %751 = vmatpush.bf16.msra.mxu0 0
      %752 = vmatpush.bf16.msra.mxu0 0
      %753 = vmatpush.bf16.msra.mxu0 %v744
      %754 = vmatmul.bf16.gmra.mxu0 %v647
      %v755 = vpop.f32.mrf.mxu0
      %v756 = vadd.f32 0.0, %v755
      %v757 = vpop.f32.mrf.mxu0
      %v758 = vadd.f32 0.0, %v757
      %759 = vmatmul.bf16.gmra.mxu0 %v650
      %v760 = vpop.f32.mrf.mxu0
      %v761 = vadd.f32 0.0, %v760
      %v762 = vpop.f32.mrf.mxu0
      %v763 = vadd.f32 0.0, %v762
      %764 = vmatmul.bf16.gmra.mxu0 %v653
      %v765 = vpop.f32.mrf.mxu0
      %v766 = vadd.f32 0.0, %v765
      %v767 = vpop.f32.mrf.mxu0
      %v768 = vadd.f32 0.0, %v767
      %769 = vmatmul.bf16.gmra.mxu0 %v656
      %v770 = vpop.f32.mrf.mxu0
      %v771 = vadd.f32 0.0, %v770
      %v772 = vpop.f32.mrf.mxu0
      %v773 = vadd.f32 0.0, %v772
      %774 = vmatmul.bf16.gmra.mxu0 %v659
      %v775 = vpop.f32.mrf.mxu0
      %v776 = vadd.f32 0.0, %v775
      %v777 = vpop.f32.mrf.mxu0
      %v778 = vadd.f32 0.0, %v777
      %779 = vmatmul.bf16.gmra.mxu0 %v662
      %v780 = vpop.f32.mrf.mxu0
      %v781 = vadd.f32 0.0, %v780
      %v782 = vpop.f32.mrf.mxu0
      %v783 = vadd.f32 0.0, %v782
      %784 = vmatmul.bf16.gmra.mxu0 %v665
      %v785 = vpop.f32.mrf.mxu0
      %v786 = vadd.f32 0.0, %v785
      %v787 = vpop.f32.mrf.mxu0
      %v788 = vadd.f32 0.0, %v787
      %789 = vmatmul.bf16.gmra.mxu0 %v668
      %v790 = vpop.f32.mrf.mxu0
      %v791 = vadd.f32 0.0, %v790
      %v792 = vpop.f32.mrf.mxu0
      %v793 = vadd.f32 0.0, %v792
      %794 = vmatmul.bf16.gmra.mxu0 %v671
      %v795 = vpop.f32.mrf.mxu0
      %v796 = vadd.f32 0.0, %v795
      %v797 = vpop.f32.mrf.mxu0
      %v798 = vadd.f32 0.0, %v797
      %799 = vmatmul.bf16.gmra.mxu0 %v674
      %v800 = vpop.f32.mrf.mxu0
      %v801 = vadd.f32 0.0, %v800
      %v802 = vpop.f32.mrf.mxu0
      %v803 = vadd.f32 0.0, %v802
      %804 = vmatmul.bf16.gmra.mxu0 %v677
      %v805 = vpop.f32.mrf.mxu0
      %v806 = vadd.f32 0.0, %v805
      %v807 = vpop.f32.mrf.mxu0
      %v808 = vadd.f32 0.0, %v807
      %809 = vmatmul.bf16.gmra.mxu0 %v680
      %v810 = vpop.f32.mrf.mxu0
      %v811 = vadd.f32 0.0, %v810
      %v812 = vpop.f32.mrf.mxu0
      %v813 = vadd.f32 0.0, %v812
      %814 = vmatmul.bf16.gmra.mxu0 %v683
      %v815 = vpop.f32.mrf.mxu0
      %v816 = vadd.f32 0.0, %v815
      %v817 = vpop.f32.mrf.mxu0
      %v818 = vadd.f32 0.0, %v817
      %819 = vmatmul.bf16.gmra.mxu0 %v686
      %v820 = vpop.f32.mrf.mxu0
      %v821 = vadd.f32 0.0, %v820
      %v822 = vpop.f32.mrf.mxu0
      %v823 = vadd.f32 0.0, %v822
      %824 = vmatmul.bf16.gmra.mxu0 %v689
      %v825 = vpop.f32.mrf.mxu0
      %v826 = vadd.f32 0.0, %v825
      %v827 = vpop.f32.mrf.mxu0
      %v828 = vadd.f32 0.0, %v827
      %829 = vmatmul.bf16.gmra.mxu0 %v692
      %v830 = vpop.f32.mrf.mxu0
      %v831 = vadd.f32 0.0, %v830
      %v832 = vpop.f32.mrf.mxu0
      %v833 = vadd.f32 0.0, %v832
      %834 = vmatmul.bf16.gmra.mxu0 %v695
      %v835 = vpop.f32.mrf.mxu0
      %v836 = vadd.f32 0.0, %v835
      %v837 = vpop.f32.mrf.mxu0
      %v838 = vadd.f32 0.0, %v837
      %839 = vmatmul.bf16.gmra.mxu0 %v698
      %v840 = vpop.f32.mrf.mxu0
      %v841 = vadd.f32 0.0, %v840
      %v842 = vpop.f32.mrf.mxu0
      %v843 = vadd.f32 0.0, %v842
      %844 = vmatmul.bf16.gmra.mxu0 %v701
      %v845 = vpop.f32.mrf.mxu0
      %v846 = vadd.f32 0.0, %v845
      %v847 = vpop.f32.mrf.mxu0
      %v848 = vadd.f32 0.0, %v847
      %849 = vmatmul.bf16.gmra.mxu0 %v704
      %v850 = vpop.f32.mrf.mxu0
      %v851 = vadd.f32 0.0, %v850
      %v852 = vpop.f32.mrf.mxu0
      %v853 = vadd.f32 0.0, %v852
      %854 = vmatmul.bf16.gmra.mxu0 %v707
      %v855 = vpop.f32.mrf.mxu0
      %v856 = vadd.f32 0.0, %v855
      %v857 = vpop.f32.mrf.mxu0
      %v858 = vadd.f32 0.0, %v857
      %859 = vmatmul.bf16.gmra.mxu0 %v710
      %v860 = vpop.f32.mrf.mxu0
      %v861 = vadd.f32 0.0, %v860
      %v862 = vpop.f32.mrf.mxu0
      %v863 = vadd.f32 0.0, %v862
      %864 = vmatmul.bf16.gmra.mxu0 %v713
      %v865 = vpop.f32.mrf.mxu0
      %v866 = vadd.f32 0.0, %v865
      %v867 = vpop.f32.mrf.mxu0
      %v868 = vadd.f32 0.0, %v867
      %869 = vmatmul.bf16.gmra.mxu0 %v716
      %v870 = vpop.f32.mrf.mxu0
      %v871 = vadd.f32 0.0, %v870
      %v872 = vpop.f32.mrf.mxu0
      %v873 = vadd.f32 0.0, %v872
      %874 = vmatmul.bf16.gmra.mxu0 %v719
      %v875 = vpop.f32.mrf.mxu0
      %v876 = vadd.f32 0.0, %v875
      %v877 = vpop.f32.mrf.mxu0
      %v878 = vadd.f32 0.0, %v877
      %879 = vmatmul.bf16.gmra.mxu0 %v722
      %v880 = vpop.f32.mrf.mxu0
      %v881 = vadd.f32 0.0, %v880
      %v882 = vpop.f32.mrf.mxu0
      %v883 = vadd.f32 0.0, %v882
      %884 = vmatmul.bf16.gmra.mxu0 %v725
      %v885 = vpop.f32.mrf.mxu0
      %v886 = vadd.f32 0.0, %v885
      %v887 = vpop.f32.mrf.mxu0
      %v888 = vadd.f32 0.0, %v887
      %889 = vmatmul.bf16.gmra.mxu0 %v728
      %v890 = vpop.f32.mrf.mxu0
      %v891 = vadd.f32 0.0, %v890
      %v892 = vpop.f32.mrf.mxu0
      %v893 = vadd.f32 0.0, %v892
      %894 = vmatmul.bf16.gmra.mxu0 %v731
      %v895 = vpop.f32.mrf.mxu0
      %v896 = vadd.f32 0.0, %v895
      %v897 = vpop.f32.mrf.mxu0
      %v898 = vadd.f32 0.0, %v897
      %899 = vmatmul.bf16.gmra.mxu0 %v734
      %v900 = vpop.f32.mrf.mxu0
      %v901 = vadd.f32 0.0, %v900
      %v902 = vpop.f32.mrf.mxu0
      %v903 = vadd.f32 0.0, %v902
      %904 = vmatmul.bf16.gmra.mxu0 %v737
      %v905 = vpop.f32.mrf.mxu0
      %v906 = vadd.f32 0.0, %v905
      %v907 = vpop.f32.mrf.mxu0
      %v908 = vadd.f32 0.0, %v907
      %909 = vmatmul.bf16.gmra.mxu0 %v740
      %v910 = vpop.f32.mrf.mxu0
      %v911 = vadd.f32 0.0, %v910
      %v912 = vpop.f32.mrf.mxu0
      %v913 = vadd.f32 0.0, %v912
      %914 = vdwg.mxu0
      %v979 = vunpack.c.l.b16 %v355
      %v980 = vunpack.c.l.b16 %v356
      %v981 = vunpack.c.l.b16 %v357
      %v982 = vunpack.c.l.b16 %v358
      %v983 = vunpack.c.l.b16 %v359
      %v984 = vunpack.c.l.b16 %v360
      %v985 = vunpack.c.l.b16 %v361
      %v986 = vunpack.c.l.b16 %v362
      %v987 = vunpack.c.l.b16 %v363
      %v988 = vunpack.c.l.b16 %v364
      %v989 = vunpack.c.l.b16 %v365
      %v990 = vunpack.c.l.b16 %v366
      %v991 = vunpack.c.l.b16 %v367
      %v992 = vunpack.c.l.b16 %v368
      %v993 = vunpack.c.l.b16 %v369
      %v994 = vunpack.c.l.b16 %v370
      %v995 = vunpack.c.l.b16 %v371
      %v996 = vunpack.c.l.b16 %v372
      %v997 = vunpack.c.l.b16 %v373
      %v998 = vunpack.c.l.b16 %v374
      %v999 = vunpack.c.l.b16 %v375
      %v1000 = vunpack.c.l.b16 %v376
      %v1001 = vunpack.c.l.b16 %v377
      %v1002 = vunpack.c.l.b16 %v378
      %v1003 = vunpack.c.l.b16 %v379
      %v1004 = vunpack.c.l.b16 %v380
      %v1005 = vunpack.c.l.b16 %v381
      %v1006 = vunpack.c.l.b16 %v382
      %v1007 = vunpack.c.l.b16 %v383
      %v1008 = vunpack.c.l.b16 %v384
      %v1009 = vunpack.c.l.b16 %v385
      %v1010 = vunpack.c.l.b16 %v386
      %v1011 = vunpack.c.l.b16 %v387
      %v1012 = vunpack.c.l.b16 %v388
      %v1013 = vunpack.c.l.b16 %v389
      %v1014 = vunpack.c.l.b16 %v390
      %v1015 = vunpack.c.l.b16 %v391
      %v1016 = vunpack.c.l.b16 %v392
      %v1017 = vunpack.c.l.b16 %v393
      %v1018 = vunpack.c.l.b16 %v394
      %v1019 = vunpack.c.l.b16 %v395
      %v1020 = vunpack.c.l.b16 %v396
      %v1021 = vunpack.c.l.b16 %v397
      %v1022 = vunpack.c.l.b16 %v398
      %v1023 = vunpack.c.l.b16 %v399
      %v1024 = vunpack.c.l.b16 %v400
      %v1025 = vunpack.c.l.b16 %v401
      %v1026 = vunpack.c.l.b16 %v402
      %v1027 = vunpack.c.l.b16 %v403
      %v1028 = vunpack.c.l.b16 %v404
      %v1029 = vunpack.c.l.b16 %v405
      %v1030 = vunpack.c.l.b16 %v406
      %v1031 = vunpack.c.l.b16 %v407
      %v1032 = vunpack.c.l.b16 %v408
      %v1033 = vunpack.c.l.b16 %v409
      %v1034 = vunpack.c.l.b16 %v410
      %v1035 = vunpack.c.l.b16 %v411
      %v1036 = vunpack.c.l.b16 %v412
      %v1037 = vunpack.c.l.b16 %v413
      %v1038 = vunpack.c.l.b16 %v414
      %v1039 = vunpack.c.l.b16 %v415
      %v1040 = vunpack.c.l.b16 %v416
      %v1041 = vunpack.c.l.b16 %v417
      %v1042 = vunpack.c.l.b16 %v418
      %v1043 = vpack.c.b16 %v980, %v979
      %v1044 = vpack.c.b16 %v982, %v981
      %v1045 = vpack.c.b16 %v984, %v983
      %v1046 = vpack.c.b16 %v986, %v985
      %v1047 = vpack.c.b16 %v988, %v987
      %v1048 = vpack.c.b16 %v990, %v989
      %v1049 = vpack.c.b16 %v992, %v991
      %v1050 = vpack.c.b16 %v994, %v993
      %v1051 = vpack.c.b16 %v996, %v995
      %v1052 = vpack.c.b16 %v998, %v997
      %v1053 = vpack.c.b16 %v1000, %v999
      %v1054 = vpack.c.b16 %v1002, %v1001
      %v1055 = vpack.c.b16 %v1004, %v1003
      %v1056 = vpack.c.b16 %v1006, %v1005
      %v1057 = vpack.c.b16 %v1008, %v1007
      %v1058 = vpack.c.b16 %v1010, %v1009
      %v1059 = vpack.c.b16 %v1012, %v1011
      %v1060 = vpack.c.b16 %v1014, %v1013
      %v1061 = vpack.c.b16 %v1016, %v1015
      %v1062 = vpack.c.b16 %v1018, %v1017
      %v1063 = vpack.c.b16 %v1020, %v1019
      %v1064 = vpack.c.b16 %v1022, %v1021
      %v1065 = vpack.c.b16 %v1024, %v1023
      %v1066 = vpack.c.b16 %v1026, %v1025
      %v1067 = vpack.c.b16 %v1028, %v1027
      %v1068 = vpack.c.b16 %v1030, %v1029
      %v1069 = vpack.c.b16 %v1032, %v1031
      %v1070 = vpack.c.b16 %v1034, %v1033
      %v1071 = vpack.c.b16 %v1036, %v1035
      %v1072 = vpack.c.b16 %v1038, %v1037
      %v1073 = vpack.c.b16 %v1040, %v1039
      %v1074 = vpack.c.b16 %v1042, %v1041
      %v1076 = vsel %vm645, %v1043, 0
      %v1079 = vsel %vm645, %v1044, 0
      %v1082 = vsel %vm645, %v1045, 0
      %v1085 = vsel %vm645, %v1046, 0
      %v1088 = vsel %vm645, %v1047, 0
      %v1091 = vsel %vm645, %v1048, 0
      %v1094 = vsel %vm645, %v1049, 0
      %v1097 = vsel %vm645, %v1050, 0
      %v1100 = vsel %vm645, %v1051, 0
      %v1103 = vsel %vm645, %v1052, 0
      %v1106 = vsel %vm645, %v1053, 0
      %v1109 = vsel %vm645, %v1054, 0
      %v1112 = vsel %vm645, %v1055, 0
      %v1115 = vsel %vm645, %v1056, 0
      %v1118 = vsel %vm645, %v1057, 0
      %v1121 = vsel %vm645, %v1058, 0
      %v1124 = vsel %vm645, %v1059, 0
      %v1127 = vsel %vm645, %v1060, 0
      %v1130 = vsel %vm645, %v1061, 0
      %v1133 = vsel %vm645, %v1062, 0
      %v1136 = vsel %vm645, %v1063, 0
      %v1139 = vsel %vm645, %v1064, 0
      %v1142 = vsel %vm645, %v1065, 0
      %v1145 = vsel %vm645, %v1066, 0
      %v1148 = vsel %vm645, %v1067, 0
      %v1151 = vsel %vm645, %v1068, 0
      %v1154 = vsel %vm645, %v1069, 0
      %v1157 = vsel %vm645, %v1070, 0
      %v1160 = vsel %vm645, %v1071, 0
      %v1163 = vsel %vm645, %v1072, 0
      %v1166 = vsel %vm645, %v1073, 0
      %v1169 = vsel %vm645, %v1074, 0
      %v1172 = vsel %vm742, %v419, 0
      %1174 = vmatpush.bf16.msra.mxu0 0
      %1175 = vmatpush.bf16.msra.mxu0 0
      %1176 = vmatpush.bf16.msra.mxu0 0
      %1177 = vmatpush.bf16.msra.mxu0 0
      %1178 = vmatpush.bf16.msra.mxu0 0
      %1179 = vmatpush.bf16.msra.mxu0 0
      %1180 = vmatpush.bf16.msra.mxu0 0
      %1181 = vmatpush.bf16.msra.mxu0 %v1172
      %1182 = vmatmul.bf16.gmra.mxu0 %v1076
      %v1183 = vpop.f32.mrf.mxu0
      %v1184 = vadd.f32 %v756, %v1183
      %v1185 = vpop.f32.mrf.mxu0
      %v1186 = vadd.f32 %v758, %v1185
      %1187 = vmatmul.bf16.gmra.mxu0 %v1079
      %v1188 = vpop.f32.mrf.mxu0
      %v1189 = vadd.f32 %v761, %v1188
      %v1190 = vpop.f32.mrf.mxu0
      %v1191 = vadd.f32 %v763, %v1190
      %1192 = vmatmul.bf16.gmra.mxu0 %v1082
      %v1193 = vpop.f32.mrf.mxu0
      %v1194 = vadd.f32 %v766, %v1193
      %v1195 = vpop.f32.mrf.mxu0
      %v1196 = vadd.f32 %v768, %v1195
      %1197 = vmatmul.bf16.gmra.mxu0 %v1085
      %v1198 = vpop.f32.mrf.mxu0
      %v1199 = vadd.f32 %v771, %v1198
      %v1200 = vpop.f32.mrf.mxu0
      %v1201 = vadd.f32 %v773, %v1200
      %1202 = vmatmul.bf16.gmra.mxu0 %v1088
      %v1203 = vpop.f32.mrf.mxu0
      %v1204 = vadd.f32 %v776, %v1203
      %v1205 = vpop.f32.mrf.mxu0
      %v1206 = vadd.f32 %v778, %v1205
      %1207 = vmatmul.bf16.gmra.mxu0 %v1091
      %v1208 = vpop.f32.mrf.mxu0
      %v1209 = vadd.f32 %v781, %v1208
      %v1210 = vpop.f32.mrf.mxu0
      %v1211 = vadd.f32 %v783, %v1210
      %1212 = vmatmul.bf16.gmra.mxu0 %v1094
      %v1213 = vpop.f32.mrf.mxu0
      %v1214 = vadd.f32 %v786, %v1213
      %v1215 = vpop.f32.mrf.mxu0
      %v1216 = vadd.f32 %v788, %v1215
      %1217 = vmatmul.bf16.gmra.mxu0 %v1097
      %v1218 = vpop.f32.mrf.mxu0
      %v1219 = vadd.f32 %v791, %v1218
      %v1220 = vpop.f32.mrf.mxu0
      %v1221 = vadd.f32 %v793, %v1220
      %1222 = vmatmul.bf16.gmra.mxu0 %v1100
      %v1223 = vpop.f32.mrf.mxu0
      %v1224 = vadd.f32 %v796, %v1223
      %v1225 = vpop.f32.mrf.mxu0
      %v1226 = vadd.f32 %v798, %v1225
      %1227 = vmatmul.bf16.gmra.mxu0 %v1103
      %v1228 = vpop.f32.mrf.mxu0
      %v1229 = vadd.f32 %v801, %v1228
      %v1230 = vpop.f32.mrf.mxu0
      %v1231 = vadd.f32 %v803, %v1230
      %1232 = vmatmul.bf16.gmra.mxu0 %v1106
      %v1233 = vpop.f32.mrf.mxu0
      %v1234 = vadd.f32 %v806, %v1233
      %v1235 = vpop.f32.mrf.mxu0
      %v1236 = vadd.f32 %v808, %v1235
      %1237 = vmatmul.bf16.gmra.mxu0 %v1109
      %v1238 = vpop.f32.mrf.mxu0
      %v1239 = vadd.f32 %v811, %v1238
      %v1240 = vpop.f32.mrf.mxu0
      %v1241 = vadd.f32 %v813, %v1240
      %1242 = vmatmul.bf16.gmra.mxu0 %v1112
      %v1243 = vpop.f32.mrf.mxu0
      %v1244 = vadd.f32 %v816, %v1243
      %v1245 = vpop.f32.mrf.mxu0
      %v1246 = vadd.f32 %v818, %v1245
      %1247 = vmatmul.bf16.gmra.mxu0 %v1115
      %v1248 = vpop.f32.mrf.mxu0
      %v1249 = vadd.f32 %v821, %v1248
      %v1250 = vpop.f32.mrf.mxu0
      %v1251 = vadd.f32 %v823, %v1250
      %1252 = vmatmul.bf16.gmra.mxu0 %v1118
      %v1253 = vpop.f32.mrf.mxu0
      %v1254 = vadd.f32 %v826, %v1253
      %v1255 = vpop.f32.mrf.mxu0
      %v1256 = vadd.f32 %v828, %v1255
      %1257 = vmatmul.bf16.gmra.mxu0 %v1121
      %v1258 = vpop.f32.mrf.mxu0
      %v1259 = vadd.f32 %v831, %v1258
      %v1260 = vpop.f32.mrf.mxu0
      %v1261 = vadd.f32 %v833, %v1260
      %1262 = vmatmul.bf16.gmra.mxu0 %v1124
      %v1263 = vpop.f32.mrf.mxu0
      %v1264 = vadd.f32 %v836, %v1263
      %v1265 = vpop.f32.mrf.mxu0
      %v1266 = vadd.f32 %v838, %v1265
      %1267 = vmatmul.bf16.gmra.mxu0 %v1127
      %v1268 = vpop.f32.mrf.mxu0
      %v1269 = vadd.f32 %v841, %v1268
      %v1270 = vpop.f32.mrf.mxu0
      %v1271 = vadd.f32 %v843, %v1270
      %1272 = vmatmul.bf16.gmra.mxu0 %v1130
      %v1273 = vpop.f32.mrf.mxu0
      %v1274 = vadd.f32 %v846, %v1273
      %v1275 = vpop.f32.mrf.mxu0
      %v1276 = vadd.f32 %v848, %v1275
      %1277 = vmatmul.bf16.gmra.mxu0 %v1133
      %v1278 = vpop.f32.mrf.mxu0
      %v1279 = vadd.f32 %v851, %v1278
      %v1280 = vpop.f32.mrf.mxu0
      %v1281 = vadd.f32 %v853, %v1280
      %1282 = vmatmul.bf16.gmra.mxu0 %v1136
      %v1283 = vpop.f32.mrf.mxu0
      %v1284 = vadd.f32 %v856, %v1283
      %v1285 = vpop.f32.mrf.mxu0
      %v1286 = vadd.f32 %v858, %v1285
      %1287 = vmatmul.bf16.gmra.mxu0 %v1139
      %v1288 = vpop.f32.mrf.mxu0
      %v1289 = vadd.f32 %v861, %v1288
      %v1290 = vpop.f32.mrf.mxu0
      %v1291 = vadd.f32 %v863, %v1290
      %1292 = vmatmul.bf16.gmra.mxu0 %v1142
      %v1293 = vpop.f32.mrf.mxu0
      %v1294 = vadd.f32 %v866, %v1293
      %v1295 = vpop.f32.mrf.mxu0
      %v1296 = vadd.f32 %v868, %v1295
      %1297 = vmatmul.bf16.gmra.mxu0 %v1145
      %v1298 = vpop.f32.mrf.mxu0
      %v1299 = vadd.f32 %v871, %v1298
      %v1300 = vpop.f32.mrf.mxu0
      %v1301 = vadd.f32 %v873, %v1300
      %1302 = vmatmul.bf16.gmra.mxu0 %v1148
      %v1303 = vpop.f32.mrf.mxu0
      %v1304 = vadd.f32 %v876, %v1303
      %v1305 = vpop.f32.mrf.mxu0
      %v1306 = vadd.f32 %v878, %v1305
      %1307 = vmatmul.bf16.gmra.mxu0 %v1151
      %v1308 = vpop.f32.mrf.mxu0
      %v1309 = vadd.f32 %v881, %v1308
      %v1310 = vpop.f32.mrf.mxu0
      %v1311 = vadd.f32 %v883, %v1310
      %1312 = vmatmul.bf16.gmra.mxu0 %v1154
      %v1313 = vpop.f32.mrf.mxu0
      %v1314 = vadd.f32 %v886, %v1313
      %v1315 = vpop.f32.mrf.mxu0
      %v1316 = vadd.f32 %v888, %v1315
      %1317 = vmatmul.bf16.gmra.mxu0 %v1157
      %v1318 = vpop.f32.mrf.mxu0
      %v1319 = vadd.f32 %v891, %v1318
      %v1320 = vpop.f32.mrf.mxu0
      %v1321 = vadd.f32 %v893, %v1320
      %1322 = vmatmul.bf16.gmra.mxu0 %v1160
      %v1323 = vpop.f32.mrf.mxu0
      %v1324 = vadd.f32 %v896, %v1323
      %v1325 = vpop.f32.mrf.mxu0
      %v1326 = vadd.f32 %v898, %v1325
      %1327 = vmatmul.bf16.gmra.mxu0 %v1163
      %v1328 = vpop.f32.mrf.mxu0
      %v1329 = vadd.f32 %v901, %v1328
      %v1330 = vpop.f32.mrf.mxu0
      %v1331 = vadd.f32 %v903, %v1330
      %1332 = vmatmul.bf16.gmra.mxu0 %v1166
      %v1333 = vpop.f32.mrf.mxu0
      %v1334 = vadd.f32 %v906, %v1333
      %v1335 = vpop.f32.mrf.mxu0
      %v1336 = vadd.f32 %v908, %v1335
      %1337 = vmatmul.bf16.gmra.mxu0 %v1169
      %v1338 = vpop.f32.mrf.mxu0
      %v1339 = vadd.f32 %v911, %v1338
      %v1340 = vpop.f32.mrf.mxu0
      %v1341 = vadd.f32 %v913, %v1340
      %1342 = vdwg.mxu0
      %v1343 = vld [vmem:[%s346] sm:$0xf]
      %v1344 = vld [vmem:[%s346 + $0x4] sm:$0xf]
      %v1345 = vld [vmem:[%s346 + $0x8] sm:$0xf]
      %v1346 = vld [vmem:[%s346 + $0xc] sm:$0xf]
      %v1347 = vld [vmem:[%s346 + $0x10] sm:$0xf]
      %v1348 = vld [vmem:[%s346 + $0x14] sm:$0xf]
      %v1349 = vld [vmem:[%s346 + $0x18] sm:$0xf]
      %v1350 = vld [vmem:[%s346 + $0x1c] sm:$0xf]
      %v1351 = vld [vmem:[%s346 + $0x20] sm:$0xf]
      %v1352 = vld [vmem:[%s346 + $0x24] sm:$0xf]
      %v1353 = vld [vmem:[%s346 + $0x28] sm:$0xf]
      %v1354 = vld [vmem:[%s346 + $0x2c] sm:$0xf]
      %v1355 = vld [vmem:[%s346 + $0x30] sm:$0xf]
      %v1356 = vld [vmem:[%s346 + $0x34] sm:$0xf]
      %v1357 = vld [vmem:[%s346 + $0x38] sm:$0xf]
      %v1358 = vld [vmem:[%s346 + $0x3c] sm:$0xf]
      %v1359 = vld [vmem:[%s346 + $0x40] sm:$0xf]
      %v1360 = vld [vmem:[%s346 + $0x44] sm:$0xf]
      %v1361 = vld [vmem:[%s346 + $0x48] sm:$0xf]
      %v1362 = vld [vmem:[%s346 + $0x4c] sm:$0xf]
      %v1363 = vld [vmem:[%s346 + $0x50] sm:$0xf]
      %v1364 = vld [vmem:[%s346 + $0x54] sm:$0xf]
      %v1365 = vld [vmem:[%s346 + $0x58] sm:$0xf]
      %v1366 = vld [vmem:[%s346 + $0x5c] sm:$0xf]
      %v1367 = vld [vmem:[%s346 + $0x60] sm:$0xf]
      %v1368 = vld [vmem:[%s346 + $0x64] sm:$0xf]
      %v1369 = vld [vmem:[%s346 + $0x68] sm:$0xf]
      %v1370 = vld [vmem:[%s346 + $0x6c] sm:$0xf]
      %v1371 = vld [vmem:[%s346 + $0x70] sm:$0xf]
      %v1372 = vld [vmem:[%s346 + $0x74] sm:$0xf]
      %v1373 = vld [vmem:[%s346 + $0x78] sm:$0xf]
      %v1374 = vld [vmem:[%s346 + $0x7c] sm:$0xf]
      %v1375 = vld [vmem:[%s346 + $0x80] sm:$0xf]
      %v1376 = vld [vmem:[%s346 + $0x84] sm:$0xf]
      %v1377 = vld [vmem:[%s346 + $0x88] sm:$0xf]
      %v1378 = vld [vmem:[%s346 + $0x8c] sm:$0xf]
      %v1379 = vld [vmem:[%s346 + $0x90] sm:$0xf]
      %v1380 = vld [vmem:[%s346 + $0x94] sm:$0xf]
      %v1381 = vld [vmem:[%s346 + $0x98] sm:$0xf]
      %v1382 = vld [vmem:[%s346 + $0x9c] sm:$0xf]
      %v1383 = vld [vmem:[%s346 + $0xa0] sm:$0xf]
      %v1384 = vld [vmem:[%s346 + $0xa4] sm:$0xf]
      %v1385 = vld [vmem:[%s346 + $0xa8] sm:$0xf]
      %v1386 = vld [vmem:[%s346 + $0xac] sm:$0xf]
      %v1387 = vld [vmem:[%s346 + $0xb0] sm:$0xf]
      %v1388 = vld [vmem:[%s346 + $0xb4] sm:$0xf]
      %v1389 = vld [vmem:[%s346 + $0xb8] sm:$0xf]
      %v1390 = vld [vmem:[%s346 + $0xbc] sm:$0xf]
      %v1391 = vld [vmem:[%s346 + $0xc0] sm:$0xf]
      %v1392 = vld [vmem:[%s346 + $0xc4] sm:$0xf]
      %v1393 = vld [vmem:[%s346 + $0xc8] sm:$0xf]
      %v1394 = vld [vmem:[%s346 + $0xcc] sm:$0xf]
      %v1395 = vld [vmem:[%s346 + $0xd0] sm:$0xf]
      %v1396 = vld [vmem:[%s346 + $0xd4] sm:$0xf]
      %v1397 = vld [vmem:[%s346 + $0xd8] sm:$0xf]
      %v1398 = vld [vmem:[%s346 + $0xdc] sm:$0xf]
      %v1399 = vld [vmem:[%s346 + $0xe0] sm:$0xf]
      %v1400 = vld [vmem:[%s346 + $0xe4] sm:$0xf]
      %v1401 = vld [vmem:[%s346 + $0xe8] sm:$0xf]
      %v1402 = vld [vmem:[%s346 + $0xec] sm:$0xf]
      %v1403 = vld [vmem:[%s346 + $0xf0] sm:$0xf]
      %v1404 = vld [vmem:[%s346 + $0xf4] sm:$0xf]
      %v1405 = vld [vmem:[%s346 + $0xf8] sm:$0xf]
      %v1406 = vld [vmem:[%s346 + $0xfc] sm:$0xf]
      %v1407 = vld [vmem:[%s5] sm:$0xf]
      %v1472 = vunpack.c.l.b16 %v1343
      %v1473 = vunpack.c.l.b16 %v1344
      %v1474 = vunpack.c.l.b16 %v1345
      %v1475 = vunpack.c.l.b16 %v1346
      %v1476 = vunpack.c.l.b16 %v1347
      %v1477 = vunpack.c.l.b16 %v1348
      %v1478 = vunpack.c.l.b16 %v1349
      %v1479 = vunpack.c.l.b16 %v1350
      %v1480 = vunpack.c.l.b16 %v1351
      %v1481 = vunpack.c.l.b16 %v1352
      %v1482 = vunpack.c.l.b16 %v1353
      %v1483 = vunpack.c.l.b16 %v1354
      %v1484 = vunpack.c.l.b16 %v1355
      %v1485 = vunpack.c.l.b16 %v1356
      %v1486 = vunpack.c.l.b16 %v1357
      %v1487 = vunpack.c.l.b16 %v1358
      %v1488 = vunpack.c.l.b16 %v1359
      %v1489 = vunpack.c.l.b16 %v1360
      %v1490 = vunpack.c.l.b16 %v1361
      %v1491 = vunpack.c.l.b16 %v1362
      %v1492 = vunpack.c.l.b16 %v1363
      %v1493 = vunpack.c.l.b16 %v1364
      %v1494 = vunpack.c.l.b16 %v1365
      %v1495 = vunpack.c.l.b16 %v1366
      %v1496 = vunpack.c.l.b16 %v1367
      %v1497 = vunpack.c.l.b16 %v1368
      %v1498 = vunpack.c.l.b16 %v1369
      %v1499 = vunpack.c.l.b16 %v1370
      %v1500 = vunpack.c.l.b16 %v1371
      %v1501 = vunpack.c.l.b16 %v1372
      %v1502 = vunpack.c.l.b16 %v1373
      %v1503 = vunpack.c.l.b16 %v1374
      %v1504 = vunpack.c.l.b16 %v1375
      %v1505 = vunpack.c.l.b16 %v1376
      %v1506 = vunpack.c.l.b16 %v1377
      %v1507 = vunpack.c.l.b16 %v1378
      %v1508 = vunpack.c.l.b16 %v1379
      %v1509 = vunpack.c.l.b16 %v1380
      %v1510 = vunpack.c.l.b16 %v1381
      %v1511 = vunpack.c.l.b16 %v1382
      %v1512 = vunpack.c.l.b16 %v1383
      %v1513 = vunpack.c.l.b16 %v1384
      %v1514 = vunpack.c.l.b16 %v1385
      %v1515 = vunpack.c.l.b16 %v1386
      %v1516 = vunpack.c.l.b16 %v1387
      %v1517 = vunpack.c.l.b16 %v1388
      %v1518 = vunpack.c.l.b16 %v1389
      %v1519 = vunpack.c.l.b16 %v1390
      %v1520 = vunpack.c.l.b16 %v1391
      %v1521 = vunpack.c.l.b16 %v1392
      %v1522 = vunpack.c.l.b16 %v1393
      %v1523 = vunpack.c.l.b16 %v1394
      %v1524 = vunpack.c.l.b16 %v1395
      %v1525 = vunpack.c.l.b16 %v1396
      %v1526 = vunpack.c.l.b16 %v1397
      %v1527 = vunpack.c.l.b16 %v1398
      %v1528 = vunpack.c.l.b16 %v1399
      %v1529 = vunpack.c.l.b16 %v1400
      %v1530 = vunpack.c.l.b16 %v1401
      %v1531 = vunpack.c.l.b16 %v1402
      %v1532 = vunpack.c.l.b16 %v1403
      %v1533 = vunpack.c.l.b16 %v1404
      %v1534 = vunpack.c.l.b16 %v1405
      %v1535 = vunpack.c.l.b16 %v1406
      %v1536 = vpack.c.b16 %v1473, %v1472
      %v1537 = vpack.c.b16 %v1475, %v1474
      %v1538 = vpack.c.b16 %v1477, %v1476
      %v1539 = vpack.c.b16 %v1479, %v1478
      %v1540 = vpack.c.b16 %v1481, %v1480
      %v1541 = vpack.c.b16 %v1483, %v1482
      %v1542 = vpack.c.b16 %v1485, %v1484
      %v1543 = vpack.c.b16 %v1487, %v1486
      %v1544 = vpack.c.b16 %v1489, %v1488
      %v1545 = vpack.c.b16 %v1491, %v1490
      %v1546 = vpack.c.b16 %v1493, %v1492
      %v1547 = vpack.c.b16 %v1495, %v1494
      %v1548 = vpack.c.b16 %v1497, %v1496
      %v1549 = vpack.c.b16 %v1499, %v1498
      %v1550 = vpack.c.b16 %v1501, %v1500
      %v1551 = vpack.c.b16 %v1503, %v1502
      %v1552 = vpack.c.b16 %v1505, %v1504
      %v1553 = vpack.c.b16 %v1507, %v1506
      %v1554 = vpack.c.b16 %v1509, %v1508
      %v1555 = vpack.c.b16 %v1511, %v1510
      %v1556 = vpack.c.b16 %v1513, %v1512
      %v1557 = vpack.c.b16 %v1515, %v1514
      %v1558 = vpack.c.b16 %v1517, %v1516
      %v1559 = vpack.c.b16 %v1519, %v1518
      %v1560 = vpack.c.b16 %v1521, %v1520
      %v1561 = vpack.c.b16 %v1523, %v1522
      %v1562 = vpack.c.b16 %v1525, %v1524
      %v1563 = vpack.c.b16 %v1527, %v1526
      %v1564 = vpack.c.b16 %v1529, %v1528
      %v1565 = vpack.c.b16 %v1531, %v1530
      %v1566 = vpack.c.b16 %v1533, %v1532
      %v1567 = vpack.c.b16 %v1535, %v1534
      %v1569 = vsel %vm645, %v1536, 0
      %v1572 = vsel %vm645, %v1537, 0
      %v1575 = vsel %vm645, %v1538, 0
      %v1578 = vsel %vm645, %v1539, 0
      %v1581 = vsel %vm645, %v1540, 0
      %v1584 = vsel %vm645, %v1541, 0
      %v1587 = vsel %vm645, %v1542, 0
      %v1590 = vsel %vm645, %v1543, 0
      %v1593 = vsel %vm645, %v1544, 0
      %v1596 = vsel %vm645, %v1545, 0
      %v1599 = vsel %vm645, %v1546, 0
      %v1602 = vsel %vm645, %v1547, 0
      %v1605 = vsel %vm645, %v1548, 0
      %v1608 = vsel %vm645, %v1549, 0
      %v1611 = vsel %vm645, %v1550, 0
      %v1614 = vsel %vm645, %v1551, 0
      %v1617 = vsel %vm645, %v1552, 0
      %v1620 = vsel %vm645, %v1553, 0
      %v1623 = vsel %vm645, %v1554, 0
      %v1626 = vsel %vm645, %v1555, 0
      %v1629 = vsel %vm645, %v1556, 0
      %v1632 = vsel %vm645, %v1557, 0
      %v1635 = vsel %vm645, %v1558, 0
      %v1638 = vsel %vm645, %v1559, 0
      %v1641 = vsel %vm645, %v1560, 0
      %v1644 = vsel %vm645, %v1561, 0
      %v1647 = vsel %vm645, %v1562, 0
      %v1650 = vsel %vm645, %v1563, 0
      %v1653 = vsel %vm645, %v1564, 0
      %v1656 = vsel %vm645, %v1565, 0
      %v1659 = vsel %vm645, %v1566, 0
      %v1662 = vsel %vm645, %v1567, 0
      %v1665 = vsel %vm742, %v1407, 0
      %1667 = vmatpush.bf16.msra.mxu0 0
      %1668 = vmatpush.bf16.msra.mxu0 0
      %1669 = vmatpush.bf16.msra.mxu0 0
      %1670 = vmatpush.bf16.msra.mxu0 0
      %1671 = vmatpush.bf16.msra.mxu0 0
      %1672 = vmatpush.bf16.msra.mxu0 0
      %1673 = vmatpush.bf16.msra.mxu0 0
      %1674 = vmatpush.bf16.msra.mxu0 %v1665
      %1675 = vmatmul.bf16.gmra.mxu0 %v1569
      %v1676 = vpop.f32.mrf.mxu0
      %v1677 = vadd.f32 0.0, %v1676
      %v1678 = vpop.f32.mrf.mxu0
      %v1679 = vadd.f32 0.0, %v1678
      %1680 = vmatmul.bf16.gmra.mxu0 %v1572
      %v1681 = vpop.f32.mrf.mxu0
      %v1682 = vadd.f32 0.0, %v1681
      %v1683 = vpop.f32.mrf.mxu0
      %v1684 = vadd.f32 0.0, %v1683
      %1685 = vmatmul.bf16.gmra.mxu0 %v1575
      %v1686 = vpop.f32.mrf.mxu0
      %v1687 = vadd.f32 0.0, %v1686
      %v1688 = vpop.f32.mrf.mxu0
      %v1689 = vadd.f32 0.0, %v1688
      %1690 = vmatmul.bf16.gmra.mxu0 %v1578
      %v1691 = vpop.f32.mrf.mxu0
      %v1692 = vadd.f32 0.0, %v1691
      %v1693 = vpop.f32.mrf.mxu0
      %v1694 = vadd.f32 0.0, %v1693
      %1695 = vmatmul.bf16.gmra.mxu0 %v1581
      %v1696 = vpop.f32.mrf.mxu0
      %v1697 = vadd.f32 0.0, %v1696
      %v1698 = vpop.f32.mrf.mxu0
      %v1699 = vadd.f32 0.0, %v1698
      %1700 = vmatmul.bf16.gmra.mxu0 %v1584
      %v1701 = vpop.f32.mrf.mxu0
      %v1702 = vadd.f32 0.0, %v1701
      %v1703 = vpop.f32.mrf.mxu0
      %v1704 = vadd.f32 0.0, %v1703
      %1705 = vmatmul.bf16.gmra.mxu0 %v1587
      %v1706 = vpop.f32.mrf.mxu0
      %v1707 = vadd.f32 0.0, %v1706
      %v1708 = vpop.f32.mrf.mxu0
      %v1709 = vadd.f32 0.0, %v1708
      %1710 = vmatmul.bf16.gmra.mxu0 %v1590
      %v1711 = vpop.f32.mrf.mxu0
      %v1712 = vadd.f32 0.0, %v1711
      %v1713 = vpop.f32.mrf.mxu0
      %v1714 = vadd.f32 0.0, %v1713
      %1715 = vmatmul.bf16.gmra.mxu0 %v1593
      %v1716 = vpop.f32.mrf.mxu0
      %v1717 = vadd.f32 0.0, %v1716
      %v1718 = vpop.f32.mrf.mxu0
      %v1719 = vadd.f32 0.0, %v1718
      %1720 = vmatmul.bf16.gmra.mxu0 %v1596
      %v1721 = vpop.f32.mrf.mxu0
      %v1722 = vadd.f32 0.0, %v1721
      %v1723 = vpop.f32.mrf.mxu0
      %v1724 = vadd.f32 0.0, %v1723
      %1725 = vmatmul.bf16.gmra.mxu0 %v1599
      %v1726 = vpop.f32.mrf.mxu0
      %v1727 = vadd.f32 0.0, %v1726
      %v1728 = vpop.f32.mrf.mxu0
      %v1729 = vadd.f32 0.0, %v1728
      %1730 = vmatmul.bf16.gmra.mxu0 %v1602
      %v1731 = vpop.f32.mrf.mxu0
      %v1732 = vadd.f32 0.0, %v1731
      %v1733 = vpop.f32.mrf.mxu0
      %v1734 = vadd.f32 0.0, %v1733
      %1735 = vmatmul.bf16.gmra.mxu0 %v1605
      %v1736 = vpop.f32.mrf.mxu0
      %v1737 = vadd.f32 0.0, %v1736
      %v1738 = vpop.f32.mrf.mxu0
      %v1739 = vadd.f32 0.0, %v1738
      %1740 = vmatmul.bf16.gmra.mxu0 %v1608
      %v1741 = vpop.f32.mrf.mxu0
      %v1742 = vadd.f32 0.0, %v1741
      %v1743 = vpop.f32.mrf.mxu0
      %v1744 = vadd.f32 0.0, %v1743
      %1745 = vmatmul.bf16.gmra.mxu0 %v1611
      %v1746 = vpop.f32.mrf.mxu0
      %v1747 = vadd.f32 0.0, %v1746
      %v1748 = vpop.f32.mrf.mxu0
      %v1749 = vadd.f32 0.0, %v1748
      %1750 = vmatmul.bf16.gmra.mxu0 %v1614
      %v1751 = vpop.f32.mrf.mxu0
      %v1752 = vadd.f32 0.0, %v1751
      %v1753 = vpop.f32.mrf.mxu0
      %v1754 = vadd.f32 0.0, %v1753
      %1755 = vmatmul.bf16.gmra.mxu0 %v1617
      %v1756 = vpop.f32.mrf.mxu0
      %v1757 = vadd.f32 0.0, %v1756
      %v1758 = vpop.f32.mrf.mxu0
      %v1759 = vadd.f32 0.0, %v1758
      %1760 = vmatmul.bf16.gmra.mxu0 %v1620
      %v1761 = vpop.f32.mrf.mxu0
      %v1762 = vadd.f32 0.0, %v1761
      %v1763 = vpop.f32.mrf.mxu0
      %v1764 = vadd.f32 0.0, %v1763
      %1765 = vmatmul.bf16.gmra.mxu0 %v1623
      %v1766 = vpop.f32.mrf.mxu0
      %v1767 = vadd.f32 0.0, %v1766
      %v1768 = vpop.f32.mrf.mxu0
      %v1769 = vadd.f32 0.0, %v1768
      %1770 = vmatmul.bf16.gmra.mxu0 %v1626
      %v1771 = vpop.f32.mrf.mxu0
      %v1772 = vadd.f32 0.0, %v1771
      %v1773 = vpop.f32.mrf.mxu0
      %v1774 = vadd.f32 0.0, %v1773
      %1775 = vmatmul.bf16.gmra.mxu0 %v1629
      %v1776 = vpop.f32.mrf.mxu0
      %v1777 = vadd.f32 0.0, %v1776
      %v1778 = vpop.f32.mrf.mxu0
      %v1779 = vadd.f32 0.0, %v1778
      %1780 = vmatmul.bf16.gmra.mxu0 %v1632
      %v1781 = vpop.f32.mrf.mxu0
      %v1782 = vadd.f32 0.0, %v1781
      %v1783 = vpop.f32.mrf.mxu0
      %v1784 = vadd.f32 0.0, %v1783
      %1785 = vmatmul.bf16.gmra.mxu0 %v1635
      %v1786 = vpop.f32.mrf.mxu0
      %v1787 = vadd.f32 0.0, %v1786
      %v1788 = vpop.f32.mrf.mxu0
      %v1789 = vadd.f32 0.0, %v1788
      %1790 = vmatmul.bf16.gmra.mxu0 %v1638
      %v1791 = vpop.f32.mrf.mxu0
      %v1792 = vadd.f32 0.0, %v1791
      %v1793 = vpop.f32.mrf.mxu0
      %v1794 = vadd.f32 0.0, %v1793
      %1795 = vmatmul.bf16.gmra.mxu0 %v1641
      %v1796 = vpop.f32.mrf.mxu0
      %v1797 = vadd.f32 0.0, %v1796
      %v1798 = vpop.f32.mrf.mxu0
      %v1799 = vadd.f32 0.0, %v1798
      %1800 = vmatmul.bf16.gmra.mxu0 %v1644
      %v1801 = vpop.f32.mrf.mxu0
      %v1802 = vadd.f32 0.0, %v1801
      %v1803 = vpop.f32.mrf.mxu0
      %v1804 = vadd.f32 0.0, %v1803
      %1805 = vmatmul.bf16.gmra.mxu0 %v1647
      %v1806 = vpop.f32.mrf.mxu0
      %v1807 = vadd.f32 0.0, %v1806
      %v1808 = vpop.f32.mrf.mxu0
      %v1809 = vadd.f32 0.0, %v1808
      %1810 = vmatmul.bf16.gmra.mxu0 %v1650
      %v1811 = vpop.f32.mrf.mxu0
      %v1812 = vadd.f32 0.0, %v1811
      %v1813 = vpop.f32.mrf.mxu0
      %v1814 = vadd.f32 0.0, %v1813
      %1815 = vmatmul.bf16.gmra.mxu0 %v1653
      %v1816 = vpop.f32.mrf.mxu0
      %v1817 = vadd.f32 0.0, %v1816
      %v1818 = vpop.f32.mrf.mxu0
      %v1819 = vadd.f32 0.0, %v1818
      %1820 = vmatmul.bf16.gmra.mxu0 %v1656
      %v1821 = vpop.f32.mrf.mxu0
      %v1822 = vadd.f32 0.0, %v1821
      %v1823 = vpop.f32.mrf.mxu0
      %v1824 = vadd.f32 0.0, %v1823
      %1825 = vmatmul.bf16.gmra.mxu0 %v1659
      %v1826 = vpop.f32.mrf.mxu0
      %v1827 = vadd.f32 0.0, %v1826
      %v1828 = vpop.f32.mrf.mxu0
      %v1829 = vadd.f32 0.0, %v1828
      %1830 = vmatmul.bf16.gmra.mxu0 %v1662
      %v1831 = vpop.f32.mrf.mxu0
      %v1832 = vadd.f32 0.0, %v1831
      %v1833 = vpop.f32.mrf.mxu0
      %v1834 = vadd.f32 0.0, %v1833
      %1835 = vdwg.mxu0
      %v1836 = vadd.f32 %v1184, %v1677
      %v1837 = vadd.f32 %v1186, %v1679
      %v1838 = vadd.f32 %v1189, %v1682
      %v1839 = vadd.f32 %v1191, %v1684
      %v1840 = vadd.f32 %v1194, %v1687
      %v1841 = vadd.f32 %v1196, %v1689
      %v1842 = vadd.f32 %v1199, %v1692
      %v1843 = vadd.f32 %v1201, %v1694
      %v1844 = vadd.f32 %v1204, %v1697
      %v1845 = vadd.f32 %v1206, %v1699
      %v1846 = vadd.f32 %v1209, %v1702
      %v1847 = vadd.f32 %v1211, %v1704
      %v1848 = vadd.f32 %v1214, %v1707
      %v1849 = vadd.f32 %v1216, %v1709
      %v1850 = vadd.f32 %v1219, %v1712
      %v1851 = vadd.f32 %v1221, %v1714
      %v1852 = vadd.f32 %v1224, %v1717
      %v1853 = vadd.f32 %v1226, %v1719
      %v1854 = vadd.f32 %v1229, %v1722
      %v1855 = vadd.f32 %v1231, %v1724
      %v1856 = vadd.f32 %v1234, %v1727
      %v1857 = vadd.f32 %v1236, %v1729
      %v1858 = vadd.f32 %v1239, %v1732
      %v1859 = vadd.f32 %v1241, %v1734
      %v1860 = vadd.f32 %v1244, %v1737
      %v1861 = vadd.f32 %v1246, %v1739
      %v1862 = vadd.f32 %v1249, %v1742
      %v1863 = vadd.f32 %v1251, %v1744
      %v1864 = vadd.f32 %v1254, %v1747
      %v1865 = vadd.f32 %v1256, %v1749
      %v1866 = vadd.f32 %v1259, %v1752
      %v1867 = vadd.f32 %v1261, %v1754
      %v1868 = vadd.f32 %v1264, %v1757
      %v1869 = vadd.f32 %v1266, %v1759
      %v1870 = vadd.f32 %v1269, %v1762
      %v1871 = vadd.f32 %v1271, %v1764
      %v1872 = vadd.f32 %v1274, %v1767
      %v1873 = vadd.f32 %v1276, %v1769
      %v1874 = vadd.f32 %v1279, %v1772
      %v1875 = vadd.f32 %v1281, %v1774
      %v1876 = vadd.f32 %v1284, %v1777
      %v1877 = vadd.f32 %v1286, %v1779
      %v1878 = vadd.f32 %v1289, %v1782
      %v1879 = vadd.f32 %v1291, %v1784
      %v1880 = vadd.f32 %v1294, %v1787
      %v1881 = vadd.f32 %v1296, %v1789
      %v1882 = vadd.f32 %v1299, %v1792
      %v1883 = vadd.f32 %v1301, %v1794
      %v1884 = vadd.f32 %v1304, %v1797
      %v1885 = vadd.f32 %v1306, %v1799
      %v1886 = vadd.f32 %v1309, %v1802
      %v1887 = vadd.f32 %v1311, %v1804
      %v1888 = vadd.f32 %v1314, %v1807
      %v1889 = vadd.f32 %v1316, %v1809
      %v1890 = vadd.f32 %v1319, %v1812
      %v1891 = vadd.f32 %v1321, %v1814
      %v1892 = vadd.f32 %v1324, %v1817
      %v1893 = vadd.f32 %v1326, %v1819
      %v1894 = vadd.f32 %v1329, %v1822
      %v1895 = vadd.f32 %v1331, %v1824
      %v1896 = vadd.f32 %v1334, %v1827
      %v1897 = vadd.f32 %v1336, %v1829
      %v1898 = vadd.f32 %v1339, %v1832
      %v1899 = vadd.f32 %v1341, %v1834
      %v1900 = vld [vmem:[%s6] sm:$0x1]
      %v1902 = vperm.slane %v1900, 0
      %v1904 = vadd.f32 %v1836, %v1902
      %v1905 = vadd.f32 %v1837, %v1902
      %v1906 = vadd.f32 %v1838, %v1902
      %v1907 = vadd.f32 %v1839, %v1902
      %v1908 = vadd.f32 %v1840, %v1902
      %v1909 = vadd.f32 %v1841, %v1902
      %v1910 = vadd.f32 %v1842, %v1902
      %v1911 = vadd.f32 %v1843, %v1902
      %v1912 = vadd.f32 %v1844, %v1902
      %v1913 = vadd.f32 %v1845, %v1902
      %v1914 = vadd.f32 %v1846, %v1902
      %v1915 = vadd.f32 %v1847, %v1902
      %v1916 = vadd.f32 %v1848, %v1902
      %v1917 = vadd.f32 %v1849, %v1902
      %v1918 = vadd.f32 %v1850, %v1902
      %v1919 = vadd.f32 %v1851, %v1902
      %v1920 = vadd.f32 %v1852, %v1902
      %v1921 = vadd.f32 %v1853, %v1902
      %v1922 = vadd.f32 %v1854, %v1902
      %v1923 = vadd.f32 %v1855, %v1902
      %v1924 = vadd.f32 %v1856, %v1902
      %v1925 = vadd.f32 %v1857, %v1902
      %v1926 = vadd.f32 %v1858, %v1902
      %v1927 = vadd.f32 %v1859, %v1902
      %v1928 = vadd.f32 %v1860, %v1902
      %v1929 = vadd.f32 %v1861, %v1902
      %v1930 = vadd.f32 %v1862, %v1902
      %v1931 = vadd.f32 %v1863, %v1902
      %v1932 = vadd.f32 %v1864, %v1902
      %v1933 = vadd.f32 %v1865, %v1902
      %v1934 = vadd.f32 %v1866, %v1902
      %v1935 = vadd.f32 %v1867, %v1902
      %v1936 = vadd.f32 %v1868, %v1902
      %v1937 = vadd.f32 %v1869, %v1902
      %v1938 = vadd.f32 %v1870, %v1902
      %v1939 = vadd.f32 %v1871, %v1902
      %v1940 = vadd.f32 %v1872, %v1902
      %v1941 = vadd.f32 %v1873, %v1902
      %v1942 = vadd.f32 %v1874, %v1902
      %v1943 = vadd.f32 %v1875, %v1902
      %v1944 = vadd.f32 %v1876, %v1902
      %v1945 = vadd.f32 %v1877, %v1902
      %v1946 = vadd.f32 %v1878, %v1902
      %v1947 = vadd.f32 %v1879, %v1902
      %v1948 = vadd.f32 %v1880, %v1902
      %v1949 = vadd.f32 %v1881, %v1902
      %v1950 = vadd.f32 %v1882, %v1902
      %v1951 = vadd.f32 %v1883, %v1902
      %v1952 = vadd.f32 %v1884, %v1902
      %v1953 = vadd.f32 %v1885, %v1902
      %v1954 = vadd.f32 %v1886, %v1902
      %v1955 = vadd.f32 %v1887, %v1902
      %v1956 = vadd.f32 %v1888, %v1902
      %v1957 = vadd.f32 %v1889, %v1902
      %v1958 = vadd.f32 %v1890, %v1902
      %v1959 = vadd.f32 %v1891, %v1902
      %v1960 = vadd.f32 %v1892, %v1902
      %v1961 = vadd.f32 %v1893, %v1902
      %v1962 = vadd.f32 %v1894, %v1902
      %v1963 = vadd.f32 %v1895, %v1902
      %v1964 = vadd.f32 %v1896, %v1902
      %v1965 = vadd.f32 %v1897, %v1902
      %v1966 = vadd.f32 %v1898, %v1902
      %v1967 = vadd.f32 %v1899, %v1902
      %1968 = vst [vmem:[%s352] sm:$0xff] %v1904
      %1969 = vst [vmem:[%s352 + $0x8] sm:$0xff] %v1905
      %1970 = vst [vmem:[%s352 + $0x10] sm:$0xff] %v1906
      %1971 = vst [vmem:[%s352 + $0x18] sm:$0xff] %v1907
      %1972 = vst [vmem:[%s352 + $0x20] sm:$0xff] %v1908
      %1973 = vst [vmem:[%s352 + $0x28] sm:$0xff] %v1909
      %1974 = vst [vmem:[%s352 + $0x30] sm:$0xff] %v1910
      %1975 = vst [vmem:[%s352 + $0x38] sm:$0xff] %v1911
      %1976 = vst [vmem:[%s352 + $0x40] sm:$0xff] %v1912
      %1977 = vst [vmem:[%s352 + $0x48] sm:$0xff] %v1913
      %1978 = vst [vmem:[%s352 + $0x50] sm:$0xff] %v1914
      %1979 = vst [vmem:[%s352 + $0x58] sm:$0xff] %v1915
      %1980 = vst [vmem:[%s352 + $0x60] sm:$0xff] %v1916
      %1981 = vst [vmem:[%s352 + $0x68] sm:$0xff] %v1917
      %1982 = vst [vmem:[%s352 + $0x70] sm:$0xff] %v1918
      %1983 = vst [vmem:[%s352 + $0x78] sm:$0xff] %v1919
      %1984 = vst [vmem:[%s352 + $0x80] sm:$0xff] %v1920
      %1985 = vst [vmem:[%s352 + $0x88] sm:$0xff] %v1921
      %1986 = vst [vmem:[%s352 + $0x90] sm:$0xff] %v1922
      %1987 = vst [vmem:[%s352 + $0x98] sm:$0xff] %v1923
      %1988 = vst [vmem:[%s352 + $0xa0] sm:$0xff] %v1924
      %1989 = vst [vmem:[%s352 + $0xa8] sm:$0xff] %v1925
      %1990 = vst [vmem:[%s352 + $0xb0] sm:$0xff] %v1926
      %1991 = vst [vmem:[%s352 + $0xb8] sm:$0xff] %v1927
      %1992 = vst [vmem:[%s352 + $0xc0] sm:$0xff] %v1928
      %1993 = vst [vmem:[%s352 + $0xc8] sm:$0xff] %v1929
      %1994 = vst [vmem:[%s352 + $0xd0] sm:$0xff] %v1930
      %1995 = vst [vmem:[%s352 + $0xd8] sm:$0xff] %v1931
      %1996 = vst [vmem:[%s352 + $0xe0] sm:$0xff] %v1932
      %1997 = vst [vmem:[%s352 + $0xe8] sm:$0xff] %v1933
      %1998 = vst [vmem:[%s352 + $0xf0] sm:$0xff] %v1934
      %1999 = vst [vmem:[%s352 + $0xf8] sm:$0xff] %v1935
      %2000 = vst [vmem:[%s352 + $0x100] sm:$0xff] %v1936
      %2001 = vst [vmem:[%s352 + $0x108] sm:$0xff] %v1937
      %2002 = vst [vmem:[%s352 + $0x110] sm:$0xff] %v1938
      %2003 = vst [vmem:[%s352 + $0x118] sm:$0xff] %v1939
      %2004 = vst [vmem:[%s352 + $0x120] sm:$0xff] %v1940
      %2005 = vst [vmem:[%s352 + $0x128] sm:$0xff] %v1941
      %2006 = vst [vmem:[%s352 + $0x130] sm:$0xff] %v1942
      %2007 = vst [vmem:[%s352 + $0x138] sm:$0xff] %v1943
      %2008 = vst [vmem:[%s352 + $0x140] sm:$0xff] %v1944
      %2009 = vst [vmem:[%s352 + $0x148] sm:$0xff] %v1945
      %2010 = vst [vmem:[%s352 + $0x150] sm:$0xff] %v1946
      %2011 = vst [vmem:[%s352 + $0x158] sm:$0xff] %v1947
      %2012 = vst [vmem:[%s352 + $0x160] sm:$0xff] %v1948
      %2013 = vst [vmem:[%s352 + $0x168] sm:$0xff] %v1949
      %2014 = vst [vmem:[%s352 + $0x170] sm:$0xff] %v1950
      %2015 = vst [vmem:[%s352 + $0x178] sm:$0xff] %v1951
      %2016 = vst [vmem:[%s352 + $0x180] sm:$0xff] %v1952
      %2017 = vst [vmem:[%s352 + $0x188] sm:$0xff] %v1953
      %2018 = vst [vmem:[%s352 + $0x190] sm:$0xff] %v1954
      %2019 = vst [vmem:[%s352 + $0x198] sm:$0xff] %v1955
      %2020 = vst [vmem:[%s352 + $0x1a0] sm:$0xff] %v1956
      %2021 = vst [vmem:[%s352 + $0x1a8] sm:$0xff] %v1957
      %2022 = vst [vmem:[%s352 + $0x1b0] sm:$0xff] %v1958
      %2023 = vst [vmem:[%s352 + $0x1b8] sm:$0xff] %v1959
      %2024 = vst [vmem:[%s352 + $0x1c0] sm:$0xff] %v1960
      %2025 = vst [vmem:[%s352 + $0x1c8] sm:$0xff] %v1961
      %2026 = vst [vmem:[%s352 + $0x1d0] sm:$0xff] %v1962
      %2027 = vst [vmem:[%s352 + $0x1d8] sm:$0xff] %v1963
      %2028 = vst [vmem:[%s352 + $0x1e0] sm:$0xff] %v1964
      %2029 = vst [vmem:[%s352 + $0x1e8] sm:$0xff] %v1965
      %2030 = vst [vmem:[%s352 + $0x1f0] sm:$0xff] %v1966
      %2031 = vst [vmem:[%s352 + $0x1f8] sm:$0xff] %v1967
      %s2032 = smul.u32 64, %s20
      %p2033 = scmp.lt.s32.totalorder %s2032, 255
      %s2034 = scalar_select %p2033, %s2032, 255
      %s2035 = smul.addr %s2034, 8
      %s2036 = scalar_lea.vmem %s8, %s2035
      // Predicated region
      $region53: #{sisr_block.33} parent=51 // pred_check
        %p2037 = pneg %p221
      $region54: #{sisr_block.33} parent=51 // pred_check_branch
        %2039 = sbr.rel (%p2037) target = $region56
      $region55: #{sisr_block.33} parent=51 // pred_region
        %s2040 = smul.u32 64, %s20
      $region56: #{sisr_block.33} parent=51 // pred_fallthru
        _
    $region52: #{sisr_block.33} parent=5 // pred_fallthru
      _
    %p2041 = scmp.le.s32.totalorder 2, %s15
    // Predicated region
    $region57: #{sisr_block.33} parent=5 // pred_check
      %p2042 = pneg %p2041
    $region58: #{sisr_block.33} parent=5 // pred_check_branch
      %2044 = sbr.rel (%p2042) target = $region60
    $region59: #{sisr_block.33} parent=5 // pred_region
      %s2045 = ssub.s32 %s15, 2
      // Predicated region
      $region61: #{sisr_block.33} parent=59 // pred_check
        %p2046 = pneg %p227
      $region62: #{sisr_block.33} parent=59 // pred_check_branch
        %2048 = sbr.rel (%p2046) target = $region64
      $region63: #{sisr_block.33} parent=59 // pred_region
        %s2049 = smul.u32 64, %s21
        %p2050 = scmp.lt.s32.totalorder %s2049, 255
        %s2051 = scalar_select %p2050, %s2049, 255
        %s2052 = smul.addr %s2051, 8
        %s2053 = scalar_lea.vmem %s8, %s2052
      $region64: #{sisr_block.33} parent=59 // pred_fallthru
        _
    $region60: #{sisr_block.33} parent=5 // pred_fallthru
      _
  $region6: #{sisr_block.33} parent=0 // loop_footer
    %s19 = sadd.s32 1, %s15
  $region7: #{sisr_block.33} parent=0 // loop_footer_branch
    %14 = sbr.rel target = $region3
  $region8: #{sisr_block.33} parent=0 // loop_exit
    _

</llo_original>
